<compile_context>
chip_gen: v7x
topology: tpu7x:2x2x1
jax: 0.10.0
libtpu: 0.0.40
codegen_flags: <defaults>
</compile_context>

<pallas_src>
import functools
import math

import jax
import jax.numpy as jnp
from jax.experimental import pallas as pl
from jax.experimental.pallas import tpu as pltpu


def _round_up(x, m):
    return (x + m - 1) // m * m


# ----------------------------------------------------------------------------
# Pallas kernel: fused (patches @ weight) + bias + activation, tiled over (M,N)
# ----------------------------------------------------------------------------
def _matmul_bias_act_kernel(a_ref, w_ref, b_ref, o_ref, *, act):
    # bf16 x bf16 -> f32 accumulate on the MXU.
    acc = jnp.dot(a_ref[...], w_ref[...], preferred_element_type=jnp.float32)
    acc = acc + b_ref[...]          # (1, tn) broadcasts over rows, f32
    if act == "relu":
        acc = jnp.maximum(acc, 0.0)
    elif act == "sigmoid":
        acc = jax.nn.sigmoid(acc)   # EUP, f32
    o_ref[...] = acc


def pallas_matmul_bias_act(a, w_p, b_p, act):
    """a: (M, K) f32 patches. w_p: (Kp, Np) bf16 pre-padded weight matrix.
    b_p: (1, Np) f32 pre-padded bias.  Returns (M, Np) f32."""
    M, K = a.shape
    Kp, Np = w_p.shape

    tn = 128
    tm = min(256, _round_up(M, 8))
    Mp = _round_up(M, tm)

    # Pad rows to the tile grid, pad K to the weight's Kp, cast to bf16.
    a_p = jnp.pad(a, ((0, Mp - M), (0, Kp - K))).astype(jnp.bfloat16)

    grid = (Mp // tm, Np // tn)
    cost = pl.CostEstimate(
        flops=2 * Mp * Kp * Np,
        transcendentals=(Mp * Np) if act == "sigmoid" else 0,
        bytes_accessed=a_p.size * 2 + w_p.size * 2 + b_p.size * 4 + Mp * Np * 4,
    )

    out = pl.pallas_call(
        functools.partial(_matmul_bias_act_kernel, act=act),
        out_shape=jax.ShapeDtypeStruct((Mp, Np), jnp.float32),
        grid=grid,
        in_specs=[
            pl.BlockSpec((tm, Kp), lambda i, j: (i, 0)),
            pl.BlockSpec((Kp, tn), lambda i, j: (0, j)),
            pl.BlockSpec((1, tn), lambda i, j: (0, j)),
        ],
        out_specs=pl.BlockSpec((tm, tn), lambda i, j: (i, j)),
        compiler_params=pltpu.CompilerParams(
            dimension_semantics=("parallel", "parallel"),
            vmem_limit_bytes=32 * 1024 * 1024),
        cost_estimate=cost,
    )(a_p, w_p, b_p)
    return out[:M, :]


# ----------------------------------------------------------------------------
# Glue: im2col patch extraction (plain JAX, fused under jit)
# ----------------------------------------------------------------------------
def _im2col(x, kh, kw, stride):
    """x: NHWC -> patches (N*out_h*out_w, kh*kw*C), out_h, out_w."""
    N, H, W, C = x.shape
    out_h = (H - kh) // stride + 1
    out_w = (W - kw) // stride + 1
    cols = []
    for i in range(kh):
        for j in range(kw):
            cols.append(
                x[:, i:i + stride * out_h:stride, j:j + stride * out_w:stride, :])
    patches = jnp.stack(cols, axis=3)  # (N, oh, ow, kh*kw, C)
    return patches.reshape(N * out_h * out_w, kh * kw * C), out_h, out_w


def conv2d(x, w_p, b_p, kh, kw, out_ch, stride, padding, act):
    """x: NHWC. w_p/b_p: pre-padded matmul-form weight (bf16) / bias (f32)."""
    if padding > 0:
        x = jnp.pad(x, ((0, 0), (padding, padding), (padding, padding), (0, 0)))
    patches, oh, ow = _im2col(x, kh, kw, stride)
    out = pallas_matmul_bias_act(patches, w_p, b_p, act)
    N = x.shape[0]
    return out[:, :out_ch].reshape(N, oh, ow, out_ch)


def conv_transpose2d(x, w_p, b_p, kh, kw, out_ch, stride, padding,
                     output_padding, act):
    """x: NHWC. Exact PyTorch ConvTranspose2d as a flipped forward conv."""
    N, H, W, C = x.shape
    if stride > 1:
        dH, dW = (H - 1) * stride + 1, (W - 1) * stride + 1
        xd = jnp.zeros((N, dH, dW, C), x.dtype).at[:, ::stride, ::stride, :].set(x)
    else:
        xd = x
    ph = kh - 1 - padding
    pw = kw - 1 - padding
    xd = jnp.pad(xd, ((0, 0),
                      (ph, ph + output_padding),
                      (pw, pw + output_padding),
                      (0, 0)))
    patches, oh, ow = _im2col(xd, kh, kw, 1)
    out = pallas_matmul_bias_act(patches, w_p, b_p, act)
    return out[:, :out_ch].reshape(N, oh, ow, out_ch)


# ----------------------------------------------------------------------------
# One-time weight preparation (hoisted out of the forward)
# ----------------------------------------------------------------------------
def _prep_conv_weight(weight):
    """PyTorch Conv2d weight (out_ch, in_ch, kh, kw) -> (Kp, Np) bf16."""
    out_ch, in_ch, kh, kw = weight.shape
    w_mat = jnp.transpose(weight, (2, 3, 1, 0)).reshape(kh * kw * in_ch, out_ch)
    Kp = _round_up(kh * kw * in_ch, 128)
    Np = _round_up(out_ch, 128)
    return jnp.pad(w_mat, ((0, Kp - w_mat.shape[0]),
                           (0, Np - w_mat.shape[1]))).astype(jnp.bfloat16)


def _prep_deconv_weight(weight):
    """PyTorch ConvTranspose2d weight (in_ch, out_ch, kh, kw) -> equivalent
    flipped forward-conv matrix (Kp, Np) bf16."""
    w_conv = jnp.transpose(weight, (1, 0, 2, 3))[:, :, ::-1, ::-1]
    return _prep_conv_weight(w_conv)


def _prep_bias(bias):
    n = bias.shape[0]
    Np = _round_up(n, 128)
    return jnp.pad(bias, (0, Np - n)).reshape(1, Np).astype(jnp.float32)


def prepare_params(params):
    prep = {}
    for name in ("c1", "c2", "c3"):
        prep[name + "_w"] = _prep_conv_weight(params[name + "_w"])
        prep[name + "_b"] = _prep_bias(params[name + "_b"])
    for name in ("d1", "d2", "d3"):
        prep[name + "_w"] = _prep_deconv_weight(params[name + "_w"])
        prep[name + "_b"] = _prep_bias(params[name + "_b"])
    return prep


# ----------------------------------------------------------------------------
# Deterministic parameter init (PyTorch-like uniform bounds, fixed PRNG)
# ----------------------------------------------------------------------------
def init_params(key):
    keys = jax.random.split(key, 12)
    params = {}
    # Encoder convs: weight (out_ch, in_ch, kh, kw); fan_in = in_ch*kh*kw.
    specs_conv = [("c1", (16, 1, 3, 3)), ("c2", (32, 16, 3, 3)),
                  ("c3", (64, 32, 7, 7))]
    # Decoder deconvs: weight (in_ch, out_ch, kh, kw);
    # PyTorch uses fan_in = weight.size(1)*kh*kw = out_ch*kh*kw.
    specs_deconv = [("d1", (64, 32, 7, 7)), ("d2", (32, 16, 3, 3)),
                    ("d3", (16, 1, 3, 3))]

    k = 0
    for name, shp in specs_conv:
        fan_in = shp[1] * shp[2] * shp[3]
        bound = 1.0 / math.sqrt(fan_in)
        params[name + "_w"] = jax.random.uniform(keys[k], shp, jnp.float32,
                                                 -bound, bound)
        params[name + "_b"] = jax.random.uniform(keys[k + 1], (shp[0],),
                                                 jnp.float32, -bound, bound)
        k += 2
    for name, shp in specs_deconv:
        fan_in = shp[1] * shp[2] * shp[3]
        bound = 1.0 / math.sqrt(fan_in)
        params[name + "_w"] = jax.random.uniform(keys[k], shp, jnp.float32,
                                                 -bound, bound)
        params[name + "_b"] = jax.random.uniform(keys[k + 1], (shp[1],),
                                                 jnp.float32, -bound, bound)
        k += 2
    return params


# ----------------------------------------------------------------------------
# CAE forward (jitted end-to-end)
# ----------------------------------------------------------------------------
def cae_forward(prep, x_nchw):
    x = jnp.transpose(x_nchw, (0, 2, 3, 1))  # -> NHWC
    # Encoder
    x = conv2d(x, prep["c1_w"], prep["c1_b"], 3, 3, 16,
               stride=2, padding=1, act="relu")
    x = conv2d(x, prep["c2_w"], prep["c2_b"], 3, 3, 32,
               stride=2, padding=1, act="relu")
    x = conv2d(x, prep["c3_w"], prep["c3_b"], 7, 7, 64,
               stride=1, padding=0, act="none")
    # Decoder
    x = conv_transpose2d(x, prep["d1_w"], prep["d1_b"], 7, 7, 32,
                         stride=1, padding=0, output_padding=0, act="relu")
    x = conv_transpose2d(x, prep["d2_w"], prep["d2_b"], 3, 3, 16,
                         stride=2, padding=1, output_padding=1, act="relu")
    x = conv_transpose2d(x, prep["d3_w"], prep["d3_b"], 3, 3, 1,
                         stride=2, padding=1, output_padding=1, act="sigmoid")
    return jnp.transpose(x, (0, 3, 1, 2))  # -> NCHW


cae_forward_jit = jax.jit(cae_forward)


if __name__ == "__main__":
    key = jax.random.PRNGKey(0)
    k_param, k_input = jax.random.split(key)
    params = init_params(k_param)
    prep = jax.tree_util.tree_map(jax.block_until_ready, prepare_params(params))

    # MNIST-like input: batch=2, 1 channel, 28x28 (the 7x7 encoder conv needs
    # a 7x7 feature map after two stride-2 convs, and the decoder mirrors it).
    x = jax.random.uniform(k_input, (2, 1, 28, 28), jnp.float32)

    out = cae_forward_jit(prep, x)
    out = jax.block_until_ready(out)

    assert out.shape == (2, 1, 28, 28), out.shape
    assert bool(jnp.all(jnp.isfinite(out)))
    assert bool(jnp.all((out >= 0.0) & (out <= 1.0)))  # sigmoid output range
    print("KERNEL_OK")
</pallas_src>

<mosaic_0001>
module attributes {stable_mosaic.version = 11 : i64} {
  func.func @_matmul_bias_act_kernel(%arg0: i32, %arg1: i32, %arg2: memref<256x128xbf16, #tpu.memory_space<vmem>>, %arg3: memref<128x128xbf16, #tpu.memory_space<vmem>>, %arg4: memref<1x128xf32, #tpu.memory_space<vmem>>, %arg5: memref<256x128xf32, #tpu.memory_space<vmem>>) attributes {dimension_semantics = [#tpu.dimension_semantics<parallel>, #tpu.dimension_semantics<parallel>], iteration_bounds = array<i64: 2, 1>, scalar_prefetch = 0 : i64, scratch_operands = 0 : i64, tpu.core_type = #tpu.core_type<tc>, window_params = [{transform_indices = @transform_0, window_bounds = array<i64: 256, 128>}, {transform_indices = @transform_1, window_bounds = array<i64: 128, 128>}, {transform_indices = @transform_2, window_bounds = array<i64: 1, 128>}, {transform_indices = @transform_3, window_bounds = array<i64: 256, 128>}]} {
    %c0 = arith.constant 0 : index
    %c0_0 = arith.constant 0 : index
    %0 = vector.load %arg2[%c0, %c0_0] : memref<256x128xbf16, #tpu.memory_space<vmem>>, vector<256x128xbf16>
    %c0_1 = arith.constant 0 : index
    %c0_2 = arith.constant 0 : index
    %1 = vector.load %arg3[%c0_1, %c0_2] : memref<128x128xbf16, #tpu.memory_space<vmem>>, vector<128x128xbf16>
    %cst = arith.constant dense<0.000000e+00> : vector<256x128xf32>
    %2 = tpu.matmul %0, %1, %cst {dimension_numbers = #tpu.dot_dimension_numbers<[1], [0], [0], [1], [0, 0, 1, 1], [], []>} : vector<256x128xbf16>, vector<128x128xbf16>, vector<256x128xf32> -> vector<256x128xf32>
    %c0_3 = arith.constant 0 : index
    %c0_4 = arith.constant 0 : index
    %3 = vector.load %arg4[%c0_3, %c0_4] : memref<1x128xf32, #tpu.memory_space<vmem>>, vector<1x128xf32>
    %4 = vector.broadcast %3 : vector<1x128xf32> to vector<256x128xf32>
    %5 = arith.addf %2, %4 : vector<256x128xf32>
    %cst_5 = arith.constant 0.000000e+00 : f32
    %6 = vector.broadcast %cst_5 : f32 to vector<256x128xf32>
    %7 = arith.maximumf %5, %6 : vector<256x128xf32>
    %c0_6 = arith.constant 0 : index
    %c0_7 = arith.constant 0 : index
    %8 = vector.load %arg5[%c0_6, %c0_7] : memref<256x128xf32, #tpu.memory_space<vmem>>, vector<256x128xf32>
    tpu.vector_store %arg5[%c0_6, %c0_7], %7 {strides = array<i32>} : memref<256x128xf32, #tpu.memory_space<vmem>>, vector<256x128xf32>,
    return
  }
  func.func @transform_0(%arg0: i32, %arg1: i32) -> (i32, i32) {
    %c0_i32 = arith.constant 0 : i32
    %c0_i32_0 = arith.constant 0 : i32
    return %arg0, %c0_i32 : i32, i32
  }
  func.func @transform_1(%arg0: i32, %arg1: i32) -> (i32, i32) {
    %c0_i32 = arith.constant 0 : i32
    %c0_i32_0 = arith.constant 0 : i32
    return %c0_i32, %arg1 : i32, i32
  }
  func.func @transform_2(%arg0: i32, %arg1: i32) -> (i32, i32) {
    %c0_i32 = arith.constant 0 : i32
    %c0_i32_0 = arith.constant 0 : i32
    return %c0_i32, %arg1 : i32, i32
  }
  func.func @transform_3(%arg0: i32, %arg1: i32) -> (i32, i32) {
    %c0_i32 = arith.constant 0 : i32
    return %arg0, %arg1 : i32, i32
  }
}

module attributes {stable_mosaic.version = 11 : i64} {
  func.func @_matmul_bias_act_kernel(%arg0: i32, %arg1: i32, %arg2: memref<104x256xbf16, #tpu.memory_space<vmem>>, %arg3: memref<256x128xbf16, #tpu.memory_space<vmem>>, %arg4: memref<1x128xf32, #tpu.memory_space<vmem>>, %arg5: memref<104x128xf32, #tpu.memory_space<vmem>>) attributes {dimension_semantics = [#tpu.dimension_semantics<parallel>, #tpu.dimension_semantics<parallel>], iteration_bounds = array<i64: 1, 1>, scalar_prefetch = 0 : i64, scratch_operands = 0 : i64, tpu.core_type = #tpu.core_type<tc>, window_params = [{transform_indices = @transform_0, window_bounds = array<i64: 104, 256>}, {transform_indices = @transform_1, window_bounds = array<i64: 256, 128>}, {transform_indices = @transform_2, window_bounds = array<i64: 1, 128>}, {transform_indices = @transform_3, window_bounds = array<i64: 104, 128>}]} {
    %c0 = arith.constant 0 : index
    %c0_0 = arith.constant 0 : index
    %0 = vector.load %arg2[%c0, %c0_0] : memref<104x256xbf16, #tpu.memory_space<vmem>>, vector<104x256xbf16>
    %c0_1 = arith.constant 0 : index
    %c0_2 = arith.constant 0 : index
    %1 = vector.load %arg3[%c0_1, %c0_2] : memref<256x128xbf16, #tpu.memory_space<vmem>>, vector<256x128xbf16>
    %cst = arith.constant dense<0.000000e+00> : vector<104x128xf32>
    %2 = tpu.matmul %0, %1, %cst {dimension_numbers = #tpu.dot_dimension_numbers<[1], [0], [0], [1], [0, 0, 1, 1], [], []>} : vector<104x256xbf16>, vector<256x128xbf16>, vector<104x128xf32> -> vector<104x128xf32>
    %c0_3 = arith.constant 0 : index
    %c0_4 = arith.constant 0 : index
    %3 = vector.load %arg4[%c0_3, %c0_4] : memref<1x128xf32, #tpu.memory_space<vmem>>, vector<1x128xf32>
    %4 = vector.broadcast %3 : vector<1x128xf32> to vector<104x128xf32>
    %5 = arith.addf %2, %4 : vector<104x128xf32>
    %cst_5 = arith.constant 0.000000e+00 : f32
    %6 = vector.broadcast %cst_5 : f32 to vector<104x128xf32>
    %7 = arith.maximumf %5, %6 : vector<104x128xf32>
    %c0_6 = arith.constant 0 : index
    %c0_7 = arith.constant 0 : index
    %8 = vector.load %arg5[%c0_6, %c0_7] : memref<104x128xf32, #tpu.memory_space<vmem>>, vector<104x128xf32>
    tpu.vector_store %arg5[%c0_6, %c0_7], %7 {strides = array<i32>} : memref<104x128xf32, #tpu.memory_space<vmem>>, vector<104x128xf32>,
    return
  }
  func.func @transform_0(%arg0: i32, %arg1: i32) -> (i32, i32) {
    %c0_i32 = arith.constant 0 : i32
    %c0_i32_0 = arith.constant 0 : i32
    return %arg0, %c0_i32 : i32, i32
  }
  func.func @transform_1(%arg0: i32, %arg1: i32) -> (i32, i32) {
    %c0_i32 = arith.constant 0 : i32
    %c0_i32_0 = arith.constant 0 : i32
    return %c0_i32, %arg1 : i32, i32
  }
  func.func @transform_2(%arg0: i32, %arg1: i32) -> (i32, i32) {
    %c0_i32 = arith.constant 0 : i32
    %c0_i32_0 = arith.constant 0 : i32
    return %c0_i32, %arg1 : i32, i32
  }
  func.func @transform_3(%arg0: i32, %arg1: i32) -> (i32, i32) {
    %c0_i32 = arith.constant 0 : i32
    return %arg0, %arg1 : i32, i32
  }
}

module attributes {stable_mosaic.version = 11 : i64} {
  func.func @_matmul_bias_act_kernel(%arg0: i32, %arg1: i32, %arg2: memref<8x1664xbf16, #tpu.memory_space<vmem>>, %arg3: memref<1664x128xbf16, #tpu.memory_space<vmem>>, %arg4: memref<1x128xf32, #tpu.memory_space<vmem>>, %arg5: memref<8x128xf32, #tpu.memory_space<vmem>>) attributes {dimension_semantics = [#tpu.dimension_semantics<parallel>, #tpu.dimension_semantics<parallel>], iteration_bounds = array<i64: 1, 1>, scalar_prefetch = 0 : i64, scratch_operands = 0 : i64, tpu.core_type = #tpu.core_type<tc>, window_params = [{transform_indices = @transform_0, window_bounds = array<i64: 8, 1664>}, {transform_indices = @transform_1, window_bounds = array<i64: 1664, 128>}, {transform_indices = @transform_2, window_bounds = array<i64: 1, 128>}, {transform_indices = @transform_3, window_bounds = array<i64: 8, 128>}]} {
    %c0 = arith.constant 0 : index
    %c0_0 = arith.constant 0 : index
    %0 = vector.load %arg2[%c0, %c0_0] : memref<8x1664xbf16, #tpu.memory_space<vmem>>, vector<8x1664xbf16>
    %c0_1 = arith.constant 0 : index
    %c0_2 = arith.constant 0 : index
    %1 = vector.load %arg3[%c0_1, %c0_2] : memref<1664x128xbf16, #tpu.memory_space<vmem>>, vector<1664x128xbf16>
    %cst = arith.constant dense<0.000000e+00> : vector<8x128xf32>
    %2 = tpu.matmul %0, %1, %cst {dimension_numbers = #tpu.dot_dimension_numbers<[1], [0], [0], [1], [0, 0, 1, 1], [], []>} : vector<8x1664xbf16>, vector<1664x128xbf16>, vector<8x128xf32> -> vector<8x128xf32>
    %c0_3 = arith.constant 0 : index
    %c0_4 = arith.constant 0 : index
    %3 = vector.load %arg4[%c0_3, %c0_4] : memref<1x128xf32, #tpu.memory_space<vmem>>, vector<1x128xf32>
    %4 = vector.broadcast %3 : vector<1x128xf32> to vector<8x128xf32>
    %5 = arith.addf %2, %4 : vector<8x128xf32>
    %c0_5 = arith.constant 0 : index
    %c0_6 = arith.constant 0 : index
    %6 = vector.load %arg5[%c0_5, %c0_6] : memref<8x128xf32, #tpu.memory_space<vmem>>, vector<8x128xf32>
    tpu.vector_store %arg5[%c0_5, %c0_6], %5 {strides = array<i32>} : memref<8x128xf32, #tpu.memory_space<vmem>>, vector<8x128xf32>,
    return
  }
  func.func @transform_0(%arg0: i32, %arg1: i32) -> (i32, i32) {
    %c0_i32 = arith.constant 0 : i32
    %c0_i32_0 = arith.constant 0 : i32
    return %arg0, %c0_i32 : i32, i32
  }
  func.func @transform_1(%arg0: i32, %arg1: i32) -> (i32, i32) {
    %c0_i32 = arith.constant 0 : i32
    %c0_i32_0 = arith.constant 0 : i32
    return %c0_i32, %arg1 : i32, i32
  }
  func.func @transform_2(%arg0: i32, %arg1: i32) -> (i32, i32) {
    %c0_i32 = arith.constant 0 : i32
    %c0_i32_0 = arith.constant 0 : i32
    return %c0_i32, %arg1 : i32, i32
  }
  func.func @transform_3(%arg0: i32, %arg1: i32) -> (i32, i32) {
    %c0_i32 = arith.constant 0 : i32
    return %arg0, %arg1 : i32, i32
  }
}

module attributes {stable_mosaic.version = 11 : i64} {
  func.func @_matmul_bias_act_kernel(%arg0: i32, %arg1: i32, %arg2: memref<104x3200xbf16, #tpu.memory_space<vmem>>, %arg3: memref<3200x128xbf16, #tpu.memory_space<vmem>>, %arg4: memref<1x128xf32, #tpu.memory_space<vmem>>, %arg5: memref<104x128xf32, #tpu.memory_space<vmem>>) attributes {dimension_semantics = [#tpu.dimension_semantics<parallel>, #tpu.dimension_semantics<parallel>], iteration_bounds = array<i64: 1, 1>, scalar_prefetch = 0 : i64, scratch_operands = 0 : i64, tpu.core_type = #tpu.core_type<tc>, window_params = [{transform_indices = @transform_0, window_bounds = array<i64: 104, 3200>}, {transform_indices = @transform_1, window_bounds = array<i64: 3200, 128>}, {transform_indices = @transform_2, window_bounds = array<i64: 1, 128>}, {transform_indices = @transform_3, window_bounds = array<i64: 104, 128>}]} {
    %c0 = arith.constant 0 : index
    %c0_0 = arith.constant 0 : index
    %0 = vector.load %arg2[%c0, %c0_0] : memref<104x3200xbf16, #tpu.memory_space<vmem>>, vector<104x3200xbf16>
    %c0_1 = arith.constant 0 : index
    %c0_2 = arith.constant 0 : index
    %1 = vector.load %arg3[%c0_1, %c0_2] : memref<3200x128xbf16, #tpu.memory_space<vmem>>, vector<3200x128xbf16>
    %cst = arith.constant dense<0.000000e+00> : vector<104x128xf32>
    %2 = tpu.matmul %0, %1, %cst {dimension_numbers = #tpu.dot_dimension_numbers<[1], [0], [0], [1], [0, 0, 1, 1], [], []>} : vector<104x3200xbf16>, vector<3200x128xbf16>, vector<104x128xf32> -> vector<104x128xf32>
    %c0_3 = arith.constant 0 : index
    %c0_4 = arith.constant 0 : index
    %3 = vector.load %arg4[%c0_3, %c0_4] : memref<1x128xf32, #tpu.memory_space<vmem>>, vector<1x128xf32>
    %4 = vector.broadcast %3 : vector<1x128xf32> to vector<104x128xf32>
    %5 = arith.addf %2, %4 : vector<104x128xf32>
    %cst_5 = arith.constant 0.000000e+00 : f32
    %6 = vector.broadcast %cst_5 : f32 to vector<104x128xf32>
    %7 = arith.maximumf %5, %6 : vector<104x128xf32>
    %c0_6 = arith.constant 0 : index
    %c0_7 = arith.constant 0 : index
    %8 = vector.load %arg5[%c0_6, %c0_7] : memref<104x128xf32, #tpu.memory_space<vmem>>, vector<104x128xf32>
    tpu.vector_store %arg5[%c0_6, %c0_7], %7 {strides = array<i32>} : memref<104x128xf32, #tpu.memory_space<vmem>>, vector<104x128xf32>,
    return
  }
  func.func @transform_0(%arg0: i32, %arg1: i32) -> (i32, i32) {
    %c0_i32 = arith.constant 0 : i32
    %c0_i32_0 = arith.constant 0 : i32
    return %arg0, %c0_i32 : i32, i32
  }
  func.func @transform_1(%arg0: i32, %arg1: i32) -> (i32, i32) {
    %c0_i32 = arith.constant 0 : i32
    %c0_i32_0 = arith.constant 0 : i32
    return %c0_i32, %arg1 : i32, i32
  }
  func.func @transform_2(%arg0: i32, %arg1: i32) -> (i32, i32) {
    %c0_i32 = arith.constant 0 : i32
    %c0_i32_0 = arith.constant 0 : i32
    return %c0_i32, %arg1 : i32, i32
  }
  func.func @transform_3(%arg0: i32, %arg1: i32) -> (i32, i32) {
    %c0_i32 = arith.constant 0 : i32
    return %arg0, %arg1 : i32, i32
  }
}

module attributes {stable_mosaic.version = 11 : i64} {
  func.func @_matmul_bias_act_kernel(%arg0: i32, %arg1: i32, %arg2: memref<256x384xbf16, #tpu.memory_space<vmem>>, %arg3: memref<384x128xbf16, #tpu.memory_space<vmem>>, %arg4: memref<1x128xf32, #tpu.memory_space<vmem>>, %arg5: memref<256x128xf32, #tpu.memory_space<vmem>>) attributes {dimension_semantics = [#tpu.dimension_semantics<parallel>, #tpu.dimension_semantics<parallel>], iteration_bounds = array<i64: 2, 1>, scalar_prefetch = 0 : i64, scratch_operands = 0 : i64, tpu.core_type = #tpu.core_type<tc>, window_params = [{transform_indices = @transform_0, window_bounds = array<i64: 256, 384>}, {transform_indices = @transform_1, window_bounds = array<i64: 384, 128>}, {transform_indices = @transform_2, window_bounds = array<i64: 1, 128>}, {transform_indices = @transform_3, window_bounds = array<i64: 256, 128>}]} {
    %c0 = arith.constant 0 : index
    %c0_0 = arith.constant 0 : index
    %0 = vector.load %arg2[%c0, %c0_0] : memref<256x384xbf16, #tpu.memory_space<vmem>>, vector<256x384xbf16>
    %c0_1 = arith.constant 0 : index
    %c0_2 = arith.constant 0 : index
    %1 = vector.load %arg3[%c0_1, %c0_2] : memref<384x128xbf16, #tpu.memory_space<vmem>>, vector<384x128xbf16>
    %cst = arith.constant dense<0.000000e+00> : vector<256x128xf32>
    %2 = tpu.matmul %0, %1, %cst {dimension_numbers = #tpu.dot_dimension_numbers<[1], [0], [0], [1], [0, 0, 1, 1], [], []>} : vector<256x384xbf16>, vector<384x128xbf16>, vector<256x128xf32> -> vector<256x128xf32>
    %c0_3 = arith.constant 0 : index
    %c0_4 = arith.constant 0 : index
    %3 = vector.load %arg4[%c0_3, %c0_4] : memref<1x128xf32, #tpu.memory_space<vmem>>, vector<1x128xf32>
    %4 = vector.broadcast %3 : vector<1x128xf32> to vector<256x128xf32>
    %5 = arith.addf %2, %4 : vector<256x128xf32>
    %cst_5 = arith.constant 0.000000e+00 : f32
    %6 = vector.broadcast %cst_5 : f32 to vector<256x128xf32>
    %7 = arith.maximumf %5, %6 : vector<256x128xf32>
    %c0_6 = arith.constant 0 : index
    %c0_7 = arith.constant 0 : index
    %8 = vector.load %arg5[%c0_6, %c0_7] : memref<256x128xf32, #tpu.memory_space<vmem>>, vector<256x128xf32>
    tpu.vector_store %arg5[%c0_6, %c0_7], %7 {strides = array<i32>} : memref<256x128xf32, #tpu.memory_space<vmem>>, vector<256x128xf32>,
    return
  }
  func.func @transform_0(%arg0: i32, %arg1: i32) -> (i32, i32) {
    %c0_i32 = arith.constant 0 : i32
    %c0_i32_0 = arith.constant 0 : i32
    return %arg0, %c0_i32 : i32, i32
  }
  func.func @transform_1(%arg0: i32, %arg1: i32) -> (i32, i32) {
    %c0_i32 = arith.constant 0 : i32
    %c0_i32_0 = arith.constant 0 : i32
    return %c0_i32, %arg1 : i32, i32
  }
  func.func @transform_2(%arg0: i32, %arg1: i32) -> (i32, i32) {
    %c0_i32 = arith.constant 0 : i32
    %c0_i32_0 = arith.constant 0 : i32
    return %c0_i32, %arg1 : i32, i32
  }
  func.func @transform_3(%arg0: i32, %arg1: i32) -> (i32, i32) {
    %c0_i32 = arith.constant 0 : i32
    return %arg0, %arg1 : i32, i32
  }
}

module attributes {stable_mosaic.version = 11 : i64} {
  func.func @_matmul_bias_act_kernel(%arg0: i32, %arg1: i32, %arg2: memref<256x256xbf16, #tpu.memory_space<vmem>>, %arg3: memref<256x128xbf16, #tpu.memory_space<vmem>>, %arg4: memref<1x128xf32, #tpu.memory_space<vmem>>, %arg5: memref<256x128xf32, #tpu.memory_space<vmem>>) attributes {dimension_semantics = [#tpu.dimension_semantics<parallel>, #tpu.dimension_semantics<parallel>], iteration_bounds = array<i64: 7, 1>, scalar_prefetch = 0 : i64, scratch_operands = 0 : i64, tpu.core_type = #tpu.core_type<tc>, window_params = [{transform_indices = @transform_0, window_bounds = array<i64: 256, 256>}, {transform_indices = @transform_1, window_bounds = array<i64: 256, 128>}, {transform_indices = @transform_2, window_bounds = array<i64: 1, 128>}, {transform_indices = @transform_3, window_bounds = array<i64: 256, 128>}]} {
    %c0 = arith.constant 0 : index
    %c0_0 = arith.constant 0 : index
    %0 = vector.load %arg2[%c0, %c0_0] : memref<256x256xbf16, #tpu.memory_space<vmem>>, vector<256x256xbf16>
    %c0_1 = arith.constant 0 : index
    %c0_2 = arith.constant 0 : index
    %1 = vector.load %arg3[%c0_1, %c0_2] : memref<256x128xbf16, #tpu.memory_space<vmem>>, vector<256x128xbf16>
    %cst = arith.constant dense<0.000000e+00> : vector<256x128xf32>
    %2 = tpu.matmul %0, %1, %cst {dimension_numbers = #tpu.dot_dimension_numbers<[1], [0], [0], [1], [0, 0, 1, 1], [], []>} : vector<256x256xbf16>, vector<256x128xbf16>, vector<256x128xf32> -> vector<256x128xf32>
    %c0_3 = arith.constant 0 : index
    %c0_4 = arith.constant 0 : index
    %3 = vector.load %arg4[%c0_3, %c0_4] : memref<1x128xf32, #tpu.memory_space<vmem>>, vector<1x128xf32>
    %4 = vector.broadcast %3 : vector<1x128xf32> to vector<256x128xf32>
    %5 = arith.addf %2, %4 : vector<256x128xf32>
    %6 = arith.negf %5 : vector<256x128xf32>
    %7 = math.exp %6 : vector<256x128xf32>
    %cst_5 = arith.constant 1.000000e+00 : f32
    %8 = vector.broadcast %cst_5 : f32 to vector<256x128xf32>
    %9 = arith.addf %8, %7 : vector<256x128xf32>
    %10 = arith.divf %8, %9 : vector<256x128xf32>
    %c0_6 = arith.constant 0 : index
    %c0_7 = arith.constant 0 : index
    %11 = vector.load %arg5[%c0_6, %c0_7] : memref<256x128xf32, #tpu.memory_space<vmem>>, vector<256x128xf32>
    tpu.vector_store %arg5[%c0_6, %c0_7], %10 {strides = array<i32>} : memref<256x128xf32, #tpu.memory_space<vmem>>, vector<256x128xf32>,
    return
  }
  func.func @transform_0(%arg0: i32, %arg1: i32) -> (i32, i32) {
    %c0_i32 = arith.constant 0 : i32
    %c0_i32_0 = arith.constant 0 : i32
    return %arg0, %c0_i32 : i32, i32
  }
  func.func @transform_1(%arg0: i32, %arg1: i32) -> (i32, i32) {
    %c0_i32 = arith.constant 0 : i32
    %c0_i32_0 = arith.constant 0 : i32
    return %c0_i32, %arg1 : i32, i32
  }
  func.func @transform_2(%arg0: i32, %arg1: i32) -> (i32, i32) {
    %c0_i32 = arith.constant 0 : i32
    %c0_i32_0 = arith.constant 0 : i32
    return %c0_i32, %arg1 : i32, i32
  }
  func.func @transform_3(%arg0: i32, %arg1: i32) -> (i32, i32) {
    %c0_i32 = arith.constant 0 : i32
    return %arg0, %arg1 : i32, i32
  }
}

</mosaic_0001>

<llo_original>
// kernel: cae_forward.6
$region0: #{cae_forward.6}
  #allocation0 [shape = 'u32[]', space=smem, size = 0x4, offset = 0x4, fixed_abs, tag = 'smem constant byte address 0x4 - core index']
  #allocation1 [shape = 'u32[144,128]{1,0:T(1,128)}', space=vmem, size = 0x12000, scoped, tag = 'internal scratch']
  %s0 = inlined_call_operand.vmem [shape: bf16[512,128], index: 0, kind: input, shape index: {}]
  %s1 = inlined_call_operand.hbm [shape: bf16[128,128], index: 1, kind: input, shape index: {}]
  %s2 = inlined_call_operand.hbm [shape: f32[1,128], index: 2, kind: input, shape index: {}]
  %s3 = inlined_call_operand.vmem [shape: f32[512,128], index: 3, kind: output, shape index: {}]
  %s4 = sld [smem:[#allocation0]]
  $region53: #{cae_forward.6} parent=0
    _
  %s6 = ssub.s32 1, %s4
  %s7 = scalar_select 0, %s6, %s4
  $region1: #{cae_forward.6} parent=0
    #allocation2 [shape = 'u8[32768]{0}', space=vmem, size = 0x8000, scoped, tag = 'input window, operand 1, single buffered']
    #allocation3 [shape = 's32[2]{0}', space=sflag, size = 0x8, scoped, tag = 'scoped memory for cae_forward.6']
    #allocation4 [shape = 'u8[512]{0}', space=vmem, size = 0x400, scoped, tag = 'input window, operand 2, single buffered']
    #allocation5 [shape = 's32[1]{0}', space=sflag, size = 0x4, scoped, tag = 'scoped memory for cae_forward.6']
    %8 = vsyncpa [#allocation3], 0
    %9 = vsyncpa [#allocation5], 0
    loop: start=0, step=1, limit=4
    $region2: #{cae_forward.6} parent=1 // loop_pre_header
      _
    $region3: #{cae_forward.6} parent=1 // loop_header
      %s11 = sphi 0, %s15
      %p12 = scmp.ge.s32.totalorder %s11, 4
      %s18 = sphi 0, %s30
      %s19 = sphi 0, %s26
      %s20 = sphi 0, %s18
      %s21 = sphi 0, %s19
      %s22 = sphi 0, %s20
      %s23 = sphi 0, %s21
      %s33 = sphi 0, %s35
      %s36 = sphi 0, %s33
      %s37 = sphi 0, %s36
      %s53 = sphi 0, %s37
      %s59 = sphi 0, %s61
      %s62 = sphi 0, %s59
      %s63 = sphi 0, %s62
      %s79 = sphi 0, %s63
      %s85 = sphi 0, %s87
      %s88 = sphi 0, %s85
      %s89 = sphi 0, %s88
      %s105 = sphi 0, %s89
      %s113 = sphi 0, %s115
      %s116 = sphi 0, %s113
      %s117 = sphi 0, %s116
      %s133 = sphi 0, %s117
    $region4: #{cae_forward.6} parent=1 // loop_header_branch
      %14 = sbr.rel (%p12) target = $region8
    $region5: #{cae_forward.6} parent=1 // loop_body
      %s16 = ssub.s32 %s11, 1
      %s17 = ssub.s32 %s11, 2
      %s24 = sadd.s32 1, %s19
      %p25 = scmp.ge.s32.totalorder %s24, 1
      %s26 = scalar_select %p25, 0, %s24
      %s27 = sadd.s32 1, %s18
      %s28 = scalar_select %p25, %s27, %s18
      %p29 = scmp.ge.s32.totalorder %s28, 2
      %s30 = scalar_select %p29, 0, %s28
      %s31 = ssub.s32 %s18, %s30
      %p32 = scmp.eq.s32.totalorder %s31, 0
      %s34 = sadd.s32 %s33, 1
      %s35 = scalar_select %p32, %s33, %s34
      %p38 = pneg %p32
      %p39 = scmp.eq.s32.totalorder %s11, 1
      %p40 = por %p38, %p39
      %p41 = scmp.ne.s32.totalorder %s33, %s36
      %p42 = scmp.eq.s32.totalorder %s11, 0
      %p43 = por %p41, %p42
      %p44 = scmp.ne.s32.totalorder %s33, %s36
      %p45 = scmp.eq.s32.totalorder %s16, 1
      %p46 = por %p44, %p45
      %p47 = scmp.ne.s32.totalorder %s36, %s37
      %p48 = scmp.eq.s32.totalorder %s16, 0
      %p49 = por %p47, %p48
      %p50 = scmp.ne.s32.totalorder %s36, %s37
      %p51 = scmp.eq.s32.totalorder %s17, 1
      %p52 = por %p50, %p51
      %p54 = scmp.ne.s32.totalorder %s37, %s53
      %p55 = scmp.eq.s32.totalorder %s17, 0
      %p56 = por %p54, %p55
      %s57 = ssub.s32 %s19, %s26
      %p58 = scmp.eq.s32.totalorder %s57, 0
      %s60 = sadd.s32 %s59, 1
      %s61 = scalar_select %p58, %s59, %s60
      %p64 = pneg %p58
      %p65 = scmp.eq.s32.totalorder %s11, 1
      %p66 = por %p64, %p65
      %p67 = scmp.ne.s32.totalorder %s59, %s62
      %p68 = scmp.eq.s32.totalorder %s11, 0
      %p69 = por %p67, %p68
      %p70 = scmp.ne.s32.totalorder %s59, %s62
      %p71 = scmp.eq.s32.totalorder %s16, 1
      %p72 = por %p70, %p71
      %p73 = scmp.ne.s32.totalorder %s62, %s63
      %p74 = scmp.eq.s32.totalorder %s16, 0
      %p75 = por %p73, %p74
      %p76 = scmp.ne.s32.totalorder %s62, %s63
      %p77 = scmp.eq.s32.totalorder %s17, 1
      %p78 = por %p76, %p77
      %p80 = scmp.ne.s32.totalorder %s63, %s79
      %p81 = scmp.eq.s32.totalorder %s17, 0
      %p82 = por %p80, %p81
      %s83 = ssub.s32 %s19, %s26
      %p84 = scmp.eq.s32.totalorder %s83, 0
      %s86 = sadd.s32 %s85, 1
      %s87 = scalar_select %p84, %s85, %s86
      %p90 = pneg %p84
      %p91 = scmp.eq.s32.totalorder %s11, 1
      %p92 = por %p90, %p91
      %p93 = scmp.ne.s32.totalorder %s85, %s88
      %p94 = scmp.eq.s32.totalorder %s11, 0
      %p95 = por %p93, %p94
      %p96 = scmp.ne.s32.totalorder %s85, %s88
      %p97 = scmp.eq.s32.totalorder %s16, 1
      %p98 = por %p96, %p97
      %p99 = scmp.ne.s32.totalorder %s88, %s89
      %p100 = scmp.eq.s32.totalorder %s16, 0
      %p101 = por %p99, %p100
      %p102 = scmp.ne.s32.totalorder %s88, %s89
      %p103 = scmp.eq.s32.totalorder %s17, 1
      %p104 = por %p102, %p103
      %p106 = scmp.ne.s32.totalorder %s89, %s105
      %p107 = scmp.eq.s32.totalorder %s17, 0
      %p108 = por %p106, %p107
      %s109 = ssub.s32 %s18, %s30
      %s110 = ssub.s32 %s19, %s26
      %s111 = sor.u32 %s109, %s110
      %p112 = scmp.eq.s32.totalorder %s111, 0
      %s114 = sadd.s32 %s113, 1
      %s115 = scalar_select %p112, %s113, %s114
      %p118 = pneg %p112
      %p119 = scmp.eq.s32.totalorder %s11, 1
      %p120 = por %p118, %p119
      %p121 = scmp.ne.s32.totalorder %s113, %s116
      %p122 = scmp.eq.s32.totalorder %s11, 0
      %p123 = por %p121, %p122
      %p124 = scmp.ne.s32.totalorder %s113, %s116
      %p125 = scmp.eq.s32.totalorder %s16, 1
      %p126 = por %p124, %p125
      %p127 = scmp.ne.s32.totalorder %s116, %s117
      %p128 = scmp.eq.s32.totalorder %s16, 0
      %p129 = por %p127, %p128
      %p130 = scmp.ne.s32.totalorder %s116, %s117
      %p131 = scmp.eq.s32.totalorder %s17, 1
      %p132 = por %p130, %p131
      %p134 = scmp.ne.s32.totalorder %s117, %s133
      %p135 = scmp.eq.s32.totalorder %s17, 0
      %p136 = por %p134, %p135
      %p137 = scmp.le.s32.totalorder 1, %s11
      %p138 = scmp.lt.s32.totalorder %s11, 3
      %p139 = pnand %p137, %p138
      %p140 = pneg %p139
      // Predicated region
      $region9: #{cae_forward.6} parent=5 // pred_check
        _
      $region10: #{cae_forward.6} parent=5 // pred_check_branch
        %142 = sbr.rel (%p139) target = $region12
      $region11: #{cae_forward.6} parent=5 // pred_region
        %s143 = ssub.s32 %s11, 1
        // Predicated region
        $region13: #{cae_forward.6} parent=11 // pred_check
          %p144 = pneg %p75
        $region14: #{cae_forward.6} parent=11 // pred_check_branch
          %146 = sbr.rel (%p144) target = $region16
        $region15: #{cae_forward.6} parent=11 // pred_region
          %s148 = ssub.s32 1024, 1024
          %149 = vsyncadd [#allocation3], %s148
          %s150 = smul.addr %s21, 64
          %s151 = scalar_lea.hbm %s1, %s150
          %s152 = sshll.u32 [#allocation2], 4
          %s153 = int_to_ptr.vmem [resolvable:$true] %s152
          %158 = dma.hbm_to_vmem [thread:$0]  %s151, 1024, %s153, [#allocation3], 64, 64, 4
        $region16: #{cae_forward.6} parent=11 // pred_fallthru
          _
        // Predicated region
        $region17: #{cae_forward.6} parent=11 // pred_check
          %p159 = pneg %p101
        $region18: #{cae_forward.6} parent=11 // pred_check_branch
          %161 = sbr.rel (%p159) target = $region20
        $region19: #{cae_forward.6} parent=11 // pred_region
          %s163 = ssub.s32 16, 16
          %164 = vsyncadd [#allocation5], %s163
          %s165 = smul.addr %s21, 16
          %s166 = scalar_lea.hbm %s2, %s165
          %s168 = sshll.u32 [#allocation4], 4
          %s169 = int_to_ptr.vmem [resolvable:$true] %s168
          %171 = dma.hbm_to_vmem [thread:$0]  %s166, 16, %s169, [#allocation5]
        $region20: #{cae_forward.6} parent=11 // pred_fallthru
          _
      $region12: #{cae_forward.6} parent=5 // pred_fallthru
        _
      %p172 = scmp.lt.s32.totalorder %s11, 2
      // Predicated region
      $region21: #{cae_forward.6} parent=5 // pred_check
        %p173 = pneg %p172
      $region22: #{cae_forward.6} parent=5 // pred_check_branch
        %175 = sbr.rel (%p173) target = $region24
      $region23: #{cae_forward.6} parent=5 // pred_region
        // Predicated region
        $region25: #{cae_forward.6} parent=23 // pred_check
          %p176 = pneg %p43
        $region26: #{cae_forward.6} parent=23 // pred_check_branch
          %178 = sbr.rel (%p176) target = $region28
        $region27: #{cae_forward.6} parent=23 // pred_region
          %s179 = smul.u32 32, %s18
          %p180 = scmp.lt.s32.totalorder %s179, 63
          %s181 = scalar_select %p180, %s179, 63
          %s182 = smul.addr %s181, 4
          %s183 = scalar_lea.vmem %s0, %s182
          %s184 = smul.u32 32, %s18
        $region28: #{cae_forward.6} parent=23 // pred_fallthru
          _
      $region24: #{cae_forward.6} parent=5 // pred_fallthru
        _
      %p185 = scmp.le.s32.totalorder 1, %s11
      %p186 = scmp.lt.s32.totalorder %s11, 3
      %p187 = pnand %p185, %p186
      %p188 = pneg %p187
      // Predicated region
      $region29: #{cae_forward.6} parent=5 // pred_check
        _
      $region30: #{cae_forward.6} parent=5 // pred_check_branch
        %190 = sbr.rel (%p187) target = $region32
      $region31: #{cae_forward.6} parent=5 // pred_region
        %s191 = ssub.s32 %s11, 1
        // Predicated region
        $region33: #{cae_forward.6} parent=31 // pred_check
          %p192 = pneg %p75
        $region34: #{cae_forward.6} parent=31 // pred_check_branch
          %194 = sbr.rel (%p192) target = $region36
        $region35: #{cae_forward.6} parent=31 // pred_region
          %195 = dma.done [#allocation3], 1024
        $region36: #{cae_forward.6} parent=31 // pred_fallthru
          _
        // Predicated region
        $region37: #{cae_forward.6} parent=31 // pred_check
          %p196 = pneg %p101
        $region38: #{cae_forward.6} parent=31 // pred_check_branch
          %198 = sbr.rel (%p196) target = $region40
        $region39: #{cae_forward.6} parent=31 // pred_region
          %199 = dma.done [#allocation5], 16
        $region40: #{cae_forward.6} parent=31 // pred_fallthru
          _
        %s200 = smul.u32 32, %s20
        %p201 = scmp.lt.s32.totalorder %s200, 63
        %s202 = scalar_select %p201, %s200, 63
        %s203 = smul.addr %s202, 4
        %s204 = scalar_lea.vmem %s0, %s203
        %p205 = pneg %p49
        %p206 = pneg %p46
        %p207 = pneg %p75
        %p208 = pneg %p72
        %p209 = pneg %p101
        %p210 = pneg %p98
        %p211 = pneg %p129
        %p212 = pneg %p126
        %s213 = smul.u32 32, %s20
        %p214 = scmp.lt.s32.totalorder %s213, 63
        %s215 = scalar_select %p214, %s213, 63
        %p216 = scmp.lt.s32.totalorder %s21, 0
        %s217 = scalar_select %p216, %s21, 0
        %s218 = sadd.s32 %s217, %s215
        %s219 = smul.addr %s218, 8
        %s220 = scalar_lea.vmem %s3, %s219
        %s221 = smul.u32 32, %s20
        %p222 = scmp.lt.s32.totalorder %s221, 63
        %s223 = scalar_select %p222, %s221, 63
        %s224 = smul.addr %s223, 4
        %s225 = scalar_lea.vmem %s0, %s224
        %s226 = smul.u32 32, %s20
        %s227 = smul.u32 32, %s20
        %p228 = scmp.lt.s32.totalorder %s227, 63
        %s229 = scalar_select %p228, %s227, 63
        %p230 = scmp.lt.s32.totalorder %s21, 0
        %s231 = scalar_select %p230, %s21, 0
        %s232 = sadd.s32 %s231, %s229
        %s233 = smul.addr %s232, 8
        %s234 = scalar_lea.vmem %s3, %s233
        %s235 = smul.u32 32, %s20
        %v237 = vld [vmem:[%s225] sm:$0xf]
        %v238 = vld [vmem:[%s225 + $0x4] sm:$0xf]
        %v239 = vld [vmem:[%s225 + $0x8] sm:$0xf]
        %v240 = vld [vmem:[%s225 + $0xc] sm:$0xf]
        %v241 = vld [vmem:[%s225 + $0x10] sm:$0xf]
        %v242 = vld [vmem:[%s225 + $0x14] sm:$0xf]
        %v243 = vld [vmem:[%s225 + $0x18] sm:$0xf]
        %v244 = vld [vmem:[%s225 + $0x1c] sm:$0xf]
        %v245 = vld [vmem:[%s225 + $0x20] sm:$0xf]
        %v246 = vld [vmem:[%s225 + $0x24] sm:$0xf]
        %v247 = vld [vmem:[%s225 + $0x28] sm:$0xf]
        %v248 = vld [vmem:[%s225 + $0x2c] sm:$0xf]
        %v249 = vld [vmem:[%s225 + $0x30] sm:$0xf]
        %v250 = vld [vmem:[%s225 + $0x34] sm:$0xf]
        %v251 = vld [vmem:[%s225 + $0x38] sm:$0xf]
        %v252 = vld [vmem:[%s225 + $0x3c] sm:$0xf]
        %v253 = vld [vmem:[%s225 + $0x40] sm:$0xf]
        %v254 = vld [vmem:[%s225 + $0x44] sm:$0xf]
        %v255 = vld [vmem:[%s225 + $0x48] sm:$0xf]
        %v256 = vld [vmem:[%s225 + $0x4c] sm:$0xf]
        %v257 = vld [vmem:[%s225 + $0x50] sm:$0xf]
        %v258 = vld [vmem:[%s225 + $0x54] sm:$0xf]
        %v259 = vld [vmem:[%s225 + $0x58] sm:$0xf]
        %v260 = vld [vmem:[%s225 + $0x5c] sm:$0xf]
        %v261 = vld [vmem:[%s225 + $0x60] sm:$0xf]
        %v262 = vld [vmem:[%s225 + $0x64] sm:$0xf]
        %v263 = vld [vmem:[%s225 + $0x68] sm:$0xf]
        %v264 = vld [vmem:[%s225 + $0x6c] sm:$0xf]
        %v265 = vld [vmem:[%s225 + $0x70] sm:$0xf]
        %v266 = vld [vmem:[%s225 + $0x74] sm:$0xf]
        %v267 = vld [vmem:[%s225 + $0x78] sm:$0xf]
        %v268 = vld [vmem:[%s225 + $0x7c] sm:$0xf]
        %v269 = vld [vmem:[#allocation2] sm:$0xf]
        %v270 = vld [vmem:[#allocation2 + $0x4] sm:$0xf]
        %v271 = vld [vmem:[#allocation2 + $0x8] sm:$0xf]
        %v272 = vld [vmem:[#allocation2 + $0xc] sm:$0xf]
        %v273 = vld [vmem:[#allocation2 + $0x10] sm:$0xf]
        %v274 = vld [vmem:[#allocation2 + $0x14] sm:$0xf]
        %v275 = vld [vmem:[#allocation2 + $0x18] sm:$0xf]
        %v276 = vld [vmem:[#allocation2 + $0x1c] sm:$0xf]
        %v277 = vld [vmem:[#allocation2 + $0x20] sm:$0xf]
        %v278 = vld [vmem:[#allocation2 + $0x24] sm:$0xf]
        %v279 = vld [vmem:[#allocation2 + $0x28] sm:$0xf]
        %v280 = vld [vmem:[#allocation2 + $0x2c] sm:$0xf]
        %v281 = vld [vmem:[#allocation2 + $0x30] sm:$0xf]
        %v282 = vld [vmem:[#allocation2 + $0x34] sm:$0xf]
        %v283 = vld [vmem:[#allocation2 + $0x38] sm:$0xf]
        %v284 = vld [vmem:[#allocation2 + $0x3c] sm:$0xf]
        %v285 = vld [vmem:[#allocation4] sm:$0x1]
        %v287 = vlaneseq
        %v288 = vshrl.u32 %v287, 7
        %v289 = vsub.s32 0, %v288
        %v290 = vrot.slane %v285, %v289
        %v324 = vunpack.c.l.b16 %v237
        %v325 = vunpack.c.l.b16 %v238
        %v326 = vunpack.c.l.b16 %v239
        %v327 = vunpack.c.l.b16 %v240
        %v328 = vunpack.c.l.b16 %v241
        %v329 = vunpack.c.l.b16 %v242
        %v330 = vunpack.c.l.b16 %v243
        %v331 = vunpack.c.l.b16 %v244
        %v332 = vunpack.c.l.b16 %v245
        %v333 = vunpack.c.l.b16 %v246
        %v334 = vunpack.c.l.b16 %v247
        %v335 = vunpack.c.l.b16 %v248
        %v336 = vunpack.c.l.b16 %v249
        %v337 = vunpack.c.l.b16 %v250
        %v338 = vunpack.c.l.b16 %v251
        %v339 = vunpack.c.l.b16 %v252
        %v340 = vunpack.c.l.b16 %v253
        %v341 = vunpack.c.l.b16 %v254
        %v342 = vunpack.c.l.b16 %v255
        %v343 = vunpack.c.l.b16 %v256
        %v344 = vunpack.c.l.b16 %v257
        %v345 = vunpack.c.l.b16 %v258
        %v346 = vunpack.c.l.b16 %v259
        %v347 = vunpack.c.l.b16 %v260
        %v348 = vunpack.c.l.b16 %v261
        %v349 = vunpack.c.l.b16 %v262
        %v350 = vunpack.c.l.b16 %v263
        %v351 = vunpack.c.l.b16 %v264
        %v352 = vunpack.c.l.b16 %v265
        %v353 = vunpack.c.l.b16 %v266
        %v354 = vunpack.c.l.b16 %v267
        %v355 = vunpack.c.l.b16 %v268
        %v356 = vpack.c.b16 %v325, %v324
        %v357 = vpack.c.b16 %v327, %v326
        %v358 = vpack.c.b16 %v329, %v328
        %v359 = vpack.c.b16 %v331, %v330
        %v360 = vpack.c.b16 %v333, %v332
        %v361 = vpack.c.b16 %v335, %v334
        %v362 = vpack.c.b16 %v337, %v336
        %v363 = vpack.c.b16 %v339, %v338
        %v364 = vpack.c.b16 %v341, %v340
        %v365 = vpack.c.b16 %v343, %v342
        %v366 = vpack.c.b16 %v345, %v344
        %v367 = vpack.c.b16 %v347, %v346
        %v368 = vpack.c.b16 %v349, %v348
        %v369 = vpack.c.b16 %v351, %v350
        %v370 = vpack.c.b16 %v353, %v352
        %v371 = vpack.c.b16 %v355, %v354
        %v404 = vunpack.c.l.b16 %v269
        %v405 = vunpack.c.l.b16 %v270
        %v406 = vunpack.c.l.b16 %v271
        %v407 = vunpack.c.l.b16 %v272
        %v408 = vunpack.c.l.b16 %v273
        %v409 = vunpack.c.l.b16 %v274
        %v410 = vunpack.c.l.b16 %v275
        %v411 = vunpack.c.l.b16 %v276
        %v412 = vunpack.c.l.b16 %v277
        %v413 = vunpack.c.l.b16 %v278
        %v414 = vunpack.c.l.b16 %v279
        %v415 = vunpack.c.l.b16 %v280
        %v416 = vunpack.c.l.b16 %v281
        %v417 = vunpack.c.l.b16 %v282
        %v418 = vunpack.c.l.b16 %v283
        %v419 = vunpack.c.l.b16 %v284
        %v420 = vpack.c.b16 %v405, %v404
        %v421 = vpack.c.b16 %v407, %v406
        %v422 = vpack.c.b16 %v409, %v408
        %v423 = vpack.c.b16 %v411, %v410
        %v424 = vpack.c.b16 %v413, %v412
        %v425 = vpack.c.b16 %v415, %v414
        %v426 = vpack.c.b16 %v417, %v416
        %v427 = vpack.c.b16 %v419, %v418
        %436 = vmatprep.subr.bf16.mxu0 0
        %437 = vmatpush1.bf16.msra.mxu0 %v420
        %438 = vmatprep.subr.bf16.mxu0 0
        %439 = vmatpush1.bf16.msra.mxu0 %v421
        %440 = vmatprep.subr.bf16.mxu0 0
        %441 = vmatpush1.bf16.msra.mxu0 %v422
        %442 = vmatprep.subr.bf16.mxu0 0
        %443 = vmatpush1.bf16.msra.mxu0 %v423
        %444 = vmatprep.subr.bf16.mxu0 0
        %445 = vmatpush1.bf16.msra.mxu0 %v424
        %446 = vmatprep.subr.bf16.mxu0 0
        %447 = vmatpush1.bf16.msra.mxu0 %v425
        %448 = vmatprep.subr.bf16.mxu0 0
        %449 = vmatpush1.bf16.msra.mxu0 %v426
        %450 = vmatprep.subr.bf16.mxu0 0
        %451 = vmatpush1.bf16.msra.mxu0 %v427
        %452 = vmatprep.subr.bf16.mxu0 0
        %453 = vmatpush1.bf16.msra.mxu0 0
        %454 = vmatprep.subr.bf16.mxu0 0
        %455 = vmatpush1.bf16.msra.mxu0 0
        %456 = vmatprep.subr.bf16.mxu0 0
        %457 = vmatpush1.bf16.msra.mxu0 0
        %458 = vmatprep.subr.bf16.mxu0 0
        %459 = vmatpush1.bf16.msra.mxu0 0
        %460 = vmatprep.subr.bf16.mxu0 0
        %461 = vmatpush1.bf16.msra.mxu0 0
        %462 = vmatprep.subr.bf16.mxu0 0
        %463 = vmatpush1.bf16.msra.mxu0 0
        %464 = vmatprep.subr.bf16.mxu0 0
        %465 = vmatpush1.bf16.msra.mxu0 0
        %466 = vmatprep.subr.bf16.mxu0 0
        %467 = vmatpush1.bf16.msra.mxu0 0
        %468 = vmatprep.mubr.bf16.mxu0 0
        %469 = vmatmul.mubr.bf16.gmra.mrb[0].mxu0 %v356
        %v470 = vpop.f32.mrb[0].mxu0
        %v471 = vadd.f32 %v290, %v470
        %v472 = vpop.f32.mrb[0].mxu0
        %v473 = vpop.f32.mrb[0].mxu0
        %v474 = vadd.f32 %v290, %v473
        %v475 = vpop.f32.mrb[0].mxu0
        %476 = vmatprep.mubr.bf16.mxu0 0
        %477 = vmatmul.mubr.bf16.gmra.mrb[0].mxu0 %v357
        %v478 = vpop.f32.mrb[0].mxu0
        %v479 = vadd.f32 %v290, %v478
        %v480 = vpop.f32.mrb[0].mxu0
        %v481 = vpop.f32.mrb[0].mxu0
        %v482 = vadd.f32 %v290, %v481
        %v483 = vpop.f32.mrb[0].mxu0
        %484 = vmatprep.mubr.bf16.mxu0 0
        %485 = vmatmul.mubr.bf16.gmra.mrb[0].mxu0 %v358
        %v486 = vpop.f32.mrb[0].mxu0
        %v487 = vadd.f32 %v290, %v486
        %v488 = vpop.f32.mrb[0].mxu0
        %v489 = vpop.f32.mrb[0].mxu0
        %v490 = vadd.f32 %v290, %v489
        %v491 = vpop.f32.mrb[0].mxu0
        %492 = vmatprep.mubr.bf16.mxu0 0
        %493 = vmatmul.mubr.bf16.gmra.mrb[0].mxu0 %v359
        %v494 = vpop.f32.mrb[0].mxu0
        %v495 = vadd.f32 %v290, %v494
        %v496 = vpop.f32.mrb[0].mxu0
        %v497 = vpop.f32.mrb[0].mxu0
        %v498 = vadd.f32 %v290, %v497
        %v499 = vpop.f32.mrb[0].mxu0
        %500 = vmatprep.mubr.bf16.mxu0 0
        %501 = vmatmul.mubr.bf16.gmra.mrb[0].mxu0 %v360
        %v502 = vpop.f32.mrb[0].mxu0
        %v503 = vadd.f32 %v290, %v502
        %v504 = vpop.f32.mrb[0].mxu0
        %v505 = vpop.f32.mrb[0].mxu0
        %v506 = vadd.f32 %v290, %v505
        %v507 = vpop.f32.mrb[0].mxu0
        %508 = vmatprep.mubr.bf16.mxu0 0
        %509 = vmatmul.mubr.bf16.gmra.mrb[0].mxu0 %v361
        %v510 = vpop.f32.mrb[0].mxu0
        %v511 = vadd.f32 %v290, %v510
        %v512 = vpop.f32.mrb[0].mxu0
        %v513 = vpop.f32.mrb[0].mxu0
        %v514 = vadd.f32 %v290, %v513
        %v515 = vpop.f32.mrb[0].mxu0
        %516 = vmatprep.mubr.bf16.mxu0 0
        %517 = vmatmul.mubr.bf16.gmra.mrb[0].mxu0 %v362
        %v518 = vpop.f32.mrb[0].mxu0
        %v519 = vadd.f32 %v290, %v518
        %v520 = vpop.f32.mrb[0].mxu0
        %v521 = vpop.f32.mrb[0].mxu0
        %v522 = vadd.f32 %v290, %v521
        %v523 = vpop.f32.mrb[0].mxu0
        %524 = vmatprep.mubr.bf16.mxu0 0
        %525 = vmatmul.mubr.bf16.gmra.mrb[0].mxu0 %v363
        %v526 = vpop.f32.mrb[0].mxu0
        %v527 = vadd.f32 %v290, %v526
        %v528 = vpop.f32.mrb[0].mxu0
        %v529 = vpop.f32.mrb[0].mxu0
        %v530 = vadd.f32 %v290, %v529
        %v531 = vpop.f32.mrb[0].mxu0
        %532 = vmatprep.mubr.bf16.mxu0 0
        %533 = vmatmul.mubr.bf16.gmra.mrb[0].mxu0 %v364
        %v534 = vpop.f32.mrb[0].mxu0
        %v535 = vadd.f32 %v290, %v534
        %v536 = vpop.f32.mrb[0].mxu0
        %v537 = vpop.f32.mrb[0].mxu0
        %v538 = vadd.f32 %v290, %v537
        %v539 = vpop.f32.mrb[0].mxu0
        %540 = vmatprep.mubr.bf16.mxu0 0
        %541 = vmatmul.mubr.bf16.gmra.mrb[0].mxu0 %v365
        %v542 = vpop.f32.mrb[0].mxu0
        %v543 = vadd.f32 %v290, %v542
        %v544 = vpop.f32.mrb[0].mxu0
        %v545 = vpop.f32.mrb[0].mxu0
        %v546 = vadd.f32 %v290, %v545
        %v547 = vpop.f32.mrb[0].mxu0
        %548 = vmatprep.mubr.bf16.mxu0 0
        %549 = vmatmul.mubr.bf16.gmra.mrb[0].mxu0 %v366
        %v550 = vpop.f32.mrb[0].mxu0
        %v551 = vadd.f32 %v290, %v550
        %v552 = vpop.f32.mrb[0].mxu0
        %v553 = vpop.f32.mrb[0].mxu0
        %v554 = vadd.f32 %v290, %v553
        %v555 = vpop.f32.mrb[0].mxu0
        %556 = vmatprep.mubr.bf16.mxu0 0
        %557 = vmatmul.mubr.bf16.gmra.mrb[0].mxu0 %v367
        %v558 = vpop.f32.mrb[0].mxu0
        %v559 = vadd.f32 %v290, %v558
        %v560 = vpop.f32.mrb[0].mxu0
        %v561 = vpop.f32.mrb[0].mxu0
        %v562 = vadd.f32 %v290, %v561
        %v563 = vpop.f32.mrb[0].mxu0
        %564 = vmatprep.mubr.bf16.mxu0 0
        %565 = vmatmul.mubr.bf16.gmra.mrb[0].mxu0 %v368
        %v566 = vpop.f32.mrb[0].mxu0
        %v567 = vadd.f32 %v290, %v566
        %v568 = vpop.f32.mrb[0].mxu0
        %v569 = vpop.f32.mrb[0].mxu0
        %v570 = vadd.f32 %v290, %v569
        %v571 = vpop.f32.mrb[0].mxu0
        %572 = vmatprep.mubr.bf16.mxu0 0
        %573 = vmatmul.mubr.bf16.gmra.mrb[0].mxu0 %v369
        %v574 = vpop.f32.mrb[0].mxu0
        %v575 = vadd.f32 %v290, %v574
        %v576 = vpop.f32.mrb[0].mxu0
        %v577 = vpop.f32.mrb[0].mxu0
        %v578 = vadd.f32 %v290, %v577
        %v579 = vpop.f32.mrb[0].mxu0
        %580 = vmatprep.mubr.bf16.mxu0 0
        %581 = vmatmul.mubr.bf16.gmra.mrb[0].mxu0 %v370
        %v582 = vpop.f32.mrb[0].mxu0
        %v583 = vadd.f32 %v290, %v582
        %v584 = vpop.f32.mrb[0].mxu0
        %v585 = vpop.f32.mrb[0].mxu0
        %v586 = vadd.f32 %v290, %v585
        %v587 = vpop.f32.mrb[0].mxu0
        %588 = vmatprep.mubr.bf16.mxu0 0
        %589 = vmatmul.mubr.bf16.gmra.mrb[0].mxu0 %v371
        %v590 = vpop.f32.mrb[0].mxu0
        %v591 = vadd.f32 %v290, %v590
        %v592 = vpop.f32.mrb[0].mxu0
        %v593 = vpop.f32.mrb[0].mxu0
        %v594 = vadd.f32 %v290, %v593
        %v595 = vpop.f32.mrb[0].mxu0
        %596 = vdwg.mxu0
        %v597 = vmax.f32 %v471, 0.0
        %v598 = vmax.f32 %v474, 0.0
        %v599 = vmax.f32 %v479, 0.0
        %v600 = vmax.f32 %v482, 0.0
        %v601 = vmax.f32 %v487, 0.0
        %v602 = vmax.f32 %v490, 0.0
        %v603 = vmax.f32 %v495, 0.0
        %v604 = vmax.f32 %v498, 0.0
        %v605 = vmax.f32 %v503, 0.0
        %v606 = vmax.f32 %v506, 0.0
        %v607 = vmax.f32 %v511, 0.0
        %v608 = vmax.f32 %v514, 0.0
        %v609 = vmax.f32 %v519, 0.0
        %v610 = vmax.f32 %v522, 0.0
        %v611 = vmax.f32 %v527, 0.0
        %v612 = vmax.f32 %v530, 0.0
        %v613 = vmax.f32 %v535, 0.0
        %v614 = vmax.f32 %v538, 0.0
        %v615 = vmax.f32 %v543, 0.0
        %v616 = vmax.f32 %v546, 0.0
        %v617 = vmax.f32 %v551, 0.0
        %v618 = vmax.f32 %v554, 0.0
        %v619 = vmax.f32 %v559, 0.0
        %v620 = vmax.f32 %v562, 0.0
        %v621 = vmax.f32 %v567, 0.0
        %v622 = vmax.f32 %v570, 0.0
        %v623 = vmax.f32 %v575, 0.0
        %v624 = vmax.f32 %v578, 0.0
        %v625 = vmax.f32 %v583, 0.0
        %v626 = vmax.f32 %v586, 0.0
        %v627 = vmax.f32 %v591, 0.0
        %v628 = vmax.f32 %v594, 0.0
        %629 = vst [vmem:[%s234] sm:$0xff] %v597
        %630 = vst [vmem:[%s234 + $0x8] sm:$0xff] %v598
        %631 = vst [vmem:[%s234 + $0x10] sm:$0xff] %v599
        %632 = vst [vmem:[%s234 + $0x18] sm:$0xff] %v600
        %633 = vst [vmem:[%s234 + $0x20] sm:$0xff] %v601
        %634 = vst [vmem:[%s234 + $0x28] sm:$0xff] %v602
        %635 = vst [vmem:[%s234 + $0x30] sm:$0xff] %v603
        %636 = vst [vmem:[%s234 + $0x38] sm:$0xff] %v604
        %637 = vst [vmem:[%s234 + $0x40] sm:$0xff] %v605
        %638 = vst [vmem:[%s234 + $0x48] sm:$0xff] %v606
        %639 = vst [vmem:[%s234 + $0x50] sm:$0xff] %v607
        %640 = vst [vmem:[%s234 + $0x58] sm:$0xff] %v608
        %641 = vst [vmem:[%s234 + $0x60] sm:$0xff] %v609
        %642 = vst [vmem:[%s234 + $0x68] sm:$0xff] %v610
        %643 = vst [vmem:[%s234 + $0x70] sm:$0xff] %v611
        %644 = vst [vmem:[%s234 + $0x78] sm:$0xff] %v612
        %645 = vst [vmem:[%s234 + $0x80] sm:$0xff] %v613
        %646 = vst [vmem:[%s234 + $0x88] sm:$0xff] %v614
        %647 = vst [vmem:[%s234 + $0x90] sm:$0xff] %v615
        %648 = vst [vmem:[%s234 + $0x98] sm:$0xff] %v616
        %649 = vst [vmem:[%s234 + $0xa0] sm:$0xff] %v617
        %650 = vst [vmem:[%s234 + $0xa8] sm:$0xff] %v618
        %651 = vst [vmem:[%s234 + $0xb0] sm:$0xff] %v619
        %652 = vst [vmem:[%s234 + $0xb8] sm:$0xff] %v620
        %653 = vst [vmem:[%s234 + $0xc0] sm:$0xff] %v621
        %654 = vst [vmem:[%s234 + $0xc8] sm:$0xff] %v622
        %655 = vst [vmem:[%s234 + $0xd0] sm:$0xff] %v623
        %656 = vst [vmem:[%s234 + $0xd8] sm:$0xff] %v624
        %657 = vst [vmem:[%s234 + $0xe0] sm:$0xff] %v625
        %658 = vst [vmem:[%s234 + $0xe8] sm:$0xff] %v626
        %659 = vst [vmem:[%s234 + $0xf0] sm:$0xff] %v627
        %660 = vst [vmem:[%s234 + $0xf8] sm:$0xff] %v628
        %s661 = smul.u32 32, %s20
        %p662 = scmp.lt.s32.totalorder %s661, 63
        %s663 = scalar_select %p662, %s661, 63
        %p664 = scmp.lt.s32.totalorder %s21, 0
        %s665 = scalar_select %p664, %s21, 0
        %s666 = sadd.s32 %s665, %s663
        %s667 = smul.addr %s666, 8
        %s668 = scalar_lea.vmem %s3, %s667
        // Predicated region
        $region41: #{cae_forward.6} parent=31 // pred_check
          %p669 = pneg %p126
        $region42: #{cae_forward.6} parent=31 // pred_check_branch
          %671 = sbr.rel (%p669) target = $region44
        $region43: #{cae_forward.6} parent=31 // pred_region
          %s672 = smul.u32 32, %s20
        $region44: #{cae_forward.6} parent=31 // pred_fallthru
          _
      $region32: #{cae_forward.6} parent=5 // pred_fallthru
        _
      %p673 = scmp.le.s32.totalorder 2, %s11
      // Predicated region
      $region45: #{cae_forward.6} parent=5 // pred_check
        %p674 = pneg %p673
      $region46: #{cae_forward.6} parent=5 // pred_check_branch
        %676 = sbr.rel (%p674) target = $region48
      $region47: #{cae_forward.6} parent=5 // pred_region
        %s677 = ssub.s32 %s11, 2
        // Predicated region
        $region49: #{cae_forward.6} parent=47 // pred_check
          %p678 = pneg %p132
        $region50: #{cae_forward.6} parent=47 // pred_check_branch
          %680 = sbr.rel (%p678) target = $region52
        $region51: #{cae_forward.6} parent=47 // pred_region
          %s681 = smul.u32 32, %s22
          %p682 = scmp.lt.s32.totalorder %s681, 63
          %s683 = scalar_select %p682, %s681, 63
          %p684 = scmp.lt.s32.totalorder %s23, 0
          %s685 = scalar_select %p684, %s23, 0
          %s686 = sadd.s32 %s685, %s683
          %s687 = smul.addr %s686, 8
          %s688 = scalar_lea.vmem %s3, %s687
        $region52: #{cae_forward.6} parent=47 // pred_fallthru
          _
      $region48: #{cae_forward.6} parent=5 // pred_fallthru
        _
    $region6: #{cae_forward.6} parent=1 // loop_footer
      %s15 = sadd.s32 1, %s11
    $region7: #{cae_forward.6} parent=1 // loop_footer_branch
      %10 = sbr.rel target = $region3
    $region8: #{cae_forward.6} parent=1 // loop_exit
      _
    %689 = vsyncpa [#allocation3], 1
    %s690 = scalar_lea.sflag [#allocation3], 1
    %691 = vsyncpa %s690, 1
    %692 = vsyncpa [#allocation5], 1

// kernel: cae_forward.7
$region0: #{cae_forward.7}
  #allocation0 [shape = 'u32[]', space=smem, size = 0x4, offset = 0x4, fixed_abs, tag = 'smem constant byte address 0x4 - core index']
  #allocation1 [shape = 'u32[144,128]{1,0:T(1,128)}', space=vmem, size = 0x12000, scoped, tag = 'internal scratch']
  %s0 = inlined_call_operand.vmem [shape: bf16[104,256], index: 0, kind: input, shape index: {}]
  %s1 = inlined_call_operand.vmem [shape: bf16[256,128], index: 1, kind: input, shape index: {}]
  %s2 = inlined_call_operand.vmem [shape: f32[1,128], index: 2, kind: input, shape index: {}]
  %s3 = inlined_call_operand.vmem [shape: f32[104,128], index: 3, kind: output, shape index: {}]
  %s4 = sld [smem:[#allocation0]]
  $region22: #{cae_forward.7} parent=0
    _
  %s6 = ssub.s32 1, %s4
  %s7 = scalar_select 0, %s6, %s4
  // Predicated region
  $region2: #{cae_forward.7} parent=0 // pred_check
    _
  $region3: #{cae_forward.7} parent=0 // pred_check_branch
    %9 = sbr.rel (0) target = $region5
  $region4: #{cae_forward.7} parent=0 // pred_region
    _
  $region5: #{cae_forward.7} parent=0 // pred_fallthru
    _
  // Predicated region
  $region6: #{cae_forward.7} parent=0 // pred_check
    _
  $region7: #{cae_forward.7} parent=0 // pred_check_branch
    %11 = sbr.rel (0) target = $region9
  $region8: #{cae_forward.7} parent=0 // pred_region
    _
  $region9: #{cae_forward.7} parent=0 // pred_fallthru
    _
  // Predicated region
  $region10: #{cae_forward.7} parent=0 // pred_check
    _
  $region11: #{cae_forward.7} parent=0 // pred_check_branch
    %13 = sbr.rel (0) target = $region13
  $region12: #{cae_forward.7} parent=0 // pred_region
    _
  $region13: #{cae_forward.7} parent=0 // pred_fallthru
    _
  %v15 = vld [vmem:[%s0] sm:$0xff]
  %v16 = vld [vmem:[%s0 + $0x8] sm:$0xff]
  %v17 = vld [vmem:[%s0 + $0x10] sm:$0xff]
  %v18 = vld [vmem:[%s0 + $0x18] sm:$0xff]
  %v19 = vld [vmem:[%s0 + $0x20] sm:$0xff]
  %v20 = vld [vmem:[%s0 + $0x28] sm:$0xff]
  %v21 = vld [vmem:[%s0 + $0x30] sm:$0xff]
  %v22 = vld [vmem:[%s0 + $0x38] sm:$0xff]
  %v23 = vld [vmem:[%s0 + $0x40] sm:$0xff]
  %v24 = vld [vmem:[%s0 + $0x48] sm:$0xff]
  %v25 = vld [vmem:[%s0 + $0x50] sm:$0xff]
  %v26 = vld [vmem:[%s0 + $0x58] sm:$0xff]
  %v27 = vld [vmem:[%s0 + $0x60] sm:$0xff]
  %v28 = vld [vmem:[%s1] sm:$0xf]
  %v29 = vld [vmem:[%s1 + $0x4] sm:$0xf]
  %v30 = vld [vmem:[%s1 + $0x8] sm:$0xf]
  %v31 = vld [vmem:[%s1 + $0xc] sm:$0xf]
  %v32 = vld [vmem:[%s1 + $0x10] sm:$0xf]
  %v33 = vld [vmem:[%s1 + $0x14] sm:$0xf]
  %v34 = vld [vmem:[%s1 + $0x18] sm:$0xf]
  %v35 = vld [vmem:[%s1 + $0x1c] sm:$0xf]
  %v36 = vld [vmem:[%s1 + $0x20] sm:$0xf]
  %v37 = vld [vmem:[%s1 + $0x24] sm:$0xf]
  %v38 = vld [vmem:[%s1 + $0x28] sm:$0xf]
  %v39 = vld [vmem:[%s1 + $0x2c] sm:$0xf]
  %v40 = vld [vmem:[%s1 + $0x30] sm:$0xf]
  %v41 = vld [vmem:[%s1 + $0x34] sm:$0xf]
  %v42 = vld [vmem:[%s1 + $0x38] sm:$0xf]
  %v43 = vld [vmem:[%s1 + $0x3c] sm:$0xf]
  %v44 = vld [vmem:[%s1 + $0x40] sm:$0xf]
  %v45 = vld [vmem:[%s1 + $0x44] sm:$0xf]
  %v46 = vld [vmem:[%s1 + $0x48] sm:$0xf]
  %v47 = vld [vmem:[%s1 + $0x4c] sm:$0xf]
  %v48 = vld [vmem:[%s1 + $0x50] sm:$0xf]
  %v49 = vld [vmem:[%s1 + $0x54] sm:$0xf]
  %v50 = vld [vmem:[%s1 + $0x58] sm:$0xf]
  %v51 = vld [vmem:[%s1 + $0x5c] sm:$0xf]
  %v52 = vld [vmem:[%s1 + $0x60] sm:$0xf]
  %v53 = vld [vmem:[%s1 + $0x64] sm:$0xf]
  %v54 = vld [vmem:[%s1 + $0x68] sm:$0xf]
  %v55 = vld [vmem:[%s1 + $0x6c] sm:$0xf]
  %v56 = vld [vmem:[%s1 + $0x70] sm:$0xf]
  %v57 = vld [vmem:[%s1 + $0x74] sm:$0xf]
  %v58 = vld [vmem:[%s1 + $0x78] sm:$0xf]
  %v59 = vld [vmem:[%s1 + $0x7c] sm:$0xf]
  %v60 = vld [vmem:[%s2] sm:$0x1]
  %v62 = vlaneseq
  %v63 = vshrl.u32 %v62, 7
  %v64 = vsub.s32 0, %v63
  %v65 = vrot.slane %v60, %v64
  %v80 = vunpack.c.l.b16 %v15
  %v81 = vunpack.c.h.b16 %v15
  %v82 = vunpack.c.l.b16 %v16
  %v83 = vunpack.c.h.b16 %v16
  %v84 = vunpack.c.l.b16 %v17
  %v85 = vunpack.c.h.b16 %v17
  %v86 = vunpack.c.l.b16 %v18
  %v87 = vunpack.c.h.b16 %v18
  %v88 = vunpack.c.l.b16 %v19
  %v89 = vunpack.c.h.b16 %v19
  %v90 = vunpack.c.l.b16 %v20
  %v91 = vunpack.c.h.b16 %v20
  %v92 = vunpack.c.l.b16 %v21
  %v93 = vunpack.c.h.b16 %v21
  %v94 = vunpack.c.l.b16 %v22
  %v95 = vunpack.c.h.b16 %v22
  %v96 = vunpack.c.l.b16 %v23
  %v97 = vunpack.c.h.b16 %v23
  %v98 = vunpack.c.l.b16 %v24
  %v99 = vunpack.c.h.b16 %v24
  %v100 = vunpack.c.l.b16 %v25
  %v101 = vunpack.c.h.b16 %v25
  %v102 = vunpack.c.l.b16 %v26
  %v103 = vunpack.c.h.b16 %v26
  %v104 = vunpack.c.l.b16 %v27
  %v105 = vunpack.c.h.b16 %v27
  %v106 = vpack.c.b16 %v82, %v80
  %v107 = vpack.c.b16 %v83, %v81
  %v108 = vpack.c.b16 %v86, %v84
  %v109 = vpack.c.b16 %v87, %v85
  %v110 = vpack.c.b16 %v90, %v88
  %v111 = vpack.c.b16 %v91, %v89
  %v112 = vpack.c.b16 %v94, %v92
  %v113 = vpack.c.b16 %v95, %v93
  %v114 = vpack.c.b16 %v98, %v96
  %v115 = vpack.c.b16 %v99, %v97
  %v116 = vpack.c.b16 %v102, %v100
  %v117 = vpack.c.b16 %v103, %v101
  %v118 = vpack.c.b16 %v104, %v104
  %v119 = vpack.c.b16 %v105, %v105
  %v166 = vunpack.c.l.b16 %v28
  %v167 = vunpack.c.l.b16 %v29
  %v168 = vunpack.c.l.b16 %v30
  %v169 = vunpack.c.l.b16 %v31
  %v170 = vunpack.c.l.b16 %v32
  %v171 = vunpack.c.l.b16 %v33
  %v172 = vunpack.c.l.b16 %v34
  %v173 = vunpack.c.l.b16 %v35
  %v174 = vunpack.c.l.b16 %v36
  %v175 = vunpack.c.l.b16 %v37
  %v176 = vunpack.c.l.b16 %v38
  %v177 = vunpack.c.l.b16 %v39
  %v178 = vunpack.c.l.b16 %v40
  %v179 = vunpack.c.l.b16 %v41
  %v180 = vunpack.c.l.b16 %v42
  %v181 = vunpack.c.l.b16 %v43
  %v182 = vunpack.c.l.b16 %v44
  %v183 = vunpack.c.l.b16 %v45
  %v184 = vunpack.c.l.b16 %v46
  %v185 = vunpack.c.l.b16 %v47
  %v186 = vunpack.c.l.b16 %v48
  %v187 = vunpack.c.l.b16 %v49
  %v188 = vunpack.c.l.b16 %v50
  %v189 = vunpack.c.l.b16 %v51
  %v190 = vunpack.c.l.b16 %v52
  %v191 = vunpack.c.l.b16 %v53
  %v192 = vunpack.c.l.b16 %v54
  %v193 = vunpack.c.l.b16 %v55
  %v194 = vunpack.c.l.b16 %v56
  %v195 = vunpack.c.l.b16 %v57
  %v196 = vunpack.c.l.b16 %v58
  %v197 = vunpack.c.l.b16 %v59
  %v198 = vpack.c.b16 %v167, %v166
  %v199 = vpack.c.b16 %v169, %v168
  %v200 = vpack.c.b16 %v171, %v170
  %v201 = vpack.c.b16 %v173, %v172
  %v202 = vpack.c.b16 %v175, %v174
  %v203 = vpack.c.b16 %v177, %v176
  %v204 = vpack.c.b16 %v179, %v178
  %v205 = vpack.c.b16 %v181, %v180
  %v206 = vpack.c.b16 %v183, %v182
  %v207 = vpack.c.b16 %v185, %v184
  %v208 = vpack.c.b16 %v187, %v186
  %v209 = vpack.c.b16 %v189, %v188
  %v210 = vpack.c.b16 %v191, %v190
  %v211 = vpack.c.b16 %v193, %v192
  %v212 = vpack.c.b16 %v195, %v194
  %v213 = vpack.c.b16 %v197, %v196
  %230 = vmatprep.subr.bf16.mxu0 0
  %231 = vmatpush1.bf16.msra.mxu0 %v198
  %232 = vmatprep.subr.bf16.mxu0 0
  %233 = vmatpush1.bf16.msra.mxu0 %v199
  %234 = vmatprep.subr.bf16.mxu0 0
  %235 = vmatpush1.bf16.msra.mxu0 %v200
  %236 = vmatprep.subr.bf16.mxu0 0
  %237 = vmatpush1.bf16.msra.mxu0 %v201
  %238 = vmatprep.subr.bf16.mxu0 0
  %239 = vmatpush1.bf16.msra.mxu0 %v202
  %240 = vmatprep.subr.bf16.mxu0 0
  %241 = vmatpush1.bf16.msra.mxu0 %v203
  %242 = vmatprep.subr.bf16.mxu0 0
  %243 = vmatpush1.bf16.msra.mxu0 %v204
  %244 = vmatprep.subr.bf16.mxu0 0
  %245 = vmatpush1.bf16.msra.mxu0 %v205
  %246 = vmatprep.subr.bf16.mxu0 0
  %247 = vmatpush1.bf16.msra.mxu0 %v206
  %248 = vmatprep.subr.bf16.mxu0 0
  %249 = vmatpush1.bf16.msra.mxu0 %v207
  %250 = vmatprep.subr.bf16.mxu0 0
  %251 = vmatpush1.bf16.msra.mxu0 %v208
  %252 = vmatprep.subr.bf16.mxu0 0
  %253 = vmatpush1.bf16.msra.mxu0 %v209
  %254 = vmatprep.subr.bf16.mxu0 0
  %255 = vmatpush1.bf16.msra.mxu0 %v210
  %256 = vmatprep.subr.bf16.mxu0 0
  %257 = vmatpush1.bf16.msra.mxu0 %v211
  %258 = vmatprep.subr.bf16.mxu0 0
  %259 = vmatpush1.bf16.msra.mxu0 %v212
  %260 = vmatprep.subr.bf16.mxu0 0
  %261 = vmatpush1.bf16.msra.mxu0 %v213
  %262 = vmatprep.mubr.bf16.mxu0 %v107
  %263 = vmatmul.mubr.bf16.gmra.mrb[0].mxu0 %v106
  %v264 = vpop.f32.mrb[0].mxu0
  %v265 = vadd.f32 %v65, %v264
  %v266 = vpop.f32.mrb[0].mxu0
  %v267 = vpop.f32.mrb[0].mxu0
  %v268 = vadd.f32 %v65, %v267
  %v269 = vpop.f32.mrb[0].mxu0
  %270 = vmatprep.mubr.bf16.mxu0 %v109
  %271 = vmatmul.mubr.bf16.gmra.mrb[0].mxu0 %v108
  %v272 = vpop.f32.mrb[0].mxu0
  %v273 = vadd.f32 %v65, %v272
  %v274 = vpop.f32.mrb[0].mxu0
  %v275 = vpop.f32.mrb[0].mxu0
  %v276 = vadd.f32 %v65, %v275
  %v277 = vpop.f32.mrb[0].mxu0
  %278 = vmatprep.mubr.bf16.mxu0 %v111
  %279 = vmatmul.mubr.bf16.gmra.mrb[0].mxu0 %v110
  %v280 = vpop.f32.mrb[0].mxu0
  %v281 = vadd.f32 %v65, %v280
  %v282 = vpop.f32.mrb[0].mxu0
  %v283 = vpop.f32.mrb[0].mxu0
  %v284 = vadd.f32 %v65, %v283
  %v285 = vpop.f32.mrb[0].mxu0
  %286 = vmatprep.mubr.bf16.mxu0 %v113
  %287 = vmatmul.mubr.bf16.gmra.mrb[0].mxu0 %v112
  %v288 = vpop.f32.mrb[0].mxu0
  %v289 = vadd.f32 %v65, %v288
  %v290 = vpop.f32.mrb[0].mxu0
  %v291 = vpop.f32.mrb[0].mxu0
  %v292 = vadd.f32 %v65, %v291
  %v293 = vpop.f32.mrb[0].mxu0
  %294 = vmatprep.mubr.bf16.mxu0 %v115
  %295 = vmatmul.mubr.bf16.gmra.mrb[0].mxu0 %v114
  %v296 = vpop.f32.mrb[0].mxu0
  %v297 = vadd.f32 %v65, %v296
  %v298 = vpop.f32.mrb[0].mxu0
  %v299 = vpop.f32.mrb[0].mxu0
  %v300 = vadd.f32 %v65, %v299
  %v301 = vpop.f32.mrb[0].mxu0
  %302 = vmatprep.mubr.bf16.mxu0 %v117
  %303 = vmatmul.mubr.bf16.gmra.mrb[0].mxu0 %v116
  %v304 = vpop.f32.mrb[0].mxu0
  %v305 = vadd.f32 %v65, %v304
  %v306 = vpop.f32.mrb[0].mxu0
  %v307 = vpop.f32.mrb[0].mxu0
  %v308 = vadd.f32 %v65, %v307
  %v309 = vpop.f32.mrb[0].mxu0
  %310 = vmatprep.mubr.bf16.mxu0 %v119
  %311 = vmatmul.mubr.bf16.gmra.mrb[0].mxu0 %v118
  %v312 = vpop.f32.mrb[0].mxu0
  %v313 = vadd.f32 %v65, %v312
  %v314 = vpop.f32.mrb[0].mxu0
  %v315 = vpop.f32.mrb[0].mxu0
  %v316 = vpop.f32.mrb[0].mxu0
  %317 = vdwg.mxu0
  %v318 = vmax.f32 %v265, 0.0
  %v319 = vmax.f32 %v268, 0.0
  %v320 = vmax.f32 %v273, 0.0
  %v321 = vmax.f32 %v276, 0.0
  %v322 = vmax.f32 %v281, 0.0
  %v323 = vmax.f32 %v284, 0.0
  %v324 = vmax.f32 %v289, 0.0
  %v325 = vmax.f32 %v292, 0.0
  %v326 = vmax.f32 %v297, 0.0
  %v327 = vmax.f32 %v300, 0.0
  %v328 = vmax.f32 %v305, 0.0
  %v329 = vmax.f32 %v308, 0.0
  %v330 = vmax.f32 %v313, 0.0
  %331 = vst [vmem:[%s3] sm:$0xff] %v318
  %332 = vst [vmem:[%s3 + $0x8] sm:$0xff] %v319
  %333 = vst [vmem:[%s3 + $0x10] sm:$0xff] %v320
  %334 = vst [vmem:[%s3 + $0x18] sm:$0xff] %v321
  %335 = vst [vmem:[%s3 + $0x20] sm:$0xff] %v322
  %336 = vst [vmem:[%s3 + $0x28] sm:$0xff] %v323
  %337 = vst [vmem:[%s3 + $0x30] sm:$0xff] %v324
  %338 = vst [vmem:[%s3 + $0x38] sm:$0xff] %v325
  %339 = vst [vmem:[%s3 + $0x40] sm:$0xff] %v326
  %340 = vst [vmem:[%s3 + $0x48] sm:$0xff] %v327
  %341 = vst [vmem:[%s3 + $0x50] sm:$0xff] %v328
  %342 = vst [vmem:[%s3 + $0x58] sm:$0xff] %v329
  %343 = vst [vmem:[%s3 + $0x60] sm:$0xff] %v330
  // Predicated region
  $region14: #{cae_forward.7} parent=0 // pred_check
    _
  $region15: #{cae_forward.7} parent=0 // pred_check_branch
    %345 = sbr.rel (0) target = $region17
  $region16: #{cae_forward.7} parent=0 // pred_region
    _
  $region17: #{cae_forward.7} parent=0 // pred_fallthru
    _
  // Predicated region
  $region18: #{cae_forward.7} parent=0 // pred_check
    _
  $region19: #{cae_forward.7} parent=0 // pred_check_branch
    %347 = sbr.rel (0) target = $region21
  $region20: #{cae_forward.7} parent=0 // pred_region
    _
  $region21: #{cae_forward.7} parent=0 // pred_fallthru
    _

// kernel: cae_forward.8
$region0: #{cae_forward.8}
  #allocation0 [shape = 'u32[]', space=smem, size = 0x4, offset = 0x4, fixed_abs, tag = 'smem constant byte address 0x4 - core index']
  #allocation1 [shape = 'u32[144,128]{1,0:T(1,128)}', space=vmem, size = 0x12000, scoped, tag = 'internal scratch']
  %s0 = inlined_call_operand.vmem [shape: bf16[8,1664], index: 0, kind: input, shape index: {}]
  %s1 = inlined_call_operand.vmem [shape: bf16[1664,128], index: 1, kind: input, shape index: {}]
  %s2 = inlined_call_operand.vmem [shape: f32[1,128], index: 2, kind: input, shape index: {}]
  %s3 = inlined_call_operand.vmem [shape: f32[8,128], index: 3, kind: output, shape index: {}]
  %s4 = sld [smem:[#allocation0]]
  $region22: #{cae_forward.8} parent=0
    _
  %s6 = ssub.s32 1, %s4
  %s7 = scalar_select 0, %s6, %s4
  // Predicated region
  $region2: #{cae_forward.8} parent=0 // pred_check
    _
  $region3: #{cae_forward.8} parent=0 // pred_check_branch
    %9 = sbr.rel (0) target = $region5
  $region4: #{cae_forward.8} parent=0 // pred_region
    _
  $region5: #{cae_forward.8} parent=0 // pred_fallthru
    _
  // Predicated region
  $region6: #{cae_forward.8} parent=0 // pred_check
    _
  $region7: #{cae_forward.8} parent=0 // pred_check_branch
    %11 = sbr.rel (0) target = $region9
  $region8: #{cae_forward.8} parent=0 // pred_region
    _
  $region9: #{cae_forward.8} parent=0 // pred_fallthru
    _
  // Predicated region
  $region10: #{cae_forward.8} parent=0 // pred_check
    _
  $region11: #{cae_forward.8} parent=0 // pred_check_branch
    %13 = sbr.rel (0) target = $region13
  $region12: #{cae_forward.8} parent=0 // pred_region
    _
  $region13: #{cae_forward.8} parent=0 // pred_fallthru
    _
  %v15 = vld [vmem:[%s0] sm:$0xff]
  %v16 = vld [vmem:[%s0 + $0x8] sm:$0xff]
  %v17 = vld [vmem:[%s0 + $0x10] sm:$0xff]
  %v18 = vld [vmem:[%s0 + $0x18] sm:$0xff]
  %v19 = vld [vmem:[%s0 + $0x20] sm:$0xff]
  %v20 = vld [vmem:[%s0 + $0x28] sm:$0xff]
  %v21 = vld [vmem:[%s0 + $0x30] sm:$0xf]
  %v22 = vld [vmem:[%s1] sm:$0xf]
  %v23 = vld [vmem:[%s1 + $0x4] sm:$0xf]
  %v24 = vld [vmem:[%s1 + $0x8] sm:$0xf]
  %v25 = vld [vmem:[%s1 + $0xc] sm:$0xf]
  %v26 = vld [vmem:[%s1 + $0x10] sm:$0xf]
  %v27 = vld [vmem:[%s1 + $0x14] sm:$0xf]
  %v28 = vld [vmem:[%s1 + $0x18] sm:$0xf]
  %v29 = vld [vmem:[%s1 + $0x1c] sm:$0xf]
  %v30 = vld [vmem:[%s1 + $0x20] sm:$0xf]
  %v31 = vld [vmem:[%s1 + $0x24] sm:$0xf]
  %v32 = vld [vmem:[%s1 + $0x28] sm:$0xf]
  %v33 = vld [vmem:[%s1 + $0x2c] sm:$0xf]
  %v34 = vld [vmem:[%s1 + $0x30] sm:$0xf]
  %v35 = vld [vmem:[%s1 + $0x34] sm:$0xf]
  %v36 = vld [vmem:[%s1 + $0x38] sm:$0xf]
  %v37 = vld [vmem:[%s1 + $0x3c] sm:$0xf]
  %v38 = vld [vmem:[%s1 + $0x40] sm:$0xf]
  %v39 = vld [vmem:[%s1 + $0x44] sm:$0xf]
  %v40 = vld [vmem:[%s1 + $0x48] sm:$0xf]
  %v41 = vld [vmem:[%s1 + $0x4c] sm:$0xf]
  %v42 = vld [vmem:[%s1 + $0x50] sm:$0xf]
  %v43 = vld [vmem:[%s1 + $0x54] sm:$0xf]
  %v44 = vld [vmem:[%s1 + $0x58] sm:$0xf]
  %v45 = vld [vmem:[%s1 + $0x5c] sm:$0xf]
  %v46 = vld [vmem:[%s1 + $0x60] sm:$0xf]
  %v47 = vld [vmem:[%s1 + $0x64] sm:$0xf]
  %v48 = vld [vmem:[%s1 + $0x68] sm:$0xf]
  %v49 = vld [vmem:[%s1 + $0x6c] sm:$0xf]
  %v50 = vld [vmem:[%s1 + $0x70] sm:$0xf]
  %v51 = vld [vmem:[%s1 + $0x74] sm:$0xf]
  %v52 = vld [vmem:[%s1 + $0x78] sm:$0xf]
  %v53 = vld [vmem:[%s1 + $0x7c] sm:$0xf]
  %v54 = vld [vmem:[%s1 + $0x80] sm:$0xf]
  %v55 = vld [vmem:[%s1 + $0x84] sm:$0xf]
  %v56 = vld [vmem:[%s1 + $0x88] sm:$0xf]
  %v57 = vld [vmem:[%s1 + $0x8c] sm:$0xf]
  %v58 = vld [vmem:[%s1 + $0x90] sm:$0xf]
  %v59 = vld [vmem:[%s1 + $0x94] sm:$0xf]
  %v60 = vld [vmem:[%s1 + $0x98] sm:$0xf]
  %v61 = vld [vmem:[%s1 + $0x9c] sm:$0xf]
  %v62 = vld [vmem:[%s1 + $0xa0] sm:$0xf]
  %v63 = vld [vmem:[%s1 + $0xa4] sm:$0xf]
  %v64 = vld [vmem:[%s1 + $0xa8] sm:$0xf]
  %v65 = vld [vmem:[%s1 + $0xac] sm:$0xf]
  %v66 = vld [vmem:[%s1 + $0xb0] sm:$0xf]
  %v67 = vld [vmem:[%s1 + $0xb4] sm:$0xf]
  %v68 = vld [vmem:[%s1 + $0xb8] sm:$0xf]
  %v69 = vld [vmem:[%s1 + $0xbc] sm:$0xf]
  %v70 = vld [vmem:[%s1 + $0xc0] sm:$0xf]
  %v71 = vld [vmem:[%s1 + $0xc4] sm:$0xf]
  %v72 = vld [vmem:[%s1 + $0xc8] sm:$0xf]
  %v73 = vld [vmem:[%s1 + $0xcc] sm:$0xf]
  %v74 = vld [vmem:[%s1 + $0xd0] sm:$0xf]
  %v75 = vld [vmem:[%s1 + $0xd4] sm:$0xf]
  %v76 = vld [vmem:[%s1 + $0xd8] sm:$0xf]
  %v77 = vld [vmem:[%s1 + $0xdc] sm:$0xf]
  %v78 = vld [vmem:[%s1 + $0xe0] sm:$0xf]
  %v79 = vld [vmem:[%s1 + $0xe4] sm:$0xf]
  %v80 = vld [vmem:[%s1 + $0xe8] sm:$0xf]
  %v81 = vld [vmem:[%s1 + $0xec] sm:$0xf]
  %v82 = vld [vmem:[%s1 + $0xf0] sm:$0xf]
  %v83 = vld [vmem:[%s1 + $0xf4] sm:$0xf]
  %v84 = vld [vmem:[%s1 + $0xf8] sm:$0xf]
  %v85 = vld [vmem:[%s1 + $0xfc] sm:$0xf]
  %v86 = vld [vmem:[%s1 + $0x100] sm:$0xf]
  %v87 = vld [vmem:[%s1 + $0x104] sm:$0xf]
  %v88 = vld [vmem:[%s1 + $0x108] sm:$0xf]
  %v89 = vld [vmem:[%s1 + $0x10c] sm:$0xf]
  %v90 = vld [vmem:[%s1 + $0x110] sm:$0xf]
  %v91 = vld [vmem:[%s1 + $0x114] sm:$0xf]
  %v92 = vld [vmem:[%s1 + $0x118] sm:$0xf]
  %v93 = vld [vmem:[%s1 + $0x11c] sm:$0xf]
  %v94 = vld [vmem:[%s1 + $0x120] sm:$0xf]
  %v95 = vld [vmem:[%s1 + $0x124] sm:$0xf]
  %v96 = vld [vmem:[%s1 + $0x128] sm:$0xf]
  %v97 = vld [vmem:[%s1 + $0x12c] sm:$0xf]
  %v98 = vld [vmem:[%s1 + $0x130] sm:$0xf]
  %v99 = vld [vmem:[%s1 + $0x134] sm:$0xf]
  %v100 = vld [vmem:[%s1 + $0x138] sm:$0xf]
  %v101 = vld [vmem:[%s1 + $0x13c] sm:$0xf]
  %v102 = vld [vmem:[%s1 + $0x140] sm:$0xf]
  %v103 = vld [vmem:[%s1 + $0x144] sm:$0xf]
  %v104 = vld [vmem:[%s1 + $0x148] sm:$0xf]
  %v105 = vld [vmem:[%s1 + $0x14c] sm:$0xf]
  %v106 = vld [vmem:[%s1 + $0x150] sm:$0xf]
  %v107 = vld [vmem:[%s1 + $0x154] sm:$0xf]
  %v108 = vld [vmem:[%s1 + $0x158] sm:$0xf]
  %v109 = vld [vmem:[%s1 + $0x15c] sm:$0xf]
  %v110 = vld [vmem:[%s1 + $0x160] sm:$0xf]
  %v111 = vld [vmem:[%s1 + $0x164] sm:$0xf]
  %v112 = vld [vmem:[%s1 + $0x168] sm:$0xf]
  %v113 = vld [vmem:[%s1 + $0x16c] sm:$0xf]
  %v114 = vld [vmem:[%s1 + $0x170] sm:$0xf]
  %v115 = vld [vmem:[%s1 + $0x174] sm:$0xf]
  %v116 = vld [vmem:[%s1 + $0x178] sm:$0xf]
  %v117 = vld [vmem:[%s1 + $0x17c] sm:$0xf]
  %v118 = vld [vmem:[%s1 + $0x180] sm:$0xf]
  %v119 = vld [vmem:[%s1 + $0x184] sm:$0xf]
  %v120 = vld [vmem:[%s1 + $0x188] sm:$0xf]
  %v121 = vld [vmem:[%s1 + $0x18c] sm:$0xf]
  %v122 = vld [vmem:[%s1 + $0x190] sm:$0xf]
  %v123 = vld [vmem:[%s1 + $0x194] sm:$0xf]
  %v124 = vld [vmem:[%s1 + $0x198] sm:$0xf]
  %v125 = vld [vmem:[%s1 + $0x19c] sm:$0xf]
  %v126 = vld [vmem:[%s1 + $0x1a0] sm:$0xf]
  %v127 = vld [vmem:[%s1 + $0x1a4] sm:$0xf]
  %v128 = vld [vmem:[%s1 + $0x1a8] sm:$0xf]
  %v129 = vld [vmem:[%s1 + $0x1ac] sm:$0xf]
  %v130 = vld [vmem:[%s1 + $0x1b0] sm:$0xf]
  %v131 = vld [vmem:[%s1 + $0x1b4] sm:$0xf]
  %v132 = vld [vmem:[%s1 + $0x1b8] sm:$0xf]
  %v133 = vld [vmem:[%s1 + $0x1bc] sm:$0xf]
  %v134 = vld [vmem:[%s1 + $0x1c0] sm:$0xf]
  %v135 = vld [vmem:[%s1 + $0x1c4] sm:$0xf]
  %v136 = vld [vmem:[%s1 + $0x1c8] sm:$0xf]
  %v137 = vld [vmem:[%s1 + $0x1cc] sm:$0xf]
  %v138 = vld [vmem:[%s1 + $0x1d0] sm:$0xf]
  %v139 = vld [vmem:[%s1 + $0x1d4] sm:$0xf]
  %v140 = vld [vmem:[%s1 + $0x1d8] sm:$0xf]
  %v141 = vld [vmem:[%s1 + $0x1dc] sm:$0xf]
  %v142 = vld [vmem:[%s1 + $0x1e0] sm:$0xf]
  %v143 = vld [vmem:[%s1 + $0x1e4] sm:$0xf]
  %v144 = vld [vmem:[%s1 + $0x1e8] sm:$0xf]
  %v145 = vld [vmem:[%s1 + $0x1ec] sm:$0xf]
  %v146 = vld [vmem:[%s1 + $0x1f0] sm:$0xf]
  %v147 = vld [vmem:[%s1 + $0x1f4] sm:$0xf]
  %v148 = vld [vmem:[%s1 + $0x1f8] sm:$0xf]
  %v149 = vld [vmem:[%s1 + $0x1fc] sm:$0xf]
  %v150 = vld [vmem:[%s1 + $0x200] sm:$0xf]
  %v151 = vld [vmem:[%s1 + $0x204] sm:$0xf]
  %v152 = vld [vmem:[%s1 + $0x208] sm:$0xf]
  %v153 = vld [vmem:[%s1 + $0x20c] sm:$0xf]
  %v154 = vld [vmem:[%s1 + $0x210] sm:$0xf]
  %v155 = vld [vmem:[%s1 + $0x214] sm:$0xf]
  %v156 = vld [vmem:[%s1 + $0x218] sm:$0xf]
  %v157 = vld [vmem:[%s1 + $0x21c] sm:$0xf]
  %v158 = vld [vmem:[%s1 + $0x220] sm:$0xf]
  %v159 = vld [vmem:[%s1 + $0x224] sm:$0xf]
  %v160 = vld [vmem:[%s1 + $0x228] sm:$0xf]
  %v161 = vld [vmem:[%s1 + $0x22c] sm:$0xf]
  %v162 = vld [vmem:[%s1 + $0x230] sm:$0xf]
  %v163 = vld [vmem:[%s1 + $0x234] sm:$0xf]
  %v164 = vld [vmem:[%s1 + $0x238] sm:$0xf]
  %v165 = vld [vmem:[%s1 + $0x23c] sm:$0xf]
  %v166 = vld [vmem:[%s1 + $0x240] sm:$0xf]
  %v167 = vld [vmem:[%s1 + $0x244] sm:$0xf]
  %v168 = vld [vmem:[%s1 + $0x248] sm:$0xf]
  %v169 = vld [vmem:[%s1 + $0x24c] sm:$0xf]
  %v170 = vld [vmem:[%s1 + $0x250] sm:$0xf]
  %v171 = vld [vmem:[%s1 + $0x254] sm:$0xf]
  %v172 = vld [vmem:[%s1 + $0x258] sm:$0xf]
  %v173 = vld [vmem:[%s1 + $0x25c] sm:$0xf]
  %v174 = vld [vmem:[%s1 + $0x260] sm:$0xf]
  %v175 = vld [vmem:[%s1 + $0x264] sm:$0xf]
  %v176 = vld [vmem:[%s1 + $0x268] sm:$0xf]
  %v177 = vld [vmem:[%s1 + $0x26c] sm:$0xf]
  %v178 = vld [vmem:[%s1 + $0x270] sm:$0xf]
  %v179 = vld [vmem:[%s1 + $0x274] sm:$0xf]
  %v180 = vld [vmem:[%s1 + $0x278] sm:$0xf]
  %v181 = vld [vmem:[%s1 + $0x27c] sm:$0xf]
  %v182 = vld [vmem:[%s1 + $0x280] sm:$0xf]
  %v183 = vld [vmem:[%s1 + $0x284] sm:$0xf]
  %v184 = vld [vmem:[%s1 + $0x288] sm:$0xf]
  %v185 = vld [vmem:[%s1 + $0x28c] sm:$0xf]
  %v186 = vld [vmem:[%s1 + $0x290] sm:$0xf]
  %v187 = vld [vmem:[%s1 + $0x294] sm:$0xf]
  %v188 = vld [vmem:[%s1 + $0x298] sm:$0xf]
  %v189 = vld [vmem:[%s1 + $0x29c] sm:$0xf]
  %v190 = vld [vmem:[%s1 + $0x2a0] sm:$0xf]
  %v191 = vld [vmem:[%s1 + $0x2a4] sm:$0xf]
  %v192 = vld [vmem:[%s1 + $0x2a8] sm:$0xf]
  %v193 = vld [vmem:[%s1 + $0x2ac] sm:$0xf]
  %v194 = vld [vmem:[%s1 + $0x2b0] sm:$0xf]
  %v195 = vld [vmem:[%s1 + $0x2b4] sm:$0xf]
  %v196 = vld [vmem:[%s1 + $0x2b8] sm:$0xf]
  %v197 = vld [vmem:[%s1 + $0x2bc] sm:$0xf]
  %v198 = vld [vmem:[%s1 + $0x2c0] sm:$0xf]
  %v199 = vld [vmem:[%s1 + $0x2c4] sm:$0xf]
  %v200 = vld [vmem:[%s1 + $0x2c8] sm:$0xf]
  %v201 = vld [vmem:[%s1 + $0x2cc] sm:$0xf]
  %v202 = vld [vmem:[%s1 + $0x2d0] sm:$0xf]
  %v203 = vld [vmem:[%s1 + $0x2d4] sm:$0xf]
  %v204 = vld [vmem:[%s1 + $0x2d8] sm:$0xf]
  %v205 = vld [vmem:[%s1 + $0x2dc] sm:$0xf]
  %v206 = vld [vmem:[%s1 + $0x2e0] sm:$0xf]
  %v207 = vld [vmem:[%s1 + $0x2e4] sm:$0xf]
  %v208 = vld [vmem:[%s1 + $0x2e8] sm:$0xf]
  %v209 = vld [vmem:[%s1 + $0x2ec] sm:$0xf]
  %v210 = vld [vmem:[%s1 + $0x2f0] sm:$0xf]
  %v211 = vld [vmem:[%s1 + $0x2f4] sm:$0xf]
  %v212 = vld [vmem:[%s1 + $0x2f8] sm:$0xf]
  %v213 = vld [vmem:[%s1 + $0x2fc] sm:$0xf]
  %v214 = vld [vmem:[%s1 + $0x300] sm:$0xf]
  %v215 = vld [vmem:[%s1 + $0x304] sm:$0xf]
  %v216 = vld [vmem:[%s1 + $0x308] sm:$0xf]
  %v217 = vld [vmem:[%s1 + $0x30c] sm:$0xf]
  %v218 = vld [vmem:[%s1 + $0x310] sm:$0xf]
  %v219 = vld [vmem:[%s1 + $0x314] sm:$0xf]
  %v220 = vld [vmem:[%s1 + $0x318] sm:$0xf]
  %v221 = vld [vmem:[%s1 + $0x31c] sm:$0xf]
  %v222 = vld [vmem:[%s1 + $0x320] sm:$0xf]
  %v223 = vld [vmem:[%s1 + $0x324] sm:$0xf]
  %v224 = vld [vmem:[%s1 + $0x328] sm:$0xf]
  %v225 = vld [vmem:[%s1 + $0x32c] sm:$0xf]
  %v226 = vld [vmem:[%s1 + $0x330] sm:$0xf]
  %v227 = vld [vmem:[%s1 + $0x334] sm:$0xf]
  %v228 = vld [vmem:[%s1 + $0x338] sm:$0xf]
  %v229 = vld [vmem:[%s1 + $0x33c] sm:$0xf]
  %v230 = vld [vmem:[%s2] sm:$0x1]
  %v232 = vlaneseq
  %v233 = vshrl.u32 %v232, 7
  %v234 = vsub.s32 0, %v233
  %v235 = vrot.slane %v230, %v234
  %v244 = vunpack.c.l.b16 %v15
  %v245 = vunpack.c.h.b16 %v15
  %v246 = vunpack.c.l.b16 %v16
  %v247 = vunpack.c.h.b16 %v16
  %v248 = vunpack.c.l.b16 %v17
  %v249 = vunpack.c.h.b16 %v17
  %v250 = vunpack.c.l.b16 %v18
  %v251 = vunpack.c.h.b16 %v18
  %v252 = vunpack.c.l.b16 %v19
  %v253 = vunpack.c.h.b16 %v19
  %v254 = vunpack.c.l.b16 %v20
  %v255 = vunpack.c.h.b16 %v20
  %v256 = vunpack.c.l.b16 %v21
  %v257 = vpack.c.b16 %v244, %v244
  %v258 = vpack.c.b16 %v245, %v245
  %v259 = vpack.c.b16 %v246, %v246
  %v260 = vpack.c.b16 %v247, %v247
  %v261 = vpack.c.b16 %v248, %v248
  %v262 = vpack.c.b16 %v249, %v249
  %v263 = vpack.c.b16 %v250, %v250
  %v264 = vpack.c.b16 %v251, %v251
  %v265 = vpack.c.b16 %v252, %v252
  %v266 = vpack.c.b16 %v253, %v253
  %v267 = vpack.c.b16 %v254, %v254
  %v268 = vpack.c.b16 %v255, %v255
  %v269 = vpack.c.b16 %v256, %v256
  %v491 = vunpack.c.l.b16 %v22
  %v492 = vunpack.c.l.b16 %v23
  %v493 = vunpack.c.l.b16 %v24
  %v494 = vunpack.c.l.b16 %v25
  %v495 = vunpack.c.l.b16 %v26
  %v496 = vunpack.c.l.b16 %v27
  %v497 = vunpack.c.l.b16 %v28
  %v498 = vunpack.c.l.b16 %v29
  %v499 = vunpack.c.l.b16 %v30
  %v500 = vunpack.c.l.b16 %v31
  %v501 = vunpack.c.l.b16 %v32
  %v502 = vunpack.c.l.b16 %v33
  %v503 = vunpack.c.l.b16 %v34
  %v504 = vunpack.c.l.b16 %v35
  %v505 = vunpack.c.l.b16 %v36
  %v506 = vunpack.c.l.b16 %v37
  %v507 = vunpack.c.l.b16 %v38
  %v508 = vunpack.c.l.b16 %v39
  %v509 = vunpack.c.l.b16 %v40
  %v510 = vunpack.c.l.b16 %v41
  %v511 = vunpack.c.l.b16 %v42
  %v512 = vunpack.c.l.b16 %v43
  %v513 = vunpack.c.l.b16 %v44
  %v514 = vunpack.c.l.b16 %v45
  %v515 = vunpack.c.l.b16 %v46
  %v516 = vunpack.c.l.b16 %v47
  %v517 = vunpack.c.l.b16 %v48
  %v518 = vunpack.c.l.b16 %v49
  %v519 = vunpack.c.l.b16 %v50
  %v520 = vunpack.c.l.b16 %v51
  %v521 = vunpack.c.l.b16 %v52
  %v522 = vunpack.c.l.b16 %v53
  %v523 = vunpack.c.l.b16 %v54
  %v524 = vunpack.c.l.b16 %v55
  %v525 = vunpack.c.l.b16 %v56
  %v526 = vunpack.c.l.b16 %v57
  %v527 = vunpack.c.l.b16 %v58
  %v528 = vunpack.c.l.b16 %v59
  %v529 = vunpack.c.l.b16 %v60
  %v530 = vunpack.c.l.b16 %v61
  %v531 = vunpack.c.l.b16 %v62
  %v532 = vunpack.c.l.b16 %v63
  %v533 = vunpack.c.l.b16 %v64
  %v534 = vunpack.c.l.b16 %v65
  %v535 = vunpack.c.l.b16 %v66
  %v536 = vunpack.c.l.b16 %v67
  %v537 = vunpack.c.l.b16 %v68
  %v538 = vunpack.c.l.b16 %v69
  %v539 = vunpack.c.l.b16 %v70
  %v540 = vunpack.c.l.b16 %v71
  %v541 = vunpack.c.l.b16 %v72
  %v542 = vunpack.c.l.b16 %v73
  %v543 = vunpack.c.l.b16 %v74
  %v544 = vunpack.c.l.b16 %v75
  %v545 = vunpack.c.l.b16 %v76
  %v546 = vunpack.c.l.b16 %v77
  %v547 = vunpack.c.l.b16 %v78
  %v548 = vunpack.c.l.b16 %v79
  %v549 = vunpack.c.l.b16 %v80
  %v550 = vunpack.c.l.b16 %v81
  %v551 = vunpack.c.l.b16 %v82
  %v552 = vunpack.c.l.b16 %v83
  %v553 = vunpack.c.l.b16 %v84
  %v554 = vunpack.c.l.b16 %v85
  %v555 = vunpack.c.l.b16 %v86
  %v556 = vunpack.c.l.b16 %v87
  %v557 = vunpack.c.l.b16 %v88
  %v558 = vunpack.c.l.b16 %v89
  %v559 = vunpack.c.l.b16 %v90
  %v560 = vunpack.c.l.b16 %v91
  %v561 = vunpack.c.l.b16 %v92
  %v562 = vunpack.c.l.b16 %v93
  %v563 = vunpack.c.l.b16 %v94
  %v564 = vunpack.c.l.b16 %v95
  %v565 = vunpack.c.l.b16 %v96
  %v566 = vunpack.c.l.b16 %v97
  %v567 = vunpack.c.l.b16 %v98
  %v568 = vunpack.c.l.b16 %v99
  %v569 = vunpack.c.l.b16 %v100
  %v570 = vunpack.c.l.b16 %v101
  %v571 = vunpack.c.l.b16 %v102
  %v572 = vunpack.c.l.b16 %v103
  %v573 = vunpack.c.l.b16 %v104
  %v574 = vunpack.c.l.b16 %v105
  %v575 = vunpack.c.l.b16 %v106
  %v576 = vunpack.c.l.b16 %v107
  %v577 = vunpack.c.l.b16 %v108
  %v578 = vunpack.c.l.b16 %v109
  %v579 = vunpack.c.l.b16 %v110
  %v580 = vunpack.c.l.b16 %v111
  %v581 = vunpack.c.l.b16 %v112
  %v582 = vunpack.c.l.b16 %v113
  %v583 = vunpack.c.l.b16 %v114
  %v584 = vunpack.c.l.b16 %v115
  %v585 = vunpack.c.l.b16 %v116
  %v586 = vunpack.c.l.b16 %v117
  %v587 = vunpack.c.l.b16 %v118
  %v588 = vunpack.c.l.b16 %v119
  %v589 = vunpack.c.l.b16 %v120
  %v590 = vunpack.c.l.b16 %v121
  %v591 = vunpack.c.l.b16 %v122
  %v592 = vunpack.c.l.b16 %v123
  %v593 = vunpack.c.l.b16 %v124
  %v594 = vunpack.c.l.b16 %v125
  %v595 = vunpack.c.l.b16 %v126
  %v596 = vunpack.c.l.b16 %v127
  %v597 = vunpack.c.l.b16 %v128
  %v598 = vunpack.c.l.b16 %v129
  %v599 = vunpack.c.l.b16 %v130
  %v600 = vunpack.c.l.b16 %v131
  %v601 = vunpack.c.l.b16 %v132
  %v602 = vunpack.c.l.b16 %v133
  %v603 = vunpack.c.l.b16 %v134
  %v604 = vunpack.c.l.b16 %v135
  %v605 = vunpack.c.l.b16 %v136
  %v606 = vunpack.c.l.b16 %v137
  %v607 = vunpack.c.l.b16 %v138
  %v608 = vunpack.c.l.b16 %v139
  %v609 = vunpack.c.l.b16 %v140
  %v610 = vunpack.c.l.b16 %v141
  %v611 = vunpack.c.l.b16 %v142
  %v612 = vunpack.c.l.b16 %v143
  %v613 = vunpack.c.l.b16 %v144
  %v614 = vunpack.c.l.b16 %v145
  %v615 = vunpack.c.l.b16 %v146
  %v616 = vunpack.c.l.b16 %v147
  %v617 = vunpack.c.l.b16 %v148
  %v618 = vunpack.c.l.b16 %v149
  %v619 = vunpack.c.l.b16 %v150
  %v620 = vunpack.c.l.b16 %v151
  %v621 = vunpack.c.l.b16 %v152
  %v622 = vunpack.c.l.b16 %v153
  %v623 = vunpack.c.l.b16 %v154
  %v624 = vunpack.c.l.b16 %v155
  %v625 = vunpack.c.l.b16 %v156
  %v626 = vunpack.c.l.b16 %v157
  %v627 = vunpack.c.l.b16 %v158
  %v628 = vunpack.c.l.b16 %v159
  %v629 = vunpack.c.l.b16 %v160
  %v630 = vunpack.c.l.b16 %v161
  %v631 = vunpack.c.l.b16 %v162
  %v632 = vunpack.c.l.b16 %v163
  %v633 = vunpack.c.l.b16 %v164
  %v634 = vunpack.c.l.b16 %v165
  %v635 = vunpack.c.l.b16 %v166
  %v636 = vunpack.c.l.b16 %v167
  %v637 = vunpack.c.l.b16 %v168
  %v638 = vunpack.c.l.b16 %v169
  %v639 = vunpack.c.l.b16 %v170
  %v640 = vunpack.c.l.b16 %v171
  %v641 = vunpack.c.l.b16 %v172
  %v642 = vunpack.c.l.b16 %v173
  %v643 = vunpack.c.l.b16 %v174
  %v644 = vunpack.c.l.b16 %v175
  %v645 = vunpack.c.l.b16 %v176
  %v646 = vunpack.c.l.b16 %v177
  %v647 = vunpack.c.l.b16 %v178
  %v648 = vunpack.c.l.b16 %v179
  %v649 = vunpack.c.l.b16 %v180
  %v650 = vunpack.c.l.b16 %v181
  %v651 = vunpack.c.l.b16 %v182
  %v652 = vunpack.c.l.b16 %v183
  %v653 = vunpack.c.l.b16 %v184
  %v654 = vunpack.c.l.b16 %v185
  %v655 = vunpack.c.l.b16 %v186
  %v656 = vunpack.c.l.b16 %v187
  %v657 = vunpack.c.l.b16 %v188
  %v658 = vunpack.c.l.b16 %v189
  %v659 = vunpack.c.l.b16 %v190
  %v660 = vunpack.c.l.b16 %v191
  %v661 = vunpack.c.l.b16 %v192
  %v662 = vunpack.c.l.b16 %v193
  %v663 = vunpack.c.l.b16 %v194
  %v664 = vunpack.c.l.b16 %v195
  %v665 = vunpack.c.l.b16 %v196
  %v666 = vunpack.c.l.b16 %v197
  %v667 = vunpack.c.l.b16 %v198
  %v668 = vunpack.c.l.b16 %v199
  %v669 = vunpack.c.l.b16 %v200
  %v670 = vunpack.c.l.b16 %v201
  %v671 = vunpack.c.l.b16 %v202
  %v672 = vunpack.c.l.b16 %v203
  %v673 = vunpack.c.l.b16 %v204
  %v674 = vunpack.c.l.b16 %v205
  %v675 = vunpack.c.l.b16 %v206
  %v676 = vunpack.c.l.b16 %v207
  %v677 = vunpack.c.l.b16 %v208
  %v678 = vunpack.c.l.b16 %v209
  %v679 = vunpack.c.l.b16 %v210
  %v680 = vunpack.c.l.b16 %v211
  %v681 = vunpack.c.l.b16 %v212
  %v682 = vunpack.c.l.b16 %v213
  %v683 = vunpack.c.l.b16 %v214
  %v684 = vunpack.c.l.b16 %v215
  %v685 = vunpack.c.l.b16 %v216
  %v686 = vunpack.c.l.b16 %v217
  %v687 = vunpack.c.l.b16 %v218
  %v688 = vunpack.c.l.b16 %v219
  %v689 = vunpack.c.l.b16 %v220
  %v690 = vunpack.c.l.b16 %v221
  %v691 = vunpack.c.l.b16 %v222
  %v692 = vunpack.c.l.b16 %v223
  %v693 = vunpack.c.l.b16 %v224
  %v694 = vunpack.c.l.b16 %v225
  %v695 = vunpack.c.l.b16 %v226
  %v696 = vunpack.c.l.b16 %v227
  %v697 = vunpack.c.l.b16 %v228
  %v698 = vunpack.c.l.b16 %v229
  %v699 = vpack.c.b16 %v492, %v491
  %v700 = vpack.c.b16 %v494, %v493
  %v701 = vpack.c.b16 %v496, %v495
  %v702 = vpack.c.b16 %v498, %v497
  %v703 = vpack.c.b16 %v500, %v499
  %v704 = vpack.c.b16 %v502, %v501
  %v705 = vpack.c.b16 %v504, %v503
  %v706 = vpack.c.b16 %v506, %v505
  %v707 = vpack.c.b16 %v508, %v507
  %v708 = vpack.c.b16 %v510, %v509
  %v709 = vpack.c.b16 %v512, %v511
  %v710 = vpack.c.b16 %v514, %v513
  %v711 = vpack.c.b16 %v516, %v515
  %v712 = vpack.c.b16 %v518, %v517
  %v713 = vpack.c.b16 %v520, %v519
  %v714 = vpack.c.b16 %v522, %v521
  %v715 = vpack.c.b16 %v524, %v523
  %v716 = vpack.c.b16 %v526, %v525
  %v717 = vpack.c.b16 %v528, %v527
  %v718 = vpack.c.b16 %v530, %v529
  %v719 = vpack.c.b16 %v532, %v531
  %v720 = vpack.c.b16 %v534, %v533
  %v721 = vpack.c.b16 %v536, %v535
  %v722 = vpack.c.b16 %v538, %v537
  %v723 = vpack.c.b16 %v540, %v539
  %v724 = vpack.c.b16 %v542, %v541
  %v725 = vpack.c.b16 %v544, %v543
  %v726 = vpack.c.b16 %v546, %v545
  %v727 = vpack.c.b16 %v548, %v547
  %v728 = vpack.c.b16 %v550, %v549
  %v729 = vpack.c.b16 %v552, %v551
  %v730 = vpack.c.b16 %v554, %v553
  %v731 = vpack.c.b16 %v556, %v555
  %v732 = vpack.c.b16 %v558, %v557
  %v733 = vpack.c.b16 %v560, %v559
  %v734 = vpack.c.b16 %v562, %v561
  %v735 = vpack.c.b16 %v564, %v563
  %v736 = vpack.c.b16 %v566, %v565
  %v737 = vpack.c.b16 %v568, %v567
  %v738 = vpack.c.b16 %v570, %v569
  %v739 = vpack.c.b16 %v572, %v571
  %v740 = vpack.c.b16 %v574, %v573
  %v741 = vpack.c.b16 %v576, %v575
  %v742 = vpack.c.b16 %v578, %v577
  %v743 = vpack.c.b16 %v580, %v579
  %v744 = vpack.c.b16 %v582, %v581
  %v745 = vpack.c.b16 %v584, %v583
  %v746 = vpack.c.b16 %v586, %v585
  %v747 = vpack.c.b16 %v588, %v587
  %v748 = vpack.c.b16 %v590, %v589
  %v749 = vpack.c.b16 %v592, %v591
  %v750 = vpack.c.b16 %v594, %v593
  %v751 = vpack.c.b16 %v596, %v595
  %v752 = vpack.c.b16 %v598, %v597
  %v753 = vpack.c.b16 %v600, %v599
  %v754 = vpack.c.b16 %v602, %v601
  %v755 = vpack.c.b16 %v604, %v603
  %v756 = vpack.c.b16 %v606, %v605
  %v757 = vpack.c.b16 %v608, %v607
  %v758 = vpack.c.b16 %v610, %v609
  %v759 = vpack.c.b16 %v612, %v611
  %v760 = vpack.c.b16 %v614, %v613
  %v761 = vpack.c.b16 %v616, %v615
  %v762 = vpack.c.b16 %v618, %v617
  %v763 = vpack.c.b16 %v620, %v619
  %v764 = vpack.c.b16 %v622, %v621
  %v765 = vpack.c.b16 %v624, %v623
  %v766 = vpack.c.b16 %v626, %v625
  %v767 = vpack.c.b16 %v628, %v627
  %v768 = vpack.c.b16 %v630, %v629
  %v769 = vpack.c.b16 %v632, %v631
  %v770 = vpack.c.b16 %v634, %v633
  %v771 = vpack.c.b16 %v636, %v635
  %v772 = vpack.c.b16 %v638, %v637
  %v773 = vpack.c.b16 %v640, %v639
  %v774 = vpack.c.b16 %v642, %v641
  %v775 = vpack.c.b16 %v644, %v643
  %v776 = vpack.c.b16 %v646, %v645
  %v777 = vpack.c.b16 %v648, %v647
  %v778 = vpack.c.b16 %v650, %v649
  %v779 = vpack.c.b16 %v652, %v651
  %v780 = vpack.c.b16 %v654, %v653
  %v781 = vpack.c.b16 %v656, %v655
  %v782 = vpack.c.b16 %v658, %v657
  %v783 = vpack.c.b16 %v660, %v659
  %v784 = vpack.c.b16 %v662, %v661
  %v785 = vpack.c.b16 %v664, %v663
  %v786 = vpack.c.b16 %v666, %v665
  %v787 = vpack.c.b16 %v668, %v667
  %v788 = vpack.c.b16 %v670, %v669
  %v789 = vpack.c.b16 %v672, %v671
  %v790 = vpack.c.b16 %v674, %v673
  %v791 = vpack.c.b16 %v676, %v675
  %v792 = vpack.c.b16 %v678, %v677
  %v793 = vpack.c.b16 %v680, %v679
  %v794 = vpack.c.b16 %v682, %v681
  %v795 = vpack.c.b16 %v684, %v683
  %v796 = vpack.c.b16 %v686, %v685
  %v797 = vpack.c.b16 %v688, %v687
  %v798 = vpack.c.b16 %v690, %v689
  %v799 = vpack.c.b16 %v692, %v691
  %v800 = vpack.c.b16 %v694, %v693
  %v801 = vpack.c.b16 %v696, %v695
  %v802 = vpack.c.b16 %v698, %v697
  %907 = vmatprep.subr.bf16.mxu0 0
  %908 = vmatpush1.bf16.msra.mxu0 %v699
  %909 = vmatprep.subr.bf16.mxu0 0
  %910 = vmatpush1.bf16.msra.mxu0 %v700
  %911 = vmatprep.subr.bf16.mxu0 0
  %912 = vmatpush1.bf16.msra.mxu0 %v701
  %913 = vmatprep.subr.bf16.mxu0 0
  %914 = vmatpush1.bf16.msra.mxu0 %v702
  %915 = vmatprep.subr.bf16.mxu0 0
  %916 = vmatpush1.bf16.msra.mxu0 %v703
  %917 = vmatprep.subr.bf16.mxu0 0
  %918 = vmatpush1.bf16.msra.mxu0 %v704
  %919 = vmatprep.subr.bf16.mxu0 0
  %920 = vmatpush1.bf16.msra.mxu0 %v705
  %921 = vmatprep.subr.bf16.mxu0 0
  %922 = vmatpush1.bf16.msra.mxu0 %v706
  %923 = vmatprep.subr.bf16.mxu0 0
  %924 = vmatpush1.bf16.msra.mxu0 %v707
  %925 = vmatprep.subr.bf16.mxu0 0
  %926 = vmatpush1.bf16.msra.mxu0 %v708
  %927 = vmatprep.subr.bf16.mxu0 0
  %928 = vmatpush1.bf16.msra.mxu0 %v709
  %929 = vmatprep.subr.bf16.mxu0 0
  %930 = vmatpush1.bf16.msra.mxu0 %v710
  %931 = vmatprep.subr.bf16.mxu0 0
  %932 = vmatpush1.bf16.msra.mxu0 %v711
  %933 = vmatprep.subr.bf16.mxu0 0
  %934 = vmatpush1.bf16.msra.mxu0 %v712
  %935 = vmatprep.subr.bf16.mxu0 0
  %936 = vmatpush1.bf16.msra.mxu0 %v713
  %937 = vmatprep.subr.bf16.mxu0 0
  %938 = vmatpush1.bf16.msra.mxu0 %v714
  %939 = vmatprep.mubr.bf16.mxu0 %v258
  %940 = vmatmul.mubr.bf16.gmra.mrb[0].mxu0 %v257
  %v941 = vpop.f32.mrb[0].mxu0
  %v942 = vadd.f32 %v235, %v941
  %v943 = vpop.f32.mrb[0].mxu0
  %v944 = vpop.f32.mrb[0].mxu0
  %v945 = vpop.f32.mrb[0].mxu0
  %946 = vdwg.mxu0
  %947 = vmatprep.subr.bf16.mxu0 0
  %948 = vmatpush1.bf16.msra.mxu0 %v715
  %949 = vmatprep.subr.bf16.mxu0 0
  %950 = vmatpush1.bf16.msra.mxu0 %v716
  %951 = vmatprep.subr.bf16.mxu0 0
  %952 = vmatpush1.bf16.msra.mxu0 %v717
  %953 = vmatprep.subr.bf16.mxu0 0
  %954 = vmatpush1.bf16.msra.mxu0 %v718
  %955 = vmatprep.subr.bf16.mxu0 0
  %956 = vmatpush1.bf16.msra.mxu0 %v719
  %957 = vmatprep.subr.bf16.mxu0 0
  %958 = vmatpush1.bf16.msra.mxu0 %v720
  %959 = vmatprep.subr.bf16.mxu0 0
  %960 = vmatpush1.bf16.msra.mxu0 %v721
  %961 = vmatprep.subr.bf16.mxu0 0
  %962 = vmatpush1.bf16.msra.mxu0 %v722
  %963 = vmatprep.subr.bf16.mxu0 0
  %964 = vmatpush1.bf16.msra.mxu0 %v723
  %965 = vmatprep.subr.bf16.mxu0 0
  %966 = vmatpush1.bf16.msra.mxu0 %v724
  %967 = vmatprep.subr.bf16.mxu0 0
  %968 = vmatpush1.bf16.msra.mxu0 %v725
  %969 = vmatprep.subr.bf16.mxu0 0
  %970 = vmatpush1.bf16.msra.mxu0 %v726
  %971 = vmatprep.subr.bf16.mxu0 0
  %972 = vmatpush1.bf16.msra.mxu0 %v727
  %973 = vmatprep.subr.bf16.mxu0 0
  %974 = vmatpush1.bf16.msra.mxu0 %v728
  %975 = vmatprep.subr.bf16.mxu0 0
  %976 = vmatpush1.bf16.msra.mxu0 %v729
  %977 = vmatprep.subr.bf16.mxu0 0
  %978 = vmatpush1.bf16.msra.mxu0 %v730
  %979 = vmatprep.mubr.bf16.mxu0 %v260
  %980 = vmatmul.mubr.bf16.gmra.mrb[0].mxu0 %v259
  %v981 = vpop.f32.mrb[0].mxu0
  %v982 = vadd.f32 %v942, %v981
  %v983 = vpop.f32.mrb[0].mxu0
  %v984 = vpop.f32.mrb[0].mxu0
  %v985 = vpop.f32.mrb[0].mxu0
  %986 = vdwg.mxu0
  %987 = vmatprep.subr.bf16.mxu0 0
  %988 = vmatpush1.bf16.msra.mxu0 %v731
  %989 = vmatprep.subr.bf16.mxu0 0
  %990 = vmatpush1.bf16.msra.mxu0 %v732
  %991 = vmatprep.subr.bf16.mxu0 0
  %992 = vmatpush1.bf16.msra.mxu0 %v733
  %993 = vmatprep.subr.bf16.mxu0 0
  %994 = vmatpush1.bf16.msra.mxu0 %v734
  %995 = vmatprep.subr.bf16.mxu0 0
  %996 = vmatpush1.bf16.msra.mxu0 %v735
  %997 = vmatprep.subr.bf16.mxu0 0
  %998 = vmatpush1.bf16.msra.mxu0 %v736
  %999 = vmatprep.subr.bf16.mxu0 0
  %1000 = vmatpush1.bf16.msra.mxu0 %v737
  %1001 = vmatprep.subr.bf16.mxu0 0
  %1002 = vmatpush1.bf16.msra.mxu0 %v738
  %1003 = vmatprep.subr.bf16.mxu0 0
  %1004 = vmatpush1.bf16.msra.mxu0 %v739
  %1005 = vmatprep.subr.bf16.mxu0 0
  %1006 = vmatpush1.bf16.msra.mxu0 %v740
  %1007 = vmatprep.subr.bf16.mxu0 0
  %1008 = vmatpush1.bf16.msra.mxu0 %v741
  %1009 = vmatprep.subr.bf16.mxu0 0
  %1010 = vmatpush1.bf16.msra.mxu0 %v742
  %1011 = vmatprep.subr.bf16.mxu0 0
  %1012 = vmatpush1.bf16.msra.mxu0 %v743
  %1013 = vmatprep.subr.bf16.mxu0 0
  %1014 = vmatpush1.bf16.msra.mxu0 %v744
  %1015 = vmatprep.subr.bf16.mxu0 0
  %1016 = vmatpush1.bf16.msra.mxu0 %v745
  %1017 = vmatprep.subr.bf16.mxu0 0
  %1018 = vmatpush1.bf16.msra.mxu0 %v746
  %1019 = vmatprep.mubr.bf16.mxu0 %v262
  %1020 = vmatmul.mubr.bf16.gmra.mrb[0].mxu0 %v261
  %v1021 = vpop.f32.mrb[0].mxu0
  %v1022 = vadd.f32 %v982, %v1021
  %v1023 = vpop.f32.mrb[0].mxu0
  %v1024 = vpop.f32.mrb[0].mxu0
  %v1025 = vpop.f32.mrb[0].mxu0
  %1026 = vdwg.mxu0
  %1027 = vmatprep.subr.bf16.mxu0 0
  %1028 = vmatpush1.bf16.msra.mxu0 %v747
  %1029 = vmatprep.subr.bf16.mxu0 0
  %1030 = vmatpush1.bf16.msra.mxu0 %v748
  %1031 = vmatprep.subr.bf16.mxu0 0
  %1032 = vmatpush1.bf16.msra.mxu0 %v749
  %1033 = vmatprep.subr.bf16.mxu0 0
  %1034 = vmatpush1.bf16.msra.mxu0 %v750
  %1035 = vmatprep.subr.bf16.mxu0 0
  %1036 = vmatpush1.bf16.msra.mxu0 %v751
  %1037 = vmatprep.subr.bf16.mxu0 0
  %1038 = vmatpush1.bf16.msra.mxu0 %v752
  %1039 = vmatprep.subr.bf16.mxu0 0
  %1040 = vmatpush1.bf16.msra.mxu0 %v753
  %1041 = vmatprep.subr.bf16.mxu0 0
  %1042 = vmatpush1.bf16.msra.mxu0 %v754
  %1043 = vmatprep.subr.bf16.mxu0 0
  %1044 = vmatpush1.bf16.msra.mxu0 %v755
  %1045 = vmatprep.subr.bf16.mxu0 0
  %1046 = vmatpush1.bf16.msra.mxu0 %v756
  %1047 = vmatprep.subr.bf16.mxu0 0
  %1048 = vmatpush1.bf16.msra.mxu0 %v757
  %1049 = vmatprep.subr.bf16.mxu0 0
  %1050 = vmatpush1.bf16.msra.mxu0 %v758
  %1051 = vmatprep.subr.bf16.mxu0 0
  %1052 = vmatpush1.bf16.msra.mxu0 %v759
  %1053 = vmatprep.subr.bf16.mxu0 0
  %1054 = vmatpush1.bf16.msra.mxu0 %v760
  %1055 = vmatprep.subr.bf16.mxu0 0
  %1056 = vmatpush1.bf16.msra.mxu0 %v761
  %1057 = vmatprep.subr.bf16.mxu0 0
  %1058 = vmatpush1.bf16.msra.mxu0 %v762
  %1059 = vmatprep.mubr.bf16.mxu0 %v264
  %1060 = vmatmul.mubr.bf16.gmra.mrb[0].mxu0 %v263
  %v1061 = vpop.f32.mrb[0].mxu0
  %v1062 = vadd.f32 %v1022, %v1061
  %v1063 = vpop.f32.mrb[0].mxu0
  %v1064 = vpop.f32.mrb[0].mxu0
  %v1065 = vpop.f32.mrb[0].mxu0
  %1066 = vdwg.mxu0
  %1067 = vmatprep.subr.bf16.mxu0 0
  %1068 = vmatpush1.bf16.msra.mxu0 %v763
  %1069 = vmatprep.subr.bf16.mxu0 0
  %1070 = vmatpush1.bf16.msra.mxu0 %v764
  %1071 = vmatprep.subr.bf16.mxu0 0
  %1072 = vmatpush1.bf16.msra.mxu0 %v765
  %1073 = vmatprep.subr.bf16.mxu0 0
  %1074 = vmatpush1.bf16.msra.mxu0 %v766
  %1075 = vmatprep.subr.bf16.mxu0 0
  %1076 = vmatpush1.bf16.msra.mxu0 %v767
  %1077 = vmatprep.subr.bf16.mxu0 0
  %1078 = vmatpush1.bf16.msra.mxu0 %v768
  %1079 = vmatprep.subr.bf16.mxu0 0
  %1080 = vmatpush1.bf16.msra.mxu0 %v769
  %1081 = vmatprep.subr.bf16.mxu0 0
  %1082 = vmatpush1.bf16.msra.mxu0 %v770
  %1083 = vmatprep.subr.bf16.mxu0 0
  %1084 = vmatpush1.bf16.msra.mxu0 %v771
  %1085 = vmatprep.subr.bf16.mxu0 0
  %1086 = vmatpush1.bf16.msra.mxu0 %v772
  %1087 = vmatprep.subr.bf16.mxu0 0
  %1088 = vmatpush1.bf16.msra.mxu0 %v773
  %1089 = vmatprep.subr.bf16.mxu0 0
  %1090 = vmatpush1.bf16.msra.mxu0 %v774
  %1091 = vmatprep.subr.bf16.mxu0 0
  %1092 = vmatpush1.bf16.msra.mxu0 %v775
  %1093 = vmatprep.subr.bf16.mxu0 0
  %1094 = vmatpush1.bf16.msra.mxu0 %v776
  %1095 = vmatprep.subr.bf16.mxu0 0
  %1096 = vmatpush1.bf16.msra.mxu0 %v777
  %1097 = vmatprep.subr.bf16.mxu0 0
  %1098 = vmatpush1.bf16.msra.mxu0 %v778
  %1099 = vmatprep.mubr.bf16.mxu0 %v266
  %1100 = vmatmul.mubr.bf16.gmra.mrb[0].mxu0 %v265
  %v1101 = vpop.f32.mrb[0].mxu0
  %v1102 = vadd.f32 %v1062, %v1101
  %v1103 = vpop.f32.mrb[0].mxu0
  %v1104 = vpop.f32.mrb[0].mxu0
  %v1105 = vpop.f32.mrb[0].mxu0
  %1106 = vdwg.mxu0
  %1107 = vmatprep.subr.bf16.mxu0 0
  %1108 = vmatpush1.bf16.msra.mxu0 %v779
  %1109 = vmatprep.subr.bf16.mxu0 0
  %1110 = vmatpush1.bf16.msra.mxu0 %v780
  %1111 = vmatprep.subr.bf16.mxu0 0
  %1112 = vmatpush1.bf16.msra.mxu0 %v781
  %1113 = vmatprep.subr.bf16.mxu0 0
  %1114 = vmatpush1.bf16.msra.mxu0 %v782
  %1115 = vmatprep.subr.bf16.mxu0 0
  %1116 = vmatpush1.bf16.msra.mxu0 %v783
  %1117 = vmatprep.subr.bf16.mxu0 0
  %1118 = vmatpush1.bf16.msra.mxu0 %v784
  %1119 = vmatprep.subr.bf16.mxu0 0
  %1120 = vmatpush1.bf16.msra.mxu0 %v785
  %1121 = vmatprep.subr.bf16.mxu0 0
  %1122 = vmatpush1.bf16.msra.mxu0 %v786
  %1123 = vmatprep.subr.bf16.mxu0 0
  %1124 = vmatpush1.bf16.msra.mxu0 %v787
  %1125 = vmatprep.subr.bf16.mxu0 0
  %1126 = vmatpush1.bf16.msra.mxu0 %v788
  %1127 = vmatprep.subr.bf16.mxu0 0
  %1128 = vmatpush1.bf16.msra.mxu0 %v789
  %1129 = vmatprep.subr.bf16.mxu0 0
  %1130 = vmatpush1.bf16.msra.mxu0 %v790
  %1131 = vmatprep.subr.bf16.mxu0 0
  %1132 = vmatpush1.bf16.msra.mxu0 %v791
  %1133 = vmatprep.subr.bf16.mxu0 0
  %1134 = vmatpush1.bf16.msra.mxu0 %v792
  %1135 = vmatprep.subr.bf16.mxu0 0
  %1136 = vmatpush1.bf16.msra.mxu0 %v793
  %1137 = vmatprep.subr.bf16.mxu0 0
  %1138 = vmatpush1.bf16.msra.mxu0 %v794
  %1139 = vmatprep.mubr.bf16.mxu0 %v268
  %1140 = vmatmul.mubr.bf16.gmra.mrb[0].mxu0 %v267
  %v1141 = vpop.f32.mrb[0].mxu0
  %v1142 = vadd.f32 %v1102, %v1141
  %v1143 = vpop.f32.mrb[0].mxu0
  %v1144 = vpop.f32.mrb[0].mxu0
  %v1145 = vpop.f32.mrb[0].mxu0
  %1146 = vdwg.mxu0
  %1147 = vmatprep.subr.bf16.mxu0 0
  %1148 = vmatpush1.bf16.msra.mxu0 %v795
  %1149 = vmatprep.subr.bf16.mxu0 0
  %1150 = vmatpush1.bf16.msra.mxu0 %v796
  %1151 = vmatprep.subr.bf16.mxu0 0
  %1152 = vmatpush1.bf16.msra.mxu0 %v797
  %1153 = vmatprep.subr.bf16.mxu0 0
  %1154 = vmatpush1.bf16.msra.mxu0 %v798
  %1155 = vmatprep.subr.bf16.mxu0 0
  %1156 = vmatpush1.bf16.msra.mxu0 %v799
  %1157 = vmatprep.subr.bf16.mxu0 0
  %1158 = vmatpush1.bf16.msra.mxu0 %v800
  %1159 = vmatprep.subr.bf16.mxu0 0
  %1160 = vmatpush1.bf16.msra.mxu0 %v801
  %1161 = vmatprep.subr.bf16.mxu0 0
  %1162 = vmatpush1.bf16.msra.mxu0 %v802
  %1163 = vmatprep.subr.bf16.mxu0 0
  %1164 = vmatpush1.bf16.msra.mxu0 0
  %1165 = vmatprep.subr.bf16.mxu0 0
  %1166 = vmatpush1.bf16.msra.mxu0 0
  %1167 = vmatprep.subr.bf16.mxu0 0
  %1168 = vmatpush1.bf16.msra.mxu0 0
  %1169 = vmatprep.subr.bf16.mxu0 0
  %1170 = vmatpush1.bf16.msra.mxu0 0
  %1171 = vmatprep.subr.bf16.mxu0 0
  %1172 = vmatpush1.bf16.msra.mxu0 0
  %1173 = vmatprep.subr.bf16.mxu0 0
  %1174 = vmatpush1.bf16.msra.mxu0 0
  %1175 = vmatprep.subr.bf16.mxu0 0
  %1176 = vmatpush1.bf16.msra.mxu0 0
  %1177 = vmatprep.subr.bf16.mxu0 0
  %1178 = vmatpush1.bf16.msra.mxu0 0
  %1179 = vmatprep.mubr.bf16.mxu0 0
  %1180 = vmatmul.mubr.bf16.gmra.mrb[0].mxu0 %v269
  %v1181 = vpop.f32.mrb[0].mxu0
  %v1182 = vadd.f32 %v1142, %v1181
  %v1183 = vpop.f32.mrb[0].mxu0
  %v1184 = vpop.f32.mrb[0].mxu0
  %v1185 = vpop.f32.mrb[0].mxu0
  %1186 = vdwg.mxu0
  %1187 = vst [vmem:[%s3] sm:$0xff] %v1182
  // Predicated region
  $region14: #{cae_forward.8} parent=0 // pred_check
    _
  $region15: #{cae_forward.8} parent=0 // pred_check_branch
    %1189 = sbr.rel (0) target = $region17
  $region16: #{cae_forward.8} parent=0 // pred_region
    _
  $region17: #{cae_forward.8} parent=0 // pred_fallthru
    _
  // Predicated region
  $region18: #{cae_forward.8} parent=0 // pred_check
    _
  $region19: #{cae_forward.8} parent=0 // pred_check_branch
    %1191 = sbr.rel (0) target = $region21
  $region20: #{cae_forward.8} parent=0 // pred_region
    _
  $region21: #{cae_forward.8} parent=0 // pred_fallthru
    _

// kernel: cae_forward.9
$region0: #{cae_forward.9}
  #allocation0 [shape = 'u32[]', space=smem, size = 0x4, offset = 0x4, fixed_abs, tag = 'smem constant byte address 0x4 - core index']
  #allocation1 [shape = 'u32[144,128]{1,0:T(1,128)}', space=vmem, size = 0x12000, scoped, tag = 'internal scratch']
  %s0 = inlined_call_operand.vmem [shape: bf16[104,3200], index: 0, kind: input, shape index: {}]
  %s1 = inlined_call_operand.vmem [shape: bf16[3200,128], index: 1, kind: input, shape index: {}]
  %s2 = inlined_call_operand.vmem [shape: f32[1,128], index: 2, kind: input, shape index: {}]
  %s3 = inlined_call_operand.vmem [shape: f32[104,128], index: 3, kind: output, shape index: {}]
  %s4 = sld [smem:[#allocation0]]
  $region22: #{cae_forward.9} parent=0
    _
  %s6 = ssub.s32 1, %s4
  %s7 = scalar_select 0, %s6, %s4
  // Predicated region
  $region2: #{cae_forward.9} parent=0 // pred_check
    _
  $region3: #{cae_forward.9} parent=0 // pred_check_branch
    %9 = sbr.rel (0) target = $region5
  $region4: #{cae_forward.9} parent=0 // pred_region
    _
  $region5: #{cae_forward.9} parent=0 // pred_fallthru
    _
  // Predicated region
  $region6: #{cae_forward.9} parent=0 // pred_check
    _
  $region7: #{cae_forward.9} parent=0 // pred_check_branch
    %11 = sbr.rel (0) target = $region9
  $region8: #{cae_forward.9} parent=0 // pred_region
    _
  $region9: #{cae_forward.9} parent=0 // pred_fallthru
    _
  // Predicated region
  $region10: #{cae_forward.9} parent=0 // pred_check
    _
  $region11: #{cae_forward.9} parent=0 // pred_check_branch
    %13 = sbr.rel (0) target = $region13
  $region12: #{cae_forward.9} parent=0 // pred_region
    _
  $region13: #{cae_forward.9} parent=0 // pred_fallthru
    _
  %v15 = vld [vmem:[%s0] sm:$0xff]
  %v16 = vld [vmem:[%s0 + $0x8] sm:$0xff]
  %v17 = vld [vmem:[%s0 + $0x10] sm:$0xff]
  %v18 = vld [vmem:[%s0 + $0x18] sm:$0xff]
  %v19 = vld [vmem:[%s0 + $0x20] sm:$0xff]
  %v20 = vld [vmem:[%s0 + $0x28] sm:$0xff]
  %v21 = vld [vmem:[%s0 + $0x30] sm:$0xff]
  %v22 = vld [vmem:[%s0 + $0x38] sm:$0xff]
  %v23 = vld [vmem:[%s0 + $0x40] sm:$0xff]
  %v24 = vld [vmem:[%s0 + $0x48] sm:$0xff]
  %v25 = vld [vmem:[%s0 + $0x50] sm:$0xff]
  %v26 = vld [vmem:[%s0 + $0x58] sm:$0xff]
  %v27 = vld [vmem:[%s0 + $0x60] sm:$0xf]
  %v28 = vld [vmem:[%s0 + $0x64] sm:$0xff]
  %v29 = vld [vmem:[%s0 + $0x6c] sm:$0xff]
  %v30 = vld [vmem:[%s0 + $0x74] sm:$0xff]
  %v31 = vld [vmem:[%s0 + $0x7c] sm:$0xff]
  %v32 = vld [vmem:[%s0 + $0x84] sm:$0xff]
  %v33 = vld [vmem:[%s0 + $0x8c] sm:$0xff]
  %v34 = vld [vmem:[%s0 + $0x94] sm:$0xff]
  %v35 = vld [vmem:[%s0 + $0x9c] sm:$0xff]
  %v36 = vld [vmem:[%s0 + $0xa4] sm:$0xff]
  %v37 = vld [vmem:[%s0 + $0xac] sm:$0xff]
  %v38 = vld [vmem:[%s0 + $0xb4] sm:$0xff]
  %v39 = vld [vmem:[%s0 + $0xbc] sm:$0xff]
  %v40 = vld [vmem:[%s0 + $0xc4] sm:$0xf]
  %v41 = vld [vmem:[%s0 + $0xc8] sm:$0xff]
  %v42 = vld [vmem:[%s0 + $0xd0] sm:$0xff]
  %v43 = vld [vmem:[%s0 + $0xd8] sm:$0xff]
  %v44 = vld [vmem:[%s0 + $0xe0] sm:$0xff]
  %v45 = vld [vmem:[%s0 + $0xe8] sm:$0xff]
  %v46 = vld [vmem:[%s0 + $0xf0] sm:$0xff]
  %v47 = vld [vmem:[%s0 + $0xf8] sm:$0xff]
  %v48 = vld [vmem:[%s0 + $0x100] sm:$0xff]
  %v49 = vld [vmem:[%s0 + $0x108] sm:$0xff]
  %v50 = vld [vmem:[%s0 + $0x110] sm:$0xff]
  %v51 = vld [vmem:[%s0 + $0x118] sm:$0xff]
  %v52 = vld [vmem:[%s0 + $0x120] sm:$0xff]
  %v53 = vld [vmem:[%s0 + $0x128] sm:$0xf]
  %v54 = vld [vmem:[%s0 + $0x12c] sm:$0xff]
  %v55 = vld [vmem:[%s0 + $0x134] sm:$0xff]
  %v56 = vld [vmem:[%s0 + $0x13c] sm:$0xff]
  %v57 = vld [vmem:[%s0 + $0x144] sm:$0xff]
  %v58 = vld [vmem:[%s0 + $0x14c] sm:$0xff]
  %v59 = vld [vmem:[%s0 + $0x154] sm:$0xff]
  %v60 = vld [vmem:[%s0 + $0x15c] sm:$0xff]
  %v61 = vld [vmem:[%s0 + $0x164] sm:$0xff]
  %v62 = vld [vmem:[%s0 + $0x16c] sm:$0xff]
  %v63 = vld [vmem:[%s0 + $0x174] sm:$0xff]
  %v64 = vld [vmem:[%s0 + $0x17c] sm:$0xff]
  %v65 = vld [vmem:[%s0 + $0x184] sm:$0xff]
  %v66 = vld [vmem:[%s0 + $0x18c] sm:$0xf]
  %v67 = vld [vmem:[%s0 + $0x190] sm:$0xff]
  %v68 = vld [vmem:[%s0 + $0x198] sm:$0xff]
  %v69 = vld [vmem:[%s0 + $0x1a0] sm:$0xff]
  %v70 = vld [vmem:[%s0 + $0x1a8] sm:$0xff]
  %v71 = vld [vmem:[%s0 + $0x1b0] sm:$0xff]
  %v72 = vld [vmem:[%s0 + $0x1b8] sm:$0xff]
  %v73 = vld [vmem:[%s0 + $0x1c0] sm:$0xff]
  %v74 = vld [vmem:[%s0 + $0x1c8] sm:$0xff]
  %v75 = vld [vmem:[%s0 + $0x1d0] sm:$0xff]
  %v76 = vld [vmem:[%s0 + $0x1d8] sm:$0xff]
  %v77 = vld [vmem:[%s0 + $0x1e0] sm:$0xff]
  %v78 = vld [vmem:[%s0 + $0x1e8] sm:$0xff]
  %v79 = vld [vmem:[%s0 + $0x1f0] sm:$0xf]
  %v80 = vld [vmem:[%s0 + $0x1f4] sm:$0xff]
  %v81 = vld [vmem:[%s0 + $0x1fc] sm:$0xff]
  %v82 = vld [vmem:[%s0 + $0x204] sm:$0xff]
  %v83 = vld [vmem:[%s0 + $0x20c] sm:$0xff]
  %v84 = vld [vmem:[%s0 + $0x214] sm:$0xff]
  %v85 = vld [vmem:[%s0 + $0x21c] sm:$0xff]
  %v86 = vld [vmem:[%s0 + $0x224] sm:$0xff]
  %v87 = vld [vmem:[%s0 + $0x22c] sm:$0xff]
  %v88 = vld [vmem:[%s0 + $0x234] sm:$0xff]
  %v89 = vld [vmem:[%s0 + $0x23c] sm:$0xff]
  %v90 = vld [vmem:[%s0 + $0x244] sm:$0xff]
  %v91 = vld [vmem:[%s0 + $0x24c] sm:$0xff]
  %v92 = vld [vmem:[%s0 + $0x254] sm:$0xf]
  %v93 = vld [vmem:[%s0 + $0x258] sm:$0xff]
  %v94 = vld [vmem:[%s0 + $0x260] sm:$0xff]
  %v95 = vld [vmem:[%s0 + $0x268] sm:$0xff]
  %v96 = vld [vmem:[%s0 + $0x270] sm:$0xff]
  %v97 = vld [vmem:[%s0 + $0x278] sm:$0xff]
  %v98 = vld [vmem:[%s0 + $0x280] sm:$0xff]
  %v99 = vld [vmem:[%s0 + $0x288] sm:$0xff]
  %v100 = vld [vmem:[%s0 + $0x290] sm:$0xff]
  %v101 = vld [vmem:[%s0 + $0x298] sm:$0xff]
  %v102 = vld [vmem:[%s0 + $0x2a0] sm:$0xff]
  %v103 = vld [vmem:[%s0 + $0x2a8] sm:$0xff]
  %v104 = vld [vmem:[%s0 + $0x2b0] sm:$0xff]
  %v105 = vld [vmem:[%s0 + $0x2b8] sm:$0xf]
  %v106 = vld [vmem:[%s0 + $0x2bc] sm:$0xff]
  %v107 = vld [vmem:[%s0 + $0x2c4] sm:$0xff]
  %v108 = vld [vmem:[%s0 + $0x2cc] sm:$0xff]
  %v109 = vld [vmem:[%s0 + $0x2d4] sm:$0xff]
  %v110 = vld [vmem:[%s0 + $0x2dc] sm:$0xff]
  %v111 = vld [vmem:[%s0 + $0x2e4] sm:$0xff]
  %v112 = vld [vmem:[%s0 + $0x2ec] sm:$0xff]
  %v113 = vld [vmem:[%s0 + $0x2f4] sm:$0xff]
  %v114 = vld [vmem:[%s0 + $0x2fc] sm:$0xff]
  %v115 = vld [vmem:[%s0 + $0x304] sm:$0xff]
  %v116 = vld [vmem:[%s0 + $0x30c] sm:$0xff]
  %v117 = vld [vmem:[%s0 + $0x314] sm:$0xff]
  %v118 = vld [vmem:[%s0 + $0x31c] sm:$0xf]
  %v119 = vld [vmem:[%s0 + $0x320] sm:$0xff]
  %v120 = vld [vmem:[%s0 + $0x328] sm:$0xff]
  %v121 = vld [vmem:[%s0 + $0x330] sm:$0xff]
  %v122 = vld [vmem:[%s0 + $0x338] sm:$0xff]
  %v123 = vld [vmem:[%s0 + $0x340] sm:$0xff]
  %v124 = vld [vmem:[%s0 + $0x348] sm:$0xff]
  %v125 = vld [vmem:[%s0 + $0x350] sm:$0xff]
  %v126 = vld [vmem:[%s0 + $0x358] sm:$0xff]
  %v127 = vld [vmem:[%s0 + $0x360] sm:$0xff]
  %v128 = vld [vmem:[%s0 + $0x368] sm:$0xff]
  %v129 = vld [vmem:[%s0 + $0x370] sm:$0xff]
  %v130 = vld [vmem:[%s0 + $0x378] sm:$0xff]
  %v131 = vld [vmem:[%s0 + $0x380] sm:$0xf]
  %v132 = vld [vmem:[%s0 + $0x384] sm:$0xff]
  %v133 = vld [vmem:[%s0 + $0x38c] sm:$0xff]
  %v134 = vld [vmem:[%s0 + $0x394] sm:$0xff]
  %v135 = vld [vmem:[%s0 + $0x39c] sm:$0xff]
  %v136 = vld [vmem:[%s0 + $0x3a4] sm:$0xff]
  %v137 = vld [vmem:[%s0 + $0x3ac] sm:$0xff]
  %v138 = vld [vmem:[%s0 + $0x3b4] sm:$0xff]
  %v139 = vld [vmem:[%s0 + $0x3bc] sm:$0xff]
  %v140 = vld [vmem:[%s0 + $0x3c4] sm:$0xff]
  %v141 = vld [vmem:[%s0 + $0x3cc] sm:$0xff]
  %v142 = vld [vmem:[%s0 + $0x3d4] sm:$0xff]
  %v143 = vld [vmem:[%s0 + $0x3dc] sm:$0xff]
  %v144 = vld [vmem:[%s0 + $0x3e4] sm:$0xf]
  %v145 = vld [vmem:[%s0 + $0x3e8] sm:$0xff]
  %v146 = vld [vmem:[%s0 + $0x3f0] sm:$0xff]
  %v147 = vld [vmem:[%s0 + $0x3f8] sm:$0xff]
  %v148 = vld [vmem:[%s0 + $0x400] sm:$0xff]
  %v149 = vld [vmem:[%s0 + $0x408] sm:$0xff]
  %v150 = vld [vmem:[%s0 + $0x410] sm:$0xff]
  %v151 = vld [vmem:[%s0 + $0x418] sm:$0xff]
  %v152 = vld [vmem:[%s0 + $0x420] sm:$0xff]
  %v153 = vld [vmem:[%s0 + $0x428] sm:$0xff]
  %v154 = vld [vmem:[%s0 + $0x430] sm:$0xff]
  %v155 = vld [vmem:[%s0 + $0x438] sm:$0xff]
  %v156 = vld [vmem:[%s0 + $0x440] sm:$0xff]
  %v157 = vld [vmem:[%s0 + $0x448] sm:$0xf]
  %v158 = vld [vmem:[%s0 + $0x44c] sm:$0xff]
  %v159 = vld [vmem:[%s0 + $0x454] sm:$0xff]
  %v160 = vld [vmem:[%s0 + $0x45c] sm:$0xff]
  %v161 = vld [vmem:[%s0 + $0x464] sm:$0xff]
  %v162 = vld [vmem:[%s0 + $0x46c] sm:$0xff]
  %v163 = vld [vmem:[%s0 + $0x474] sm:$0xff]
  %v164 = vld [vmem:[%s0 + $0x47c] sm:$0xff]
  %v165 = vld [vmem:[%s0 + $0x484] sm:$0xff]
  %v166 = vld [vmem:[%s0 + $0x48c] sm:$0xff]
  %v167 = vld [vmem:[%s0 + $0x494] sm:$0xff]
  %v168 = vld [vmem:[%s0 + $0x49c] sm:$0xff]
  %v169 = vld [vmem:[%s0 + $0x4a4] sm:$0xff]
  %v170 = vld [vmem:[%s0 + $0x4ac] sm:$0xf]
  %v171 = vld [vmem:[%s0 + $0x4b0] sm:$0xff]
  %v172 = vld [vmem:[%s0 + $0x4b8] sm:$0xff]
  %v173 = vld [vmem:[%s0 + $0x4c0] sm:$0xff]
  %v174 = vld [vmem:[%s0 + $0x4c8] sm:$0xff]
  %v175 = vld [vmem:[%s0 + $0x4d0] sm:$0xff]
  %v176 = vld [vmem:[%s0 + $0x4d8] sm:$0xff]
  %v177 = vld [vmem:[%s0 + $0x4e0] sm:$0xff]
  %v178 = vld [vmem:[%s0 + $0x4e8] sm:$0xff]
  %v179 = vld [vmem:[%s0 + $0x4f0] sm:$0xff]
  %v180 = vld [vmem:[%s0 + $0x4f8] sm:$0xff]
  %v181 = vld [vmem:[%s0 + $0x500] sm:$0xff]
  %v182 = vld [vmem:[%s0 + $0x508] sm:$0xff]
  %v183 = vld [vmem:[%s0 + $0x510] sm:$0xf]
  %v184 = vld [vmem:[%s1] sm:$0xf]
  %v185 = vld [vmem:[%s1 + $0x4] sm:$0xf]
  %v186 = vld [vmem:[%s1 + $0x8] sm:$0xf]
  %v187 = vld [vmem:[%s1 + $0xc] sm:$0xf]
  %v188 = vld [vmem:[%s1 + $0x10] sm:$0xf]
  %v189 = vld [vmem:[%s1 + $0x14] sm:$0xf]
  %v190 = vld [vmem:[%s1 + $0x18] sm:$0xf]
  %v191 = vld [vmem:[%s1 + $0x1c] sm:$0xf]
  %v192 = vld [vmem:[%s1 + $0x20] sm:$0xf]
  %v193 = vld [vmem:[%s1 + $0x24] sm:$0xf]
  %v194 = vld [vmem:[%s1 + $0x28] sm:$0xf]
  %v195 = vld [vmem:[%s1 + $0x2c] sm:$0xf]
  %v196 = vld [vmem:[%s1 + $0x30] sm:$0xf]
  %v197 = vld [vmem:[%s1 + $0x34] sm:$0xf]
  %v198 = vld [vmem:[%s1 + $0x38] sm:$0xf]
  %v199 = vld [vmem:[%s1 + $0x3c] sm:$0xf]
  %v200 = vld [vmem:[%s1 + $0x40] sm:$0xf]
  %v201 = vld [vmem:[%s1 + $0x44] sm:$0xf]
  %v202 = vld [vmem:[%s1 + $0x48] sm:$0xf]
  %v203 = vld [vmem:[%s1 + $0x4c] sm:$0xf]
  %v204 = vld [vmem:[%s1 + $0x50] sm:$0xf]
  %v205 = vld [vmem:[%s1 + $0x54] sm:$0xf]
  %v206 = vld [vmem:[%s1 + $0x58] sm:$0xf]
  %v207 = vld [vmem:[%s1 + $0x5c] sm:$0xf]
  %v208 = vld [vmem:[%s1 + $0x60] sm:$0xf]
  %v209 = vld [vmem:[%s1 + $0x64] sm:$0xf]
  %v210 = vld [vmem:[%s1 + $0x68] sm:$0xf]
  %v211 = vld [vmem:[%s1 + $0x6c] sm:$0xf]
  %v212 = vld [vmem:[%s1 + $0x70] sm:$0xf]
  %v213 = vld [vmem:[%s1 + $0x74] sm:$0xf]
  %v214 = vld [vmem:[%s1 + $0x78] sm:$0xf]
  %v215 = vld [vmem:[%s1 + $0x7c] sm:$0xf]
  %v216 = vld [vmem:[%s1 + $0x80] sm:$0xf]
  %v217 = vld [vmem:[%s1 + $0x84] sm:$0xf]
  %v218 = vld [vmem:[%s1 + $0x88] sm:$0xf]
  %v219 = vld [vmem:[%s1 + $0x8c] sm:$0xf]
  %v220 = vld [vmem:[%s1 + $0x90] sm:$0xf]
  %v221 = vld [vmem:[%s1 + $0x94] sm:$0xf]
  %v222 = vld [vmem:[%s1 + $0x98] sm:$0xf]
  %v223 = vld [vmem:[%s1 + $0x9c] sm:$0xf]
  %v224 = vld [vmem:[%s1 + $0xa0] sm:$0xf]
  %v225 = vld [vmem:[%s1 + $0xa4] sm:$0xf]
  %v226 = vld [vmem:[%s1 + $0xa8] sm:$0xf]
  %v227 = vld [vmem:[%s1 + $0xac] sm:$0xf]
  %v228 = vld [vmem:[%s1 + $0xb0] sm:$0xf]
  %v229 = vld [vmem:[%s1 + $0xb4] sm:$0xf]
  %v230 = vld [vmem:[%s1 + $0xb8] sm:$0xf]
  %v231 = vld [vmem:[%s1 + $0xbc] sm:$0xf]
  %v232 = vld [vmem:[%s1 + $0xc0] sm:$0xf]
  %v233 = vld [vmem:[%s1 + $0xc4] sm:$0xf]
  %v234 = vld [vmem:[%s1 + $0xc8] sm:$0xf]
  %v235 = vld [vmem:[%s1 + $0xcc] sm:$0xf]
  %v236 = vld [vmem:[%s1 + $0xd0] sm:$0xf]
  %v237 = vld [vmem:[%s1 + $0xd4] sm:$0xf]
  %v238 = vld [vmem:[%s1 + $0xd8] sm:$0xf]
  %v239 = vld [vmem:[%s1 + $0xdc] sm:$0xf]
  %v240 = vld [vmem:[%s1 + $0xe0] sm:$0xf]
  %v241 = vld [vmem:[%s1 + $0xe4] sm:$0xf]
  %v242 = vld [vmem:[%s1 + $0xe8] sm:$0xf]
  %v243 = vld [vmem:[%s1 + $0xec] sm:$0xf]
  %v244 = vld [vmem:[%s1 + $0xf0] sm:$0xf]
  %v245 = vld [vmem:[%s1 + $0xf4] sm:$0xf]
  %v246 = vld [vmem:[%s1 + $0xf8] sm:$0xf]
  %v247 = vld [vmem:[%s1 + $0xfc] sm:$0xf]
  %v248 = vld [vmem:[%s1 + $0x100] sm:$0xf]
  %v249 = vld [vmem:[%s1 + $0x104] sm:$0xf]
  %v250 = vld [vmem:[%s1 + $0x108] sm:$0xf]
  %v251 = vld [vmem:[%s1 + $0x10c] sm:$0xf]
  %v252 = vld [vmem:[%s1 + $0x110] sm:$0xf]
  %v253 = vld [vmem:[%s1 + $0x114] sm:$0xf]
  %v254 = vld [vmem:[%s1 + $0x118] sm:$0xf]
  %v255 = vld [vmem:[%s1 + $0x11c] sm:$0xf]
  %v256 = vld [vmem:[%s1 + $0x120] sm:$0xf]
  %v257 = vld [vmem:[%s1 + $0x124] sm:$0xf]
  %v258 = vld [vmem:[%s1 + $0x128] sm:$0xf]
  %v259 = vld [vmem:[%s1 + $0x12c] sm:$0xf]
  %v260 = vld [vmem:[%s1 + $0x130] sm:$0xf]
  %v261 = vld [vmem:[%s1 + $0x134] sm:$0xf]
  %v262 = vld [vmem:[%s1 + $0x138] sm:$0xf]
  %v263 = vld [vmem:[%s1 + $0x13c] sm:$0xf]
  %v264 = vld [vmem:[%s1 + $0x140] sm:$0xf]
  %v265 = vld [vmem:[%s1 + $0x144] sm:$0xf]
  %v266 = vld [vmem:[%s1 + $0x148] sm:$0xf]
  %v267 = vld [vmem:[%s1 + $0x14c] sm:$0xf]
  %v268 = vld [vmem:[%s1 + $0x150] sm:$0xf]
  %v269 = vld [vmem:[%s1 + $0x154] sm:$0xf]
  %v270 = vld [vmem:[%s1 + $0x158] sm:$0xf]
  %v271 = vld [vmem:[%s1 + $0x15c] sm:$0xf]
  %v272 = vld [vmem:[%s1 + $0x160] sm:$0xf]
  %v273 = vld [vmem:[%s1 + $0x164] sm:$0xf]
  %v274 = vld [vmem:[%s1 + $0x168] sm:$0xf]
  %v275 = vld [vmem:[%s1 + $0x16c] sm:$0xf]
  %v276 = vld [vmem:[%s1 + $0x170] sm:$0xf]
  %v277 = vld [vmem:[%s1 + $0x174] sm:$0xf]
  %v278 = vld [vmem:[%s1 + $0x178] sm:$0xf]
  %v279 = vld [vmem:[%s1 + $0x17c] sm:$0xf]
  %v280 = vld [vmem:[%s1 + $0x180] sm:$0xf]
  %v281 = vld [vmem:[%s1 + $0x184] sm:$0xf]
  %v282 = vld [vmem:[%s1 + $0x188] sm:$0xf]
  %v283 = vld [vmem:[%s1 + $0x18c] sm:$0xf]
  %v284 = vld [vmem:[%s1 + $0x190] sm:$0xf]
  %v285 = vld [vmem:[%s1 + $0x194] sm:$0xf]
  %v286 = vld [vmem:[%s1 + $0x198] sm:$0xf]
  %v287 = vld [vmem:[%s1 + $0x19c] sm:$0xf]
  %v288 = vld [vmem:[%s1 + $0x1a0] sm:$0xf]
  %v289 = vld [vmem:[%s1 + $0x1a4] sm:$0xf]
  %v290 = vld [vmem:[%s1 + $0x1a8] sm:$0xf]
  %v291 = vld [vmem:[%s1 + $0x1ac] sm:$0xf]
  %v292 = vld [vmem:[%s1 + $0x1b0] sm:$0xf]
  %v293 = vld [vmem:[%s1 + $0x1b4] sm:$0xf]
  %v294 = vld [vmem:[%s1 + $0x1b8] sm:$0xf]
  %v295 = vld [vmem:[%s1 + $0x1bc] sm:$0xf]
  %v296 = vld [vmem:[%s1 + $0x1c0] sm:$0xf]
  %v297 = vld [vmem:[%s1 + $0x1c4] sm:$0xf]
  %v298 = vld [vmem:[%s1 + $0x1c8] sm:$0xf]
  %v299 = vld [vmem:[%s1 + $0x1cc] sm:$0xf]
  %v300 = vld [vmem:[%s1 + $0x1d0] sm:$0xf]
  %v301 = vld [vmem:[%s1 + $0x1d4] sm:$0xf]
  %v302 = vld [vmem:[%s1 + $0x1d8] sm:$0xf]
  %v303 = vld [vmem:[%s1 + $0x1dc] sm:$0xf]
  %v304 = vld [vmem:[%s1 + $0x1e0] sm:$0xf]
  %v305 = vld [vmem:[%s1 + $0x1e4] sm:$0xf]
  %v306 = vld [vmem:[%s1 + $0x1e8] sm:$0xf]
  %v307 = vld [vmem:[%s1 + $0x1ec] sm:$0xf]
  %v308 = vld [vmem:[%s1 + $0x1f0] sm:$0xf]
  %v309 = vld [vmem:[%s1 + $0x1f4] sm:$0xf]
  %v310 = vld [vmem:[%s1 + $0x1f8] sm:$0xf]
  %v311 = vld [vmem:[%s1 + $0x1fc] sm:$0xf]
  %v312 = vld [vmem:[%s1 + $0x200] sm:$0xf]
  %v313 = vld [vmem:[%s1 + $0x204] sm:$0xf]
  %v314 = vld [vmem:[%s1 + $0x208] sm:$0xf]
  %v315 = vld [vmem:[%s1 + $0x20c] sm:$0xf]
  %v316 = vld [vmem:[%s1 + $0x210] sm:$0xf]
  %v317 = vld [vmem:[%s1 + $0x214] sm:$0xf]
  %v318 = vld [vmem:[%s1 + $0x218] sm:$0xf]
  %v319 = vld [vmem:[%s1 + $0x21c] sm:$0xf]
  %v320 = vld [vmem:[%s1 + $0x220] sm:$0xf]
  %v321 = vld [vmem:[%s1 + $0x224] sm:$0xf]
  %v322 = vld [vmem:[%s1 + $0x228] sm:$0xf]
  %v323 = vld [vmem:[%s1 + $0x22c] sm:$0xf]
  %v324 = vld [vmem:[%s1 + $0x230] sm:$0xf]
  %v325 = vld [vmem:[%s1 + $0x234] sm:$0xf]
  %v326 = vld [vmem:[%s1 + $0x238] sm:$0xf]
  %v327 = vld [vmem:[%s1 + $0x23c] sm:$0xf]
  %v328 = vld [vmem:[%s1 + $0x240] sm:$0xf]
  %v329 = vld [vmem:[%s1 + $0x244] sm:$0xf]
  %v330 = vld [vmem:[%s1 + $0x248] sm:$0xf]
  %v331 = vld [vmem:[%s1 + $0x24c] sm:$0xf]
  %v332 = vld [vmem:[%s1 + $0x250] sm:$0xf]
  %v333 = vld [vmem:[%s1 + $0x254] sm:$0xf]
  %v334 = vld [vmem:[%s1 + $0x258] sm:$0xf]
  %v335 = vld [vmem:[%s1 + $0x25c] sm:$0xf]
  %v336 = vld [vmem:[%s1 + $0x260] sm:$0xf]
  %v337 = vld [vmem:[%s1 + $0x264] sm:$0xf]
  %v338 = vld [vmem:[%s1 + $0x268] sm:$0xf]
  %v339 = vld [vmem:[%s1 + $0x26c] sm:$0xf]
  %v340 = vld [vmem:[%s1 + $0x270] sm:$0xf]
  %v341 = vld [vmem:[%s1 + $0x274] sm:$0xf]
  %v342 = vld [vmem:[%s1 + $0x278] sm:$0xf]
  %v343 = vld [vmem:[%s1 + $0x27c] sm:$0xf]
  %v344 = vld [vmem:[%s1 + $0x280] sm:$0xf]
  %v345 = vld [vmem:[%s1 + $0x284] sm:$0xf]
  %v346 = vld [vmem:[%s1 + $0x288] sm:$0xf]
  %v347 = vld [vmem:[%s1 + $0x28c] sm:$0xf]
  %v348 = vld [vmem:[%s1 + $0x290] sm:$0xf]
  %v349 = vld [vmem:[%s1 + $0x294] sm:$0xf]
  %v350 = vld [vmem:[%s1 + $0x298] sm:$0xf]
  %v351 = vld [vmem:[%s1 + $0x29c] sm:$0xf]
  %v352 = vld [vmem:[%s1 + $0x2a0] sm:$0xf]
  %v353 = vld [vmem:[%s1 + $0x2a4] sm:$0xf]
  %v354 = vld [vmem:[%s1 + $0x2a8] sm:$0xf]
  %v355 = vld [vmem:[%s1 + $0x2ac] sm:$0xf]
  %v356 = vld [vmem:[%s1 + $0x2b0] sm:$0xf]
  %v357 = vld [vmem:[%s1 + $0x2b4] sm:$0xf]
  %v358 = vld [vmem:[%s1 + $0x2b8] sm:$0xf]
  %v359 = vld [vmem:[%s1 + $0x2bc] sm:$0xf]
  %v360 = vld [vmem:[%s1 + $0x2c0] sm:$0xf]
  %v361 = vld [vmem:[%s1 + $0x2c4] sm:$0xf]
  %v362 = vld [vmem:[%s1 + $0x2c8] sm:$0xf]
  %v363 = vld [vmem:[%s1 + $0x2cc] sm:$0xf]
  %v364 = vld [vmem:[%s1 + $0x2d0] sm:$0xf]
  %v365 = vld [vmem:[%s1 + $0x2d4] sm:$0xf]
  %v366 = vld [vmem:[%s1 + $0x2d8] sm:$0xf]
  %v367 = vld [vmem:[%s1 + $0x2dc] sm:$0xf]
  %v368 = vld [vmem:[%s1 + $0x2e0] sm:$0xf]
  %v369 = vld [vmem:[%s1 + $0x2e4] sm:$0xf]
  %v370 = vld [vmem:[%s1 + $0x2e8] sm:$0xf]
  %v371 = vld [vmem:[%s1 + $0x2ec] sm:$0xf]
  %v372 = vld [vmem:[%s1 + $0x2f0] sm:$0xf]
  %v373 = vld [vmem:[%s1 + $0x2f4] sm:$0xf]
  %v374 = vld [vmem:[%s1 + $0x2f8] sm:$0xf]
  %v375 = vld [vmem:[%s1 + $0x2fc] sm:$0xf]
  %v376 = vld [vmem:[%s1 + $0x300] sm:$0xf]
  %v377 = vld [vmem:[%s1 + $0x304] sm:$0xf]
  %v378 = vld [vmem:[%s1 + $0x308] sm:$0xf]
  %v379 = vld [vmem:[%s1 + $0x30c] sm:$0xf]
  %v380 = vld [vmem:[%s1 + $0x310] sm:$0xf]
  %v381 = vld [vmem:[%s1 + $0x314] sm:$0xf]
  %v382 = vld [vmem:[%s1 + $0x318] sm:$0xf]
  %v383 = vld [vmem:[%s1 + $0x31c] sm:$0xf]
  %v384 = vld [vmem:[%s1 + $0x320] sm:$0xf]
  %v385 = vld [vmem:[%s1 + $0x324] sm:$0xf]
  %v386 = vld [vmem:[%s1 + $0x328] sm:$0xf]
  %v387 = vld [vmem:[%s1 + $0x32c] sm:$0xf]
  %v388 = vld [vmem:[%s1 + $0x330] sm:$0xf]
  %v389 = vld [vmem:[%s1 + $0x334] sm:$0xf]
  %v390 = vld [vmem:[%s1 + $0x338] sm:$0xf]
  %v391 = vld [vmem:[%s1 + $0x33c] sm:$0xf]
  %v392 = vld [vmem:[%s1 + $0x340] sm:$0xf]
  %v393 = vld [vmem:[%s1 + $0x344] sm:$0xf]
  %v394 = vld [vmem:[%s1 + $0x348] sm:$0xf]
  %v395 = vld [vmem:[%s1 + $0x34c] sm:$0xf]
  %v396 = vld [vmem:[%s1 + $0x350] sm:$0xf]
  %v397 = vld [vmem:[%s1 + $0x354] sm:$0xf]
  %v398 = vld [vmem:[%s1 + $0x358] sm:$0xf]
  %v399 = vld [vmem:[%s1 + $0x35c] sm:$0xf]
  %v400 = vld [vmem:[%s1 + $0x360] sm:$0xf]
  %v401 = vld [vmem:[%s1 + $0x364] sm:$0xf]
  %v402 = vld [vmem:[%s1 + $0x368] sm:$0xf]
  %v403 = vld [vmem:[%s1 + $0x36c] sm:$0xf]
  %v404 = vld [vmem:[%s1 + $0x370] sm:$0xf]
  %v405 = vld [vmem:[%s1 + $0x374] sm:$0xf]
  %v406 = vld [vmem:[%s1 + $0x378] sm:$0xf]
  %v407 = vld [vmem:[%s1 + $0x37c] sm:$0xf]
  %v408 = vld [vmem:[%s1 + $0x380] sm:$0xf]
  %v409 = vld [vmem:[%s1 + $0x384] sm:$0xf]
  %v410 = vld [vmem:[%s1 + $0x388] sm:$0xf]
  %v411 = vld [vmem:[%s1 + $0x38c] sm:$0xf]
  %v412 = vld [vmem:[%s1 + $0x390] sm:$0xf]
  %v413 = vld [vmem:[%s1 + $0x394] sm:$0xf]
  %v414 = vld [vmem:[%s1 + $0x398] sm:$0xf]
  %v415 = vld [vmem:[%s1 + $0x39c] sm:$0xf]
  %v416 = vld [vmem:[%s1 + $0x3a0] sm:$0xf]
  %v417 = vld [vmem:[%s1 + $0x3a4] sm:$0xf]
  %v418 = vld [vmem:[%s1 + $0x3a8] sm:$0xf]
  %v419 = vld [vmem:[%s1 + $0x3ac] sm:$0xf]
  %v420 = vld [vmem:[%s1 + $0x3b0] sm:$0xf]
  %v421 = vld [vmem:[%s1 + $0x3b4] sm:$0xf]
  %v422 = vld [vmem:[%s1 + $0x3b8] sm:$0xf]
  %v423 = vld [vmem:[%s1 + $0x3bc] sm:$0xf]
  %v424 = vld [vmem:[%s1 + $0x3c0] sm:$0xf]
  %v425 = vld [vmem:[%s1 + $0x3c4] sm:$0xf]
  %v426 = vld [vmem:[%s1 + $0x3c8] sm:$0xf]
  %v427 = vld [vmem:[%s1 + $0x3cc] sm:$0xf]
  %v428 = vld [vmem:[%s1 + $0x3d0] sm:$0xf]
  %v429 = vld [vmem:[%s1 + $0x3d4] sm:$0xf]
  %v430 = vld [vmem:[%s1 + $0x3d8] sm:$0xf]
  %v431 = vld [vmem:[%s1 + $0x3dc] sm:$0xf]
  %v432 = vld [vmem:[%s1 + $0x3e0] sm:$0xf]
  %v433 = vld [vmem:[%s1 + $0x3e4] sm:$0xf]
  %v434 = vld [vmem:[%s1 + $0x3e8] sm:$0xf]
  %v435 = vld [vmem:[%s1 + $0x3ec] sm:$0xf]
  %v436 = vld [vmem:[%s1 + $0x3f0] sm:$0xf]
  %v437 = vld [vmem:[%s1 + $0x3f4] sm:$0xf]
  %v438 = vld [vmem:[%s1 + $0x3f8] sm:$0xf]
  %v439 = vld [vmem:[%s1 + $0x3fc] sm:$0xf]
  %v440 = vld [vmem:[%s1 + $0x400] sm:$0xf]
  %v441 = vld [vmem:[%s1 + $0x404] sm:$0xf]
  %v442 = vld [vmem:[%s1 + $0x408] sm:$0xf]
  %v443 = vld [vmem:[%s1 + $0x40c] sm:$0xf]
  %v444 = vld [vmem:[%s1 + $0x410] sm:$0xf]
  %v445 = vld [vmem:[%s1 + $0x414] sm:$0xf]
  %v446 = vld [vmem:[%s1 + $0x418] sm:$0xf]
  %v447 = vld [vmem:[%s1 + $0x41c] sm:$0xf]
  %v448 = vld [vmem:[%s1 + $0x420] sm:$0xf]
  %v449 = vld [vmem:[%s1 + $0x424] sm:$0xf]
  %v450 = vld [vmem:[%s1 + $0x428] sm:$0xf]
  %v451 = vld [vmem:[%s1 + $0x42c] sm:$0xf]
  %v452 = vld [vmem:[%s1 + $0x430] sm:$0xf]
  %v453 = vld [vmem:[%s1 + $0x434] sm:$0xf]
  %v454 = vld [vmem:[%s1 + $0x438] sm:$0xf]
  %v455 = vld [vmem:[%s1 + $0x43c] sm:$0xf]
  %v456 = vld [vmem:[%s1 + $0x440] sm:$0xf]
  %v457 = vld [vmem:[%s1 + $0x444] sm:$0xf]
  %v458 = vld [vmem:[%s1 + $0x448] sm:$0xf]
  %v459 = vld [vmem:[%s1 + $0x44c] sm:$0xf]
  %v460 = vld [vmem:[%s1 + $0x450] sm:$0xf]
  %v461 = vld [vmem:[%s1 + $0x454] sm:$0xf]
  %v462 = vld [vmem:[%s1 + $0x458] sm:$0xf]
  %v463 = vld [vmem:[%s1 + $0x45c] sm:$0xf]
  %v464 = vld [vmem:[%s1 + $0x460] sm:$0xf]
  %v465 = vld [vmem:[%s1 + $0x464] sm:$0xf]
  %v466 = vld [vmem:[%s1 + $0x468] sm:$0xf]
  %v467 = vld [vmem:[%s1 + $0x46c] sm:$0xf]
  %v468 = vld [vmem:[%s1 + $0x470] sm:$0xf]
  %v469 = vld [vmem:[%s1 + $0x474] sm:$0xf]
  %v470 = vld [vmem:[%s1 + $0x478] sm:$0xf]
  %v471 = vld [vmem:[%s1 + $0x47c] sm:$0xf]
  %v472 = vld [vmem:[%s1 + $0x480] sm:$0xf]
  %v473 = vld [vmem:[%s1 + $0x484] sm:$0xf]
  %v474 = vld [vmem:[%s1 + $0x488] sm:$0xf]
  %v475 = vld [vmem:[%s1 + $0x48c] sm:$0xf]
  %v476 = vld [vmem:[%s1 + $0x490] sm:$0xf]
  %v477 = vld [vmem:[%s1 + $0x494] sm:$0xf]
  %v478 = vld [vmem:[%s1 + $0x498] sm:$0xf]
  %v479 = vld [vmem:[%s1 + $0x49c] sm:$0xf]
  %v480 = vld [vmem:[%s1 + $0x4a0] sm:$0xf]
  %v481 = vld [vmem:[%s1 + $0x4a4] sm:$0xf]
  %v482 = vld [vmem:[%s1 + $0x4a8] sm:$0xf]
  %v483 = vld [vmem:[%s1 + $0x4ac] sm:$0xf]
  %v484 = vld [vmem:[%s1 + $0x4b0] sm:$0xf]
  %v485 = vld [vmem:[%s1 + $0x4b4] sm:$0xf]
  %v486 = vld [vmem:[%s1 + $0x4b8] sm:$0xf]
  %v487 = vld [vmem:[%s1 + $0x4bc] sm:$0xf]
  %v488 = vld [vmem:[%s1 + $0x4c0] sm:$0xf]
  %v489 = vld [vmem:[%s1 + $0x4c4] sm:$0xf]
  %v490 = vld [vmem:[%s1 + $0x4c8] sm:$0xf]
  %v491 = vld [vmem:[%s1 + $0x4cc] sm:$0xf]
  %v492 = vld [vmem:[%s1 + $0x4d0] sm:$0xf]
  %v493 = vld [vmem:[%s1 + $0x4d4] sm:$0xf]
  %v494 = vld [vmem:[%s1 + $0x4d8] sm:$0xf]
  %v495 = vld [vmem:[%s1 + $0x4dc] sm:$0xf]
  %v496 = vld [vmem:[%s1 + $0x4e0] sm:$0xf]
  %v497 = vld [vmem:[%s1 + $0x4e4] sm:$0xf]
  %v498 = vld [vmem:[%s1 + $0x4e8] sm:$0xf]
  %v499 = vld [vmem:[%s1 + $0x4ec] sm:$0xf]
  %v500 = vld [vmem:[%s1 + $0x4f0] sm:$0xf]
  %v501 = vld [vmem:[%s1 + $0x4f4] sm:$0xf]
  %v502 = vld [vmem:[%s1 + $0x4f8] sm:$0xf]
  %v503 = vld [vmem:[%s1 + $0x4fc] sm:$0xf]
  %v504 = vld [vmem:[%s1 + $0x500] sm:$0xf]
  %v505 = vld [vmem:[%s1 + $0x504] sm:$0xf]
  %v506 = vld [vmem:[%s1 + $0x508] sm:$0xf]
  %v507 = vld [vmem:[%s1 + $0x50c] sm:$0xf]
  %v508 = vld [vmem:[%s1 + $0x510] sm:$0xf]
  %v509 = vld [vmem:[%s1 + $0x514] sm:$0xf]
  %v510 = vld [vmem:[%s1 + $0x518] sm:$0xf]
  %v511 = vld [vmem:[%s1 + $0x51c] sm:$0xf]
  %v512 = vld [vmem:[%s1 + $0x520] sm:$0xf]
  %v513 = vld [vmem:[%s1 + $0x524] sm:$0xf]
  %v514 = vld [vmem:[%s1 + $0x528] sm:$0xf]
  %v515 = vld [vmem:[%s1 + $0x52c] sm:$0xf]
  %v516 = vld [vmem:[%s1 + $0x530] sm:$0xf]
  %v517 = vld [vmem:[%s1 + $0x534] sm:$0xf]
  %v518 = vld [vmem:[%s1 + $0x538] sm:$0xf]
  %v519 = vld [vmem:[%s1 + $0x53c] sm:$0xf]
  %v520 = vld [vmem:[%s1 + $0x540] sm:$0xf]
  %v521 = vld [vmem:[%s1 + $0x544] sm:$0xf]
  %v522 = vld [vmem:[%s1 + $0x548] sm:$0xf]
  %v523 = vld [vmem:[%s1 + $0x54c] sm:$0xf]
  %v524 = vld [vmem:[%s1 + $0x550] sm:$0xf]
  %v525 = vld [vmem:[%s1 + $0x554] sm:$0xf]
  %v526 = vld [vmem:[%s1 + $0x558] sm:$0xf]
  %v527 = vld [vmem:[%s1 + $0x55c] sm:$0xf]
  %v528 = vld [vmem:[%s1 + $0x560] sm:$0xf]
  %v529 = vld [vmem:[%s1 + $0x564] sm:$0xf]
  %v530 = vld [vmem:[%s1 + $0x568] sm:$0xf]
  %v531 = vld [vmem:[%s1 + $0x56c] sm:$0xf]
  %v532 = vld [vmem:[%s1 + $0x570] sm:$0xf]
  %v533 = vld [vmem:[%s1 + $0x574] sm:$0xf]
  %v534 = vld [vmem:[%s1 + $0x578] sm:$0xf]
  %v535 = vld [vmem:[%s1 + $0x57c] sm:$0xf]
  %v536 = vld [vmem:[%s1 + $0x580] sm:$0xf]
  %v537 = vld [vmem:[%s1 + $0x584] sm:$0xf]
  %v538 = vld [vmem:[%s1 + $0x588] sm:$0xf]
  %v539 = vld [vmem:[%s1 + $0x58c] sm:$0xf]
  %v540 = vld [vmem:[%s1 + $0x590] sm:$0xf]
  %v541 = vld [vmem:[%s1 + $0x594] sm:$0xf]
  %v542 = vld [vmem:[%s1 + $0x598] sm:$0xf]
  %v543 = vld [vmem:[%s1 + $0x59c] sm:$0xf]
  %v544 = vld [vmem:[%s1 + $0x5a0] sm:$0xf]
  %v545 = vld [vmem:[%s1 + $0x5a4] sm:$0xf]
  %v546 = vld [vmem:[%s1 + $0x5a8] sm:$0xf]
  %v547 = vld [vmem:[%s1 + $0x5ac] sm:$0xf]
  %v548 = vld [vmem:[%s1 + $0x5b0] sm:$0xf]
  %v549 = vld [vmem:[%s1 + $0x5b4] sm:$0xf]
  %v550 = vld [vmem:[%s1 + $0x5b8] sm:$0xf]
  %v551 = vld [vmem:[%s1 + $0x5bc] sm:$0xf]
  %v552 = vld [vmem:[%s1 + $0x5c0] sm:$0xf]
  %v553 = vld [vmem:[%s1 + $0x5c4] sm:$0xf]
  %v554 = vld [vmem:[%s1 + $0x5c8] sm:$0xf]
  %v555 = vld [vmem:[%s1 + $0x5cc] sm:$0xf]
  %v556 = vld [vmem:[%s1 + $0x5d0] sm:$0xf]
  %v557 = vld [vmem:[%s1 + $0x5d4] sm:$0xf]
  %v558 = vld [vmem:[%s1 + $0x5d8] sm:$0xf]
  %v559 = vld [vmem:[%s1 + $0x5dc] sm:$0xf]
  %v560 = vld [vmem:[%s1 + $0x5e0] sm:$0xf]
  %v561 = vld [vmem:[%s1 + $0x5e4] sm:$0xf]
  %v562 = vld [vmem:[%s1 + $0x5e8] sm:$0xf]
  %v563 = vld [vmem:[%s1 + $0x5ec] sm:$0xf]
  %v564 = vld [vmem:[%s1 + $0x5f0] sm:$0xf]
  %v565 = vld [vmem:[%s1 + $0x5f4] sm:$0xf]
  %v566 = vld [vmem:[%s1 + $0x5f8] sm:$0xf]
  %v567 = vld [vmem:[%s1 + $0x5fc] sm:$0xf]
  %v568 = vld [vmem:[%s1 + $0x600] sm:$0xf]
  %v569 = vld [vmem:[%s1 + $0x604] sm:$0xf]
  %v570 = vld [vmem:[%s1 + $0x608] sm:$0xf]
  %v571 = vld [vmem:[%s1 + $0x60c] sm:$0xf]
  %v572 = vld [vmem:[%s1 + $0x610] sm:$0xf]
  %v573 = vld [vmem:[%s1 + $0x614] sm:$0xf]
  %v574 = vld [vmem:[%s1 + $0x618] sm:$0xf]
  %v575 = vld [vmem:[%s1 + $0x61c] sm:$0xf]
  %v576 = vld [vmem:[%s1 + $0x620] sm:$0xf]
  %v577 = vld [vmem:[%s1 + $0x624] sm:$0xf]
  %v578 = vld [vmem:[%s1 + $0x628] sm:$0xf]
  %v579 = vld [vmem:[%s1 + $0x62c] sm:$0xf]
  %v580 = vld [vmem:[%s1 + $0x630] sm:$0xf]
  %v581 = vld [vmem:[%s1 + $0x634] sm:$0xf]
  %v582 = vld [vmem:[%s1 + $0x638] sm:$0xf]
  %v583 = vld [vmem:[%s1 + $0x63c] sm:$0xf]
  %v584 = vld [vmem:[%s2] sm:$0x1]
  %v586 = vlaneseq
  %v587 = vshrl.u32 %v586, 7
  %v588 = vsub.s32 0, %v587
  %v589 = vrot.slane %v584, %v588
  %v760 = vunpack.c.l.b16 %v15
  %v761 = vunpack.c.h.b16 %v15
  %v762 = vunpack.c.l.b16 %v16
  %v763 = vunpack.c.h.b16 %v16
  %v764 = vunpack.c.l.b16 %v17
  %v765 = vunpack.c.h.b16 %v17
  %v766 = vunpack.c.l.b16 %v18
  %v767 = vunpack.c.h.b16 %v18
  %v768 = vunpack.c.l.b16 %v19
  %v769 = vunpack.c.h.b16 %v19
  %v770 = vunpack.c.l.b16 %v20
  %v771 = vunpack.c.h.b16 %v20
  %v772 = vunpack.c.l.b16 %v21
  %v773 = vunpack.c.h.b16 %v21
  %v774 = vunpack.c.l.b16 %v22
  %v775 = vunpack.c.h.b16 %v22
  %v776 = vunpack.c.l.b16 %v23
  %v777 = vunpack.c.h.b16 %v23
  %v778 = vunpack.c.l.b16 %v24
  %v779 = vunpack.c.h.b16 %v24
  %v780 = vunpack.c.l.b16 %v25
  %v781 = vunpack.c.h.b16 %v25
  %v782 = vunpack.c.l.b16 %v26
  %v783 = vunpack.c.h.b16 %v26
  %v784 = vunpack.c.l.b16 %v27
  %v785 = vunpack.c.l.b16 %v28
  %v786 = vunpack.c.h.b16 %v28
  %v787 = vunpack.c.l.b16 %v29
  %v788 = vunpack.c.h.b16 %v29
  %v789 = vunpack.c.l.b16 %v30
  %v790 = vunpack.c.h.b16 %v30
  %v791 = vunpack.c.l.b16 %v31
  %v792 = vunpack.c.h.b16 %v31
  %v793 = vunpack.c.l.b16 %v32
  %v794 = vunpack.c.h.b16 %v32
  %v795 = vunpack.c.l.b16 %v33
  %v796 = vunpack.c.h.b16 %v33
  %v797 = vunpack.c.l.b16 %v34
  %v798 = vunpack.c.h.b16 %v34
  %v799 = vunpack.c.l.b16 %v35
  %v800 = vunpack.c.h.b16 %v35
  %v801 = vunpack.c.l.b16 %v36
  %v802 = vunpack.c.h.b16 %v36
  %v803 = vunpack.c.l.b16 %v37
  %v804 = vunpack.c.h.b16 %v37
  %v805 = vunpack.c.l.b16 %v38
  %v806 = vunpack.c.h.b16 %v38
  %v807 = vunpack.c.l.b16 %v39
  %v808 = vunpack.c.h.b16 %v39
  %v809 = vunpack.c.l.b16 %v40
  %v810 = vunpack.c.l.b16 %v41
  %v811 = vunpack.c.h.b16 %v41
  %v812 = vunpack.c.l.b16 %v42
  %v813 = vunpack.c.h.b16 %v42
  %v814 = vunpack.c.l.b16 %v43
  %v815 = vunpack.c.h.b16 %v43
  %v816 = vunpack.c.l.b16 %v44
  %v817 = vunpack.c.h.b16 %v44
  %v818 = vunpack.c.l.b16 %v45
  %v819 = vunpack.c.h.b16 %v45
  %v820 = vunpack.c.l.b16 %v46
  %v821 = vunpack.c.h.b16 %v46
  %v822 = vunpack.c.l.b16 %v47
  %v823 = vunpack.c.h.b16 %v47
  %v824 = vunpack.c.l.b16 %v48
  %v825 = vunpack.c.h.b16 %v48
  %v826 = vunpack.c.l.b16 %v49
  %v827 = vunpack.c.h.b16 %v49
  %v828 = vunpack.c.l.b16 %v50
  %v829 = vunpack.c.h.b16 %v50
  %v830 = vunpack.c.l.b16 %v51
  %v831 = vunpack.c.h.b16 %v51
  %v832 = vunpack.c.l.b16 %v52
  %v833 = vunpack.c.h.b16 %v52
  %v834 = vunpack.c.l.b16 %v53
  %v835 = vunpack.c.l.b16 %v54
  %v836 = vunpack.c.h.b16 %v54
  %v837 = vunpack.c.l.b16 %v55
  %v838 = vunpack.c.h.b16 %v55
  %v839 = vunpack.c.l.b16 %v56
  %v840 = vunpack.c.h.b16 %v56
  %v841 = vunpack.c.l.b16 %v57
  %v842 = vunpack.c.h.b16 %v57
  %v843 = vunpack.c.l.b16 %v58
  %v844 = vunpack.c.h.b16 %v58
  %v845 = vunpack.c.l.b16 %v59
  %v846 = vunpack.c.h.b16 %v59
  %v847 = vunpack.c.l.b16 %v60
  %v848 = vunpack.c.h.b16 %v60
  %v849 = vunpack.c.l.b16 %v61
  %v850 = vunpack.c.h.b16 %v61
  %v851 = vunpack.c.l.b16 %v62
  %v852 = vunpack.c.h.b16 %v62
  %v853 = vunpack.c.l.b16 %v63
  %v854 = vunpack.c.h.b16 %v63
  %v855 = vunpack.c.l.b16 %v64
  %v856 = vunpack.c.h.b16 %v64
  %v857 = vunpack.c.l.b16 %v65
  %v858 = vunpack.c.h.b16 %v65
  %v859 = vunpack.c.l.b16 %v66
  %v860 = vunpack.c.l.b16 %v67
  %v861 = vunpack.c.h.b16 %v67
  %v862 = vunpack.c.l.b16 %v68
  %v863 = vunpack.c.h.b16 %v68
  %v864 = vunpack.c.l.b16 %v69
  %v865 = vunpack.c.h.b16 %v69
  %v866 = vunpack.c.l.b16 %v70
  %v867 = vunpack.c.h.b16 %v70
  %v868 = vunpack.c.l.b16 %v71
  %v869 = vunpack.c.h.b16 %v71
  %v870 = vunpack.c.l.b16 %v72
  %v871 = vunpack.c.h.b16 %v72
  %v872 = vunpack.c.l.b16 %v73
  %v873 = vunpack.c.h.b16 %v73
  %v874 = vunpack.c.l.b16 %v74
  %v875 = vunpack.c.h.b16 %v74
  %v876 = vunpack.c.l.b16 %v75
  %v877 = vunpack.c.h.b16 %v75
  %v878 = vunpack.c.l.b16 %v76
  %v879 = vunpack.c.h.b16 %v76
  %v880 = vunpack.c.l.b16 %v77
  %v881 = vunpack.c.h.b16 %v77
  %v882 = vunpack.c.l.b16 %v78
  %v883 = vunpack.c.h.b16 %v78
  %v884 = vunpack.c.l.b16 %v79
  %v885 = vunpack.c.l.b16 %v80
  %v886 = vunpack.c.h.b16 %v80
  %v887 = vunpack.c.l.b16 %v81
  %v888 = vunpack.c.h.b16 %v81
  %v889 = vunpack.c.l.b16 %v82
  %v890 = vunpack.c.h.b16 %v82
  %v891 = vunpack.c.l.b16 %v83
  %v892 = vunpack.c.h.b16 %v83
  %v893 = vunpack.c.l.b16 %v84
  %v894 = vunpack.c.h.b16 %v84
  %v895 = vunpack.c.l.b16 %v85
  %v896 = vunpack.c.h.b16 %v85
  %v897 = vunpack.c.l.b16 %v86
  %v898 = vunpack.c.h.b16 %v86
  %v899 = vunpack.c.l.b16 %v87
  %v900 = vunpack.c.h.b16 %v87
  %v901 = vunpack.c.l.b16 %v88
  %v902 = vunpack.c.h.b16 %v88
  %v903 = vunpack.c.l.b16 %v89
  %v904 = vunpack.c.h.b16 %v89
  %v905 = vunpack.c.l.b16 %v90
  %v906 = vunpack.c.h.b16 %v90
  %v907 = vunpack.c.l.b16 %v91
  %v908 = vunpack.c.h.b16 %v91
  %v909 = vunpack.c.l.b16 %v92
  %v910 = vunpack.c.l.b16 %v93
  %v911 = vunpack.c.h.b16 %v93
  %v912 = vunpack.c.l.b16 %v94
  %v913 = vunpack.c.h.b16 %v94
  %v914 = vunpack.c.l.b16 %v95
  %v915 = vunpack.c.h.b16 %v95
  %v916 = vunpack.c.l.b16 %v96
  %v917 = vunpack.c.h.b16 %v96
  %v918 = vunpack.c.l.b16 %v97
  %v919 = vunpack.c.h.b16 %v97
  %v920 = vunpack.c.l.b16 %v98
  %v921 = vunpack.c.h.b16 %v98
  %v922 = vunpack.c.l.b16 %v99
  %v923 = vunpack.c.h.b16 %v99
  %v924 = vunpack.c.l.b16 %v100
  %v925 = vunpack.c.h.b16 %v100
  %v926 = vunpack.c.l.b16 %v101
  %v927 = vunpack.c.h.b16 %v101
  %v928 = vunpack.c.l.b16 %v102
  %v929 = vunpack.c.h.b16 %v102
  %v930 = vunpack.c.l.b16 %v103
  %v931 = vunpack.c.h.b16 %v103
  %v932 = vunpack.c.l.b16 %v104
  %v933 = vunpack.c.h.b16 %v104
  %v934 = vunpack.c.l.b16 %v105
  %v935 = vunpack.c.l.b16 %v106
  %v936 = vunpack.c.h.b16 %v106
  %v937 = vunpack.c.l.b16 %v107
  %v938 = vunpack.c.h.b16 %v107
  %v939 = vunpack.c.l.b16 %v108
  %v940 = vunpack.c.h.b16 %v108
  %v941 = vunpack.c.l.b16 %v109
  %v942 = vunpack.c.h.b16 %v109
  %v943 = vunpack.c.l.b16 %v110
  %v944 = vunpack.c.h.b16 %v110
  %v945 = vunpack.c.l.b16 %v111
  %v946 = vunpack.c.h.b16 %v111
  %v947 = vunpack.c.l.b16 %v112
  %v948 = vunpack.c.h.b16 %v112
  %v949 = vunpack.c.l.b16 %v113
  %v950 = vunpack.c.h.b16 %v113
  %v951 = vunpack.c.l.b16 %v114
  %v952 = vunpack.c.h.b16 %v114
  %v953 = vunpack.c.l.b16 %v115
  %v954 = vunpack.c.h.b16 %v115
  %v955 = vunpack.c.l.b16 %v116
  %v956 = vunpack.c.h.b16 %v116
  %v957 = vunpack.c.l.b16 %v117
  %v958 = vunpack.c.h.b16 %v117
  %v959 = vunpack.c.l.b16 %v118
  %v960 = vunpack.c.l.b16 %v119
  %v961 = vunpack.c.h.b16 %v119
  %v962 = vunpack.c.l.b16 %v120
  %v963 = vunpack.c.h.b16 %v120
  %v964 = vunpack.c.l.b16 %v121
  %v965 = vunpack.c.h.b16 %v121
  %v966 = vunpack.c.l.b16 %v122
  %v967 = vunpack.c.h.b16 %v122
  %v968 = vunpack.c.l.b16 %v123
  %v969 = vunpack.c.h.b16 %v123
  %v970 = vunpack.c.l.b16 %v124
  %v971 = vunpack.c.h.b16 %v124
  %v972 = vunpack.c.l.b16 %v125
  %v973 = vunpack.c.h.b16 %v125
  %v974 = vunpack.c.l.b16 %v126
  %v975 = vunpack.c.h.b16 %v126
  %v976 = vunpack.c.l.b16 %v127
  %v977 = vunpack.c.h.b16 %v127
  %v978 = vunpack.c.l.b16 %v128
  %v979 = vunpack.c.h.b16 %v128
  %v980 = vunpack.c.l.b16 %v129
  %v981 = vunpack.c.h.b16 %v129
  %v982 = vunpack.c.l.b16 %v130
  %v983 = vunpack.c.h.b16 %v130
  %v984 = vunpack.c.l.b16 %v131
  %v985 = vunpack.c.l.b16 %v132
  %v986 = vunpack.c.h.b16 %v132
  %v987 = vunpack.c.l.b16 %v133
  %v988 = vunpack.c.h.b16 %v133
  %v989 = vunpack.c.l.b16 %v134
  %v990 = vunpack.c.h.b16 %v134
  %v991 = vunpack.c.l.b16 %v135
  %v992 = vunpack.c.h.b16 %v135
  %v993 = vunpack.c.l.b16 %v136
  %v994 = vunpack.c.h.b16 %v136
  %v995 = vunpack.c.l.b16 %v137
  %v996 = vunpack.c.h.b16 %v137
  %v997 = vunpack.c.l.b16 %v138
  %v998 = vunpack.c.h.b16 %v138
  %v999 = vunpack.c.l.b16 %v139
  %v1000 = vunpack.c.h.b16 %v139
  %v1001 = vunpack.c.l.b16 %v140
  %v1002 = vunpack.c.h.b16 %v140
  %v1003 = vunpack.c.l.b16 %v141
  %v1004 = vunpack.c.h.b16 %v141
  %v1005 = vunpack.c.l.b16 %v142
  %v1006 = vunpack.c.h.b16 %v142
  %v1007 = vunpack.c.l.b16 %v143
  %v1008 = vunpack.c.h.b16 %v143
  %v1009 = vunpack.c.l.b16 %v144
  %v1010 = vunpack.c.l.b16 %v145
  %v1011 = vunpack.c.h.b16 %v145
  %v1012 = vunpack.c.l.b16 %v146
  %v1013 = vunpack.c.h.b16 %v146
  %v1014 = vunpack.c.l.b16 %v147
  %v1015 = vunpack.c.h.b16 %v147
  %v1016 = vunpack.c.l.b16 %v148
  %v1017 = vunpack.c.h.b16 %v148
  %v1018 = vunpack.c.l.b16 %v149
  %v1019 = vunpack.c.h.b16 %v149
  %v1020 = vunpack.c.l.b16 %v150
  %v1021 = vunpack.c.h.b16 %v150
  %v1022 = vunpack.c.l.b16 %v151
  %v1023 = vunpack.c.h.b16 %v151
  %v1024 = vunpack.c.l.b16 %v152
  %v1025 = vunpack.c.h.b16 %v152
  %v1026 = vunpack.c.l.b16 %v153
  %v1027 = vunpack.c.h.b16 %v153
  %v1028 = vunpack.c.l.b16 %v154
  %v1029 = vunpack.c.h.b16 %v154
  %v1030 = vunpack.c.l.b16 %v155
  %v1031 = vunpack.c.h.b16 %v155
  %v1032 = vunpack.c.l.b16 %v156
  %v1033 = vunpack.c.h.b16 %v156
  %v1034 = vunpack.c.l.b16 %v157
  %v1035 = vunpack.c.l.b16 %v158
  %v1036 = vunpack.c.h.b16 %v158
  %v1037 = vunpack.c.l.b16 %v159
  %v1038 = vunpack.c.h.b16 %v159
  %v1039 = vunpack.c.l.b16 %v160
  %v1040 = vunpack.c.h.b16 %v160
  %v1041 = vunpack.c.l.b16 %v161
  %v1042 = vunpack.c.h.b16 %v161
  %v1043 = vunpack.c.l.b16 %v162
  %v1044 = vunpack.c.h.b16 %v162
  %v1045 = vunpack.c.l.b16 %v163
  %v1046 = vunpack.c.h.b16 %v163
  %v1047 = vunpack.c.l.b16 %v164
  %v1048 = vunpack.c.h.b16 %v164
  %v1049 = vunpack.c.l.b16 %v165
  %v1050 = vunpack.c.h.b16 %v165
  %v1051 = vunpack.c.l.b16 %v166
  %v1052 = vunpack.c.h.b16 %v166
  %v1053 = vunpack.c.l.b16 %v167
  %v1054 = vunpack.c.h.b16 %v167
  %v1055 = vunpack.c.l.b16 %v168
  %v1056 = vunpack.c.h.b16 %v168
  %v1057 = vunpack.c.l.b16 %v169
  %v1058 = vunpack.c.h.b16 %v169
  %v1059 = vunpack.c.l.b16 %v170
  %v1060 = vunpack.c.l.b16 %v171
  %v1061 = vunpack.c.h.b16 %v171
  %v1062 = vunpack.c.l.b16 %v172
  %v1063 = vunpack.c.h.b16 %v172
  %v1064 = vunpack.c.l.b16 %v173
  %v1065 = vunpack.c.h.b16 %v173
  %v1066 = vunpack.c.l.b16 %v174
  %v1067 = vunpack.c.h.b16 %v174
  %v1068 = vunpack.c.l.b16 %v175
  %v1069 = vunpack.c.h.b16 %v175
  %v1070 = vunpack.c.l.b16 %v176
  %v1071 = vunpack.c.h.b16 %v176
  %v1072 = vunpack.c.l.b16 %v177
  %v1073 = vunpack.c.h.b16 %v177
  %v1074 = vunpack.c.l.b16 %v178
  %v1075 = vunpack.c.h.b16 %v178
  %v1076 = vunpack.c.l.b16 %v179
  %v1077 = vunpack.c.h.b16 %v179
  %v1078 = vunpack.c.l.b16 %v180
  %v1079 = vunpack.c.h.b16 %v180
  %v1080 = vunpack.c.l.b16 %v181
  %v1081 = vunpack.c.h.b16 %v181
  %v1082 = vunpack.c.l.b16 %v182
  %v1083 = vunpack.c.h.b16 %v182
  %v1084 = vunpack.c.l.b16 %v183
  %v1085 = vpack.c.b16 %v785, %v760
  %v1086 = vpack.c.b16 %v786, %v761
  %v1087 = vpack.c.b16 %v787, %v762
  %v1088 = vpack.c.b16 %v788, %v763
  %v1089 = vpack.c.b16 %v789, %v764
  %v1090 = vpack.c.b16 %v790, %v765
  %v1091 = vpack.c.b16 %v791, %v766
  %v1092 = vpack.c.b16 %v792, %v767
  %v1093 = vpack.c.b16 %v793, %v768
  %v1094 = vpack.c.b16 %v794, %v769
  %v1095 = vpack.c.b16 %v795, %v770
  %v1096 = vpack.c.b16 %v796, %v771
  %v1097 = vpack.c.b16 %v797, %v772
  %v1098 = vpack.c.b16 %v798, %v773
  %v1099 = vpack.c.b16 %v799, %v774
  %v1100 = vpack.c.b16 %v800, %v775
  %v1101 = vpack.c.b16 %v801, %v776
  %v1102 = vpack.c.b16 %v802, %v777
  %v1103 = vpack.c.b16 %v803, %v778
  %v1104 = vpack.c.b16 %v804, %v779
  %v1105 = vpack.c.b16 %v805, %v780
  %v1106 = vpack.c.b16 %v806, %v781
  %v1107 = vpack.c.b16 %v807, %v782
  %v1108 = vpack.c.b16 %v808, %v783
  %v1109 = vpack.c.b16 %v809, %v784
  %v1110 = vpack.c.b16 %v835, %v810
  %v1111 = vpack.c.b16 %v836, %v811
  %v1112 = vpack.c.b16 %v837, %v812
  %v1113 = vpack.c.b16 %v838, %v813
  %v1114 = vpack.c.b16 %v839, %v814
  %v1115 = vpack.c.b16 %v840, %v815
  %v1116 = vpack.c.b16 %v841, %v816
  %v1117 = vpack.c.b16 %v842, %v817
  %v1118 = vpack.c.b16 %v843, %v818
  %v1119 = vpack.c.b16 %v844, %v819
  %v1120 = vpack.c.b16 %v845, %v820
  %v1121 = vpack.c.b16 %v846, %v821
  %v1122 = vpack.c.b16 %v847, %v822
  %v1123 = vpack.c.b16 %v848, %v823
  %v1124 = vpack.c.b16 %v849, %v824
  %v1125 = vpack.c.b16 %v850, %v825
  %v1126 = vpack.c.b16 %v851, %v826
  %v1127 = vpack.c.b16 %v852, %v827
  %v1128 = vpack.c.b16 %v853, %v828
  %v1129 = vpack.c.b16 %v854, %v829
  %v1130 = vpack.c.b16 %v855, %v830
  %v1131 = vpack.c.b16 %v856, %v831
  %v1132 = vpack.c.b16 %v857, %v832
  %v1133 = vpack.c.b16 %v858, %v833
  %v1134 = vpack.c.b16 %v859, %v834
  %v1135 = vpack.c.b16 %v885, %v860
  %v1136 = vpack.c.b16 %v886, %v861
  %v1137 = vpack.c.b16 %v887, %v862
  %v1138 = vpack.c.b16 %v888, %v863
  %v1139 = vpack.c.b16 %v889, %v864
  %v1140 = vpack.c.b16 %v890, %v865
  %v1141 = vpack.c.b16 %v891, %v866
  %v1142 = vpack.c.b16 %v892, %v867
  %v1143 = vpack.c.b16 %v893, %v868
  %v1144 = vpack.c.b16 %v894, %v869
  %v1145 = vpack.c.b16 %v895, %v870
  %v1146 = vpack.c.b16 %v896, %v871
  %v1147 = vpack.c.b16 %v897, %v872
  %v1148 = vpack.c.b16 %v898, %v873
  %v1149 = vpack.c.b16 %v899, %v874
  %v1150 = vpack.c.b16 %v900, %v875
  %v1151 = vpack.c.b16 %v901, %v876
  %v1152 = vpack.c.b16 %v902, %v877
  %v1153 = vpack.c.b16 %v903, %v878
  %v1154 = vpack.c.b16 %v904, %v879
  %v1155 = vpack.c.b16 %v905, %v880
  %v1156 = vpack.c.b16 %v906, %v881
  %v1157 = vpack.c.b16 %v907, %v882
  %v1158 = vpack.c.b16 %v908, %v883
  %v1159 = vpack.c.b16 %v909, %v884
  %v1160 = vpack.c.b16 %v935, %v910
  %v1161 = vpack.c.b16 %v936, %v911
  %v1162 = vpack.c.b16 %v937, %v912
  %v1163 = vpack.c.b16 %v938, %v913
  %v1164 = vpack.c.b16 %v939, %v914
  %v1165 = vpack.c.b16 %v940, %v915
  %v1166 = vpack.c.b16 %v941, %v916
  %v1167 = vpack.c.b16 %v942, %v917
  %v1168 = vpack.c.b16 %v943, %v918
  %v1169 = vpack.c.b16 %v944, %v919
  %v1170 = vpack.c.b16 %v945, %v920
  %v1171 = vpack.c.b16 %v946, %v921
  %v1172 = vpack.c.b16 %v947, %v922
  %v1173 = vpack.c.b16 %v948, %v923
  %v1174 = vpack.c.b16 %v949, %v924
  %v1175 = vpack.c.b16 %v950, %v925
  %v1176 = vpack.c.b16 %v951, %v926
  %v1177 = vpack.c.b16 %v952, %v927
  %v1178 = vpack.c.b16 %v953, %v928
  %v1179 = vpack.c.b16 %v954, %v929
  %v1180 = vpack.c.b16 %v955, %v930
  %v1181 = vpack.c.b16 %v956, %v931
  %v1182 = vpack.c.b16 %v957, %v932
  %v1183 = vpack.c.b16 %v958, %v933
  %v1184 = vpack.c.b16 %v959, %v934
  %v1185 = vpack.c.b16 %v985, %v960
  %v1186 = vpack.c.b16 %v986, %v961
  %v1187 = vpack.c.b16 %v987, %v962
  %v1188 = vpack.c.b16 %v988, %v963
  %v1189 = vpack.c.b16 %v989, %v964
  %v1190 = vpack.c.b16 %v990, %v965
  %v1191 = vpack.c.b16 %v991, %v966
  %v1192 = vpack.c.b16 %v992, %v967
  %v1193 = vpack.c.b16 %v993, %v968
  %v1194 = vpack.c.b16 %v994, %v969
  %v1195 = vpack.c.b16 %v995, %v970
  %v1196 = vpack.c.b16 %v996, %v971
  %v1197 = vpack.c.b16 %v997, %v972
  %v1198 = vpack.c.b16 %v998, %v973
  %v1199 = vpack.c.b16 %v999, %v974
  %v1200 = vpack.c.b16 %v1000, %v975
  %v1201 = vpack.c.b16 %v1001, %v976
  %v1202 = vpack.c.b16 %v1002, %v977
  %v1203 = vpack.c.b16 %v1003, %v978
  %v1204 = vpack.c.b16 %v1004, %v979
  %v1205 = vpack.c.b16 %v1005, %v980
  %v1206 = vpack.c.b16 %v1006, %v981
  %v1207 = vpack.c.b16 %v1007, %v982
  %v1208 = vpack.c.b16 %v1008, %v983
  %v1209 = vpack.c.b16 %v1009, %v984
  %v1210 = vpack.c.b16 %v1035, %v1010
  %v1211 = vpack.c.b16 %v1036, %v1011
  %v1212 = vpack.c.b16 %v1037, %v1012
  %v1213 = vpack.c.b16 %v1038, %v1013
  %v1214 = vpack.c.b16 %v1039, %v1014
  %v1215 = vpack.c.b16 %v1040, %v1015
  %v1216 = vpack.c.b16 %v1041, %v1016
  %v1217 = vpack.c.b16 %v1042, %v1017
  %v1218 = vpack.c.b16 %v1043, %v1018
  %v1219 = vpack.c.b16 %v1044, %v1019
  %v1220 = vpack.c.b16 %v1045, %v1020
  %v1221 = vpack.c.b16 %v1046, %v1021
  %v1222 = vpack.c.b16 %v1047, %v1022
  %v1223 = vpack.c.b16 %v1048, %v1023
  %v1224 = vpack.c.b16 %v1049, %v1024
  %v1225 = vpack.c.b16 %v1050, %v1025
  %v1226 = vpack.c.b16 %v1051, %v1026
  %v1227 = vpack.c.b16 %v1052, %v1027
  %v1228 = vpack.c.b16 %v1053, %v1028
  %v1229 = vpack.c.b16 %v1054, %v1029
  %v1230 = vpack.c.b16 %v1055, %v1030
  %v1231 = vpack.c.b16 %v1056, %v1031
  %v1232 = vpack.c.b16 %v1057, %v1032
  %v1233 = vpack.c.b16 %v1058, %v1033
  %v1234 = vpack.c.b16 %v1059, %v1034
  %v1235 = vpack.c.b16 %v1060, %v1060
  %v1236 = vpack.c.b16 %v1061, %v1061
  %v1237 = vpack.c.b16 %v1062, %v1062
  %v1238 = vpack.c.b16 %v1063, %v1063
  %v1239 = vpack.c.b16 %v1064, %v1064
  %v1240 = vpack.c.b16 %v1065, %v1065
  %v1241 = vpack.c.b16 %v1066, %v1066
  %v1242 = vpack.c.b16 %v1067, %v1067
  %v1243 = vpack.c.b16 %v1068, %v1068
  %v1244 = vpack.c.b16 %v1069, %v1069
  %v1245 = vpack.c.b16 %v1070, %v1070
  %v1246 = vpack.c.b16 %v1071, %v1071
  %v1247 = vpack.c.b16 %v1072, %v1072
  %v1248 = vpack.c.b16 %v1073, %v1073
  %v1249 = vpack.c.b16 %v1074, %v1074
  %v1250 = vpack.c.b16 %v1075, %v1075
  %v1251 = vpack.c.b16 %v1076, %v1076
  %v1252 = vpack.c.b16 %v1077, %v1077
  %v1253 = vpack.c.b16 %v1078, %v1078
  %v1254 = vpack.c.b16 %v1079, %v1079
  %v1255 = vpack.c.b16 %v1080, %v1080
  %v1256 = vpack.c.b16 %v1081, %v1081
  %v1257 = vpack.c.b16 %v1082, %v1082
  %v1258 = vpack.c.b16 %v1083, %v1083
  %v1259 = vpack.c.b16 %v1084, %v1084
  %v1835 = vunpack.c.l.b16 %v184
  %v1836 = vunpack.c.l.b16 %v185
  %v1837 = vunpack.c.l.b16 %v186
  %v1838 = vunpack.c.l.b16 %v187
  %v1839 = vunpack.c.l.b16 %v188
  %v1840 = vunpack.c.l.b16 %v189
  %v1841 = vunpack.c.l.b16 %v190
  %v1842 = vunpack.c.l.b16 %v191
  %v1843 = vunpack.c.l.b16 %v192
  %v1844 = vunpack.c.l.b16 %v193
  %v1845 = vunpack.c.l.b16 %v194
  %v1846 = vunpack.c.l.b16 %v195
  %v1847 = vunpack.c.l.b16 %v196
  %v1848 = vunpack.c.l.b16 %v197
  %v1849 = vunpack.c.l.b16 %v198
  %v1850 = vunpack.c.l.b16 %v199
  %v1851 = vunpack.c.l.b16 %v200
  %v1852 = vunpack.c.l.b16 %v201
  %v1853 = vunpack.c.l.b16 %v202
  %v1854 = vunpack.c.l.b16 %v203
  %v1855 = vunpack.c.l.b16 %v204
  %v1856 = vunpack.c.l.b16 %v205
  %v1857 = vunpack.c.l.b16 %v206
  %v1858 = vunpack.c.l.b16 %v207
  %v1859 = vunpack.c.l.b16 %v208
  %v1860 = vunpack.c.l.b16 %v209
  %v1861 = vunpack.c.l.b16 %v210
  %v1862 = vunpack.c.l.b16 %v211
  %v1863 = vunpack.c.l.b16 %v212
  %v1864 = vunpack.c.l.b16 %v213
  %v1865 = vunpack.c.l.b16 %v214
  %v1866 = vunpack.c.l.b16 %v215
  %v1867 = vunpack.c.l.b16 %v216
  %v1868 = vunpack.c.l.b16 %v217
  %v1869 = vunpack.c.l.b16 %v218
  %v1870 = vunpack.c.l.b16 %v219
  %v1871 = vunpack.c.l.b16 %v220
  %v1872 = vunpack.c.l.b16 %v221
  %v1873 = vunpack.c.l.b16 %v222
  %v1874 = vunpack.c.l.b16 %v223
  %v1875 = vunpack.c.l.b16 %v224
  %v1876 = vunpack.c.l.b16 %v225
  %v1877 = vunpack.c.l.b16 %v226
  %v1878 = vunpack.c.l.b16 %v227
  %v1879 = vunpack.c.l.b16 %v228
  %v1880 = vunpack.c.l.b16 %v229
  %v1881 = vunpack.c.l.b16 %v230
  %v1882 = vunpack.c.l.b16 %v231
  %v1883 = vunpack.c.l.b16 %v232
  %v1884 = vunpack.c.l.b16 %v233
  %v1885 = vunpack.c.l.b16 %v234
  %v1886 = vunpack.c.l.b16 %v235
  %v1887 = vunpack.c.l.b16 %v236
  %v1888 = vunpack.c.l.b16 %v237
  %v1889 = vunpack.c.l.b16 %v238
  %v1890 = vunpack.c.l.b16 %v239
  %v1891 = vunpack.c.l.b16 %v240
  %v1892 = vunpack.c.l.b16 %v241
  %v1893 = vunpack.c.l.b16 %v242
  %v1894 = vunpack.c.l.b16 %v243
  %v1895 = vunpack.c.l.b16 %v244
  %v1896 = vunpack.c.l.b16 %v245
  %v1897 = vunpack.c.l.b16 %v246
  %v1898 = vunpack.c.l.b16 %v247
  %v1899 = vunpack.c.l.b16 %v248
  %v1900 = vunpack.c.l.b16 %v249
  %v1901 = vunpack.c.l.b16 %v250
  %v1902 = vunpack.c.l.b16 %v251
  %v1903 = vunpack.c.l.b16 %v252
  %v1904 = vunpack.c.l.b16 %v253
  %v1905 = vunpack.c.l.b16 %v254
  %v1906 = vunpack.c.l.b16 %v255
  %v1907 = vunpack.c.l.b16 %v256
  %v1908 = vunpack.c.l.b16 %v257
  %v1909 = vunpack.c.l.b16 %v258
  %v1910 = vunpack.c.l.b16 %v259
  %v1911 = vunpack.c.l.b16 %v260
  %v1912 = vunpack.c.l.b16 %v261
  %v1913 = vunpack.c.l.b16 %v262
  %v1914 = vunpack.c.l.b16 %v263
  %v1915 = vunpack.c.l.b16 %v264
  %v1916 = vunpack.c.l.b16 %v265
  %v1917 = vunpack.c.l.b16 %v266
  %v1918 = vunpack.c.l.b16 %v267
  %v1919 = vunpack.c.l.b16 %v268
  %v1920 = vunpack.c.l.b16 %v269
  %v1921 = vunpack.c.l.b16 %v270
  %v1922 = vunpack.c.l.b16 %v271
  %v1923 = vunpack.c.l.b16 %v272
  %v1924 = vunpack.c.l.b16 %v273
  %v1925 = vunpack.c.l.b16 %v274
  %v1926 = vunpack.c.l.b16 %v275
  %v1927 = vunpack.c.l.b16 %v276
  %v1928 = vunpack.c.l.b16 %v277
  %v1929 = vunpack.c.l.b16 %v278
  %v1930 = vunpack.c.l.b16 %v279
  %v1931 = vunpack.c.l.b16 %v280
  %v1932 = vunpack.c.l.b16 %v281
  %v1933 = vunpack.c.l.b16 %v282
  %v1934 = vunpack.c.l.b16 %v283
  %v1935 = vunpack.c.l.b16 %v284
  %v1936 = vunpack.c.l.b16 %v285
  %v1937 = vunpack.c.l.b16 %v286
  %v1938 = vunpack.c.l.b16 %v287
  %v1939 = vunpack.c.l.b16 %v288
  %v1940 = vunpack.c.l.b16 %v289
  %v1941 = vunpack.c.l.b16 %v290
  %v1942 = vunpack.c.l.b16 %v291
  %v1943 = vunpack.c.l.b16 %v292
  %v1944 = vunpack.c.l.b16 %v293
  %v1945 = vunpack.c.l.b16 %v294
  %v1946 = vunpack.c.l.b16 %v295
  %v1947 = vunpack.c.l.b16 %v296
  %v1948 = vunpack.c.l.b16 %v297
  %v1949 = vunpack.c.l.b16 %v298
  %v1950 = vunpack.c.l.b16 %v299
  %v1951 = vunpack.c.l.b16 %v300
  %v1952 = vunpack.c.l.b16 %v301
  %v1953 = vunpack.c.l.b16 %v302
  %v1954 = vunpack.c.l.b16 %v303
  %v1955 = vunpack.c.l.b16 %v304
  %v1956 = vunpack.c.l.b16 %v305
  %v1957 = vunpack.c.l.b16 %v306
  %v1958 = vunpack.c.l.b16 %v307
  %v1959 = vunpack.c.l.b16 %v308
  %v1960 = vunpack.c.l.b16 %v309
  %v1961 = vunpack.c.l.b16 %v310
  %v1962 = vunpack.c.l.b16 %v311
  %v1963 = vunpack.c.l.b16 %v312
  %v1964 = vunpack.c.l.b16 %v313
  %v1965 = vunpack.c.l.b16 %v314
  %v1966 = vunpack.c.l.b16 %v315
  %v1967 = vunpack.c.l.b16 %v316
  %v1968 = vunpack.c.l.b16 %v317
  %v1969 = vunpack.c.l.b16 %v318
  %v1970 = vunpack.c.l.b16 %v319
  %v1971 = vunpack.c.l.b16 %v320
  %v1972 = vunpack.c.l.b16 %v321
  %v1973 = vunpack.c.l.b16 %v322
  %v1974 = vunpack.c.l.b16 %v323
  %v1975 = vunpack.c.l.b16 %v324
  %v1976 = vunpack.c.l.b16 %v325
  %v1977 = vunpack.c.l.b16 %v326
  %v1978 = vunpack.c.l.b16 %v327
  %v1979 = vunpack.c.l.b16 %v328
  %v1980 = vunpack.c.l.b16 %v329
  %v1981 = vunpack.c.l.b16 %v330
  %v1982 = vunpack.c.l.b16 %v331
  %v1983 = vunpack.c.l.b16 %v332
  %v1984 = vunpack.c.l.b16 %v333
  %v1985 = vunpack.c.l.b16 %v334
  %v1986 = vunpack.c.l.b16 %v335
  %v1987 = vunpack.c.l.b16 %v336
  %v1988 = vunpack.c.l.b16 %v337
  %v1989 = vunpack.c.l.b16 %v338
  %v1990 = vunpack.c.l.b16 %v339
  %v1991 = vunpack.c.l.b16 %v340
  %v1992 = vunpack.c.l.b16 %v341
  %v1993 = vunpack.c.l.b16 %v342
  %v1994 = vunpack.c.l.b16 %v343
  %v1995 = vunpack.c.l.b16 %v344
  %v1996 = vunpack.c.l.b16 %v345
  %v1997 = vunpack.c.l.b16 %v346
  %v1998 = vunpack.c.l.b16 %v347
  %v1999 = vunpack.c.l.b16 %v348
  %v2000 = vunpack.c.l.b16 %v349
  %v2001 = vunpack.c.l.b16 %v350
  %v2002 = vunpack.c.l.b16 %v351
  %v2003 = vunpack.c.l.b16 %v352
  %v2004 = vunpack.c.l.b16 %v353
  %v2005 = vunpack.c.l.b16 %v354
  %v2006 = vunpack.c.l.b16 %v355
  %v2007 = vunpack.c.l.b16 %v356
  %v2008 = vunpack.c.l.b16 %v357
  %v2009 = vunpack.c.l.b16 %v358
  %v2010 = vunpack.c.l.b16 %v359
  %v2011 = vunpack.c.l.b16 %v360
  %v2012 = vunpack.c.l.b16 %v361
  %v2013 = vunpack.c.l.b16 %v362
  %v2014 = vunpack.c.l.b16 %v363
  %v2015 = vunpack.c.l.b16 %v364
  %v2016 = vunpack.c.l.b16 %v365
  %v2017 = vunpack.c.l.b16 %v366
  %v2018 = vunpack.c.l.b16 %v367
  %v2019 = vunpack.c.l.b16 %v368
  %v2020 = vunpack.c.l.b16 %v369
  %v2021 = vunpack.c.l.b16 %v370
  %v2022 = vunpack.c.l.b16 %v371
  %v2023 = vunpack.c.l.b16 %v372
  %v2024 = vunpack.c.l.b16 %v373
  %v2025 = vunpack.c.l.b16 %v374
  %v2026 = vunpack.c.l.b16 %v375
  %v2027 = vunpack.c.l.b16 %v376
  %v2028 = vunpack.c.l.b16 %v377
  %v2029 = vunpack.c.l.b16 %v378
  %v2030 = vunpack.c.l.b16 %v379
  %v2031 = vunpack.c.l.b16 %v380
  %v2032 = vunpack.c.l.b16 %v381
  %v2033 = vunpack.c.l.b16 %v382
  %v2034 = vunpack.c.l.b16 %v383
  %v2035 = vunpack.c.l.b16 %v384
  %v2036 = vunpack.c.l.b16 %v385
  %v2037 = vunpack.c.l.b16 %v386
  %v2038 = vunpack.c.l.b16 %v387
  %v2039 = vunpack.c.l.b16 %v388
  %v2040 = vunpack.c.l.b16 %v389
  %v2041 = vunpack.c.l.b16 %v390
  %v2042 = vunpack.c.l.b16 %v391
  %v2043 = vunpack.c.l.b16 %v392
  %v2044 = vunpack.c.l.b16 %v393
  %v2045 = vunpack.c.l.b16 %v394
  %v2046 = vunpack.c.l.b16 %v395
  %v2047 = vunpack.c.l.b16 %v396
  %v2048 = vunpack.c.l.b16 %v397
  %v2049 = vunpack.c.l.b16 %v398
  %v2050 = vunpack.c.l.b16 %v399
  %v2051 = vunpack.c.l.b16 %v400
  %v2052 = vunpack.c.l.b16 %v401
  %v2053 = vunpack.c.l.b16 %v402
  %v2054 = vunpack.c.l.b16 %v403
  %v2055 = vunpack.c.l.b16 %v404
  %v2056 = vunpack.c.l.b16 %v405
  %v2057 = vunpack.c.l.b16 %v406
  %v2058 = vunpack.c.l.b16 %v407
  %v2059 = vunpack.c.l.b16 %v408
  %v2060 = vunpack.c.l.b16 %v409
  %v2061 = vunpack.c.l.b16 %v410
  %v2062 = vunpack.c.l.b16 %v411
  %v2063 = vunpack.c.l.b16 %v412
  %v2064 = vunpack.c.l.b16 %v413
  %v2065 = vunpack.c.l.b16 %v414
  %v2066 = vunpack.c.l.b16 %v415
  %v2067 = vunpack.c.l.b16 %v416
  %v2068 = vunpack.c.l.b16 %v417
  %v2069 = vunpack.c.l.b16 %v418
  %v2070 = vunpack.c.l.b16 %v419
  %v2071 = vunpack.c.l.b16 %v420
  %v2072 = vunpack.c.l.b16 %v421
  %v2073 = vunpack.c.l.b16 %v422
  %v2074 = vunpack.c.l.b16 %v423
  %v2075 = vunpack.c.l.b16 %v424
  %v2076 = vunpack.c.l.b16 %v425
  %v2077 = vunpack.c.l.b16 %v426
  %v2078 = vunpack.c.l.b16 %v427
  %v2079 = vunpack.c.l.b16 %v428
  %v2080 = vunpack.c.l.b16 %v429
  %v2081 = vunpack.c.l.b16 %v430
  %v2082 = vunpack.c.l.b16 %v431
  %v2083 = vunpack.c.l.b16 %v432
  %v2084 = vunpack.c.l.b16 %v433
  %v2085 = vunpack.c.l.b16 %v434
  %v2086 = vunpack.c.l.b16 %v435
  %v2087 = vunpack.c.l.b16 %v436
  %v2088 = vunpack.c.l.b16 %v437
  %v2089 = vunpack.c.l.b16 %v438
  %v2090 = vunpack.c.l.b16 %v439
  %v2091 = vunpack.c.l.b16 %v440
  %v2092 = vunpack.c.l.b16 %v441
  %v2093 = vunpack.c.l.b16 %v442
  %v2094 = vunpack.c.l.b16 %v443
  %v2095 = vunpack.c.l.b16 %v444
  %v2096 = vunpack.c.l.b16 %v445
  %v2097 = vunpack.c.l.b16 %v446
  %v2098 = vunpack.c.l.b16 %v447
  %v2099 = vunpack.c.l.b16 %v448
  %v2100 = vunpack.c.l.b16 %v449
  %v2101 = vunpack.c.l.b16 %v450
  %v2102 = vunpack.c.l.b16 %v451
  %v2103 = vunpack.c.l.b16 %v452
  %v2104 = vunpack.c.l.b16 %v453
  %v2105 = vunpack.c.l.b16 %v454
  %v2106 = vunpack.c.l.b16 %v455
  %v2107 = vunpack.c.l.b16 %v456
  %v2108 = vunpack.c.l.b16 %v457
  %v2109 = vunpack.c.l.b16 %v458
  %v2110 = vunpack.c.l.b16 %v459
  %v2111 = vunpack.c.l.b16 %v460
  %v2112 = vunpack.c.l.b16 %v461
  %v2113 = vunpack.c.l.b16 %v462
  %v2114 = vunpack.c.l.b16 %v463
  %v2115 = vunpack.c.l.b16 %v464
  %v2116 = vunpack.c.l.b16 %v465
  %v2117 = vunpack.c.l.b16 %v466
  %v2118 = vunpack.c.l.b16 %v467
  %v2119 = vunpack.c.l.b16 %v468
  %v2120 = vunpack.c.l.b16 %v469
  %v2121 = vunpack.c.l.b16 %v470
  %v2122 = vunpack.c.l.b16 %v471
  %v2123 = vunpack.c.l.b16 %v472
  %v2124 = vunpack.c.l.b16 %v473
  %v2125 = vunpack.c.l.b16 %v474
  %v2126 = vunpack.c.l.b16 %v475
  %v2127 = vunpack.c.l.b16 %v476
  %v2128 = vunpack.c.l.b16 %v477
  %v2129 = vunpack.c.l.b16 %v478
  %v2130 = vunpack.c.l.b16 %v479
  %v2131 = vunpack.c.l.b16 %v480
  %v2132 = vunpack.c.l.b16 %v481
  %v2133 = vunpack.c.l.b16 %v482
  %v2134 = vunpack.c.l.b16 %v483
  %v2135 = vunpack.c.l.b16 %v484
  %v2136 = vunpack.c.l.b16 %v485
  %v2137 = vunpack.c.l.b16 %v486
  %v2138 = vunpack.c.l.b16 %v487
  %v2139 = vunpack.c.l.b16 %v488
  %v2140 = vunpack.c.l.b16 %v489
  %v2141 = vunpack.c.l.b16 %v490
  %v2142 = vunpack.c.l.b16 %v491
  %v2143 = vunpack.c.l.b16 %v492
  %v2144 = vunpack.c.l.b16 %v493
  %v2145 = vunpack.c.l.b16 %v494
  %v2146 = vunpack.c.l.b16 %v495
  %v2147 = vunpack.c.l.b16 %v496
  %v2148 = vunpack.c.l.b16 %v497
  %v2149 = vunpack.c.l.b16 %v498
  %v2150 = vunpack.c.l.b16 %v499
  %v2151 = vunpack.c.l.b16 %v500
  %v2152 = vunpack.c.l.b16 %v501
  %v2153 = vunpack.c.l.b16 %v502
  %v2154 = vunpack.c.l.b16 %v503
  %v2155 = vunpack.c.l.b16 %v504
  %v2156 = vunpack.c.l.b16 %v505
  %v2157 = vunpack.c.l.b16 %v506
  %v2158 = vunpack.c.l.b16 %v507
  %v2159 = vunpack.c.l.b16 %v508
  %v2160 = vunpack.c.l.b16 %v509
  %v2161 = vunpack.c.l.b16 %v510
  %v2162 = vunpack.c.l.b16 %v511
  %v2163 = vunpack.c.l.b16 %v512
  %v2164 = vunpack.c.l.b16 %v513
  %v2165 = vunpack.c.l.b16 %v514
  %v2166 = vunpack.c.l.b16 %v515
  %v2167 = vunpack.c.l.b16 %v516
  %v2168 = vunpack.c.l.b16 %v517
  %v2169 = vunpack.c.l.b16 %v518
  %v2170 = vunpack.c.l.b16 %v519
  %v2171 = vunpack.c.l.b16 %v520
  %v2172 = vunpack.c.l.b16 %v521
  %v2173 = vunpack.c.l.b16 %v522
  %v2174 = vunpack.c.l.b16 %v523
  %v2175 = vunpack.c.l.b16 %v524
  %v2176 = vunpack.c.l.b16 %v525
  %v2177 = vunpack.c.l.b16 %v526
  %v2178 = vunpack.c.l.b16 %v527
  %v2179 = vunpack.c.l.b16 %v528
  %v2180 = vunpack.c.l.b16 %v529
  %v2181 = vunpack.c.l.b16 %v530
  %v2182 = vunpack.c.l.b16 %v531
  %v2183 = vunpack.c.l.b16 %v532
  %v2184 = vunpack.c.l.b16 %v533
  %v2185 = vunpack.c.l.b16 %v534
  %v2186 = vunpack.c.l.b16 %v535
  %v2187 = vunpack.c.l.b16 %v536
  %v2188 = vunpack.c.l.b16 %v537
  %v2189 = vunpack.c.l.b16 %v538
  %v2190 = vunpack.c.l.b16 %v539
  %v2191 = vunpack.c.l.b16 %v540
  %v2192 = vunpack.c.l.b16 %v541
  %v2193 = vunpack.c.l.b16 %v542
  %v2194 = vunpack.c.l.b16 %v543
  %v2195 = vunpack.c.l.b16 %v544
  %v2196 = vunpack.c.l.b16 %v545
  %v2197 = vunpack.c.l.b16 %v546
  %v2198 = vunpack.c.l.b16 %v547
  %v2199 = vunpack.c.l.b16 %v548
  %v2200 = vunpack.c.l.b16 %v549
  %v2201 = vunpack.c.l.b16 %v550
  %v2202 = vunpack.c.l.b16 %v551
  %v2203 = vunpack.c.l.b16 %v552
  %v2204 = vunpack.c.l.b16 %v553
  %v2205 = vunpack.c.l.b16 %v554
  %v2206 = vunpack.c.l.b16 %v555
  %v2207 = vunpack.c.l.b16 %v556
  %v2208 = vunpack.c.l.b16 %v557
  %v2209 = vunpack.c.l.b16 %v558
  %v2210 = vunpack.c.l.b16 %v559
  %v2211 = vunpack.c.l.b16 %v560
  %v2212 = vunpack.c.l.b16 %v561
  %v2213 = vunpack.c.l.b16 %v562
  %v2214 = vunpack.c.l.b16 %v563
  %v2215 = vunpack.c.l.b16 %v564
  %v2216 = vunpack.c.l.b16 %v565
  %v2217 = vunpack.c.l.b16 %v566
  %v2218 = vunpack.c.l.b16 %v567
  %v2219 = vunpack.c.l.b16 %v568
  %v2220 = vunpack.c.l.b16 %v569
  %v2221 = vunpack.c.l.b16 %v570
  %v2222 = vunpack.c.l.b16 %v571
  %v2223 = vunpack.c.l.b16 %v572
  %v2224 = vunpack.c.l.b16 %v573
  %v2225 = vunpack.c.l.b16 %v574
  %v2226 = vunpack.c.l.b16 %v575
  %v2227 = vunpack.c.l.b16 %v576
  %v2228 = vunpack.c.l.b16 %v577
  %v2229 = vunpack.c.l.b16 %v578
  %v2230 = vunpack.c.l.b16 %v579
  %v2231 = vunpack.c.l.b16 %v580
  %v2232 = vunpack.c.l.b16 %v581
  %v2233 = vunpack.c.l.b16 %v582
  %v2234 = vunpack.c.l.b16 %v583
  %v2235 = vpack.c.b16 %v1836, %v1835
  %v2236 = vpack.c.b16 %v1838, %v1837
  %v2237 = vpack.c.b16 %v1840, %v1839
  %v2238 = vpack.c.b16 %v1842, %v1841
  %v2239 = vpack.c.b16 %v1844, %v1843
  %v2240 = vpack.c.b16 %v1846, %v1845
  %v2241 = vpack.c.b16 %v1848, %v1847
  %v2242 = vpack.c.b16 %v1850, %v1849
  %v2243 = vpack.c.b16 %v1852, %v1851
  %v2244 = vpack.c.b16 %v1854, %v1853
  %v2245 = vpack.c.b16 %v1856, %v1855
  %v2246 = vpack.c.b16 %v1858, %v1857
  %v2247 = vpack.c.b16 %v1860, %v1859
  %v2248 = vpack.c.b16 %v1862, %v1861
  %v2249 = vpack.c.b16 %v1864, %v1863
  %v2250 = vpack.c.b16 %v1866, %v1865
  %v2251 = vpack.c.b16 %v1868, %v1867
  %v2252 = vpack.c.b16 %v1870, %v1869
  %v2253 = vpack.c.b16 %v1872, %v1871
  %v2254 = vpack.c.b16 %v1874, %v1873
  %v2255 = vpack.c.b16 %v1876, %v1875
  %v2256 = vpack.c.b16 %v1878, %v1877
  %v2257 = vpack.c.b16 %v1880, %v1879
  %v2258 = vpack.c.b16 %v1882, %v1881
  %v2259 = vpack.c.b16 %v1884, %v1883
  %v2260 = vpack.c.b16 %v1886, %v1885
  %v2261 = vpack.c.b16 %v1888, %v1887
  %v2262 = vpack.c.b16 %v1890, %v1889
  %v2263 = vpack.c.b16 %v1892, %v1891
  %v2264 = vpack.c.b16 %v1894, %v1893
  %v2265 = vpack.c.b16 %v1896, %v1895
  %v2266 = vpack.c.b16 %v1898, %v1897
  %v2267 = vpack.c.b16 %v1900, %v1899
  %v2268 = vpack.c.b16 %v1902, %v1901
  %v2269 = vpack.c.b16 %v1904, %v1903
  %v2270 = vpack.c.b16 %v1906, %v1905
  %v2271 = vpack.c.b16 %v1908, %v1907
  %v2272 = vpack.c.b16 %v1910, %v1909
  %v2273 = vpack.c.b16 %v1912, %v1911
  %v2274 = vpack.c.b16 %v1914, %v1913
  %v2275 = vpack.c.b16 %v1916, %v1915
  %v2276 = vpack.c.b16 %v1918, %v1917
  %v2277 = vpack.c.b16 %v1920, %v1919
  %v2278 = vpack.c.b16 %v1922, %v1921
  %v2279 = vpack.c.b16 %v1924, %v1923
  %v2280 = vpack.c.b16 %v1926, %v1925
  %v2281 = vpack.c.b16 %v1928, %v1927
  %v2282 = vpack.c.b16 %v1930, %v1929
  %v2283 = vpack.c.b16 %v1932, %v1931
  %v2284 = vpack.c.b16 %v1934, %v1933
  %v2285 = vpack.c.b16 %v1936, %v1935
  %v2286 = vpack.c.b16 %v1938, %v1937
  %v2287 = vpack.c.b16 %v1940, %v1939
  %v2288 = vpack.c.b16 %v1942, %v1941
  %v2289 = vpack.c.b16 %v1944, %v1943
  %v2290 = vpack.c.b16 %v1946, %v1945
  %v2291 = vpack.c.b16 %v1948, %v1947
  %v2292 = vpack.c.b16 %v1950, %v1949
  %v2293 = vpack.c.b16 %v1952, %v1951
  %v2294 = vpack.c.b16 %v1954, %v1953
  %v2295 = vpack.c.b16 %v1956, %v1955
  %v2296 = vpack.c.b16 %v1958, %v1957
  %v2297 = vpack.c.b16 %v1960, %v1959
  %v2298 = vpack.c.b16 %v1962, %v1961
  %v2299 = vpack.c.b16 %v1964, %v1963
  %v2300 = vpack.c.b16 %v1966, %v1965
  %v2301 = vpack.c.b16 %v1968, %v1967
  %v2302 = vpack.c.b16 %v1970, %v1969
  %v2303 = vpack.c.b16 %v1972, %v1971
  %v2304 = vpack.c.b16 %v1974, %v1973
  %v2305 = vpack.c.b16 %v1976, %v1975
  %v2306 = vpack.c.b16 %v1978, %v1977
  %v2307 = vpack.c.b16 %v1980, %v1979
  %v2308 = vpack.c.b16 %v1982, %v1981
  %v2309 = vpack.c.b16 %v1984, %v1983
  %v2310 = vpack.c.b16 %v1986, %v1985
  %v2311 = vpack.c.b16 %v1988, %v1987
  %v2312 = vpack.c.b16 %v1990, %v1989
  %v2313 = vpack.c.b16 %v1992, %v1991
  %v2314 = vpack.c.b16 %v1994, %v1993
  %v2315 = vpack.c.b16 %v1996, %v1995
  %v2316 = vpack.c.b16 %v1998, %v1997
  %v2317 = vpack.c.b16 %v2000, %v1999
  %v2318 = vpack.c.b16 %v2002, %v2001
  %v2319 = vpack.c.b16 %v2004, %v2003
  %v2320 = vpack.c.b16 %v2006, %v2005
  %v2321 = vpack.c.b16 %v2008, %v2007
  %v2322 = vpack.c.b16 %v2010, %v2009
  %v2323 = vpack.c.b16 %v2012, %v2011
  %v2324 = vpack.c.b16 %v2014, %v2013
  %v2325 = vpack.c.b16 %v2016, %v2015
  %v2326 = vpack.c.b16 %v2018, %v2017
  %v2327 = vpack.c.b16 %v2020, %v2019
  %v2328 = vpack.c.b16 %v2022, %v2021
  %v2329 = vpack.c.b16 %v2024, %v2023
  %v2330 = vpack.c.b16 %v2026, %v2025
  %v2331 = vpack.c.b16 %v2028, %v2027
  %v2332 = vpack.c.b16 %v2030, %v2029
  %v2333 = vpack.c.b16 %v2032, %v2031
  %v2334 = vpack.c.b16 %v2034, %v2033
  %v2335 = vpack.c.b16 %v2036, %v2035
  %v2336 = vpack.c.b16 %v2038, %v2037
  %v2337 = vpack.c.b16 %v2040, %v2039
  %v2338 = vpack.c.b16 %v2042, %v2041
  %v2339 = vpack.c.b16 %v2044, %v2043
  %v2340 = vpack.c.b16 %v2046, %v2045
  %v2341 = vpack.c.b16 %v2048, %v2047
  %v2342 = vpack.c.b16 %v2050, %v2049
  %v2343 = vpack.c.b16 %v2052, %v2051
  %v2344 = vpack.c.b16 %v2054, %v2053
  %v2345 = vpack.c.b16 %v2056, %v2055
  %v2346 = vpack.c.b16 %v2058, %v2057
  %v2347 = vpack.c.b16 %v2060, %v2059
  %v2348 = vpack.c.b16 %v2062, %v2061
  %v2349 = vpack.c.b16 %v2064, %v2063
  %v2350 = vpack.c.b16 %v2066, %v2065
  %v2351 = vpack.c.b16 %v2068, %v2067
  %v2352 = vpack.c.b16 %v2070, %v2069
  %v2353 = vpack.c.b16 %v2072, %v2071
  %v2354 = vpack.c.b16 %v2074, %v2073
  %v2355 = vpack.c.b16 %v2076, %v2075
  %v2356 = vpack.c.b16 %v2078, %v2077
  %v2357 = vpack.c.b16 %v2080, %v2079
  %v2358 = vpack.c.b16 %v2082, %v2081
  %v2359 = vpack.c.b16 %v2084, %v2083
  %v2360 = vpack.c.b16 %v2086, %v2085
  %v2361 = vpack.c.b16 %v2088, %v2087
  %v2362 = vpack.c.b16 %v2090, %v2089
  %v2363 = vpack.c.b16 %v2092, %v2091
  %v2364 = vpack.c.b16 %v2094, %v2093
  %v2365 = vpack.c.b16 %v2096, %v2095
  %v2366 = vpack.c.b16 %v2098, %v2097
  %v2367 = vpack.c.b16 %v2100, %v2099
  %v2368 = vpack.c.b16 %v2102, %v2101
  %v2369 = vpack.c.b16 %v2104, %v2103
  %v2370 = vpack.c.b16 %v2106, %v2105
  %v2371 = vpack.c.b16 %v2108, %v2107
  %v2372 = vpack.c.b16 %v2110, %v2109
  %v2373 = vpack.c.b16 %v2112, %v2111
  %v2374 = vpack.c.b16 %v2114, %v2113
  %v2375 = vpack.c.b16 %v2116, %v2115
  %v2376 = vpack.c.b16 %v2118, %v2117
  %v2377 = vpack.c.b16 %v2120, %v2119
  %v2378 = vpack.c.b16 %v2122, %v2121
  %v2379 = vpack.c.b16 %v2124, %v2123
  %v2380 = vpack.c.b16 %v2126, %v2125
  %v2381 = vpack.c.b16 %v2128, %v2127
  %v2382 = vpack.c.b16 %v2130, %v2129
  %v2383 = vpack.c.b16 %v2132, %v2131
  %v2384 = vpack.c.b16 %v2134, %v2133
  %v2385 = vpack.c.b16 %v2136, %v2135
  %v2386 = vpack.c.b16 %v2138, %v2137
  %v2387 = vpack.c.b16 %v2140, %v2139
  %v2388 = vpack.c.b16 %v2142, %v2141
  %v2389 = vpack.c.b16 %v2144, %v2143
  %v2390 = vpack.c.b16 %v2146, %v2145
  %v2391 = vpack.c.b16 %v2148, %v2147
  %v2392 = vpack.c.b16 %v2150, %v2149
  %v2393 = vpack.c.b16 %v2152, %v2151
  %v2394 = vpack.c.b16 %v2154, %v2153
  %v2395 = vpack.c.b16 %v2156, %v2155
  %v2396 = vpack.c.b16 %v2158, %v2157
  %v2397 = vpack.c.b16 %v2160, %v2159
  %v2398 = vpack.c.b16 %v2162, %v2161
  %v2399 = vpack.c.b16 %v2164, %v2163
  %v2400 = vpack.c.b16 %v2166, %v2165
  %v2401 = vpack.c.b16 %v2168, %v2167
  %v2402 = vpack.c.b16 %v2170, %v2169
  %v2403 = vpack.c.b16 %v2172, %v2171
  %v2404 = vpack.c.b16 %v2174, %v2173
  %v2405 = vpack.c.b16 %v2176, %v2175
  %v2406 = vpack.c.b16 %v2178, %v2177
  %v2407 = vpack.c.b16 %v2180, %v2179
  %v2408 = vpack.c.b16 %v2182, %v2181
  %v2409 = vpack.c.b16 %v2184, %v2183
  %v2410 = vpack.c.b16 %v2186, %v2185
  %v2411 = vpack.c.b16 %v2188, %v2187
  %v2412 = vpack.c.b16 %v2190, %v2189
  %v2413 = vpack.c.b16 %v2192, %v2191
  %v2414 = vpack.c.b16 %v2194, %v2193
  %v2415 = vpack.c.b16 %v2196, %v2195
  %v2416 = vpack.c.b16 %v2198, %v2197
  %v2417 = vpack.c.b16 %v2200, %v2199
  %v2418 = vpack.c.b16 %v2202, %v2201
  %v2419 = vpack.c.b16 %v2204, %v2203
  %v2420 = vpack.c.b16 %v2206, %v2205
  %v2421 = vpack.c.b16 %v2208, %v2207
  %v2422 = vpack.c.b16 %v2210, %v2209
  %v2423 = vpack.c.b16 %v2212, %v2211
  %v2424 = vpack.c.b16 %v2214, %v2213
  %v2425 = vpack.c.b16 %v2216, %v2215
  %v2426 = vpack.c.b16 %v2218, %v2217
  %v2427 = vpack.c.b16 %v2220, %v2219
  %v2428 = vpack.c.b16 %v2222, %v2221
  %v2429 = vpack.c.b16 %v2224, %v2223
  %v2430 = vpack.c.b16 %v2226, %v2225
  %v2431 = vpack.c.b16 %v2228, %v2227
  %v2432 = vpack.c.b16 %v2230, %v2229
  %v2433 = vpack.c.b16 %v2232, %v2231
  %v2434 = vpack.c.b16 %v2234, %v2233
  %2635 = vmatprep.subr.bf16.mxu0 0
  %2636 = vmatpush1.bf16.msra.mxu0 %v2235
  %2637 = vmatprep.subr.bf16.mxu0 0
  %2638 = vmatpush1.bf16.msra.mxu0 %v2236
  %2639 = vmatprep.subr.bf16.mxu0 0
  %2640 = vmatpush1.bf16.msra.mxu0 %v2237
  %2641 = vmatprep.subr.bf16.mxu0 0
  %2642 = vmatpush1.bf16.msra.mxu0 %v2238
  %2643 = vmatprep.subr.bf16.mxu0 0
  %2644 = vmatpush1.bf16.msra.mxu0 %v2239
  %2645 = vmatprep.subr.bf16.mxu0 0
  %2646 = vmatpush1.bf16.msra.mxu0 %v2240
  %2647 = vmatprep.subr.bf16.mxu0 0
  %2648 = vmatpush1.bf16.msra.mxu0 %v2241
  %2649 = vmatprep.subr.bf16.mxu0 0
  %2650 = vmatpush1.bf16.msra.mxu0 %v2242
  %2651 = vmatprep.subr.bf16.mxu0 0
  %2652 = vmatpush1.bf16.msra.mxu0 %v2243
  %2653 = vmatprep.subr.bf16.mxu0 0
  %2654 = vmatpush1.bf16.msra.mxu0 %v2244
  %2655 = vmatprep.subr.bf16.mxu0 0
  %2656 = vmatpush1.bf16.msra.mxu0 %v2245
  %2657 = vmatprep.subr.bf16.mxu0 0
  %2658 = vmatpush1.bf16.msra.mxu0 %v2246
  %2659 = vmatprep.subr.bf16.mxu0 0
  %2660 = vmatpush1.bf16.msra.mxu0 %v2247
  %2661 = vmatprep.subr.bf16.mxu0 0
  %2662 = vmatpush1.bf16.msra.mxu0 %v2248
  %2663 = vmatprep.subr.bf16.mxu0 0
  %2664 = vmatpush1.bf16.msra.mxu0 %v2249
  %2665 = vmatprep.subr.bf16.mxu0 0
  %2666 = vmatpush1.bf16.msra.mxu0 %v2250
  %2667 = vmatprep.mubr.bf16.mxu0 %v1086
  %2668 = vmatmul.mubr.bf16.gmra.mrb[0].mxu0 %v1085
  %v2669 = vpop.f32.mrb[0].mxu0
  %v2670 = vadd.f32 %v589, %v2669
  %v2671 = vpop.f32.mrb[0].mxu0
  %v2672 = vpop.f32.mrb[0].mxu0
  %v2673 = vadd.f32 %v589, %v2672
  %v2674 = vpop.f32.mrb[0].mxu0
  %2675 = vmatprep.mubr.bf16.mxu0 %v1111
  %2676 = vmatmul.mubr.bf16.gmra.mrb[0].mxu0 %v1110
  %v2677 = vpop.f32.mrb[0].mxu0
  %v2678 = vadd.f32 %v589, %v2677
  %v2679 = vpop.f32.mrb[0].mxu0
  %v2680 = vpop.f32.mrb[0].mxu0
  %v2681 = vadd.f32 %v589, %v2680
  %v2682 = vpop.f32.mrb[0].mxu0
  %2683 = vmatprep.mubr.bf16.mxu0 %v1136
  %2684 = vmatmul.mubr.bf16.gmra.mrb[0].mxu0 %v1135
  %v2685 = vpop.f32.mrb[0].mxu0
  %v2686 = vadd.f32 %v589, %v2685
  %v2687 = vpop.f32.mrb[0].mxu0
  %v2688 = vpop.f32.mrb[0].mxu0
  %v2689 = vadd.f32 %v589, %v2688
  %v2690 = vpop.f32.mrb[0].mxu0
  %2691 = vmatprep.mubr.bf16.mxu0 %v1161
  %2692 = vmatmul.mubr.bf16.gmra.mrb[0].mxu0 %v1160
  %v2693 = vpop.f32.mrb[0].mxu0
  %v2694 = vadd.f32 %v589, %v2693
  %v2695 = vpop.f32.mrb[0].mxu0
  %v2696 = vpop.f32.mrb[0].mxu0
  %v2697 = vadd.f32 %v589, %v2696
  %v2698 = vpop.f32.mrb[0].mxu0
  %2699 = vmatprep.mubr.bf16.mxu0 %v1186
  %2700 = vmatmul.mubr.bf16.gmra.mrb[0].mxu0 %v1185
  %v2701 = vpop.f32.mrb[0].mxu0
  %v2702 = vadd.f32 %v589, %v2701
  %v2703 = vpop.f32.mrb[0].mxu0
  %v2704 = vpop.f32.mrb[0].mxu0
  %v2705 = vadd.f32 %v589, %v2704
  %v2706 = vpop.f32.mrb[0].mxu0
  %2707 = vmatprep.mubr.bf16.mxu0 %v1211
  %2708 = vmatmul.mubr.bf16.gmra.mrb[0].mxu0 %v1210
  %v2709 = vpop.f32.mrb[0].mxu0
  %v2710 = vadd.f32 %v589, %v2709
  %v2711 = vpop.f32.mrb[0].mxu0
  %v2712 = vpop.f32.mrb[0].mxu0
  %v2713 = vadd.f32 %v589, %v2712
  %v2714 = vpop.f32.mrb[0].mxu0
  %2715 = vmatprep.mubr.bf16.mxu0 %v1236
  %2716 = vmatmul.mubr.bf16.gmra.mrb[0].mxu0 %v1235
  %v2717 = vpop.f32.mrb[0].mxu0
  %v2718 = vadd.f32 %v589, %v2717
  %v2719 = vpop.f32.mrb[0].mxu0
  %v2720 = vpop.f32.mrb[0].mxu0
  %v2721 = vpop.f32.mrb[0].mxu0
  %2722 = vdwg.mxu0
  %2723 = vmatprep.subr.bf16.mxu0 0
  %2724 = vmatpush1.bf16.msra.mxu0 %v2251
  %2725 = vmatprep.subr.bf16.mxu0 0
  %2726 = vmatpush1.bf16.msra.mxu0 %v2252
  %2727 = vmatprep.subr.bf16.mxu0 0
  %2728 = vmatpush1.bf16.msra.mxu0 %v2253
  %2729 = vmatprep.subr.bf16.mxu0 0
  %2730 = vmatpush1.bf16.msra.mxu0 %v2254
  %2731 = vmatprep.subr.bf16.mxu0 0
  %2732 = vmatpush1.bf16.msra.mxu0 %v2255
  %2733 = vmatprep.subr.bf16.mxu0 0
  %2734 = vmatpush1.bf16.msra.mxu0 %v2256
  %2735 = vmatprep.subr.bf16.mxu0 0
  %2736 = vmatpush1.bf16.msra.mxu0 %v2257
  %2737 = vmatprep.subr.bf16.mxu0 0
  %2738 = vmatpush1.bf16.msra.mxu0 %v2258
  %2739 = vmatprep.subr.bf16.mxu0 0
  %2740 = vmatpush1.bf16.msra.mxu0 %v2259
  %2741 = vmatprep.subr.bf16.mxu0 0
  %2742 = vmatpush1.bf16.msra.mxu0 %v2260
  %2743 = vmatprep.subr.bf16.mxu0 0
  %2744 = vmatpush1.bf16.msra.mxu0 %v2261
  %2745 = vmatprep.subr.bf16.mxu0 0
  %2746 = vmatpush1.bf16.msra.mxu0 %v2262
  %2747 = vmatprep.subr.bf16.mxu0 0
  %2748 = vmatpush1.bf16.msra.mxu0 %v2263
  %2749 = vmatprep.subr.bf16.mxu0 0
  %2750 = vmatpush1.bf16.msra.mxu0 %v2264
  %2751 = vmatprep.subr.bf16.mxu0 0
  %2752 = vmatpush1.bf16.msra.mxu0 %v2265
  %2753 = vmatprep.subr.bf16.mxu0 0
  %2754 = vmatpush1.bf16.msra.mxu0 %v2266
  %2755 = vmatprep.mubr.bf16.mxu0 %v1088
  %2756 = vmatmul.mubr.bf16.gmra.mrb[0].mxu0 %v1087
  %v2757 = vpop.f32.mrb[0].mxu0
  %v2758 = vadd.f32 %v2670, %v2757
  %v2759 = vpop.f32.mrb[0].mxu0
  %v2760 = vpop.f32.mrb[0].mxu0
  %v2761 = vadd.f32 %v2673, %v2760
  %v2762 = vpop.f32.mrb[0].mxu0
  %2763 = vmatprep.mubr.bf16.mxu0 %v1113
  %2764 = vmatmul.mubr.bf16.gmra.mrb[0].mxu0 %v1112
  %v2765 = vpop.f32.mrb[0].mxu0
  %v2766 = vadd.f32 %v2678, %v2765
  %v2767 = vpop.f32.mrb[0].mxu0
  %v2768 = vpop.f32.mrb[0].mxu0
  %v2769 = vadd.f32 %v2681, %v2768
  %v2770 = vpop.f32.mrb[0].mxu0
  %2771 = vmatprep.mubr.bf16.mxu0 %v1138
  %2772 = vmatmul.mubr.bf16.gmra.mrb[0].mxu0 %v1137
  %v2773 = vpop.f32.mrb[0].mxu0
  %v2774 = vadd.f32 %v2686, %v2773
  %v2775 = vpop.f32.mrb[0].mxu0
  %v2776 = vpop.f32.mrb[0].mxu0
  %v2777 = vadd.f32 %v2689, %v2776
  %v2778 = vpop.f32.mrb[0].mxu0
  %2779 = vmatprep.mubr.bf16.mxu0 %v1163
  %2780 = vmatmul.mubr.bf16.gmra.mrb[0].mxu0 %v1162
  %v2781 = vpop.f32.mrb[0].mxu0
  %v2782 = vadd.f32 %v2694, %v2781
  %v2783 = vpop.f32.mrb[0].mxu0
  %v2784 = vpop.f32.mrb[0].mxu0
  %v2785 = vadd.f32 %v2697, %v2784
  %v2786 = vpop.f32.mrb[0].mxu0
  %2787 = vmatprep.mubr.bf16.mxu0 %v1188
  %2788 = vmatmul.mubr.bf16.gmra.mrb[0].mxu0 %v1187
  %v2789 = vpop.f32.mrb[0].mxu0
  %v2790 = vadd.f32 %v2702, %v2789
  %v2791 = vpop.f32.mrb[0].mxu0
  %v2792 = vpop.f32.mrb[0].mxu0
  %v2793 = vadd.f32 %v2705, %v2792
  %v2794 = vpop.f32.mrb[0].mxu0
  %2795 = vmatprep.mubr.bf16.mxu0 %v1213
  %2796 = vmatmul.mubr.bf16.gmra.mrb[0].mxu0 %v1212
  %v2797 = vpop.f32.mrb[0].mxu0
  %v2798 = vadd.f32 %v2710, %v2797
  %v2799 = vpop.f32.mrb[0].mxu0
  %v2800 = vpop.f32.mrb[0].mxu0
  %v2801 = vadd.f32 %v2713, %v2800
  %v2802 = vpop.f32.mrb[0].mxu0
  %2803 = vmatprep.mubr.bf16.mxu0 %v1238
  %2804 = vmatmul.mubr.bf16.gmra.mrb[0].mxu0 %v1237
  %v2805 = vpop.f32.mrb[0].mxu0
  %v2806 = vadd.f32 %v2718, %v2805
  %v2807 = vpop.f32.mrb[0].mxu0
  %v2808 = vpop.f32.mrb[0].mxu0
  %v2809 = vpop.f32.mrb[0].mxu0
  %2810 = vdwg.mxu0
  %2811 = vmatprep.subr.bf16.mxu0 0
  %2812 = vmatpush1.bf16.msra.mxu0 %v2267
  %2813 = vmatprep.subr.bf16.mxu0 0
  %2814 = vmatpush1.bf16.msra.mxu0 %v2268
  %2815 = vmatprep.subr.bf16.mxu0 0
  %2816 = vmatpush1.bf16.msra.mxu0 %v2269
  %2817 = vmatprep.subr.bf16.mxu0 0
  %2818 = vmatpush1.bf16.msra.mxu0 %v2270
  %2819 = vmatprep.subr.bf16.mxu0 0
  %2820 = vmatpush1.bf16.msra.mxu0 %v2271
  %2821 = vmatprep.subr.bf16.mxu0 0
  %2822 = vmatpush1.bf16.msra.mxu0 %v2272
  %2823 = vmatprep.subr.bf16.mxu0 0
  %2824 = vmatpush1.bf16.msra.mxu0 %v2273
  %2825 = vmatprep.subr.bf16.mxu0 0
  %2826 = vmatpush1.bf16.msra.mxu0 %v2274
  %2827 = vmatprep.subr.bf16.mxu0 0
  %2828 = vmatpush1.bf16.msra.mxu0 %v2275
  %2829 = vmatprep.subr.bf16.mxu0 0
  %2830 = vmatpush1.bf16.msra.mxu0 %v2276
  %2831 = vmatprep.subr.bf16.mxu0 0
  %2832 = vmatpush1.bf16.msra.mxu0 %v2277
  %2833 = vmatprep.subr.bf16.mxu0 0
  %2834 = vmatpush1.bf16.msra.mxu0 %v2278
  %2835 = vmatprep.subr.bf16.mxu0 0
  %2836 = vmatpush1.bf16.msra.mxu0 %v2279
  %2837 = vmatprep.subr.bf16.mxu0 0
  %2838 = vmatpush1.bf16.msra.mxu0 %v2280
  %2839 = vmatprep.subr.bf16.mxu0 0
  %2840 = vmatpush1.bf16.msra.mxu0 %v2281
  %2841 = vmatprep.subr.bf16.mxu0 0
  %2842 = vmatpush1.bf16.msra.mxu0 %v2282
  %2843 = vmatprep.mubr.bf16.mxu0 %v1090
  %2844 = vmatmul.mubr.bf16.gmra.mrb[0].mxu0 %v1089
  %v2845 = vpop.f32.mrb[0].mxu0
  %v2846 = vadd.f32 %v2758, %v2845
  %v2847 = vpop.f32.mrb[0].mxu0
  %v2848 = vpop.f32.mrb[0].mxu0
  %v2849 = vadd.f32 %v2761, %v2848
  %v2850 = vpop.f32.mrb[0].mxu0
  %2851 = vmatprep.mubr.bf16.mxu0 %v1115
  %2852 = vmatmul.mubr.bf16.gmra.mrb[0].mxu0 %v1114
  %v2853 = vpop.f32.mrb[0].mxu0
  %v2854 = vadd.f32 %v2766, %v2853
  %v2855 = vpop.f32.mrb[0].mxu0
  %v2856 = vpop.f32.mrb[0].mxu0
  %v2857 = vadd.f32 %v2769, %v2856
  %v2858 = vpop.f32.mrb[0].mxu0
  %2859 = vmatprep.mubr.bf16.mxu0 %v1140
  %2860 = vmatmul.mubr.bf16.gmra.mrb[0].mxu0 %v1139
  %v2861 = vpop.f32.mrb[0].mxu0
  %v2862 = vadd.f32 %v2774, %v2861
  %v2863 = vpop.f32.mrb[0].mxu0
  %v2864 = vpop.f32.mrb[0].mxu0
  %v2865 = vadd.f32 %v2777, %v2864
  %v2866 = vpop.f32.mrb[0].mxu0
  %2867 = vmatprep.mubr.bf16.mxu0 %v1165
  %2868 = vmatmul.mubr.bf16.gmra.mrb[0].mxu0 %v1164
  %v2869 = vpop.f32.mrb[0].mxu0
  %v2870 = vadd.f32 %v2782, %v2869
  %v2871 = vpop.f32.mrb[0].mxu0
  %v2872 = vpop.f32.mrb[0].mxu0
  %v2873 = vadd.f32 %v2785, %v2872
  %v2874 = vpop.f32.mrb[0].mxu0
  %2875 = vmatprep.mubr.bf16.mxu0 %v1190
  %2876 = vmatmul.mubr.bf16.gmra.mrb[0].mxu0 %v1189
  %v2877 = vpop.f32.mrb[0].mxu0
  %v2878 = vadd.f32 %v2790, %v2877
  %v2879 = vpop.f32.mrb[0].mxu0
  %v2880 = vpop.f32.mrb[0].mxu0
  %v2881 = vadd.f32 %v2793, %v2880
  %v2882 = vpop.f32.mrb[0].mxu0
  %2883 = vmatprep.mubr.bf16.mxu0 %v1215
  %2884 = vmatmul.mubr.bf16.gmra.mrb[0].mxu0 %v1214
  %v2885 = vpop.f32.mrb[0].mxu0
  %v2886 = vadd.f32 %v2798, %v2885
  %v2887 = vpop.f32.mrb[0].mxu0
  %v2888 = vpop.f32.mrb[0].mxu0
  %v2889 = vadd.f32 %v2801, %v2888
  %v2890 = vpop.f32.mrb[0].mxu0
  %2891 = vmatprep.mubr.bf16.mxu0 %v1240
  %2892 = vmatmul.mubr.bf16.gmra.mrb[0].mxu0 %v1239
  %v2893 = vpop.f32.mrb[0].mxu0
  %v2894 = vadd.f32 %v2806, %v2893
  %v2895 = vpop.f32.mrb[0].mxu0
  %v2896 = vpop.f32.mrb[0].mxu0
  %v2897 = vpop.f32.mrb[0].mxu0
  %2898 = vdwg.mxu0
  %2899 = vmatprep.subr.bf16.mxu0 0
  %2900 = vmatpush1.bf16.msra.mxu0 %v2283
  %2901 = vmatprep.subr.bf16.mxu0 0
  %2902 = vmatpush1.bf16.msra.mxu0 %v2284
  %2903 = vmatprep.subr.bf16.mxu0 0
  %2904 = vmatpush1.bf16.msra.mxu0 %v2285
  %2905 = vmatprep.subr.bf16.mxu0 0
  %2906 = vmatpush1.bf16.msra.mxu0 %v2286
  %2907 = vmatprep.subr.bf16.mxu0 0
  %2908 = vmatpush1.bf16.msra.mxu0 %v2287
  %2909 = vmatprep.subr.bf16.mxu0 0
  %2910 = vmatpush1.bf16.msra.mxu0 %v2288
  %2911 = vmatprep.subr.bf16.mxu0 0
  %2912 = vmatpush1.bf16.msra.mxu0 %v2289
  %2913 = vmatprep.subr.bf16.mxu0 0
  %2914 = vmatpush1.bf16.msra.mxu0 %v2290
  %2915 = vmatprep.subr.bf16.mxu0 0
  %2916 = vmatpush1.bf16.msra.mxu0 %v2291
  %2917 = vmatprep.subr.bf16.mxu0 0
  %2918 = vmatpush1.bf16.msra.mxu0 %v2292
  %2919 = vmatprep.subr.bf16.mxu0 0
  %2920 = vmatpush1.bf16.msra.mxu0 %v2293
  %2921 = vmatprep.subr.bf16.mxu0 0
  %2922 = vmatpush1.bf16.msra.mxu0 %v2294
  %2923 = vmatprep.subr.bf16.mxu0 0
  %2924 = vmatpush1.bf16.msra.mxu0 %v2295
  %2925 = vmatprep.subr.bf16.mxu0 0
  %2926 = vmatpush1.bf16.msra.mxu0 %v2296
  %2927 = vmatprep.subr.bf16.mxu0 0
  %2928 = vmatpush1.bf16.msra.mxu0 %v2297
  %2929 = vmatprep.subr.bf16.mxu0 0
  %2930 = vmatpush1.bf16.msra.mxu0 %v2298
  %2931 = vmatprep.mubr.bf16.mxu0 %v1092
  %2932 = vmatmul.mubr.bf16.gmra.mrb[0].mxu0 %v1091
  %v2933 = vpop.f32.mrb[0].mxu0
  %v2934 = vadd.f32 %v2846, %v2933
  %v2935 = vpop.f32.mrb[0].mxu0
  %v2936 = vpop.f32.mrb[0].mxu0
  %v2937 = vadd.f32 %v2849, %v2936
  %v2938 = vpop.f32.mrb[0].mxu0
  %2939 = vmatprep.mubr.bf16.mxu0 %v1117
  %2940 = vmatmul.mubr.bf16.gmra.mrb[0].mxu0 %v1116
  %v2941 = vpop.f32.mrb[0].mxu0
  %v2942 = vadd.f32 %v2854, %v2941
  %v2943 = vpop.f32.mrb[0].mxu0
  %v2944 = vpop.f32.mrb[0].mxu0
  %v2945 = vadd.f32 %v2857, %v2944
  %v2946 = vpop.f32.mrb[0].mxu0
  %2947 = vmatprep.mubr.bf16.mxu0 %v1142
  %2948 = vmatmul.mubr.bf16.gmra.mrb[0].mxu0 %v1141
  %v2949 = vpop.f32.mrb[0].mxu0
  %v2950 = vadd.f32 %v2862, %v2949
  %v2951 = vpop.f32.mrb[0].mxu0
  %v2952 = vpop.f32.mrb[0].mxu0
  %v2953 = vadd.f32 %v2865, %v2952
  %v2954 = vpop.f32.mrb[0].mxu0
  %2955 = vmatprep.mubr.bf16.mxu0 %v1167
  %2956 = vmatmul.mubr.bf16.gmra.mrb[0].mxu0 %v1166
  %v2957 = vpop.f32.mrb[0].mxu0
  %v2958 = vadd.f32 %v2870, %v2957
  %v2959 = vpop.f32.mrb[0].mxu0
  %v2960 = vpop.f32.mrb[0].mxu0
  %v2961 = vadd.f32 %v2873, %v2960
  %v2962 = vpop.f32.mrb[0].mxu0
  %2963 = vmatprep.mubr.bf16.mxu0 %v1192
  %2964 = vmatmul.mubr.bf16.gmra.mrb[0].mxu0 %v1191
  %v2965 = vpop.f32.mrb[0].mxu0
  %v2966 = vadd.f32 %v2878, %v2965
  %v2967 = vpop.f32.mrb[0].mxu0
  %v2968 = vpop.f32.mrb[0].mxu0
  %v2969 = vadd.f32 %v2881, %v2968
  %v2970 = vpop.f32.mrb[0].mxu0
  %2971 = vmatprep.mubr.bf16.mxu0 %v1217
  %2972 = vmatmul.mubr.bf16.gmra.mrb[0].mxu0 %v1216
  %v2973 = vpop.f32.mrb[0].mxu0
  %v2974 = vadd.f32 %v2886, %v2973
  %v2975 = vpop.f32.mrb[0].mxu0
  %v2976 = vpop.f32.mrb[0].mxu0
  %v2977 = vadd.f32 %v2889, %v2976
  %v2978 = vpop.f32.mrb[0].mxu0
  %2979 = vmatprep.mubr.bf16.mxu0 %v1242
  %2980 = vmatmul.mubr.bf16.gmra.mrb[0].mxu0 %v1241
  %v2981 = vpop.f32.mrb[0].mxu0
  %v2982 = vadd.f32 %v2894, %v2981
  %v2983 = vpop.f32.mrb[0].mxu0
  %v2984 = vpop.f32.mrb[0].mxu0
  %v2985 = vpop.f32.mrb[0].mxu0
  %2986 = vdwg.mxu0
  %2987 = vmatprep.subr.bf16.mxu0 0
  %2988 = vmatpush1.bf16.msra.mxu0 %v2299
  %2989 = vmatprep.subr.bf16.mxu0 0
  %2990 = vmatpush1.bf16.msra.mxu0 %v2300
  %2991 = vmatprep.subr.bf16.mxu0 0
  %2992 = vmatpush1.bf16.msra.mxu0 %v2301
  %2993 = vmatprep.subr.bf16.mxu0 0
  %2994 = vmatpush1.bf16.msra.mxu0 %v2302
  %2995 = vmatprep.subr.bf16.mxu0 0
  %2996 = vmatpush1.bf16.msra.mxu0 %v2303
  %2997 = vmatprep.subr.bf16.mxu0 0
  %2998 = vmatpush1.bf16.msra.mxu0 %v2304
  %2999 = vmatprep.subr.bf16.mxu0 0
  %3000 = vmatpush1.bf16.msra.mxu0 %v2305
  %3001 = vmatprep.subr.bf16.mxu0 0
  %3002 = vmatpush1.bf16.msra.mxu0 %v2306
  %3003 = vmatprep.subr.bf16.mxu0 0
  %3004 = vmatpush1.bf16.msra.mxu0 %v2307
  %3005 = vmatprep.subr.bf16.mxu0 0
  %3006 = vmatpush1.bf16.msra.mxu0 %v2308
  %3007 = vmatprep.subr.bf16.mxu0 0
  %3008 = vmatpush1.bf16.msra.mxu0 %v2309
  %3009 = vmatprep.subr.bf16.mxu0 0
  %3010 = vmatpush1.bf16.msra.mxu0 %v2310
  %3011 = vmatprep.subr.bf16.mxu0 0
  %3012 = vmatpush1.bf16.msra.mxu0 %v2311
  %3013 = vmatprep.subr.bf16.mxu0 0
  %3014 = vmatpush1.bf16.msra.mxu0 %v2312
  %3015 = vmatprep.subr.bf16.mxu0 0
  %3016 = vmatpush1.bf16.msra.mxu0 %v2313
  %3017 = vmatprep.subr.bf16.mxu0 0
  %3018 = vmatpush1.bf16.msra.mxu0 %v2314
  %3019 = vmatprep.mubr.bf16.mxu0 %v1094
  %3020 = vmatmul.mubr.bf16.gmra.mrb[0].mxu0 %v1093
  %v3021 = vpop.f32.mrb[0].mxu0
  %v3022 = vadd.f32 %v2934, %v3021
  %v3023 = vpop.f32.mrb[0].mxu0
  %v3024 = vpop.f32.mrb[0].mxu0
  %v3025 = vadd.f32 %v2937, %v3024
  %v3026 = vpop.f32.mrb[0].mxu0
  %3027 = vmatprep.mubr.bf16.mxu0 %v1119
  %3028 = vmatmul.mubr.bf16.gmra.mrb[0].mxu0 %v1118
  %v3029 = vpop.f32.mrb[0].mxu0
  %v3030 = vadd.f32 %v2942, %v3029
  %v3031 = vpop.f32.mrb[0].mxu0
  %v3032 = vpop.f32.mrb[0].mxu0
  %v3033 = vadd.f32 %v2945, %v3032
  %v3034 = vpop.f32.mrb[0].mxu0
  %3035 = vmatprep.mubr.bf16.mxu0 %v1144
  %3036 = vmatmul.mubr.bf16.gmra.mrb[0].mxu0 %v1143
  %v3037 = vpop.f32.mrb[0].mxu0
  %v3038 = vadd.f32 %v2950, %v3037
  %v3039 = vpop.f32.mrb[0].mxu0
  %v3040 = vpop.f32.mrb[0].mxu0
  %v3041 = vadd.f32 %v2953, %v3040
  %v3042 = vpop.f32.mrb[0].mxu0
  %3043 = vmatprep.mubr.bf16.mxu0 %v1169
  %3044 = vmatmul.mubr.bf16.gmra.mrb[0].mxu0 %v1168
  %v3045 = vpop.f32.mrb[0].mxu0
  %v3046 = vadd.f32 %v2958, %v3045
  %v3047 = vpop.f32.mrb[0].mxu0
  %v3048 = vpop.f32.mrb[0].mxu0
  %v3049 = vadd.f32 %v2961, %v3048
  %v3050 = vpop.f32.mrb[0].mxu0
  %3051 = vmatprep.mubr.bf16.mxu0 %v1194
  %3052 = vmatmul.mubr.bf16.gmra.mrb[0].mxu0 %v1193
  %v3053 = vpop.f32.mrb[0].mxu0
  %v3054 = vadd.f32 %v2966, %v3053
  %v3055 = vpop.f32.mrb[0].mxu0
  %v3056 = vpop.f32.mrb[0].mxu0
  %v3057 = vadd.f32 %v2969, %v3056
  %v3058 = vpop.f32.mrb[0].mxu0
  %3059 = vmatprep.mubr.bf16.mxu0 %v1219
  %3060 = vmatmul.mubr.bf16.gmra.mrb[0].mxu0 %v1218
  %v3061 = vpop.f32.mrb[0].mxu0
  %v3062 = vadd.f32 %v2974, %v3061
  %v3063 = vpop.f32.mrb[0].mxu0
  %v3064 = vpop.f32.mrb[0].mxu0
  %v3065 = vadd.f32 %v2977, %v3064
  %v3066 = vpop.f32.mrb[0].mxu0
  %3067 = vmatprep.mubr.bf16.mxu0 %v1244
  %3068 = vmatmul.mubr.bf16.gmra.mrb[0].mxu0 %v1243
  %v3069 = vpop.f32.mrb[0].mxu0
  %v3070 = vadd.f32 %v2982, %v3069
  %v3071 = vpop.f32.mrb[0].mxu0
  %v3072 = vpop.f32.mrb[0].mxu0
  %v3073 = vpop.f32.mrb[0].mxu0
  %3074 = vdwg.mxu0
  %3075 = vmatprep.subr.bf16.mxu0 0
  %3076 = vmatpush1.bf16.msra.mxu0 %v2315
  %3077 = vmatprep.subr.bf16.mxu0 0
  %3078 = vmatpush1.bf16.msra.mxu0 %v2316
  %3079 = vmatprep.subr.bf16.mxu0 0
  %3080 = vmatpush1.bf16.msra.mxu0 %v2317
  %3081 = vmatprep.subr.bf16.mxu0 0
  %3082 = vmatpush1.bf16.msra.mxu0 %v2318
  %3083 = vmatprep.subr.bf16.mxu0 0
  %3084 = vmatpush1.bf16.msra.mxu0 %v2319
  %3085 = vmatprep.subr.bf16.mxu0 0
  %3086 = vmatpush1.bf16.msra.mxu0 %v2320
  %3087 = vmatprep.subr.bf16.mxu0 0
  %3088 = vmatpush1.bf16.msra.mxu0 %v2321
  %3089 = vmatprep.subr.bf16.mxu0 0
  %3090 = vmatpush1.bf16.msra.mxu0 %v2322
  %3091 = vmatprep.subr.bf16.mxu0 0
  %3092 = vmatpush1.bf16.msra.mxu0 %v2323
  %3093 = vmatprep.subr.bf16.mxu0 0
  %3094 = vmatpush1.bf16.msra.mxu0 %v2324
  %3095 = vmatprep.subr.bf16.mxu0 0
  %3096 = vmatpush1.bf16.msra.mxu0 %v2325
  %3097 = vmatprep.subr.bf16.mxu0 0
  %3098 = vmatpush1.bf16.msra.mxu0 %v2326
  %3099 = vmatprep.subr.bf16.mxu0 0
  %3100 = vmatpush1.bf16.msra.mxu0 %v2327
  %3101 = vmatprep.subr.bf16.mxu0 0
  %3102 = vmatpush1.bf16.msra.mxu0 %v2328
  %3103 = vmatprep.subr.bf16.mxu0 0
  %3104 = vmatpush1.bf16.msra.mxu0 %v2329
  %3105 = vmatprep.subr.bf16.mxu0 0
  %3106 = vmatpush1.bf16.msra.mxu0 %v2330
  %3107 = vmatprep.mubr.bf16.mxu0 %v1096
  %3108 = vmatmul.mubr.bf16.gmra.mrb[0].mxu0 %v1095
  %v3109 = vpop.f32.mrb[0].mxu0
  %v3110 = vadd.f32 %v3022, %v3109
  %v3111 = vpop.f32.mrb[0].mxu0
  %v3112 = vpop.f32.mrb[0].mxu0
  %v3113 = vadd.f32 %v3025, %v3112
  %v3114 = vpop.f32.mrb[0].mxu0
  %3115 = vmatprep.mubr.bf16.mxu0 %v1121
  %3116 = vmatmul.mubr.bf16.gmra.mrb[0].mxu0 %v1120
  %v3117 = vpop.f32.mrb[0].mxu0
  %v3118 = vadd.f32 %v3030, %v3117
  %v3119 = vpop.f32.mrb[0].mxu0
  %v3120 = vpop.f32.mrb[0].mxu0
  %v3121 = vadd.f32 %v3033, %v3120
  %v3122 = vpop.f32.mrb[0].mxu0
  %3123 = vmatprep.mubr.bf16.mxu0 %v1146
  %3124 = vmatmul.mubr.bf16.gmra.mrb[0].mxu0 %v1145
  %v3125 = vpop.f32.mrb[0].mxu0
  %v3126 = vadd.f32 %v3038, %v3125
  %v3127 = vpop.f32.mrb[0].mxu0
  %v3128 = vpop.f32.mrb[0].mxu0
  %v3129 = vadd.f32 %v3041, %v3128
  %v3130 = vpop.f32.mrb[0].mxu0
  %3131 = vmatprep.mubr.bf16.mxu0 %v1171
  %3132 = vmatmul.mubr.bf16.gmra.mrb[0].mxu0 %v1170
  %v3133 = vpop.f32.mrb[0].mxu0
  %v3134 = vadd.f32 %v3046, %v3133
  %v3135 = vpop.f32.mrb[0].mxu0
  %v3136 = vpop.f32.mrb[0].mxu0
  %v3137 = vadd.f32 %v3049, %v3136
  %v3138 = vpop.f32.mrb[0].mxu0
  %3139 = vmatprep.mubr.bf16.mxu0 %v1196
  %3140 = vmatmul.mubr.bf16.gmra.mrb[0].mxu0 %v1195
  %v3141 = vpop.f32.mrb[0].mxu0
  %v3142 = vadd.f32 %v3054, %v3141
  %v3143 = vpop.f32.mrb[0].mxu0
  %v3144 = vpop.f32.mrb[0].mxu0
  %v3145 = vadd.f32 %v3057, %v3144
  %v3146 = vpop.f32.mrb[0].mxu0
  %3147 = vmatprep.mubr.bf16.mxu0 %v1221
  %3148 = vmatmul.mubr.bf16.gmra.mrb[0].mxu0 %v1220
  %v3149 = vpop.f32.mrb[0].mxu0
  %v3150 = vadd.f32 %v3062, %v3149
  %v3151 = vpop.f32.mrb[0].mxu0
  %v3152 = vpop.f32.mrb[0].mxu0
  %v3153 = vadd.f32 %v3065, %v3152
  %v3154 = vpop.f32.mrb[0].mxu0
  %3155 = vmatprep.mubr.bf16.mxu0 %v1246
  %3156 = vmatmul.mubr.bf16.gmra.mrb[0].mxu0 %v1245
  %v3157 = vpop.f32.mrb[0].mxu0
  %v3158 = vadd.f32 %v3070, %v3157
  %v3159 = vpop.f32.mrb[0].mxu0
  %v3160 = vpop.f32.mrb[0].mxu0
  %v3161 = vpop.f32.mrb[0].mxu0
  %3162 = vdwg.mxu0
  %3163 = vmatprep.subr.bf16.mxu0 0
  %3164 = vmatpush1.bf16.msra.mxu0 %v2331
  %3165 = vmatprep.subr.bf16.mxu0 0
  %3166 = vmatpush1.bf16.msra.mxu0 %v2332
  %3167 = vmatprep.subr.bf16.mxu0 0
  %3168 = vmatpush1.bf16.msra.mxu0 %v2333
  %3169 = vmatprep.subr.bf16.mxu0 0
  %3170 = vmatpush1.bf16.msra.mxu0 %v2334
  %3171 = vmatprep.subr.bf16.mxu0 0
  %3172 = vmatpush1.bf16.msra.mxu0 %v2335
  %3173 = vmatprep.subr.bf16.mxu0 0
  %3174 = vmatpush1.bf16.msra.mxu0 %v2336
  %3175 = vmatprep.subr.bf16.mxu0 0
  %3176 = vmatpush1.bf16.msra.mxu0 %v2337
  %3177 = vmatprep.subr.bf16.mxu0 0
  %3178 = vmatpush1.bf16.msra.mxu0 %v2338
  %3179 = vmatprep.subr.bf16.mxu0 0
  %3180 = vmatpush1.bf16.msra.mxu0 %v2339
  %3181 = vmatprep.subr.bf16.mxu0 0
  %3182 = vmatpush1.bf16.msra.mxu0 %v2340
  %3183 = vmatprep.subr.bf16.mxu0 0
  %3184 = vmatpush1.bf16.msra.mxu0 %v2341
  %3185 = vmatprep.subr.bf16.mxu0 0
  %3186 = vmatpush1.bf16.msra.mxu0 %v2342
  %3187 = vmatprep.subr.bf16.mxu0 0
  %3188 = vmatpush1.bf16.msra.mxu0 %v2343
  %3189 = vmatprep.subr.bf16.mxu0 0
  %3190 = vmatpush1.bf16.msra.mxu0 %v2344
  %3191 = vmatprep.subr.bf16.mxu0 0
  %3192 = vmatpush1.bf16.msra.mxu0 %v2345
  %3193 = vmatprep.subr.bf16.mxu0 0
  %3194 = vmatpush1.bf16.msra.mxu0 %v2346
  %3195 = vmatprep.mubr.bf16.mxu0 %v1098
  %3196 = vmatmul.mubr.bf16.gmra.mrb[0].mxu0 %v1097
  %v3197 = vpop.f32.mrb[0].mxu0
  %v3198 = vadd.f32 %v3110, %v3197
  %v3199 = vpop.f32.mrb[0].mxu0
  %v3200 = vpop.f32.mrb[0].mxu0
  %v3201 = vadd.f32 %v3113, %v3200
  %v3202 = vpop.f32.mrb[0].mxu0
  %3203 = vmatprep.mubr.bf16.mxu0 %v1123
  %3204 = vmatmul.mubr.bf16.gmra.mrb[0].mxu0 %v1122
  %v3205 = vpop.f32.mrb[0].mxu0
  %v3206 = vadd.f32 %v3118, %v3205
  %v3207 = vpop.f32.mrb[0].mxu0
  %v3208 = vpop.f32.mrb[0].mxu0
  %v3209 = vadd.f32 %v3121, %v3208
  %v3210 = vpop.f32.mrb[0].mxu0
  %3211 = vmatprep.mubr.bf16.mxu0 %v1148
  %3212 = vmatmul.mubr.bf16.gmra.mrb[0].mxu0 %v1147
  %v3213 = vpop.f32.mrb[0].mxu0
  %v3214 = vadd.f32 %v3126, %v3213
  %v3215 = vpop.f32.mrb[0].mxu0
  %v3216 = vpop.f32.mrb[0].mxu0
  %v3217 = vadd.f32 %v3129, %v3216
  %v3218 = vpop.f32.mrb[0].mxu0
  %3219 = vmatprep.mubr.bf16.mxu0 %v1173
  %3220 = vmatmul.mubr.bf16.gmra.mrb[0].mxu0 %v1172
  %v3221 = vpop.f32.mrb[0].mxu0
  %v3222 = vadd.f32 %v3134, %v3221
  %v3223 = vpop.f32.mrb[0].mxu0
  %v3224 = vpop.f32.mrb[0].mxu0
  %v3225 = vadd.f32 %v3137, %v3224
  %v3226 = vpop.f32.mrb[0].mxu0
  %3227 = vmatprep.mubr.bf16.mxu0 %v1198
  %3228 = vmatmul.mubr.bf16.gmra.mrb[0].mxu0 %v1197
  %v3229 = vpop.f32.mrb[0].mxu0
  %v3230 = vadd.f32 %v3142, %v3229
  %v3231 = vpop.f32.mrb[0].mxu0
  %v3232 = vpop.f32.mrb[0].mxu0
  %v3233 = vadd.f32 %v3145, %v3232
  %v3234 = vpop.f32.mrb[0].mxu0
  %3235 = vmatprep.mubr.bf16.mxu0 %v1223
  %3236 = vmatmul.mubr.bf16.gmra.mrb[0].mxu0 %v1222
  %v3237 = vpop.f32.mrb[0].mxu0
  %v3238 = vadd.f32 %v3150, %v3237
  %v3239 = vpop.f32.mrb[0].mxu0
  %v3240 = vpop.f32.mrb[0].mxu0
  %v3241 = vadd.f32 %v3153, %v3240
  %v3242 = vpop.f32.mrb[0].mxu0
  %3243 = vmatprep.mubr.bf16.mxu0 %v1248
  %3244 = vmatmul.mubr.bf16.gmra.mrb[0].mxu0 %v1247
  %v3245 = vpop.f32.mrb[0].mxu0
  %v3246 = vadd.f32 %v3158, %v3245
  %v3247 = vpop.f32.mrb[0].mxu0
  %v3248 = vpop.f32.mrb[0].mxu0
  %v3249 = vpop.f32.mrb[0].mxu0
  %3250 = vdwg.mxu0
  %3251 = vmatprep.subr.bf16.mxu0 0
  %3252 = vmatpush1.bf16.msra.mxu0 %v2347
  %3253 = vmatprep.subr.bf16.mxu0 0
  %3254 = vmatpush1.bf16.msra.mxu0 %v2348
  %3255 = vmatprep.subr.bf16.mxu0 0
  %3256 = vmatpush1.bf16.msra.mxu0 %v2349
  %3257 = vmatprep.subr.bf16.mxu0 0
  %3258 = vmatpush1.bf16.msra.mxu0 %v2350
  %3259 = vmatprep.subr.bf16.mxu0 0
  %3260 = vmatpush1.bf16.msra.mxu0 %v2351
  %3261 = vmatprep.subr.bf16.mxu0 0
  %3262 = vmatpush1.bf16.msra.mxu0 %v2352
  %3263 = vmatprep.subr.bf16.mxu0 0
  %3264 = vmatpush1.bf16.msra.mxu0 %v2353
  %3265 = vmatprep.subr.bf16.mxu0 0
  %3266 = vmatpush1.bf16.msra.mxu0 %v2354
  %3267 = vmatprep.subr.bf16.mxu0 0
  %3268 = vmatpush1.bf16.msra.mxu0 %v2355
  %3269 = vmatprep.subr.bf16.mxu0 0
  %3270 = vmatpush1.bf16.msra.mxu0 %v2356
  %3271 = vmatprep.subr.bf16.mxu0 0
  %3272 = vmatpush1.bf16.msra.mxu0 %v2357
  %3273 = vmatprep.subr.bf16.mxu0 0
  %3274 = vmatpush1.bf16.msra.mxu0 %v2358
  %3275 = vmatprep.subr.bf16.mxu0 0
  %3276 = vmatpush1.bf16.msra.mxu0 %v2359
  %3277 = vmatprep.subr.bf16.mxu0 0
  %3278 = vmatpush1.bf16.msra.mxu0 %v2360
  %3279 = vmatprep.subr.bf16.mxu0 0
  %3280 = vmatpush1.bf16.msra.mxu0 %v2361
  %3281 = vmatprep.subr.bf16.mxu0 0
  %3282 = vmatpush1.bf16.msra.mxu0 %v2362
  %3283 = vmatprep.mubr.bf16.mxu0 %v1100
  %3284 = vmatmul.mubr.bf16.gmra.mrb[0].mxu0 %v1099
  %v3285 = vpop.f32.mrb[0].mxu0
  %v3286 = vadd.f32 %v3198, %v3285
  %v3287 = vpop.f32.mrb[0].mxu0
  %v3288 = vpop.f32.mrb[0].mxu0
  %v3289 = vadd.f32 %v3201, %v3288
  %v3290 = vpop.f32.mrb[0].mxu0
  %3291 = vmatprep.mubr.bf16.mxu0 %v1125
  %3292 = vmatmul.mubr.bf16.gmra.mrb[0].mxu0 %v1124
  %v3293 = vpop.f32.mrb[0].mxu0
  %v3294 = vadd.f32 %v3206, %v3293
  %v3295 = vpop.f32.mrb[0].mxu0
  %v3296 = vpop.f32.mrb[0].mxu0
  %v3297 = vadd.f32 %v3209, %v3296
  %v3298 = vpop.f32.mrb[0].mxu0
  %3299 = vmatprep.mubr.bf16.mxu0 %v1150
  %3300 = vmatmul.mubr.bf16.gmra.mrb[0].mxu0 %v1149
  %v3301 = vpop.f32.mrb[0].mxu0
  %v3302 = vadd.f32 %v3214, %v3301
  %v3303 = vpop.f32.mrb[0].mxu0
  %v3304 = vpop.f32.mrb[0].mxu0
  %v3305 = vadd.f32 %v3217, %v3304
  %v3306 = vpop.f32.mrb[0].mxu0
  %3307 = vmatprep.mubr.bf16.mxu0 %v1175
  %3308 = vmatmul.mubr.bf16.gmra.mrb[0].mxu0 %v1174
  %v3309 = vpop.f32.mrb[0].mxu0
  %v3310 = vadd.f32 %v3222, %v3309
  %v3311 = vpop.f32.mrb[0].mxu0
  %v3312 = vpop.f32.mrb[0].mxu0
  %v3313 = vadd.f32 %v3225, %v3312
  %v3314 = vpop.f32.mrb[0].mxu0
  %3315 = vmatprep.mubr.bf16.mxu0 %v1200
  %3316 = vmatmul.mubr.bf16.gmra.mrb[0].mxu0 %v1199
  %v3317 = vpop.f32.mrb[0].mxu0
  %v3318 = vadd.f32 %v3230, %v3317
  %v3319 = vpop.f32.mrb[0].mxu0
  %v3320 = vpop.f32.mrb[0].mxu0
  %v3321 = vadd.f32 %v3233, %v3320
  %v3322 = vpop.f32.mrb[0].mxu0
  %3323 = vmatprep.mubr.bf16.mxu0 %v1225
  %3324 = vmatmul.mubr.bf16.gmra.mrb[0].mxu0 %v1224
  %v3325 = vpop.f32.mrb[0].mxu0
  %v3326 = vadd.f32 %v3238, %v3325
  %v3327 = vpop.f32.mrb[0].mxu0
  %v3328 = vpop.f32.mrb[0].mxu0
  %v3329 = vadd.f32 %v3241, %v3328
  %v3330 = vpop.f32.mrb[0].mxu0
  %3331 = vmatprep.mubr.bf16.mxu0 %v1250
  %3332 = vmatmul.mubr.bf16.gmra.mrb[0].mxu0 %v1249
  %v3333 = vpop.f32.mrb[0].mxu0
  %v3334 = vadd.f32 %v3246, %v3333
  %v3335 = vpop.f32.mrb[0].mxu0
  %v3336 = vpop.f32.mrb[0].mxu0
  %v3337 = vpop.f32.mrb[0].mxu0
  %3338 = vdwg.mxu0
  %3339 = vmatprep.subr.bf16.mxu0 0
  %3340 = vmatpush1.bf16.msra.mxu0 %v2363
  %3341 = vmatprep.subr.bf16.mxu0 0
  %3342 = vmatpush1.bf16.msra.mxu0 %v2364
  %3343 = vmatprep.subr.bf16.mxu0 0
  %3344 = vmatpush1.bf16.msra.mxu0 %v2365
  %3345 = vmatprep.subr.bf16.mxu0 0
  %3346 = vmatpush1.bf16.msra.mxu0 %v2366
  %3347 = vmatprep.subr.bf16.mxu0 0
  %3348 = vmatpush1.bf16.msra.mxu0 %v2367
  %3349 = vmatprep.subr.bf16.mxu0 0
  %3350 = vmatpush1.bf16.msra.mxu0 %v2368
  %3351 = vmatprep.subr.bf16.mxu0 0
  %3352 = vmatpush1.bf16.msra.mxu0 %v2369
  %3353 = vmatprep.subr.bf16.mxu0 0
  %3354 = vmatpush1.bf16.msra.mxu0 %v2370
  %3355 = vmatprep.subr.bf16.mxu0 0
  %3356 = vmatpush1.bf16.msra.mxu0 %v2371
  %3357 = vmatprep.subr.bf16.mxu0 0
  %3358 = vmatpush1.bf16.msra.mxu0 %v2372
  %3359 = vmatprep.subr.bf16.mxu0 0
  %3360 = vmatpush1.bf16.msra.mxu0 %v2373
  %3361 = vmatprep.subr.bf16.mxu0 0
  %3362 = vmatpush1.bf16.msra.mxu0 %v2374
  %3363 = vmatprep.subr.bf16.mxu0 0
  %3364 = vmatpush1.bf16.msra.mxu0 %v2375
  %3365 = vmatprep.subr.bf16.mxu0 0
  %3366 = vmatpush1.bf16.msra.mxu0 %v2376
  %3367 = vmatprep.subr.bf16.mxu0 0
  %3368 = vmatpush1.bf16.msra.mxu0 %v2377
  %3369 = vmatprep.subr.bf16.mxu0 0
  %3370 = vmatpush1.bf16.msra.mxu0 %v2378
  %3371 = vmatprep.mubr.bf16.mxu0 %v1102
  %3372 = vmatmul.mubr.bf16.gmra.mrb[0].mxu0 %v1101
  %v3373 = vpop.f32.mrb[0].mxu0
  %v3374 = vadd.f32 %v3286, %v3373
  %v3375 = vpop.f32.mrb[0].mxu0
  %v3376 = vpop.f32.mrb[0].mxu0
  %v3377 = vadd.f32 %v3289, %v3376
  %v3378 = vpop.f32.mrb[0].mxu0
  %3379 = vmatprep.mubr.bf16.mxu0 %v1127
  %3380 = vmatmul.mubr.bf16.gmra.mrb[0].mxu0 %v1126
  %v3381 = vpop.f32.mrb[0].mxu0
  %v3382 = vadd.f32 %v3294, %v3381
  %v3383 = vpop.f32.mrb[0].mxu0
  %v3384 = vpop.f32.mrb[0].mxu0
  %v3385 = vadd.f32 %v3297, %v3384
  %v3386 = vpop.f32.mrb[0].mxu0
  %3387 = vmatprep.mubr.bf16.mxu0 %v1152
  %3388 = vmatmul.mubr.bf16.gmra.mrb[0].mxu0 %v1151
  %v3389 = vpop.f32.mrb[0].mxu0
  %v3390 = vadd.f32 %v3302, %v3389
  %v3391 = vpop.f32.mrb[0].mxu0
  %v3392 = vpop.f32.mrb[0].mxu0
  %v3393 = vadd.f32 %v3305, %v3392
  %v3394 = vpop.f32.mrb[0].mxu0
  %3395 = vmatprep.mubr.bf16.mxu0 %v1177
  %3396 = vmatmul.mubr.bf16.gmra.mrb[0].mxu0 %v1176
  %v3397 = vpop.f32.mrb[0].mxu0
  %v3398 = vadd.f32 %v3310, %v3397
  %v3399 = vpop.f32.mrb[0].mxu0
  %v3400 = vpop.f32.mrb[0].mxu0
  %v3401 = vadd.f32 %v3313, %v3400
  %v3402 = vpop.f32.mrb[0].mxu0
  %3403 = vmatprep.mubr.bf16.mxu0 %v1202
  %3404 = vmatmul.mubr.bf16.gmra.mrb[0].mxu0 %v1201
  %v3405 = vpop.f32.mrb[0].mxu0
  %v3406 = vadd.f32 %v3318, %v3405
  %v3407 = vpop.f32.mrb[0].mxu0
  %v3408 = vpop.f32.mrb[0].mxu0
  %v3409 = vadd.f32 %v3321, %v3408
  %v3410 = vpop.f32.mrb[0].mxu0
  %3411 = vmatprep.mubr.bf16.mxu0 %v1227
  %3412 = vmatmul.mubr.bf16.gmra.mrb[0].mxu0 %v1226
  %v3413 = vpop.f32.mrb[0].mxu0
  %v3414 = vadd.f32 %v3326, %v3413
  %v3415 = vpop.f32.mrb[0].mxu0
  %v3416 = vpop.f32.mrb[0].mxu0
  %v3417 = vadd.f32 %v3329, %v3416
  %v3418 = vpop.f32.mrb[0].mxu0
  %3419 = vmatprep.mubr.bf16.mxu0 %v1252
  %3420 = vmatmul.mubr.bf16.gmra.mrb[0].mxu0 %v1251
  %v3421 = vpop.f32.mrb[0].mxu0
  %v3422 = vadd.f32 %v3334, %v3421
  %v3423 = vpop.f32.mrb[0].mxu0
  %v3424 = vpop.f32.mrb[0].mxu0
  %v3425 = vpop.f32.mrb[0].mxu0
  %3426 = vdwg.mxu0
  %3427 = vmatprep.subr.bf16.mxu0 0
  %3428 = vmatpush1.bf16.msra.mxu0 %v2379
  %3429 = vmatprep.subr.bf16.mxu0 0
  %3430 = vmatpush1.bf16.msra.mxu0 %v2380
  %3431 = vmatprep.subr.bf16.mxu0 0
  %3432 = vmatpush1.bf16.msra.mxu0 %v2381
  %3433 = vmatprep.subr.bf16.mxu0 0
  %3434 = vmatpush1.bf16.msra.mxu0 %v2382
  %3435 = vmatprep.subr.bf16.mxu0 0
  %3436 = vmatpush1.bf16.msra.mxu0 %v2383
  %3437 = vmatprep.subr.bf16.mxu0 0
  %3438 = vmatpush1.bf16.msra.mxu0 %v2384
  %3439 = vmatprep.subr.bf16.mxu0 0
  %3440 = vmatpush1.bf16.msra.mxu0 %v2385
  %3441 = vmatprep.subr.bf16.mxu0 0
  %3442 = vmatpush1.bf16.msra.mxu0 %v2386
  %3443 = vmatprep.subr.bf16.mxu0 0
  %3444 = vmatpush1.bf16.msra.mxu0 %v2387
  %3445 = vmatprep.subr.bf16.mxu0 0
  %3446 = vmatpush1.bf16.msra.mxu0 %v2388
  %3447 = vmatprep.subr.bf16.mxu0 0
  %3448 = vmatpush1.bf16.msra.mxu0 %v2389
  %3449 = vmatprep.subr.bf16.mxu0 0
  %3450 = vmatpush1.bf16.msra.mxu0 %v2390
  %3451 = vmatprep.subr.bf16.mxu0 0
  %3452 = vmatpush1.bf16.msra.mxu0 %v2391
  %3453 = vmatprep.subr.bf16.mxu0 0
  %3454 = vmatpush1.bf16.msra.mxu0 %v2392
  %3455 = vmatprep.subr.bf16.mxu0 0
  %3456 = vmatpush1.bf16.msra.mxu0 %v2393
  %3457 = vmatprep.subr.bf16.mxu0 0
  %3458 = vmatpush1.bf16.msra.mxu0 %v2394
  %3459 = vmatprep.mubr.bf16.mxu0 %v1104
  %3460 = vmatmul.mubr.bf16.gmra.mrb[0].mxu0 %v1103
  %v3461 = vpop.f32.mrb[0].mxu0
  %v3462 = vadd.f32 %v3374, %v3461
  %v3463 = vpop.f32.mrb[0].mxu0
  %v3464 = vpop.f32.mrb[0].mxu0
  %v3465 = vadd.f32 %v3377, %v3464
  %v3466 = vpop.f32.mrb[0].mxu0
  %3467 = vmatprep.mubr.bf16.mxu0 %v1129
  %3468 = vmatmul.mubr.bf16.gmra.mrb[0].mxu0 %v1128
  %v3469 = vpop.f32.mrb[0].mxu0
  %v3470 = vadd.f32 %v3382, %v3469
  %v3471 = vpop.f32.mrb[0].mxu0
  %v3472 = vpop.f32.mrb[0].mxu0
  %v3473 = vadd.f32 %v3385, %v3472
  %v3474 = vpop.f32.mrb[0].mxu0
  %3475 = vmatprep.mubr.bf16.mxu0 %v1154
  %3476 = vmatmul.mubr.bf16.gmra.mrb[0].mxu0 %v1153
  %v3477 = vpop.f32.mrb[0].mxu0
  %v3478 = vadd.f32 %v3390, %v3477
  %v3479 = vpop.f32.mrb[0].mxu0
  %v3480 = vpop.f32.mrb[0].mxu0
  %v3481 = vadd.f32 %v3393, %v3480
  %v3482 = vpop.f32.mrb[0].mxu0
  %3483 = vmatprep.mubr.bf16.mxu0 %v1179
  %3484 = vmatmul.mubr.bf16.gmra.mrb[0].mxu0 %v1178
  %v3485 = vpop.f32.mrb[0].mxu0
  %v3486 = vadd.f32 %v3398, %v3485
  %v3487 = vpop.f32.mrb[0].mxu0
  %v3488 = vpop.f32.mrb[0].mxu0
  %v3489 = vadd.f32 %v3401, %v3488
  %v3490 = vpop.f32.mrb[0].mxu0
  %3491 = vmatprep.mubr.bf16.mxu0 %v1204
  %3492 = vmatmul.mubr.bf16.gmra.mrb[0].mxu0 %v1203
  %v3493 = vpop.f32.mrb[0].mxu0
  %v3494 = vadd.f32 %v3406, %v3493
  %v3495 = vpop.f32.mrb[0].mxu0
  %v3496 = vpop.f32.mrb[0].mxu0
  %v3497 = vadd.f32 %v3409, %v3496
  %v3498 = vpop.f32.mrb[0].mxu0
  %3499 = vmatprep.mubr.bf16.mxu0 %v1229
  %3500 = vmatmul.mubr.bf16.gmra.mrb[0].mxu0 %v1228
  %v3501 = vpop.f32.mrb[0].mxu0
  %v3502 = vadd.f32 %v3414, %v3501
  %v3503 = vpop.f32.mrb[0].mxu0
  %v3504 = vpop.f32.mrb[0].mxu0
  %v3505 = vadd.f32 %v3417, %v3504
  %v3506 = vpop.f32.mrb[0].mxu0
  %3507 = vmatprep.mubr.bf16.mxu0 %v1254
  %3508 = vmatmul.mubr.bf16.gmra.mrb[0].mxu0 %v1253
  %v3509 = vpop.f32.mrb[0].mxu0
  %v3510 = vadd.f32 %v3422, %v3509
  %v3511 = vpop.f32.mrb[0].mxu0
  %v3512 = vpop.f32.mrb[0].mxu0
  %v3513 = vpop.f32.mrb[0].mxu0
  %3514 = vdwg.mxu0
  %3515 = vmatprep.subr.bf16.mxu0 0
  %3516 = vmatpush1.bf16.msra.mxu0 %v2395
  %3517 = vmatprep.subr.bf16.mxu0 0
  %3518 = vmatpush1.bf16.msra.mxu0 %v2396
  %3519 = vmatprep.subr.bf16.mxu0 0
  %3520 = vmatpush1.bf16.msra.mxu0 %v2397
  %3521 = vmatprep.subr.bf16.mxu0 0
  %3522 = vmatpush1.bf16.msra.mxu0 %v2398
  %3523 = vmatprep.subr.bf16.mxu0 0
  %3524 = vmatpush1.bf16.msra.mxu0 %v2399
  %3525 = vmatprep.subr.bf16.mxu0 0
  %3526 = vmatpush1.bf16.msra.mxu0 %v2400
  %3527 = vmatprep.subr.bf16.mxu0 0
  %3528 = vmatpush1.bf16.msra.mxu0 %v2401
  %3529 = vmatprep.subr.bf16.mxu0 0
  %3530 = vmatpush1.bf16.msra.mxu0 %v2402
  %3531 = vmatprep.subr.bf16.mxu0 0
  %3532 = vmatpush1.bf16.msra.mxu0 %v2403
  %3533 = vmatprep.subr.bf16.mxu0 0
  %3534 = vmatpush1.bf16.msra.mxu0 %v2404
  %3535 = vmatprep.subr.bf16.mxu0 0
  %3536 = vmatpush1.bf16.msra.mxu0 %v2405
  %3537 = vmatprep.subr.bf16.mxu0 0
  %3538 = vmatpush1.bf16.msra.mxu0 %v2406
  %3539 = vmatprep.subr.bf16.mxu0 0
  %3540 = vmatpush1.bf16.msra.mxu0 %v2407
  %3541 = vmatprep.subr.bf16.mxu0 0
  %3542 = vmatpush1.bf16.msra.mxu0 %v2408
  %3543 = vmatprep.subr.bf16.mxu0 0
  %3544 = vmatpush1.bf16.msra.mxu0 %v2409
  %3545 = vmatprep.subr.bf16.mxu0 0
  %3546 = vmatpush1.bf16.msra.mxu0 %v2410
  %3547 = vmatprep.mubr.bf16.mxu0 %v1106
  %3548 = vmatmul.mubr.bf16.gmra.mrb[0].mxu0 %v1105
  %v3549 = vpop.f32.mrb[0].mxu0
  %v3550 = vadd.f32 %v3462, %v3549
  %v3551 = vpop.f32.mrb[0].mxu0
  %v3552 = vpop.f32.mrb[0].mxu0
  %v3553 = vadd.f32 %v3465, %v3552
  %v3554 = vpop.f32.mrb[0].mxu0
  %3555 = vmatprep.mubr.bf16.mxu0 %v1131
  %3556 = vmatmul.mubr.bf16.gmra.mrb[0].mxu0 %v1130
  %v3557 = vpop.f32.mrb[0].mxu0
  %v3558 = vadd.f32 %v3470, %v3557
  %v3559 = vpop.f32.mrb[0].mxu0
  %v3560 = vpop.f32.mrb[0].mxu0
  %v3561 = vadd.f32 %v3473, %v3560
  %v3562 = vpop.f32.mrb[0].mxu0
  %3563 = vmatprep.mubr.bf16.mxu0 %v1156
  %3564 = vmatmul.mubr.bf16.gmra.mrb[0].mxu0 %v1155
  %v3565 = vpop.f32.mrb[0].mxu0
  %v3566 = vadd.f32 %v3478, %v3565
  %v3567 = vpop.f32.mrb[0].mxu0
  %v3568 = vpop.f32.mrb[0].mxu0
  %v3569 = vadd.f32 %v3481, %v3568
  %v3570 = vpop.f32.mrb[0].mxu0
  %3571 = vmatprep.mubr.bf16.mxu0 %v1181
  %3572 = vmatmul.mubr.bf16.gmra.mrb[0].mxu0 %v1180
  %v3573 = vpop.f32.mrb[0].mxu0
  %v3574 = vadd.f32 %v3486, %v3573
  %v3575 = vpop.f32.mrb[0].mxu0
  %v3576 = vpop.f32.mrb[0].mxu0
  %v3577 = vadd.f32 %v3489, %v3576
  %v3578 = vpop.f32.mrb[0].mxu0
  %3579 = vmatprep.mubr.bf16.mxu0 %v1206
  %3580 = vmatmul.mubr.bf16.gmra.mrb[0].mxu0 %v1205
  %v3581 = vpop.f32.mrb[0].mxu0
  %v3582 = vadd.f32 %v3494, %v3581
  %v3583 = vpop.f32.mrb[0].mxu0
  %v3584 = vpop.f32.mrb[0].mxu0
  %v3585 = vadd.f32 %v3497, %v3584
  %v3586 = vpop.f32.mrb[0].mxu0
  %3587 = vmatprep.mubr.bf16.mxu0 %v1231
  %3588 = vmatmul.mubr.bf16.gmra.mrb[0].mxu0 %v1230
  %v3589 = vpop.f32.mrb[0].mxu0
  %v3590 = vadd.f32 %v3502, %v3589
  %v3591 = vpop.f32.mrb[0].mxu0
  %v3592 = vpop.f32.mrb[0].mxu0
  %v3593 = vadd.f32 %v3505, %v3592
  %v3594 = vpop.f32.mrb[0].mxu0
  %3595 = vmatprep.mubr.bf16.mxu0 %v1256
  %3596 = vmatmul.mubr.bf16.gmra.mrb[0].mxu0 %v1255
  %v3597 = vpop.f32.mrb[0].mxu0
  %v3598 = vadd.f32 %v3510, %v3597
  %v3599 = vpop.f32.mrb[0].mxu0
  %v3600 = vpop.f32.mrb[0].mxu0
  %v3601 = vpop.f32.mrb[0].mxu0
  %3602 = vdwg.mxu0
  %3603 = vmatprep.subr.bf16.mxu0 0
  %3604 = vmatpush1.bf16.msra.mxu0 %v2411
  %3605 = vmatprep.subr.bf16.mxu0 0
  %3606 = vmatpush1.bf16.msra.mxu0 %v2412
  %3607 = vmatprep.subr.bf16.mxu0 0
  %3608 = vmatpush1.bf16.msra.mxu0 %v2413
  %3609 = vmatprep.subr.bf16.mxu0 0
  %3610 = vmatpush1.bf16.msra.mxu0 %v2414
  %3611 = vmatprep.subr.bf16.mxu0 0
  %3612 = vmatpush1.bf16.msra.mxu0 %v2415
  %3613 = vmatprep.subr.bf16.mxu0 0
  %3614 = vmatpush1.bf16.msra.mxu0 %v2416
  %3615 = vmatprep.subr.bf16.mxu0 0
  %3616 = vmatpush1.bf16.msra.mxu0 %v2417
  %3617 = vmatprep.subr.bf16.mxu0 0
  %3618 = vmatpush1.bf16.msra.mxu0 %v2418
  %3619 = vmatprep.subr.bf16.mxu0 0
  %3620 = vmatpush1.bf16.msra.mxu0 %v2419
  %3621 = vmatprep.subr.bf16.mxu0 0
  %3622 = vmatpush1.bf16.msra.mxu0 %v2420
  %3623 = vmatprep.subr.bf16.mxu0 0
  %3624 = vmatpush1.bf16.msra.mxu0 %v2421
  %3625 = vmatprep.subr.bf16.mxu0 0
  %3626 = vmatpush1.bf16.msra.mxu0 %v2422
  %3627 = vmatprep.subr.bf16.mxu0 0
  %3628 = vmatpush1.bf16.msra.mxu0 %v2423
  %3629 = vmatprep.subr.bf16.mxu0 0
  %3630 = vmatpush1.bf16.msra.mxu0 %v2424
  %3631 = vmatprep.subr.bf16.mxu0 0
  %3632 = vmatpush1.bf16.msra.mxu0 %v2425
  %3633 = vmatprep.subr.bf16.mxu0 0
  %3634 = vmatpush1.bf16.msra.mxu0 %v2426
  %3635 = vmatprep.mubr.bf16.mxu0 %v1108
  %3636 = vmatmul.mubr.bf16.gmra.mrb[0].mxu0 %v1107
  %v3637 = vpop.f32.mrb[0].mxu0
  %v3638 = vadd.f32 %v3550, %v3637
  %v3639 = vpop.f32.mrb[0].mxu0
  %v3640 = vpop.f32.mrb[0].mxu0
  %v3641 = vadd.f32 %v3553, %v3640
  %v3642 = vpop.f32.mrb[0].mxu0
  %3643 = vmatprep.mubr.bf16.mxu0 %v1133
  %3644 = vmatmul.mubr.bf16.gmra.mrb[0].mxu0 %v1132
  %v3645 = vpop.f32.mrb[0].mxu0
  %v3646 = vadd.f32 %v3558, %v3645
  %v3647 = vpop.f32.mrb[0].mxu0
  %v3648 = vpop.f32.mrb[0].mxu0
  %v3649 = vadd.f32 %v3561, %v3648
  %v3650 = vpop.f32.mrb[0].mxu0
  %3651 = vmatprep.mubr.bf16.mxu0 %v1158
  %3652 = vmatmul.mubr.bf16.gmra.mrb[0].mxu0 %v1157
  %v3653 = vpop.f32.mrb[0].mxu0
  %v3654 = vadd.f32 %v3566, %v3653
  %v3655 = vpop.f32.mrb[0].mxu0
  %v3656 = vpop.f32.mrb[0].mxu0
  %v3657 = vadd.f32 %v3569, %v3656
  %v3658 = vpop.f32.mrb[0].mxu0
  %3659 = vmatprep.mubr.bf16.mxu0 %v1183
  %3660 = vmatmul.mubr.bf16.gmra.mrb[0].mxu0 %v1182
  %v3661 = vpop.f32.mrb[0].mxu0
  %v3662 = vadd.f32 %v3574, %v3661
  %v3663 = vpop.f32.mrb[0].mxu0
  %v3664 = vpop.f32.mrb[0].mxu0
  %v3665 = vadd.f32 %v3577, %v3664
  %v3666 = vpop.f32.mrb[0].mxu0
  %3667 = vmatprep.mubr.bf16.mxu0 %v1208
  %3668 = vmatmul.mubr.bf16.gmra.mrb[0].mxu0 %v1207
  %v3669 = vpop.f32.mrb[0].mxu0
  %v3670 = vadd.f32 %v3582, %v3669
  %v3671 = vpop.f32.mrb[0].mxu0
  %v3672 = vpop.f32.mrb[0].mxu0
  %v3673 = vadd.f32 %v3585, %v3672
  %v3674 = vpop.f32.mrb[0].mxu0
  %3675 = vmatprep.mubr.bf16.mxu0 %v1233
  %3676 = vmatmul.mubr.bf16.gmra.mrb[0].mxu0 %v1232
  %v3677 = vpop.f32.mrb[0].mxu0
  %v3678 = vadd.f32 %v3590, %v3677
  %v3679 = vpop.f32.mrb[0].mxu0
  %v3680 = vpop.f32.mrb[0].mxu0
  %v3681 = vadd.f32 %v3593, %v3680
  %v3682 = vpop.f32.mrb[0].mxu0
  %3683 = vmatprep.mubr.bf16.mxu0 %v1258
  %3684 = vmatmul.mubr.bf16.gmra.mrb[0].mxu0 %v1257
  %v3685 = vpop.f32.mrb[0].mxu0
  %v3686 = vadd.f32 %v3598, %v3685
  %v3687 = vpop.f32.mrb[0].mxu0
  %v3688 = vpop.f32.mrb[0].mxu0
  %v3689 = vpop.f32.mrb[0].mxu0
  %3690 = vdwg.mxu0
  %3691 = vmatprep.subr.bf16.mxu0 0
  %3692 = vmatpush1.bf16.msra.mxu0 %v2427
  %3693 = vmatprep.subr.bf16.mxu0 0
  %3694 = vmatpush1.bf16.msra.mxu0 %v2428
  %3695 = vmatprep.subr.bf16.mxu0 0
  %3696 = vmatpush1.bf16.msra.mxu0 %v2429
  %3697 = vmatprep.subr.bf16.mxu0 0
  %3698 = vmatpush1.bf16.msra.mxu0 %v2430
  %3699 = vmatprep.subr.bf16.mxu0 0
  %3700 = vmatpush1.bf16.msra.mxu0 %v2431
  %3701 = vmatprep.subr.bf16.mxu0 0
  %3702 = vmatpush1.bf16.msra.mxu0 %v2432
  %3703 = vmatprep.subr.bf16.mxu0 0
  %3704 = vmatpush1.bf16.msra.mxu0 %v2433
  %3705 = vmatprep.subr.bf16.mxu0 0
  %3706 = vmatpush1.bf16.msra.mxu0 %v2434
  %3707 = vmatprep.subr.bf16.mxu0 0
  %3708 = vmatpush1.bf16.msra.mxu0 0
  %3709 = vmatprep.subr.bf16.mxu0 0
  %3710 = vmatpush1.bf16.msra.mxu0 0
  %3711 = vmatprep.subr.bf16.mxu0 0
  %3712 = vmatpush1.bf16.msra.mxu0 0
  %3713 = vmatprep.subr.bf16.mxu0 0
  %3714 = vmatpush1.bf16.msra.mxu0 0
  %3715 = vmatprep.subr.bf16.mxu0 0
  %3716 = vmatpush1.bf16.msra.mxu0 0
  %3717 = vmatprep.subr.bf16.mxu0 0
  %3718 = vmatpush1.bf16.msra.mxu0 0
  %3719 = vmatprep.subr.bf16.mxu0 0
  %3720 = vmatpush1.bf16.msra.mxu0 0
  %3721 = vmatprep.subr.bf16.mxu0 0
  %3722 = vmatpush1.bf16.msra.mxu0 0
  %3723 = vmatprep.mubr.bf16.mxu0 0
  %3724 = vmatmul.mubr.bf16.gmra.mrb[0].mxu0 %v1109
  %v3725 = vpop.f32.mrb[0].mxu0
  %v3726 = vadd.f32 %v3638, %v3725
  %v3727 = vpop.f32.mrb[0].mxu0
  %v3728 = vpop.f32.mrb[0].mxu0
  %v3729 = vadd.f32 %v3641, %v3728
  %v3730 = vpop.f32.mrb[0].mxu0
  %3731 = vmatprep.mubr.bf16.mxu0 0
  %3732 = vmatmul.mubr.bf16.gmra.mrb[0].mxu0 %v1134
  %v3733 = vpop.f32.mrb[0].mxu0
  %v3734 = vadd.f32 %v3646, %v3733
  %v3735 = vpop.f32.mrb[0].mxu0
  %v3736 = vpop.f32.mrb[0].mxu0
  %v3737 = vadd.f32 %v3649, %v3736
  %v3738 = vpop.f32.mrb[0].mxu0
  %3739 = vmatprep.mubr.bf16.mxu0 0
  %3740 = vmatmul.mubr.bf16.gmra.mrb[0].mxu0 %v1159
  %v3741 = vpop.f32.mrb[0].mxu0
  %v3742 = vadd.f32 %v3654, %v3741
  %v3743 = vpop.f32.mrb[0].mxu0
  %v3744 = vpop.f32.mrb[0].mxu0
  %v3745 = vadd.f32 %v3657, %v3744
  %v3746 = vpop.f32.mrb[0].mxu0
  %3747 = vmatprep.mubr.bf16.mxu0 0
  %3748 = vmatmul.mubr.bf16.gmra.mrb[0].mxu0 %v1184
  %v3749 = vpop.f32.mrb[0].mxu0
  %v3750 = vadd.f32 %v3662, %v3749
  %v3751 = vpop.f32.mrb[0].mxu0
  %v3752 = vpop.f32.mrb[0].mxu0
  %v3753 = vadd.f32 %v3665, %v3752
  %v3754 = vpop.f32.mrb[0].mxu0
  %3755 = vmatprep.mubr.bf16.mxu0 0
  %3756 = vmatmul.mubr.bf16.gmra.mrb[0].mxu0 %v1209
  %v3757 = vpop.f32.mrb[0].mxu0
  %v3758 = vadd.f32 %v3670, %v3757
  %v3759 = vpop.f32.mrb[0].mxu0
  %v3760 = vpop.f32.mrb[0].mxu0
  %v3761 = vadd.f32 %v3673, %v3760
  %v3762 = vpop.f32.mrb[0].mxu0
  %3763 = vmatprep.mubr.bf16.mxu0 0
  %3764 = vmatmul.mubr.bf16.gmra.mrb[0].mxu0 %v1234
  %v3765 = vpop.f32.mrb[0].mxu0
  %v3766 = vadd.f32 %v3678, %v3765
  %v3767 = vpop.f32.mrb[0].mxu0
  %v3768 = vpop.f32.mrb[0].mxu0
  %v3769 = vadd.f32 %v3681, %v3768
  %v3770 = vpop.f32.mrb[0].mxu0
  %3771 = vmatprep.mubr.bf16.mxu0 0
  %3772 = vmatmul.mubr.bf16.gmra.mrb[0].mxu0 %v1259
  %v3773 = vpop.f32.mrb[0].mxu0
  %v3774 = vadd.f32 %v3686, %v3773
  %v3775 = vpop.f32.mrb[0].mxu0
  %v3776 = vpop.f32.mrb[0].mxu0
  %v3777 = vpop.f32.mrb[0].mxu0
  %3778 = vdwg.mxu0
  %v3779 = vmax.f32 %v3726, 0.0
  %v3780 = vmax.f32 %v3729, 0.0
  %v3781 = vmax.f32 %v3734, 0.0
  %v3782 = vmax.f32 %v3737, 0.0
  %v3783 = vmax.f32 %v3742, 0.0
  %v3784 = vmax.f32 %v3745, 0.0
  %v3785 = vmax.f32 %v3750, 0.0
  %v3786 = vmax.f32 %v3753, 0.0
  %v3787 = vmax.f32 %v3758, 0.0
  %v3788 = vmax.f32 %v3761, 0.0
  %v3789 = vmax.f32 %v3766, 0.0
  %v3790 = vmax.f32 %v3769, 0.0
  %v3791 = vmax.f32 %v3774, 0.0
  %3792 = vst [vmem:[%s3] sm:$0xff] %v3779
  %3793 = vst [vmem:[%s3 + $0x8] sm:$0xff] %v3780
  %3794 = vst [vmem:[%s3 + $0x10] sm:$0xff] %v3781
  %3795 = vst [vmem:[%s3 + $0x18] sm:$0xff] %v3782
  %3796 = vst [vmem:[%s3 + $0x20] sm:$0xff] %v3783
  %3797 = vst [vmem:[%s3 + $0x28] sm:$0xff] %v3784
  %3798 = vst [vmem:[%s3 + $0x30] sm:$0xff] %v3785
  %3799 = vst [vmem:[%s3 + $0x38] sm:$0xff] %v3786
  %3800 = vst [vmem:[%s3 + $0x40] sm:$0xff] %v3787
  %3801 = vst [vmem:[%s3 + $0x48] sm:$0xff] %v3788
  %3802 = vst [vmem:[%s3 + $0x50] sm:$0xff] %v3789
  %3803 = vst [vmem:[%s3 + $0x58] sm:$0xff] %v3790
  %3804 = vst [vmem:[%s3 + $0x60] sm:$0xff] %v3791
  // Predicated region
  $region14: #{cae_forward.9} parent=0 // pred_check
    _
  $region15: #{cae_forward.9} parent=0 // pred_check_branch
    %3806 = sbr.rel (0) target = $region17
  $region16: #{cae_forward.9} parent=0 // pred_region
    _
  $region17: #{cae_forward.9} parent=0 // pred_fallthru
    _
  // Predicated region
  $region18: #{cae_forward.9} parent=0 // pred_check
    _
  $region19: #{cae_forward.9} parent=0 // pred_check_branch
    %3808 = sbr.rel (0) target = $region21
  $region20: #{cae_forward.9} parent=0 // pred_region
    _
  $region21: #{cae_forward.9} parent=0 // pred_fallthru
    _

// kernel: cae_forward.10
$region0: #{cae_forward.10}
  #allocation0 [shape = 'u32[]', space=smem, size = 0x4, offset = 0x4, fixed_abs, tag = 'smem constant byte address 0x4 - core index']
  #allocation1 [shape = 'u32[144,128]{1,0:T(1,128)}', space=vmem, size = 0x12000, scoped, tag = 'internal scratch']
  %s0 = inlined_call_operand.vmem [shape: bf16[512,384], index: 0, kind: input, shape index: {}]
  %s1 = inlined_call_operand.vmem [shape: bf16[384,128], index: 1, kind: input, shape index: {}]
  %s2 = inlined_call_operand.vmem [shape: f32[1,128], index: 2, kind: input, shape index: {}]
  %s3 = inlined_call_operand.vmem [shape: f32[512,128], index: 3, kind: output, shape index: {}]
  %s4 = sld [smem:[#allocation0]]
  $region45: #{cae_forward.10} parent=0
    _
  %s6 = ssub.s32 1, %s4
  %s7 = scalar_select 0, %s6, %s4
  loop: start=0, step=1, limit=4
  $region2: #{cae_forward.10} parent=0 // loop_pre_header
    _
  $region3: #{cae_forward.10} parent=0 // loop_header
    %s9 = sphi 0, %s13
    %p10 = scmp.ge.s32.totalorder %s9, 4
    %s16 = sphi 0, %s28
    %s17 = sphi 0, %s24
    %s18 = sphi 0, %s16
    %s19 = sphi 0, %s17
    %s20 = sphi 0, %s18
    %s21 = sphi 0, %s19
    %s31 = sphi 0, %s33
    %s34 = sphi 0, %s31
    %s35 = sphi 0, %s34
    %s51 = sphi 0, %s35
    %s57 = sphi 0, %s59
    %s60 = sphi 0, %s57
    %s61 = sphi 0, %s60
    %s77 = sphi 0, %s61
    %s83 = sphi 0, %s85
    %s86 = sphi 0, %s83
    %s87 = sphi 0, %s86
    %s103 = sphi 0, %s87
    %s111 = sphi 0, %s113
    %s114 = sphi 0, %s111
    %s115 = sphi 0, %s114
    %s131 = sphi 0, %s115
  $region4: #{cae_forward.10} parent=0 // loop_header_branch
    %12 = sbr.rel (%p10) target = $region8
  $region5: #{cae_forward.10} parent=0 // loop_body
    %s14 = ssub.s32 %s9, 1
    %s15 = ssub.s32 %s9, 2
    %s22 = sadd.s32 1, %s17
    %p23 = scmp.ge.s32.totalorder %s22, 1
    %s24 = scalar_select %p23, 0, %s22
    %s25 = sadd.s32 1, %s16
    %s26 = scalar_select %p23, %s25, %s16
    %p27 = scmp.ge.s32.totalorder %s26, 2
    %s28 = scalar_select %p27, 0, %s26
    %s29 = ssub.s32 %s16, %s28
    %p30 = scmp.eq.s32.totalorder %s29, 0
    %s32 = sadd.s32 %s31, 1
    %s33 = scalar_select %p30, %s31, %s32
    %p36 = pneg %p30
    %p37 = scmp.eq.s32.totalorder %s9, 1
    %p38 = por %p36, %p37
    %p39 = scmp.ne.s32.totalorder %s31, %s34
    %p40 = scmp.eq.s32.totalorder %s9, 0
    %p41 = por %p39, %p40
    %p42 = scmp.ne.s32.totalorder %s31, %s34
    %p43 = scmp.eq.s32.totalorder %s14, 1
    %p44 = por %p42, %p43
    %p45 = scmp.ne.s32.totalorder %s34, %s35
    %p46 = scmp.eq.s32.totalorder %s14, 0
    %p47 = por %p45, %p46
    %p48 = scmp.ne.s32.totalorder %s34, %s35
    %p49 = scmp.eq.s32.totalorder %s15, 1
    %p50 = por %p48, %p49
    %p52 = scmp.ne.s32.totalorder %s35, %s51
    %p53 = scmp.eq.s32.totalorder %s15, 0
    %p54 = por %p52, %p53
    %s55 = ssub.s32 %s17, %s24
    %p56 = scmp.eq.s32.totalorder %s55, 0
    %s58 = sadd.s32 %s57, 1
    %s59 = scalar_select %p56, %s57, %s58
    %p62 = pneg %p56
    %p63 = scmp.eq.s32.totalorder %s9, 1
    %p64 = por %p62, %p63
    %p65 = scmp.ne.s32.totalorder %s57, %s60
    %p66 = scmp.eq.s32.totalorder %s9, 0
    %p67 = por %p65, %p66
    %p68 = scmp.ne.s32.totalorder %s57, %s60
    %p69 = scmp.eq.s32.totalorder %s14, 1
    %p70 = por %p68, %p69
    %p71 = scmp.ne.s32.totalorder %s60, %s61
    %p72 = scmp.eq.s32.totalorder %s14, 0
    %p73 = por %p71, %p72
    %p74 = scmp.ne.s32.totalorder %s60, %s61
    %p75 = scmp.eq.s32.totalorder %s15, 1
    %p76 = por %p74, %p75
    %p78 = scmp.ne.s32.totalorder %s61, %s77
    %p79 = scmp.eq.s32.totalorder %s15, 0
    %p80 = por %p78, %p79
    %s81 = ssub.s32 %s17, %s24
    %p82 = scmp.eq.s32.totalorder %s81, 0
    %s84 = sadd.s32 %s83, 1
    %s85 = scalar_select %p82, %s83, %s84
    %p88 = pneg %p82
    %p89 = scmp.eq.s32.totalorder %s9, 1
    %p90 = por %p88, %p89
    %p91 = scmp.ne.s32.totalorder %s83, %s86
    %p92 = scmp.eq.s32.totalorder %s9, 0
    %p93 = por %p91, %p92
    %p94 = scmp.ne.s32.totalorder %s83, %s86
    %p95 = scmp.eq.s32.totalorder %s14, 1
    %p96 = por %p94, %p95
    %p97 = scmp.ne.s32.totalorder %s86, %s87
    %p98 = scmp.eq.s32.totalorder %s14, 0
    %p99 = por %p97, %p98
    %p100 = scmp.ne.s32.totalorder %s86, %s87
    %p101 = scmp.eq.s32.totalorder %s15, 1
    %p102 = por %p100, %p101
    %p104 = scmp.ne.s32.totalorder %s87, %s103
    %p105 = scmp.eq.s32.totalorder %s15, 0
    %p106 = por %p104, %p105
    %s107 = ssub.s32 %s16, %s28
    %s108 = ssub.s32 %s17, %s24
    %s109 = sor.u32 %s107, %s108
    %p110 = scmp.eq.s32.totalorder %s109, 0
    %s112 = sadd.s32 %s111, 1
    %s113 = scalar_select %p110, %s111, %s112
    %p116 = pneg %p110
    %p117 = scmp.eq.s32.totalorder %s9, 1
    %p118 = por %p116, %p117
    %p119 = scmp.ne.s32.totalorder %s111, %s114
    %p120 = scmp.eq.s32.totalorder %s9, 0
    %p121 = por %p119, %p120
    %p122 = scmp.ne.s32.totalorder %s111, %s114
    %p123 = scmp.eq.s32.totalorder %s14, 1
    %p124 = por %p122, %p123
    %p125 = scmp.ne.s32.totalorder %s114, %s115
    %p126 = scmp.eq.s32.totalorder %s14, 0
    %p127 = por %p125, %p126
    %p128 = scmp.ne.s32.totalorder %s114, %s115
    %p129 = scmp.eq.s32.totalorder %s15, 1
    %p130 = por %p128, %p129
    %p132 = scmp.ne.s32.totalorder %s115, %s131
    %p133 = scmp.eq.s32.totalorder %s15, 0
    %p134 = por %p132, %p133
    %p135 = scmp.le.s32.totalorder 1, %s9
    %p136 = scmp.lt.s32.totalorder %s9, 3
    %p137 = pnand %p135, %p136
    %p138 = pneg %p137
    // Predicated region
    $region9: #{cae_forward.10} parent=5 // pred_check
      _
    $region10: #{cae_forward.10} parent=5 // pred_check_branch
      %140 = sbr.rel (%p137) target = $region12
    $region11: #{cae_forward.10} parent=5 // pred_region
      %s141 = ssub.s32 %s9, 1
      // Predicated region
      $region13: #{cae_forward.10} parent=11 // pred_check
        %p142 = pneg %p73
      $region14: #{cae_forward.10} parent=11 // pred_check_branch
        %144 = sbr.rel (%p142) target = $region16
      $region15: #{cae_forward.10} parent=11 // pred_region
        %p145 = scmp.lt.s32.totalorder %s19, 0
        %s146 = scalar_select %p145, %s19, 0
        %s147 = smul.addr %s146, 4
        %s148 = scalar_lea.vmem %s1, %s147
      $region16: #{cae_forward.10} parent=11 // pred_fallthru
        _
      // Predicated region
      $region17: #{cae_forward.10} parent=11 // pred_check
        %p149 = pneg %p99
      $region18: #{cae_forward.10} parent=11 // pred_check_branch
        %151 = sbr.rel (%p149) target = $region20
      $region19: #{cae_forward.10} parent=11 // pred_region
        %p152 = scmp.lt.s32.totalorder %s19, 0
        %s153 = scalar_select %p152, %s19, 0
        %s154 = scalar_lea.vmem %s2, %s153
      $region20: #{cae_forward.10} parent=11 // pred_fallthru
        _
    $region12: #{cae_forward.10} parent=5 // pred_fallthru
      _
    %p155 = scmp.lt.s32.totalorder %s9, 2
    // Predicated region
    $region21: #{cae_forward.10} parent=5 // pred_check
      %p156 = pneg %p155
    $region22: #{cae_forward.10} parent=5 // pred_check_branch
      %158 = sbr.rel (%p156) target = $region24
    $region23: #{cae_forward.10} parent=5 // pred_region
      // Predicated region
      $region25: #{cae_forward.10} parent=23 // pred_check
        %p159 = pneg %p41
      $region26: #{cae_forward.10} parent=23 // pred_check_branch
        %161 = sbr.rel (%p159) target = $region28
      $region27: #{cae_forward.10} parent=23 // pred_region
        %s162 = smul.u32 32, %s16
        %p163 = scmp.lt.s32.totalorder %s162, 63
        %s164 = scalar_select %p163, %s162, 63
        %s165 = smul.addr %s164, 3
        %s166 = smul.addr %s165, 4
        %s167 = scalar_lea.vmem %s0, %s166
        %s168 = smul.u32 32, %s16
      $region28: #{cae_forward.10} parent=23 // pred_fallthru
        _
    $region24: #{cae_forward.10} parent=5 // pred_fallthru
      _
    %p169 = scmp.le.s32.totalorder 1, %s9
    %p170 = scmp.lt.s32.totalorder %s9, 3
    %p171 = pnand %p169, %p170
    %p172 = pneg %p171
    // Predicated region
    $region29: #{cae_forward.10} parent=5 // pred_check
      _
    $region30: #{cae_forward.10} parent=5 // pred_check_branch
      %174 = sbr.rel (%p171) target = $region32
    $region31: #{cae_forward.10} parent=5 // pred_region
      %s175 = ssub.s32 %s9, 1
      %s176 = smul.u32 32, %s18
      %p177 = scmp.lt.s32.totalorder %s176, 63
      %s178 = scalar_select %p177, %s176, 63
      %s179 = smul.addr %s178, 3
      %s180 = smul.addr %s179, 4
      %s181 = scalar_lea.vmem %s0, %s180
      %p182 = pneg %p47
      %p183 = pneg %p44
      %p184 = scmp.lt.s32.totalorder %s19, 0
      %s185 = scalar_select %p184, %s19, 0
      %s186 = smul.addr %s185, 4
      %s187 = scalar_lea.vmem %s1, %s186
      %p188 = pneg %p73
      %p189 = pneg %p70
      %p190 = scmp.lt.s32.totalorder %s19, 0
      %s191 = scalar_select %p190, %s19, 0
      %s192 = scalar_lea.vmem %s2, %s191
      %p193 = pneg %p99
      %p194 = pneg %p96
      %p195 = pneg %p127
      %p196 = pneg %p124
      %s197 = smul.u32 32, %s18
      %p198 = scmp.lt.s32.totalorder %s197, 63
      %s199 = scalar_select %p198, %s197, 63
      %p200 = scmp.lt.s32.totalorder %s19, 0
      %s201 = scalar_select %p200, %s19, 0
      %s202 = sadd.s32 %s201, %s199
      %s203 = smul.addr %s202, 8
      %s204 = scalar_lea.vmem %s3, %s203
      %s205 = smul.u32 32, %s18
      %p206 = scmp.lt.s32.totalorder %s205, 63
      %s207 = scalar_select %p206, %s205, 63
      %s208 = smul.addr %s207, 3
      %s209 = smul.addr %s208, 4
      %s210 = scalar_lea.vmem %s0, %s209
      %s211 = smul.u32 32, %s18
      %p212 = scmp.lt.s32.totalorder %s19, 0
      %s213 = scalar_select %p212, %s19, 0
      %s214 = smul.addr %s213, 4
      %s215 = scalar_lea.vmem %s1, %s214
      %p216 = scmp.lt.s32.totalorder %s19, 0
      %s217 = scalar_select %p216, %s19, 0
      %s218 = scalar_lea.vmem %s2, %s217
      %s219 = smul.u32 32, %s18
      %p220 = scmp.lt.s32.totalorder %s219, 63
      %s221 = scalar_select %p220, %s219, 63
      %p222 = scmp.lt.s32.totalorder %s19, 0
      %s223 = scalar_select %p222, %s19, 0
      %s224 = sadd.s32 %s223, %s221
      %s225 = smul.addr %s224, 8
      %s226 = scalar_lea.vmem %s3, %s225
      %s227 = smul.u32 32, %s18
      %v229 = vld [vmem:[%s210] sm:$0xff]
      %v230 = vld [vmem:[%s210 + $0x8] sm:$0xf]
      %v231 = vld [vmem:[%s210 + $0xc] sm:$0xff]
      %v232 = vld [vmem:[%s210 + $0x14] sm:$0xf]
      %v233 = vld [vmem:[%s210 + $0x18] sm:$0xff]
      %v234 = vld [vmem:[%s210 + $0x20] sm:$0xf]
      %v235 = vld [vmem:[%s210 + $0x24] sm:$0xff]
      %v236 = vld [vmem:[%s210 + $0x2c] sm:$0xf]
      %v237 = vld [vmem:[%s210 + $0x30] sm:$0xff]
      %v238 = vld [vmem:[%s210 + $0x38] sm:$0xf]
      %v239 = vld [vmem:[%s210 + $0x3c] sm:$0xff]
      %v240 = vld [vmem:[%s210 + $0x44] sm:$0xf]
      %v241 = vld [vmem:[%s210 + $0x48] sm:$0xff]
      %v242 = vld [vmem:[%s210 + $0x50] sm:$0xf]
      %v243 = vld [vmem:[%s210 + $0x54] sm:$0xff]
      %v244 = vld [vmem:[%s210 + $0x5c] sm:$0xf]
      %v245 = vld [vmem:[%s210 + $0x60] sm:$0xff]
      %v246 = vld [vmem:[%s210 + $0x68] sm:$0xf]
      %v247 = vld [vmem:[%s210 + $0x6c] sm:$0xff]
      %v248 = vld [vmem:[%s210 + $0x74] sm:$0xf]
      %v249 = vld [vmem:[%s210 + $0x78] sm:$0xff]
      %v250 = vld [vmem:[%s210 + $0x80] sm:$0xf]
      %v251 = vld [vmem:[%s210 + $0x84] sm:$0xff]
      %v252 = vld [vmem:[%s210 + $0x8c] sm:$0xf]
      %v253 = vld [vmem:[%s210 + $0x90] sm:$0xff]
      %v254 = vld [vmem:[%s210 + $0x98] sm:$0xf]
      %v255 = vld [vmem:[%s210 + $0x9c] sm:$0xff]
      %v256 = vld [vmem:[%s210 + $0xa4] sm:$0xf]
      %v257 = vld [vmem:[%s210 + $0xa8] sm:$0xff]
      %v258 = vld [vmem:[%s210 + $0xb0] sm:$0xf]
      %v259 = vld [vmem:[%s210 + $0xb4] sm:$0xff]
      %v260 = vld [vmem:[%s210 + $0xbc] sm:$0xf]
      %v261 = vld [vmem:[%s210 + $0xc0] sm:$0xff]
      %v262 = vld [vmem:[%s210 + $0xc8] sm:$0xf]
      %v263 = vld [vmem:[%s210 + $0xcc] sm:$0xff]
      %v264 = vld [vmem:[%s210 + $0xd4] sm:$0xf]
      %v265 = vld [vmem:[%s210 + $0xd8] sm:$0xff]
      %v266 = vld [vmem:[%s210 + $0xe0] sm:$0xf]
      %v267 = vld [vmem:[%s210 + $0xe4] sm:$0xff]
      %v268 = vld [vmem:[%s210 + $0xec] sm:$0xf]
      %v269 = vld [vmem:[%s210 + $0xf0] sm:$0xff]
      %v270 = vld [vmem:[%s210 + $0xf8] sm:$0xf]
      %v271 = vld [vmem:[%s210 + $0xfc] sm:$0xff]
      %v272 = vld [vmem:[%s210 + $0x104] sm:$0xf]
      %v273 = vld [vmem:[%s210 + $0x108] sm:$0xff]
      %v274 = vld [vmem:[%s210 + $0x110] sm:$0xf]
      %v275 = vld [vmem:[%s210 + $0x114] sm:$0xff]
      %v276 = vld [vmem:[%s210 + $0x11c] sm:$0xf]
      %v277 = vld [vmem:[%s210 + $0x120] sm:$0xff]
      %v278 = vld [vmem:[%s210 + $0x128] sm:$0xf]
      %v279 = vld [vmem:[%s210 + $0x12c] sm:$0xff]
      %v280 = vld [vmem:[%s210 + $0x134] sm:$0xf]
      %v281 = vld [vmem:[%s210 + $0x138] sm:$0xff]
      %v282 = vld [vmem:[%s210 + $0x140] sm:$0xf]
      %v283 = vld [vmem:[%s210 + $0x144] sm:$0xff]
      %v284 = vld [vmem:[%s210 + $0x14c] sm:$0xf]
      %v285 = vld [vmem:[%s210 + $0x150] sm:$0xff]
      %v286 = vld [vmem:[%s210 + $0x158] sm:$0xf]
      %v287 = vld [vmem:[%s210 + $0x15c] sm:$0xff]
      %v288 = vld [vmem:[%s210 + $0x164] sm:$0xf]
      %v289 = vld [vmem:[%s210 + $0x168] sm:$0xff]
      %v290 = vld [vmem:[%s210 + $0x170] sm:$0xf]
      %v291 = vld [vmem:[%s210 + $0x174] sm:$0xff]
      %v292 = vld [vmem:[%s210 + $0x17c] sm:$0xf]
      %v293 = vld [vmem:[%s215] sm:$0xf]
      %v294 = vld [vmem:[%s215 + $0x4] sm:$0xf]
      %v295 = vld [vmem:[%s215 + $0x8] sm:$0xf]
      %v296 = vld [vmem:[%s215 + $0xc] sm:$0xf]
      %v297 = vld [vmem:[%s215 + $0x10] sm:$0xf]
      %v298 = vld [vmem:[%s215 + $0x14] sm:$0xf]
      %v299 = vld [vmem:[%s215 + $0x18] sm:$0xf]
      %v300 = vld [vmem:[%s215 + $0x1c] sm:$0xf]
      %v301 = vld [vmem:[%s215 + $0x20] sm:$0xf]
      %v302 = vld [vmem:[%s215 + $0x24] sm:$0xf]
      %v303 = vld [vmem:[%s215 + $0x28] sm:$0xf]
      %v304 = vld [vmem:[%s215 + $0x2c] sm:$0xf]
      %v305 = vld [vmem:[%s215 + $0x30] sm:$0xf]
      %v306 = vld [vmem:[%s215 + $0x34] sm:$0xf]
      %v307 = vld [vmem:[%s215 + $0x38] sm:$0xf]
      %v308 = vld [vmem:[%s215 + $0x3c] sm:$0xf]
      %v309 = vld [vmem:[%s215 + $0x40] sm:$0xf]
      %v310 = vld [vmem:[%s215 + $0x44] sm:$0xf]
      %v311 = vld [vmem:[%s215 + $0x48] sm:$0xf]
      %v312 = vld [vmem:[%s215 + $0x4c] sm:$0xf]
      %v313 = vld [vmem:[%s215 + $0x50] sm:$0xf]
      %v314 = vld [vmem:[%s215 + $0x54] sm:$0xf]
      %v315 = vld [vmem:[%s215 + $0x58] sm:$0xf]
      %v316 = vld [vmem:[%s215 + $0x5c] sm:$0xf]
      %v317 = vld [vmem:[%s215 + $0x60] sm:$0xf]
      %v318 = vld [vmem:[%s215 + $0x64] sm:$0xf]
      %v319 = vld [vmem:[%s215 + $0x68] sm:$0xf]
      %v320 = vld [vmem:[%s215 + $0x6c] sm:$0xf]
      %v321 = vld [vmem:[%s215 + $0x70] sm:$0xf]
      %v322 = vld [vmem:[%s215 + $0x74] sm:$0xf]
      %v323 = vld [vmem:[%s215 + $0x78] sm:$0xf]
      %v324 = vld [vmem:[%s215 + $0x7c] sm:$0xf]
      %v325 = vld [vmem:[%s215 + $0x80] sm:$0xf]
      %v326 = vld [vmem:[%s215 + $0x84] sm:$0xf]
      %v327 = vld [vmem:[%s215 + $0x88] sm:$0xf]
      %v328 = vld [vmem:[%s215 + $0x8c] sm:$0xf]
      %v329 = vld [vmem:[%s215 + $0x90] sm:$0xf]
      %v330 = vld [vmem:[%s215 + $0x94] sm:$0xf]
      %v331 = vld [vmem:[%s215 + $0x98] sm:$0xf]
      %v332 = vld [vmem:[%s215 + $0x9c] sm:$0xf]
      %v333 = vld [vmem:[%s215 + $0xa0] sm:$0xf]
      %v334 = vld [vmem:[%s215 + $0xa4] sm:$0xf]
      %v335 = vld [vmem:[%s215 + $0xa8] sm:$0xf]
      %v336 = vld [vmem:[%s215 + $0xac] sm:$0xf]
      %v337 = vld [vmem:[%s215 + $0xb0] sm:$0xf]
      %v338 = vld [vmem:[%s215 + $0xb4] sm:$0xf]
      %v339 = vld [vmem:[%s215 + $0xb8] sm:$0xf]
      %v340 = vld [vmem:[%s215 + $0xbc] sm:$0xf]
      %v341 = vld [vmem:[%s218] sm:$0x1]
      %v343 = vlaneseq
      %v344 = vshrl.u32 %v343, 7
      %v345 = vsub.s32 0, %v344
      %v346 = vrot.slane %v341, %v345
      %v412 = vunpack.c.l.b16 %v229
      %v413 = vunpack.c.h.b16 %v229
      %v414 = vunpack.c.l.b16 %v230
      %v415 = vunpack.c.l.b16 %v231
      %v416 = vunpack.c.h.b16 %v231
      %v417 = vunpack.c.l.b16 %v232
      %v418 = vunpack.c.l.b16 %v233
      %v419 = vunpack.c.h.b16 %v233
      %v420 = vunpack.c.l.b16 %v234
      %v421 = vunpack.c.l.b16 %v235
      %v422 = vunpack.c.h.b16 %v235
      %v423 = vunpack.c.l.b16 %v236
      %v424 = vunpack.c.l.b16 %v237
      %v425 = vunpack.c.h.b16 %v237
      %v426 = vunpack.c.l.b16 %v238
      %v427 = vunpack.c.l.b16 %v239
      %v428 = vunpack.c.h.b16 %v239
      %v429 = vunpack.c.l.b16 %v240
      %v430 = vunpack.c.l.b16 %v241
      %v431 = vunpack.c.h.b16 %v241
      %v432 = vunpack.c.l.b16 %v242
      %v433 = vunpack.c.l.b16 %v243
      %v434 = vunpack.c.h.b16 %v243
      %v435 = vunpack.c.l.b16 %v244
      %v436 = vunpack.c.l.b16 %v245
      %v437 = vunpack.c.h.b16 %v245
      %v438 = vunpack.c.l.b16 %v246
      %v439 = vunpack.c.l.b16 %v247
      %v440 = vunpack.c.h.b16 %v247
      %v441 = vunpack.c.l.b16 %v248
      %v442 = vunpack.c.l.b16 %v249
      %v443 = vunpack.c.h.b16 %v249
      %v444 = vunpack.c.l.b16 %v250
      %v445 = vunpack.c.l.b16 %v251
      %v446 = vunpack.c.h.b16 %v251
      %v447 = vunpack.c.l.b16 %v252
      %v448 = vunpack.c.l.b16 %v253
      %v449 = vunpack.c.h.b16 %v253
      %v450 = vunpack.c.l.b16 %v254
      %v451 = vunpack.c.l.b16 %v255
      %v452 = vunpack.c.h.b16 %v255
      %v453 = vunpack.c.l.b16 %v256
      %v454 = vunpack.c.l.b16 %v257
      %v455 = vunpack.c.h.b16 %v257
      %v456 = vunpack.c.l.b16 %v258
      %v457 = vunpack.c.l.b16 %v259
      %v458 = vunpack.c.h.b16 %v259
      %v459 = vunpack.c.l.b16 %v260
      %v460 = vunpack.c.l.b16 %v261
      %v461 = vunpack.c.h.b16 %v261
      %v462 = vunpack.c.l.b16 %v262
      %v463 = vunpack.c.l.b16 %v263
      %v464 = vunpack.c.h.b16 %v263
      %v465 = vunpack.c.l.b16 %v264
      %v466 = vunpack.c.l.b16 %v265
      %v467 = vunpack.c.h.b16 %v265
      %v468 = vunpack.c.l.b16 %v266
      %v469 = vunpack.c.l.b16 %v267
      %v470 = vunpack.c.h.b16 %v267
      %v471 = vunpack.c.l.b16 %v268
      %v472 = vunpack.c.l.b16 %v269
      %v473 = vunpack.c.h.b16 %v269
      %v474 = vunpack.c.l.b16 %v270
      %v475 = vunpack.c.l.b16 %v271
      %v476 = vunpack.c.h.b16 %v271
      %v477 = vunpack.c.l.b16 %v272
      %v478 = vunpack.c.l.b16 %v273
      %v479 = vunpack.c.h.b16 %v273
      %v480 = vunpack.c.l.b16 %v274
      %v481 = vunpack.c.l.b16 %v275
      %v482 = vunpack.c.h.b16 %v275
      %v483 = vunpack.c.l.b16 %v276
      %v484 = vunpack.c.l.b16 %v277
      %v485 = vunpack.c.h.b16 %v277
      %v486 = vunpack.c.l.b16 %v278
      %v487 = vunpack.c.l.b16 %v279
      %v488 = vunpack.c.h.b16 %v279
      %v489 = vunpack.c.l.b16 %v280
      %v490 = vunpack.c.l.b16 %v281
      %v491 = vunpack.c.h.b16 %v281
      %v492 = vunpack.c.l.b16 %v282
      %v493 = vunpack.c.l.b16 %v283
      %v494 = vunpack.c.h.b16 %v283
      %v495 = vunpack.c.l.b16 %v284
      %v496 = vunpack.c.l.b16 %v285
      %v497 = vunpack.c.h.b16 %v285
      %v498 = vunpack.c.l.b16 %v286
      %v499 = vunpack.c.l.b16 %v287
      %v500 = vunpack.c.h.b16 %v287
      %v501 = vunpack.c.l.b16 %v288
      %v502 = vunpack.c.l.b16 %v289
      %v503 = vunpack.c.h.b16 %v289
      %v504 = vunpack.c.l.b16 %v290
      %v505 = vunpack.c.l.b16 %v291
      %v506 = vunpack.c.h.b16 %v291
      %v507 = vunpack.c.l.b16 %v292
      %v508 = vpack.c.b16 %v415, %v412
      %v509 = vpack.c.b16 %v416, %v413
      %v510 = vpack.c.b16 %v417, %v414
      %v511 = vpack.c.b16 %v421, %v418
      %v512 = vpack.c.b16 %v422, %v419
      %v513 = vpack.c.b16 %v423, %v420
      %v514 = vpack.c.b16 %v427, %v424
      %v515 = vpack.c.b16 %v428, %v425
      %v516 = vpack.c.b16 %v429, %v426
      %v517 = vpack.c.b16 %v433, %v430
      %v518 = vpack.c.b16 %v434, %v431
      %v519 = vpack.c.b16 %v435, %v432
      %v520 = vpack.c.b16 %v439, %v436
      %v521 = vpack.c.b16 %v440, %v437
      %v522 = vpack.c.b16 %v441, %v438
      %v523 = vpack.c.b16 %v445, %v442
      %v524 = vpack.c.b16 %v446, %v443
      %v525 = vpack.c.b16 %v447, %v444
      %v526 = vpack.c.b16 %v451, %v448
      %v527 = vpack.c.b16 %v452, %v449
      %v528 = vpack.c.b16 %v453, %v450
      %v529 = vpack.c.b16 %v457, %v454
      %v530 = vpack.c.b16 %v458, %v455
      %v531 = vpack.c.b16 %v459, %v456
      %v532 = vpack.c.b16 %v463, %v460
      %v533 = vpack.c.b16 %v464, %v461
      %v534 = vpack.c.b16 %v465, %v462
      %v535 = vpack.c.b16 %v469, %v466
      %v536 = vpack.c.b16 %v470, %v467
      %v537 = vpack.c.b16 %v471, %v468
      %v538 = vpack.c.b16 %v475, %v472
      %v539 = vpack.c.b16 %v476, %v473
      %v540 = vpack.c.b16 %v477, %v474
      %v541 = vpack.c.b16 %v481, %v478
      %v542 = vpack.c.b16 %v482, %v479
      %v543 = vpack.c.b16 %v483, %v480
      %v544 = vpack.c.b16 %v487, %v484
      %v545 = vpack.c.b16 %v488, %v485
      %v546 = vpack.c.b16 %v489, %v486
      %v547 = vpack.c.b16 %v493, %v490
      %v548 = vpack.c.b16 %v494, %v491
      %v549 = vpack.c.b16 %v495, %v492
      %v550 = vpack.c.b16 %v499, %v496
      %v551 = vpack.c.b16 %v500, %v497
      %v552 = vpack.c.b16 %v501, %v498
      %v553 = vpack.c.b16 %v505, %v502
      %v554 = vpack.c.b16 %v506, %v503
      %v555 = vpack.c.b16 %v507, %v504
      %v652 = vunpack.c.l.b16 %v293
      %v653 = vunpack.c.l.b16 %v294
      %v654 = vunpack.c.l.b16 %v295
      %v655 = vunpack.c.l.b16 %v296
      %v656 = vunpack.c.l.b16 %v297
      %v657 = vunpack.c.l.b16 %v298
      %v658 = vunpack.c.l.b16 %v299
      %v659 = vunpack.c.l.b16 %v300
      %v660 = vunpack.c.l.b16 %v301
      %v661 = vunpack.c.l.b16 %v302
      %v662 = vunpack.c.l.b16 %v303
      %v663 = vunpack.c.l.b16 %v304
      %v664 = vunpack.c.l.b16 %v305
      %v665 = vunpack.c.l.b16 %v306
      %v666 = vunpack.c.l.b16 %v307
      %v667 = vunpack.c.l.b16 %v308
      %v668 = vunpack.c.l.b16 %v309
      %v669 = vunpack.c.l.b16 %v310
      %v670 = vunpack.c.l.b16 %v311
      %v671 = vunpack.c.l.b16 %v312
      %v672 = vunpack.c.l.b16 %v313
      %v673 = vunpack.c.l.b16 %v314
      %v674 = vunpack.c.l.b16 %v315
      %v675 = vunpack.c.l.b16 %v316
      %v676 = vunpack.c.l.b16 %v317
      %v677 = vunpack.c.l.b16 %v318
      %v678 = vunpack.c.l.b16 %v319
      %v679 = vunpack.c.l.b16 %v320
      %v680 = vunpack.c.l.b16 %v321
      %v681 = vunpack.c.l.b16 %v322
      %v682 = vunpack.c.l.b16 %v323
      %v683 = vunpack.c.l.b16 %v324
      %v684 = vunpack.c.l.b16 %v325
      %v685 = vunpack.c.l.b16 %v326
      %v686 = vunpack.c.l.b16 %v327
      %v687 = vunpack.c.l.b16 %v328
      %v688 = vunpack.c.l.b16 %v329
      %v689 = vunpack.c.l.b16 %v330
      %v690 = vunpack.c.l.b16 %v331
      %v691 = vunpack.c.l.b16 %v332
      %v692 = vunpack.c.l.b16 %v333
      %v693 = vunpack.c.l.b16 %v334
      %v694 = vunpack.c.l.b16 %v335
      %v695 = vunpack.c.l.b16 %v336
      %v696 = vunpack.c.l.b16 %v337
      %v697 = vunpack.c.l.b16 %v338
      %v698 = vunpack.c.l.b16 %v339
      %v699 = vunpack.c.l.b16 %v340
      %v700 = vpack.c.b16 %v653, %v652
      %v701 = vpack.c.b16 %v655, %v654
      %v702 = vpack.c.b16 %v657, %v656
      %v703 = vpack.c.b16 %v659, %v658
      %v704 = vpack.c.b16 %v661, %v660
      %v705 = vpack.c.b16 %v663, %v662
      %v706 = vpack.c.b16 %v665, %v664
      %v707 = vpack.c.b16 %v667, %v666
      %v708 = vpack.c.b16 %v669, %v668
      %v709 = vpack.c.b16 %v671, %v670
      %v710 = vpack.c.b16 %v673, %v672
      %v711 = vpack.c.b16 %v675, %v674
      %v712 = vpack.c.b16 %v677, %v676
      %v713 = vpack.c.b16 %v679, %v678
      %v714 = vpack.c.b16 %v681, %v680
      %v715 = vpack.c.b16 %v683, %v682
      %v716 = vpack.c.b16 %v685, %v684
      %v717 = vpack.c.b16 %v687, %v686
      %v718 = vpack.c.b16 %v689, %v688
      %v719 = vpack.c.b16 %v691, %v690
      %v720 = vpack.c.b16 %v693, %v692
      %v721 = vpack.c.b16 %v695, %v694
      %v722 = vpack.c.b16 %v697, %v696
      %v723 = vpack.c.b16 %v699, %v698
      %748 = vmatprep.subr.bf16.mxu0 0
      %749 = vmatpush1.bf16.msra.mxu0 %v700
      %750 = vmatprep.subr.bf16.mxu0 0
      %751 = vmatpush1.bf16.msra.mxu0 %v701
      %752 = vmatprep.subr.bf16.mxu0 0
      %753 = vmatpush1.bf16.msra.mxu0 %v702
      %754 = vmatprep.subr.bf16.mxu0 0
      %755 = vmatpush1.bf16.msra.mxu0 %v703
      %756 = vmatprep.subr.bf16.mxu0 0
      %757 = vmatpush1.bf16.msra.mxu0 %v704
      %758 = vmatprep.subr.bf16.mxu0 0
      %759 = vmatpush1.bf16.msra.mxu0 %v705
      %760 = vmatprep.subr.bf16.mxu0 0
      %761 = vmatpush1.bf16.msra.mxu0 %v706
      %762 = vmatprep.subr.bf16.mxu0 0
      %763 = vmatpush1.bf16.msra.mxu0 %v707
      %764 = vmatprep.subr.bf16.mxu0 0
      %765 = vmatpush1.bf16.msra.mxu0 %v708
      %766 = vmatprep.subr.bf16.mxu0 0
      %767 = vmatpush1.bf16.msra.mxu0 %v709
      %768 = vmatprep.subr.bf16.mxu0 0
      %769 = vmatpush1.bf16.msra.mxu0 %v710
      %770 = vmatprep.subr.bf16.mxu0 0
      %771 = vmatpush1.bf16.msra.mxu0 %v711
      %772 = vmatprep.subr.bf16.mxu0 0
      %773 = vmatpush1.bf16.msra.mxu0 %v712
      %774 = vmatprep.subr.bf16.mxu0 0
      %775 = vmatpush1.bf16.msra.mxu0 %v713
      %776 = vmatprep.subr.bf16.mxu0 0
      %777 = vmatpush1.bf16.msra.mxu0 %v714
      %778 = vmatprep.subr.bf16.mxu0 0
      %779 = vmatpush1.bf16.msra.mxu0 %v715
      %780 = vmatprep.mubr.bf16.mxu0 %v509
      %781 = vmatmul.mubr.bf16.gmra.mrb[0].mxu0 %v508
      %v782 = vpop.f32.mrb[0].mxu0
      %v783 = vadd.f32 %v346, %v782
      %v784 = vpop.f32.mrb[0].mxu0
      %v785 = vpop.f32.mrb[0].mxu0
      %v786 = vadd.f32 %v346, %v785
      %v787 = vpop.f32.mrb[0].mxu0
      %788 = vmatprep.mubr.bf16.mxu0 %v512
      %789 = vmatmul.mubr.bf16.gmra.mrb[0].mxu0 %v511
      %v790 = vpop.f32.mrb[0].mxu0
      %v791 = vadd.f32 %v346, %v790
      %v792 = vpop.f32.mrb[0].mxu0
      %v793 = vpop.f32.mrb[0].mxu0
      %v794 = vadd.f32 %v346, %v793
      %v795 = vpop.f32.mrb[0].mxu0
      %796 = vmatprep.mubr.bf16.mxu0 %v515
      %797 = vmatmul.mubr.bf16.gmra.mrb[0].mxu0 %v514
      %v798 = vpop.f32.mrb[0].mxu0
      %v799 = vadd.f32 %v346, %v798
      %v800 = vpop.f32.mrb[0].mxu0
      %v801 = vpop.f32.mrb[0].mxu0
      %v802 = vadd.f32 %v346, %v801
      %v803 = vpop.f32.mrb[0].mxu0
      %804 = vmatprep.mubr.bf16.mxu0 %v518
      %805 = vmatmul.mubr.bf16.gmra.mrb[0].mxu0 %v517
      %v806 = vpop.f32.mrb[0].mxu0
      %v807 = vadd.f32 %v346, %v806
      %v808 = vpop.f32.mrb[0].mxu0
      %v809 = vpop.f32.mrb[0].mxu0
      %v810 = vadd.f32 %v346, %v809
      %v811 = vpop.f32.mrb[0].mxu0
      %812 = vmatprep.mubr.bf16.mxu0 %v521
      %813 = vmatmul.mubr.bf16.gmra.mrb[0].mxu0 %v520
      %v814 = vpop.f32.mrb[0].mxu0
      %v815 = vadd.f32 %v346, %v814
      %v816 = vpop.f32.mrb[0].mxu0
      %v817 = vpop.f32.mrb[0].mxu0
      %v818 = vadd.f32 %v346, %v817
      %v819 = vpop.f32.mrb[0].mxu0
      %820 = vmatprep.mubr.bf16.mxu0 %v524
      %821 = vmatmul.mubr.bf16.gmra.mrb[0].mxu0 %v523
      %v822 = vpop.f32.mrb[0].mxu0
      %v823 = vadd.f32 %v346, %v822
      %v824 = vpop.f32.mrb[0].mxu0
      %v825 = vpop.f32.mrb[0].mxu0
      %v826 = vadd.f32 %v346, %v825
      %v827 = vpop.f32.mrb[0].mxu0
      %828 = vmatprep.mubr.bf16.mxu0 %v527
      %829 = vmatmul.mubr.bf16.gmra.mrb[0].mxu0 %v526
      %v830 = vpop.f32.mrb[0].mxu0
      %v831 = vadd.f32 %v346, %v830
      %v832 = vpop.f32.mrb[0].mxu0
      %v833 = vpop.f32.mrb[0].mxu0
      %v834 = vadd.f32 %v346, %v833
      %v835 = vpop.f32.mrb[0].mxu0
      %836 = vmatprep.mubr.bf16.mxu0 %v530
      %837 = vmatmul.mubr.bf16.gmra.mrb[0].mxu0 %v529
      %v838 = vpop.f32.mrb[0].mxu0
      %v839 = vadd.f32 %v346, %v838
      %v840 = vpop.f32.mrb[0].mxu0
      %v841 = vpop.f32.mrb[0].mxu0
      %v842 = vadd.f32 %v346, %v841
      %v843 = vpop.f32.mrb[0].mxu0
      %844 = vmatprep.mubr.bf16.mxu0 %v533
      %845 = vmatmul.mubr.bf16.gmra.mrb[0].mxu0 %v532
      %v846 = vpop.f32.mrb[0].mxu0
      %v847 = vadd.f32 %v346, %v846
      %v848 = vpop.f32.mrb[0].mxu0
      %v849 = vpop.f32.mrb[0].mxu0
      %v850 = vadd.f32 %v346, %v849
      %v851 = vpop.f32.mrb[0].mxu0
      %852 = vmatprep.mubr.bf16.mxu0 %v536
      %853 = vmatmul.mubr.bf16.gmra.mrb[0].mxu0 %v535
      %v854 = vpop.f32.mrb[0].mxu0
      %v855 = vadd.f32 %v346, %v854
      %v856 = vpop.f32.mrb[0].mxu0
      %v857 = vpop.f32.mrb[0].mxu0
      %v858 = vadd.f32 %v346, %v857
      %v859 = vpop.f32.mrb[0].mxu0
      %860 = vmatprep.mubr.bf16.mxu0 %v539
      %861 = vmatmul.mubr.bf16.gmra.mrb[0].mxu0 %v538
      %v862 = vpop.f32.mrb[0].mxu0
      %v863 = vadd.f32 %v346, %v862
      %v864 = vpop.f32.mrb[0].mxu0
      %v865 = vpop.f32.mrb[0].mxu0
      %v866 = vadd.f32 %v346, %v865
      %v867 = vpop.f32.mrb[0].mxu0
      %868 = vmatprep.mubr.bf16.mxu0 %v542
      %869 = vmatmul.mubr.bf16.gmra.mrb[0].mxu0 %v541
      %v870 = vpop.f32.mrb[0].mxu0
      %v871 = vadd.f32 %v346, %v870
      %v872 = vpop.f32.mrb[0].mxu0
      %v873 = vpop.f32.mrb[0].mxu0
      %v874 = vadd.f32 %v346, %v873
      %v875 = vpop.f32.mrb[0].mxu0
      %876 = vmatprep.mubr.bf16.mxu0 %v545
      %877 = vmatmul.mubr.bf16.gmra.mrb[0].mxu0 %v544
      %v878 = vpop.f32.mrb[0].mxu0
      %v879 = vadd.f32 %v346, %v878
      %v880 = vpop.f32.mrb[0].mxu0
      %v881 = vpop.f32.mrb[0].mxu0
      %v882 = vadd.f32 %v346, %v881
      %v883 = vpop.f32.mrb[0].mxu0
      %884 = vmatprep.mubr.bf16.mxu0 %v548
      %885 = vmatmul.mubr.bf16.gmra.mrb[0].mxu0 %v547
      %v886 = vpop.f32.mrb[0].mxu0
      %v887 = vadd.f32 %v346, %v886
      %v888 = vpop.f32.mrb[0].mxu0
      %v889 = vpop.f32.mrb[0].mxu0
      %v890 = vadd.f32 %v346, %v889
      %v891 = vpop.f32.mrb[0].mxu0
      %892 = vmatprep.mubr.bf16.mxu0 %v551
      %893 = vmatmul.mubr.bf16.gmra.mrb[0].mxu0 %v550
      %v894 = vpop.f32.mrb[0].mxu0
      %v895 = vadd.f32 %v346, %v894
      %v896 = vpop.f32.mrb[0].mxu0
      %v897 = vpop.f32.mrb[0].mxu0
      %v898 = vadd.f32 %v346, %v897
      %v899 = vpop.f32.mrb[0].mxu0
      %900 = vmatprep.mubr.bf16.mxu0 %v554
      %901 = vmatmul.mubr.bf16.gmra.mrb[0].mxu0 %v553
      %v902 = vpop.f32.mrb[0].mxu0
      %v903 = vadd.f32 %v346, %v902
      %v904 = vpop.f32.mrb[0].mxu0
      %v905 = vpop.f32.mrb[0].mxu0
      %v906 = vadd.f32 %v346, %v905
      %v907 = vpop.f32.mrb[0].mxu0
      %908 = vdwg.mxu0
      %909 = vmatprep.subr.bf16.mxu0 0
      %910 = vmatpush1.bf16.msra.mxu0 %v716
      %911 = vmatprep.subr.bf16.mxu0 0
      %912 = vmatpush1.bf16.msra.mxu0 %v717
      %913 = vmatprep.subr.bf16.mxu0 0
      %914 = vmatpush1.bf16.msra.mxu0 %v718
      %915 = vmatprep.subr.bf16.mxu0 0
      %916 = vmatpush1.bf16.msra.mxu0 %v719
      %917 = vmatprep.subr.bf16.mxu0 0
      %918 = vmatpush1.bf16.msra.mxu0 %v720
      %919 = vmatprep.subr.bf16.mxu0 0
      %920 = vmatpush1.bf16.msra.mxu0 %v721
      %921 = vmatprep.subr.bf16.mxu0 0
      %922 = vmatpush1.bf16.msra.mxu0 %v722
      %923 = vmatprep.subr.bf16.mxu0 0
      %924 = vmatpush1.bf16.msra.mxu0 %v723
      %925 = vmatprep.subr.bf16.mxu0 0
      %926 = vmatpush1.bf16.msra.mxu0 0
      %927 = vmatprep.subr.bf16.mxu0 0
      %928 = vmatpush1.bf16.msra.mxu0 0
      %929 = vmatprep.subr.bf16.mxu0 0
      %930 = vmatpush1.bf16.msra.mxu0 0
      %931 = vmatprep.subr.bf16.mxu0 0
      %932 = vmatpush1.bf16.msra.mxu0 0
      %933 = vmatprep.subr.bf16.mxu0 0
      %934 = vmatpush1.bf16.msra.mxu0 0
      %935 = vmatprep.subr.bf16.mxu0 0
      %936 = vmatpush1.bf16.msra.mxu0 0
      %937 = vmatprep.subr.bf16.mxu0 0
      %938 = vmatpush1.bf16.msra.mxu0 0
      %939 = vmatprep.subr.bf16.mxu0 0
      %940 = vmatpush1.bf16.msra.mxu0 0
      %941 = vmatprep.mubr.bf16.mxu0 0
      %942 = vmatmul.mubr.bf16.gmra.mrb[0].mxu0 %v510
      %v943 = vpop.f32.mrb[0].mxu0
      %v944 = vadd.f32 %v783, %v943
      %v945 = vpop.f32.mrb[0].mxu0
      %v946 = vpop.f32.mrb[0].mxu0
      %v947 = vadd.f32 %v786, %v946
      %v948 = vpop.f32.mrb[0].mxu0
      %949 = vmatprep.mubr.bf16.mxu0 0
      %950 = vmatmul.mubr.bf16.gmra.mrb[0].mxu0 %v513
      %v951 = vpop.f32.mrb[0].mxu0
      %v952 = vadd.f32 %v791, %v951
      %v953 = vpop.f32.mrb[0].mxu0
      %v954 = vpop.f32.mrb[0].mxu0
      %v955 = vadd.f32 %v794, %v954
      %v956 = vpop.f32.mrb[0].mxu0
      %957 = vmatprep.mubr.bf16.mxu0 0
      %958 = vmatmul.mubr.bf16.gmra.mrb[0].mxu0 %v516
      %v959 = vpop.f32.mrb[0].mxu0
      %v960 = vadd.f32 %v799, %v959
      %v961 = vpop.f32.mrb[0].mxu0
      %v962 = vpop.f32.mrb[0].mxu0
      %v963 = vadd.f32 %v802, %v962
      %v964 = vpop.f32.mrb[0].mxu0
      %965 = vmatprep.mubr.bf16.mxu0 0
      %966 = vmatmul.mubr.bf16.gmra.mrb[0].mxu0 %v519
      %v967 = vpop.f32.mrb[0].mxu0
      %v968 = vadd.f32 %v807, %v967
      %v969 = vpop.f32.mrb[0].mxu0
      %v970 = vpop.f32.mrb[0].mxu0
      %v971 = vadd.f32 %v810, %v970
      %v972 = vpop.f32.mrb[0].mxu0
      %973 = vmatprep.mubr.bf16.mxu0 0
      %974 = vmatmul.mubr.bf16.gmra.mrb[0].mxu0 %v522
      %v975 = vpop.f32.mrb[0].mxu0
      %v976 = vadd.f32 %v815, %v975
      %v977 = vpop.f32.mrb[0].mxu0
      %v978 = vpop.f32.mrb[0].mxu0
      %v979 = vadd.f32 %v818, %v978
      %v980 = vpop.f32.mrb[0].mxu0
      %981 = vmatprep.mubr.bf16.mxu0 0
      %982 = vmatmul.mubr.bf16.gmra.mrb[0].mxu0 %v525
      %v983 = vpop.f32.mrb[0].mxu0
      %v984 = vadd.f32 %v823, %v983
      %v985 = vpop.f32.mrb[0].mxu0
      %v986 = vpop.f32.mrb[0].mxu0
      %v987 = vadd.f32 %v826, %v986
      %v988 = vpop.f32.mrb[0].mxu0
      %989 = vmatprep.mubr.bf16.mxu0 0
      %990 = vmatmul.mubr.bf16.gmra.mrb[0].mxu0 %v528
      %v991 = vpop.f32.mrb[0].mxu0
      %v992 = vadd.f32 %v831, %v991
      %v993 = vpop.f32.mrb[0].mxu0
      %v994 = vpop.f32.mrb[0].mxu0
      %v995 = vadd.f32 %v834, %v994
      %v996 = vpop.f32.mrb[0].mxu0
      %997 = vmatprep.mubr.bf16.mxu0 0
      %998 = vmatmul.mubr.bf16.gmra.mrb[0].mxu0 %v531
      %v999 = vpop.f32.mrb[0].mxu0
      %v1000 = vadd.f32 %v839, %v999
      %v1001 = vpop.f32.mrb[0].mxu0
      %v1002 = vpop.f32.mrb[0].mxu0
      %v1003 = vadd.f32 %v842, %v1002
      %v1004 = vpop.f32.mrb[0].mxu0
      %1005 = vmatprep.mubr.bf16.mxu0 0
      %1006 = vmatmul.mubr.bf16.gmra.mrb[0].mxu0 %v534
      %v1007 = vpop.f32.mrb[0].mxu0
      %v1008 = vadd.f32 %v847, %v1007
      %v1009 = vpop.f32.mrb[0].mxu0
      %v1010 = vpop.f32.mrb[0].mxu0
      %v1011 = vadd.f32 %v850, %v1010
      %v1012 = vpop.f32.mrb[0].mxu0
      %1013 = vmatprep.mubr.bf16.mxu0 0
      %1014 = vmatmul.mubr.bf16.gmra.mrb[0].mxu0 %v537
      %v1015 = vpop.f32.mrb[0].mxu0
      %v1016 = vadd.f32 %v855, %v1015
      %v1017 = vpop.f32.mrb[0].mxu0
      %v1018 = vpop.f32.mrb[0].mxu0
      %v1019 = vadd.f32 %v858, %v1018
      %v1020 = vpop.f32.mrb[0].mxu0
      %1021 = vmatprep.mubr.bf16.mxu0 0
      %1022 = vmatmul.mubr.bf16.gmra.mrb[0].mxu0 %v540
      %v1023 = vpop.f32.mrb[0].mxu0
      %v1024 = vadd.f32 %v863, %v1023
      %v1025 = vpop.f32.mrb[0].mxu0
      %v1026 = vpop.f32.mrb[0].mxu0
      %v1027 = vadd.f32 %v866, %v1026
      %v1028 = vpop.f32.mrb[0].mxu0
      %1029 = vmatprep.mubr.bf16.mxu0 0
      %1030 = vmatmul.mubr.bf16.gmra.mrb[0].mxu0 %v543
      %v1031 = vpop.f32.mrb[0].mxu0
      %v1032 = vadd.f32 %v871, %v1031
      %v1033 = vpop.f32.mrb[0].mxu0
      %v1034 = vpop.f32.mrb[0].mxu0
      %v1035 = vadd.f32 %v874, %v1034
      %v1036 = vpop.f32.mrb[0].mxu0
      %1037 = vmatprep.mubr.bf16.mxu0 0
      %1038 = vmatmul.mubr.bf16.gmra.mrb[0].mxu0 %v546
      %v1039 = vpop.f32.mrb[0].mxu0
      %v1040 = vadd.f32 %v879, %v1039
      %v1041 = vpop.f32.mrb[0].mxu0
      %v1042 = vpop.f32.mrb[0].mxu0
      %v1043 = vadd.f32 %v882, %v1042
      %v1044 = vpop.f32.mrb[0].mxu0
      %1045 = vmatprep.mubr.bf16.mxu0 0
      %1046 = vmatmul.mubr.bf16.gmra.mrb[0].mxu0 %v549
      %v1047 = vpop.f32.mrb[0].mxu0
      %v1048 = vadd.f32 %v887, %v1047
      %v1049 = vpop.f32.mrb[0].mxu0
      %v1050 = vpop.f32.mrb[0].mxu0
      %v1051 = vadd.f32 %v890, %v1050
      %v1052 = vpop.f32.mrb[0].mxu0
      %1053 = vmatprep.mubr.bf16.mxu0 0
      %1054 = vmatmul.mubr.bf16.gmra.mrb[0].mxu0 %v552
      %v1055 = vpop.f32.mrb[0].mxu0
      %v1056 = vadd.f32 %v895, %v1055
      %v1057 = vpop.f32.mrb[0].mxu0
      %v1058 = vpop.f32.mrb[0].mxu0
      %v1059 = vadd.f32 %v898, %v1058
      %v1060 = vpop.f32.mrb[0].mxu0
      %1061 = vmatprep.mubr.bf16.mxu0 0
      %1062 = vmatmul.mubr.bf16.gmra.mrb[0].mxu0 %v555
      %v1063 = vpop.f32.mrb[0].mxu0
      %v1064 = vadd.f32 %v903, %v1063
      %v1065 = vpop.f32.mrb[0].mxu0
      %v1066 = vpop.f32.mrb[0].mxu0
      %v1067 = vadd.f32 %v906, %v1066
      %v1068 = vpop.f32.mrb[0].mxu0
      %1069 = vdwg.mxu0
      %v1070 = vmax.f32 %v944, 0.0
      %v1071 = vmax.f32 %v947, 0.0
      %v1072 = vmax.f32 %v952, 0.0
      %v1073 = vmax.f32 %v955, 0.0
      %v1074 = vmax.f32 %v960, 0.0
      %v1075 = vmax.f32 %v963, 0.0
      %v1076 = vmax.f32 %v968, 0.0
      %v1077 = vmax.f32 %v971, 0.0
      %v1078 = vmax.f32 %v976, 0.0
      %v1079 = vmax.f32 %v979, 0.0
      %v1080 = vmax.f32 %v984, 0.0
      %v1081 = vmax.f32 %v987, 0.0
      %v1082 = vmax.f32 %v992, 0.0
      %v1083 = vmax.f32 %v995, 0.0
      %v1084 = vmax.f32 %v1000, 0.0
      %v1085 = vmax.f32 %v1003, 0.0
      %v1086 = vmax.f32 %v1008, 0.0
      %v1087 = vmax.f32 %v1011, 0.0
      %v1088 = vmax.f32 %v1016, 0.0
      %v1089 = vmax.f32 %v1019, 0.0
      %v1090 = vmax.f32 %v1024, 0.0
      %v1091 = vmax.f32 %v1027, 0.0
      %v1092 = vmax.f32 %v1032, 0.0
      %v1093 = vmax.f32 %v1035, 0.0
      %v1094 = vmax.f32 %v1040, 0.0
      %v1095 = vmax.f32 %v1043, 0.0
      %v1096 = vmax.f32 %v1048, 0.0
      %v1097 = vmax.f32 %v1051, 0.0
      %v1098 = vmax.f32 %v1056, 0.0
      %v1099 = vmax.f32 %v1059, 0.0
      %v1100 = vmax.f32 %v1064, 0.0
      %v1101 = vmax.f32 %v1067, 0.0
      %1102 = vst [vmem:[%s226] sm:$0xff] %v1070
      %1103 = vst [vmem:[%s226 + $0x8] sm:$0xff] %v1071
      %1104 = vst [vmem:[%s226 + $0x10] sm:$0xff] %v1072
      %1105 = vst [vmem:[%s226 + $0x18] sm:$0xff] %v1073
      %1106 = vst [vmem:[%s226 + $0x20] sm:$0xff] %v1074
      %1107 = vst [vmem:[%s226 + $0x28] sm:$0xff] %v1075
      %1108 = vst [vmem:[%s226 + $0x30] sm:$0xff] %v1076
      %1109 = vst [vmem:[%s226 + $0x38] sm:$0xff] %v1077
      %1110 = vst [vmem:[%s226 + $0x40] sm:$0xff] %v1078
      %1111 = vst [vmem:[%s226 + $0x48] sm:$0xff] %v1079
      %1112 = vst [vmem:[%s226 + $0x50] sm:$0xff] %v1080
      %1113 = vst [vmem:[%s226 + $0x58] sm:$0xff] %v1081
      %1114 = vst [vmem:[%s226 + $0x60] sm:$0xff] %v1082
      %1115 = vst [vmem:[%s226 + $0x68] sm:$0xff] %v1083
      %1116 = vst [vmem:[%s226 + $0x70] sm:$0xff] %v1084
      %1117 = vst [vmem:[%s226 + $0x78] sm:$0xff] %v1085
      %1118 = vst [vmem:[%s226 + $0x80] sm:$0xff] %v1086
      %1119 = vst [vmem:[%s226 + $0x88] sm:$0xff] %v1087
      %1120 = vst [vmem:[%s226 + $0x90] sm:$0xff] %v1088
      %1121 = vst [vmem:[%s226 + $0x98] sm:$0xff] %v1089
      %1122 = vst [vmem:[%s226 + $0xa0] sm:$0xff] %v1090
      %1123 = vst [vmem:[%s226 + $0xa8] sm:$0xff] %v1091
      %1124 = vst [vmem:[%s226 + $0xb0] sm:$0xff] %v1092
      %1125 = vst [vmem:[%s226 + $0xb8] sm:$0xff] %v1093
      %1126 = vst [vmem:[%s226 + $0xc0] sm:$0xff] %v1094
      %1127 = vst [vmem:[%s226 + $0xc8] sm:$0xff] %v1095
      %1128 = vst [vmem:[%s226 + $0xd0] sm:$0xff] %v1096
      %1129 = vst [vmem:[%s226 + $0xd8] sm:$0xff] %v1097
      %1130 = vst [vmem:[%s226 + $0xe0] sm:$0xff] %v1098
      %1131 = vst [vmem:[%s226 + $0xe8] sm:$0xff] %v1099
      %1132 = vst [vmem:[%s226 + $0xf0] sm:$0xff] %v1100
      %1133 = vst [vmem:[%s226 + $0xf8] sm:$0xff] %v1101
      %s1134 = smul.u32 32, %s18
      %p1135 = scmp.lt.s32.totalorder %s1134, 63
      %s1136 = scalar_select %p1135, %s1134, 63
      %p1137 = scmp.lt.s32.totalorder %s19, 0
      %s1138 = scalar_select %p1137, %s19, 0
      %s1139 = sadd.s32 %s1138, %s1136
      %s1140 = smul.addr %s1139, 8
      %s1141 = scalar_lea.vmem %s3, %s1140
      // Predicated region
      $region33: #{cae_forward.10} parent=31 // pred_check
        %p1142 = pneg %p124
      $region34: #{cae_forward.10} parent=31 // pred_check_branch
        %1144 = sbr.rel (%p1142) target = $region36
      $region35: #{cae_forward.10} parent=31 // pred_region
        %s1145 = smul.u32 32, %s18
      $region36: #{cae_forward.10} parent=31 // pred_fallthru
        _
    $region32: #{cae_forward.10} parent=5 // pred_fallthru
      _
    %p1146 = scmp.le.s32.totalorder 2, %s9
    // Predicated region
    $region37: #{cae_forward.10} parent=5 // pred_check
      %p1147 = pneg %p1146
    $region38: #{cae_forward.10} parent=5 // pred_check_branch
      %1149 = sbr.rel (%p1147) target = $region40
    $region39: #{cae_forward.10} parent=5 // pred_region
      %s1150 = ssub.s32 %s9, 2
      // Predicated region
      $region41: #{cae_forward.10} parent=39 // pred_check
        %p1151 = pneg %p130
      $region42: #{cae_forward.10} parent=39 // pred_check_branch
        %1153 = sbr.rel (%p1151) target = $region44
      $region43: #{cae_forward.10} parent=39 // pred_region
        %s1154 = smul.u32 32, %s20
        %p1155 = scmp.lt.s32.totalorder %s1154, 63
        %s1156 = scalar_select %p1155, %s1154, 63
        %p1157 = scmp.lt.s32.totalorder %s21, 0
        %s1158 = scalar_select %p1157, %s21, 0
        %s1159 = sadd.s32 %s1158, %s1156
        %s1160 = smul.addr %s1159, 8
        %s1161 = scalar_lea.vmem %s3, %s1160
      $region44: #{cae_forward.10} parent=39 // pred_fallthru
        _
    $region40: #{cae_forward.10} parent=5 // pred_fallthru
      _
  $region6: #{cae_forward.10} parent=0 // loop_footer
    %s13 = sadd.s32 1, %s9
  $region7: #{cae_forward.10} parent=0 // loop_footer_branch
    %8 = sbr.rel target = $region3
  $region8: #{cae_forward.10} parent=0 // loop_exit
    _

// kernel: cae_forward.11
$region0: #{cae_forward.11}
  #allocation0 [shape = 'u32[]', space=smem, size = 0x4, offset = 0x4, fixed_abs, tag = 'smem constant byte address 0x4 - core index']
  #allocation1 [shape = 'u32[144,128]{1,0:T(1,128)}', space=vmem, size = 0x12000, scoped, tag = 'internal scratch']
  %s0 = inlined_call_operand.vmem [shape: bf16[1792,256], index: 0, kind: input, shape index: {}]
  %s1 = inlined_call_operand.vmem [shape: bf16[256,128], index: 1, kind: input, shape index: {}]
  %s2 = inlined_call_operand.vmem [shape: f32[1,128], index: 2, kind: input, shape index: {}]
  %s3 = inlined_call_operand.vmem [shape: f32[1792,128], index: 3, kind: output, shape index: {}]
  %s4 = sld [smem:[#allocation0]]
  $region45: #{cae_forward.11} parent=0
    _
  %s6 = ssub.s32 1, %s4
  %s7 = scalar_select 0, %s6, %s4
  loop: start=0, step=1, limit=9
  $region2: #{cae_forward.11} parent=0 // loop_pre_header
    _
  $region3: #{cae_forward.11} parent=0 // loop_header
    %s9 = sphi 0, %s13
    %p10 = scmp.ge.s32.totalorder %s9, 9
    %s16 = sphi 0, %s28
    %s17 = sphi 0, %s24
    %s18 = sphi 0, %s16
    %s19 = sphi 0, %s17
    %s20 = sphi 0, %s18
    %s21 = sphi 0, %s19
    %s31 = sphi 0, %s33
    %s34 = sphi 0, %s31
    %s35 = sphi 0, %s34
    %s51 = sphi 0, %s35
    %s57 = sphi 0, %s59
    %s60 = sphi 0, %s57
    %s61 = sphi 0, %s60
    %s77 = sphi 0, %s61
    %s83 = sphi 0, %s85
    %s86 = sphi 0, %s83
    %s87 = sphi 0, %s86
    %s103 = sphi 0, %s87
    %s111 = sphi 0, %s113
    %s114 = sphi 0, %s111
    %s115 = sphi 0, %s114
    %s131 = sphi 0, %s115
  $region4: #{cae_forward.11} parent=0 // loop_header_branch
    %12 = sbr.rel (%p10) target = $region8
  $region5: #{cae_forward.11} parent=0 // loop_body
    %s14 = ssub.s32 %s9, 1
    %s15 = ssub.s32 %s9, 2
    %s22 = sadd.s32 1, %s17
    %p23 = scmp.ge.s32.totalorder %s22, 1
    %s24 = scalar_select %p23, 0, %s22
    %s25 = sadd.s32 1, %s16
    %s26 = scalar_select %p23, %s25, %s16
    %p27 = scmp.ge.s32.totalorder %s26, 7
    %s28 = scalar_select %p27, 0, %s26
    %s29 = ssub.s32 %s16, %s28
    %p30 = scmp.eq.s32.totalorder %s29, 0
    %s32 = sadd.s32 %s31, 1
    %s33 = scalar_select %p30, %s31, %s32
    %p36 = pneg %p30
    %p37 = scmp.eq.s32.totalorder %s9, 6
    %p38 = por %p36, %p37
    %p39 = scmp.ne.s32.totalorder %s31, %s34
    %p40 = scmp.eq.s32.totalorder %s9, 0
    %p41 = por %p39, %p40
    %p42 = scmp.ne.s32.totalorder %s31, %s34
    %p43 = scmp.eq.s32.totalorder %s14, 6
    %p44 = por %p42, %p43
    %p45 = scmp.ne.s32.totalorder %s34, %s35
    %p46 = scmp.eq.s32.totalorder %s14, 0
    %p47 = por %p45, %p46
    %p48 = scmp.ne.s32.totalorder %s34, %s35
    %p49 = scmp.eq.s32.totalorder %s15, 6
    %p50 = por %p48, %p49
    %p52 = scmp.ne.s32.totalorder %s35, %s51
    %p53 = scmp.eq.s32.totalorder %s15, 0
    %p54 = por %p52, %p53
    %s55 = ssub.s32 %s17, %s24
    %p56 = scmp.eq.s32.totalorder %s55, 0
    %s58 = sadd.s32 %s57, 1
    %s59 = scalar_select %p56, %s57, %s58
    %p62 = pneg %p56
    %p63 = scmp.eq.s32.totalorder %s9, 6
    %p64 = por %p62, %p63
    %p65 = scmp.ne.s32.totalorder %s57, %s60
    %p66 = scmp.eq.s32.totalorder %s9, 0
    %p67 = por %p65, %p66
    %p68 = scmp.ne.s32.totalorder %s57, %s60
    %p69 = scmp.eq.s32.totalorder %s14, 6
    %p70 = por %p68, %p69
    %p71 = scmp.ne.s32.totalorder %s60, %s61
    %p72 = scmp.eq.s32.totalorder %s14, 0
    %p73 = por %p71, %p72
    %p74 = scmp.ne.s32.totalorder %s60, %s61
    %p75 = scmp.eq.s32.totalorder %s15, 6
    %p76 = por %p74, %p75
    %p78 = scmp.ne.s32.totalorder %s61, %s77
    %p79 = scmp.eq.s32.totalorder %s15, 0
    %p80 = por %p78, %p79
    %s81 = ssub.s32 %s17, %s24
    %p82 = scmp.eq.s32.totalorder %s81, 0
    %s84 = sadd.s32 %s83, 1
    %s85 = scalar_select %p82, %s83, %s84
    %p88 = pneg %p82
    %p89 = scmp.eq.s32.totalorder %s9, 6
    %p90 = por %p88, %p89
    %p91 = scmp.ne.s32.totalorder %s83, %s86
    %p92 = scmp.eq.s32.totalorder %s9, 0
    %p93 = por %p91, %p92
    %p94 = scmp.ne.s32.totalorder %s83, %s86
    %p95 = scmp.eq.s32.totalorder %s14, 6
    %p96 = por %p94, %p95
    %p97 = scmp.ne.s32.totalorder %s86, %s87
    %p98 = scmp.eq.s32.totalorder %s14, 0
    %p99 = por %p97, %p98
    %p100 = scmp.ne.s32.totalorder %s86, %s87
    %p101 = scmp.eq.s32.totalorder %s15, 6
    %p102 = por %p100, %p101
    %p104 = scmp.ne.s32.totalorder %s87, %s103
    %p105 = scmp.eq.s32.totalorder %s15, 0
    %p106 = por %p104, %p105
    %s107 = ssub.s32 %s16, %s28
    %s108 = ssub.s32 %s17, %s24
    %s109 = sor.u32 %s107, %s108
    %p110 = scmp.eq.s32.totalorder %s109, 0
    %s112 = sadd.s32 %s111, 1
    %s113 = scalar_select %p110, %s111, %s112
    %p116 = pneg %p110
    %p117 = scmp.eq.s32.totalorder %s9, 6
    %p118 = por %p116, %p117
    %p119 = scmp.ne.s32.totalorder %s111, %s114
    %p120 = scmp.eq.s32.totalorder %s9, 0
    %p121 = por %p119, %p120
    %p122 = scmp.ne.s32.totalorder %s111, %s114
    %p123 = scmp.eq.s32.totalorder %s14, 6
    %p124 = por %p122, %p123
    %p125 = scmp.ne.s32.totalorder %s114, %s115
    %p126 = scmp.eq.s32.totalorder %s14, 0
    %p127 = por %p125, %p126
    %p128 = scmp.ne.s32.totalorder %s114, %s115
    %p129 = scmp.eq.s32.totalorder %s15, 6
    %p130 = por %p128, %p129
    %p132 = scmp.ne.s32.totalorder %s115, %s131
    %p133 = scmp.eq.s32.totalorder %s15, 0
    %p134 = por %p132, %p133
    %p135 = scmp.le.s32.totalorder 1, %s9
    %p136 = scmp.lt.s32.totalorder %s9, 8
    %p137 = pnand %p135, %p136
    %p138 = pneg %p137
    // Predicated region
    $region9: #{cae_forward.11} parent=5 // pred_check
      _
    $region10: #{cae_forward.11} parent=5 // pred_check_branch
      %140 = sbr.rel (%p137) target = $region12
    $region11: #{cae_forward.11} parent=5 // pred_region
      %s141 = ssub.s32 %s9, 1
      // Predicated region
      $region13: #{cae_forward.11} parent=11 // pred_check
        %p142 = pneg %p73
      $region14: #{cae_forward.11} parent=11 // pred_check_branch
        %144 = sbr.rel (%p142) target = $region16
      $region15: #{cae_forward.11} parent=11 // pred_region
        %p145 = scmp.lt.s32.totalorder %s19, 0
        %s146 = scalar_select %p145, %s19, 0
        %s147 = smul.addr %s146, 4
        %s148 = scalar_lea.vmem %s1, %s147
      $region16: #{cae_forward.11} parent=11 // pred_fallthru
        _
      // Predicated region
      $region17: #{cae_forward.11} parent=11 // pred_check
        %p149 = pneg %p99
      $region18: #{cae_forward.11} parent=11 // pred_check_branch
        %151 = sbr.rel (%p149) target = $region20
      $region19: #{cae_forward.11} parent=11 // pred_region
        %p152 = scmp.lt.s32.totalorder %s19, 0
        %s153 = scalar_select %p152, %s19, 0
        %s154 = scalar_lea.vmem %s2, %s153
      $region20: #{cae_forward.11} parent=11 // pred_fallthru
        _
    $region12: #{cae_forward.11} parent=5 // pred_fallthru
      _
    %p155 = scmp.lt.s32.totalorder %s9, 7
    // Predicated region
    $region21: #{cae_forward.11} parent=5 // pred_check
      %p156 = pneg %p155
    $region22: #{cae_forward.11} parent=5 // pred_check_branch
      %158 = sbr.rel (%p156) target = $region24
    $region23: #{cae_forward.11} parent=5 // pred_region
      // Predicated region
      $region25: #{cae_forward.11} parent=23 // pred_check
        %p159 = pneg %p41
      $region26: #{cae_forward.11} parent=23 // pred_check_branch
        %161 = sbr.rel (%p159) target = $region28
      $region27: #{cae_forward.11} parent=23 // pred_region
        %s162 = smul.u32 32, %s16
        %p163 = scmp.lt.s32.totalorder %s162, 223
        %s164 = scalar_select %p163, %s162, 223
        %s165 = smul.addr %s164, 2
        %s166 = smul.addr %s165, 4
        %s167 = scalar_lea.vmem %s0, %s166
        %s168 = smul.u32 32, %s16
      $region28: #{cae_forward.11} parent=23 // pred_fallthru
        _
    $region24: #{cae_forward.11} parent=5 // pred_fallthru
      _
    %p169 = scmp.le.s32.totalorder 1, %s9
    %p170 = scmp.lt.s32.totalorder %s9, 8
    %p171 = pnand %p169, %p170
    %p172 = pneg %p171
    // Predicated region
    $region29: #{cae_forward.11} parent=5 // pred_check
      _
    $region30: #{cae_forward.11} parent=5 // pred_check_branch
      %174 = sbr.rel (%p171) target = $region32
    $region31: #{cae_forward.11} parent=5 // pred_region
      %s175 = ssub.s32 %s9, 1
      %s176 = smul.u32 32, %s18
      %p177 = scmp.lt.s32.totalorder %s176, 223
      %s178 = scalar_select %p177, %s176, 223
      %s179 = smul.addr %s178, 2
      %s180 = smul.addr %s179, 4
      %s181 = scalar_lea.vmem %s0, %s180
      %p182 = pneg %p47
      %p183 = pneg %p44
      %p184 = scmp.lt.s32.totalorder %s19, 0
      %s185 = scalar_select %p184, %s19, 0
      %s186 = smul.addr %s185, 4
      %s187 = scalar_lea.vmem %s1, %s186
      %p188 = pneg %p73
      %p189 = pneg %p70
      %p190 = scmp.lt.s32.totalorder %s19, 0
      %s191 = scalar_select %p190, %s19, 0
      %s192 = scalar_lea.vmem %s2, %s191
      %p193 = pneg %p99
      %p194 = pneg %p96
      %p195 = pneg %p127
      %p196 = pneg %p124
      %s197 = smul.u32 32, %s18
      %p198 = scmp.lt.s32.totalorder %s197, 223
      %s199 = scalar_select %p198, %s197, 223
      %p200 = scmp.lt.s32.totalorder %s19, 0
      %s201 = scalar_select %p200, %s19, 0
      %s202 = sadd.s32 %s201, %s199
      %s203 = smul.addr %s202, 8
      %s204 = scalar_lea.vmem %s3, %s203
      %s205 = smul.u32 32, %s18
      %p206 = scmp.lt.s32.totalorder %s205, 223
      %s207 = scalar_select %p206, %s205, 223
      %s208 = smul.addr %s207, 2
      %s209 = smul.addr %s208, 4
      %s210 = scalar_lea.vmem %s0, %s209
      %s211 = smul.u32 32, %s18
      %p212 = scmp.lt.s32.totalorder %s19, 0
      %s213 = scalar_select %p212, %s19, 0
      %s214 = smul.addr %s213, 4
      %s215 = scalar_lea.vmem %s1, %s214
      %p216 = scmp.lt.s32.totalorder %s19, 0
      %s217 = scalar_select %p216, %s19, 0
      %s218 = scalar_lea.vmem %s2, %s217
      %s219 = smul.u32 32, %s18
      %p220 = scmp.lt.s32.totalorder %s219, 223
      %s221 = scalar_select %p220, %s219, 223
      %p222 = scmp.lt.s32.totalorder %s19, 0
      %s223 = scalar_select %p222, %s19, 0
      %s224 = sadd.s32 %s223, %s221
      %s225 = smul.addr %s224, 8
      %s226 = scalar_lea.vmem %s3, %s225
      %s227 = smul.u32 32, %s18
      %v229 = vld [vmem:[%s210] sm:$0xff]
      %v230 = vld [vmem:[%s210 + $0x8] sm:$0xff]
      %v231 = vld [vmem:[%s210 + $0x10] sm:$0xff]
      %v232 = vld [vmem:[%s210 + $0x18] sm:$0xff]
      %v233 = vld [vmem:[%s210 + $0x20] sm:$0xff]
      %v234 = vld [vmem:[%s210 + $0x28] sm:$0xff]
      %v235 = vld [vmem:[%s210 + $0x30] sm:$0xff]
      %v236 = vld [vmem:[%s210 + $0x38] sm:$0xff]
      %v237 = vld [vmem:[%s210 + $0x40] sm:$0xff]
      %v238 = vld [vmem:[%s210 + $0x48] sm:$0xff]
      %v239 = vld [vmem:[%s210 + $0x50] sm:$0xff]
      %v240 = vld [vmem:[%s210 + $0x58] sm:$0xff]
      %v241 = vld [vmem:[%s210 + $0x60] sm:$0xff]
      %v242 = vld [vmem:[%s210 + $0x68] sm:$0xff]
      %v243 = vld [vmem:[%s210 + $0x70] sm:$0xff]
      %v244 = vld [vmem:[%s210 + $0x78] sm:$0xff]
      %v245 = vld [vmem:[%s210 + $0x80] sm:$0xff]
      %v246 = vld [vmem:[%s210 + $0x88] sm:$0xff]
      %v247 = vld [vmem:[%s210 + $0x90] sm:$0xff]
      %v248 = vld [vmem:[%s210 + $0x98] sm:$0xff]
      %v249 = vld [vmem:[%s210 + $0xa0] sm:$0xff]
      %v250 = vld [vmem:[%s210 + $0xa8] sm:$0xff]
      %v251 = vld [vmem:[%s210 + $0xb0] sm:$0xff]
      %v252 = vld [vmem:[%s210 + $0xb8] sm:$0xff]
      %v253 = vld [vmem:[%s210 + $0xc0] sm:$0xff]
      %v254 = vld [vmem:[%s210 + $0xc8] sm:$0xff]
      %v255 = vld [vmem:[%s210 + $0xd0] sm:$0xff]
      %v256 = vld [vmem:[%s210 + $0xd8] sm:$0xff]
      %v257 = vld [vmem:[%s210 + $0xe0] sm:$0xff]
      %v258 = vld [vmem:[%s210 + $0xe8] sm:$0xff]
      %v259 = vld [vmem:[%s210 + $0xf0] sm:$0xff]
      %v260 = vld [vmem:[%s210 + $0xf8] sm:$0xff]
      %v261 = vld [vmem:[%s215] sm:$0xf]
      %v262 = vld [vmem:[%s215 + $0x4] sm:$0xf]
      %v263 = vld [vmem:[%s215 + $0x8] sm:$0xf]
      %v264 = vld [vmem:[%s215 + $0xc] sm:$0xf]
      %v265 = vld [vmem:[%s215 + $0x10] sm:$0xf]
      %v266 = vld [vmem:[%s215 + $0x14] sm:$0xf]
      %v267 = vld [vmem:[%s215 + $0x18] sm:$0xf]
      %v268 = vld [vmem:[%s215 + $0x1c] sm:$0xf]
      %v269 = vld [vmem:[%s215 + $0x20] sm:$0xf]
      %v270 = vld [vmem:[%s215 + $0x24] sm:$0xf]
      %v271 = vld [vmem:[%s215 + $0x28] sm:$0xf]
      %v272 = vld [vmem:[%s215 + $0x2c] sm:$0xf]
      %v273 = vld [vmem:[%s215 + $0x30] sm:$0xf]
      %v274 = vld [vmem:[%s215 + $0x34] sm:$0xf]
      %v275 = vld [vmem:[%s215 + $0x38] sm:$0xf]
      %v276 = vld [vmem:[%s215 + $0x3c] sm:$0xf]
      %v277 = vld [vmem:[%s215 + $0x40] sm:$0xf]
      %v278 = vld [vmem:[%s215 + $0x44] sm:$0xf]
      %v279 = vld [vmem:[%s215 + $0x48] sm:$0xf]
      %v280 = vld [vmem:[%s215 + $0x4c] sm:$0xf]
      %v281 = vld [vmem:[%s215 + $0x50] sm:$0xf]
      %v282 = vld [vmem:[%s215 + $0x54] sm:$0xf]
      %v283 = vld [vmem:[%s215 + $0x58] sm:$0xf]
      %v284 = vld [vmem:[%s215 + $0x5c] sm:$0xf]
      %v285 = vld [vmem:[%s215 + $0x60] sm:$0xf]
      %v286 = vld [vmem:[%s215 + $0x64] sm:$0xf]
      %v287 = vld [vmem:[%s215 + $0x68] sm:$0xf]
      %v288 = vld [vmem:[%s215 + $0x6c] sm:$0xf]
      %v289 = vld [vmem:[%s215 + $0x70] sm:$0xf]
      %v290 = vld [vmem:[%s215 + $0x74] sm:$0xf]
      %v291 = vld [vmem:[%s215 + $0x78] sm:$0xf]
      %v292 = vld [vmem:[%s215 + $0x7c] sm:$0xf]
      %v293 = vld [vmem:[%s218] sm:$0x1]
      %v295 = vlaneseq
      %v296 = vshrl.u32 %v295, 7
      %v297 = vsub.s32 0, %v296
      %v298 = vrot.slane %v293, %v297
      %v332 = vunpack.c.l.b16 %v229
      %v333 = vunpack.c.h.b16 %v229
      %v334 = vunpack.c.l.b16 %v230
      %v335 = vunpack.c.h.b16 %v230
      %v336 = vunpack.c.l.b16 %v231
      %v337 = vunpack.c.h.b16 %v231
      %v338 = vunpack.c.l.b16 %v232
      %v339 = vunpack.c.h.b16 %v232
      %v340 = vunpack.c.l.b16 %v233
      %v341 = vunpack.c.h.b16 %v233
      %v342 = vunpack.c.l.b16 %v234
      %v343 = vunpack.c.h.b16 %v234
      %v344 = vunpack.c.l.b16 %v235
      %v345 = vunpack.c.h.b16 %v235
      %v346 = vunpack.c.l.b16 %v236
      %v347 = vunpack.c.h.b16 %v236
      %v348 = vunpack.c.l.b16 %v237
      %v349 = vunpack.c.h.b16 %v237
      %v350 = vunpack.c.l.b16 %v238
      %v351 = vunpack.c.h.b16 %v238
      %v352 = vunpack.c.l.b16 %v239
      %v353 = vunpack.c.h.b16 %v239
      %v354 = vunpack.c.l.b16 %v240
      %v355 = vunpack.c.h.b16 %v240
      %v356 = vunpack.c.l.b16 %v241
      %v357 = vunpack.c.h.b16 %v241
      %v358 = vunpack.c.l.b16 %v242
      %v359 = vunpack.c.h.b16 %v242
      %v360 = vunpack.c.l.b16 %v243
      %v361 = vunpack.c.h.b16 %v243
      %v362 = vunpack.c.l.b16 %v244
      %v363 = vunpack.c.h.b16 %v244
      %v364 = vunpack.c.l.b16 %v245
      %v365 = vunpack.c.h.b16 %v245
      %v366 = vunpack.c.l.b16 %v246
      %v367 = vunpack.c.h.b16 %v246
      %v368 = vunpack.c.l.b16 %v247
      %v369 = vunpack.c.h.b16 %v247
      %v370 = vunpack.c.l.b16 %v248
      %v371 = vunpack.c.h.b16 %v248
      %v372 = vunpack.c.l.b16 %v249
      %v373 = vunpack.c.h.b16 %v249
      %v374 = vunpack.c.l.b16 %v250
      %v375 = vunpack.c.h.b16 %v250
      %v376 = vunpack.c.l.b16 %v251
      %v377 = vunpack.c.h.b16 %v251
      %v378 = vunpack.c.l.b16 %v252
      %v379 = vunpack.c.h.b16 %v252
      %v380 = vunpack.c.l.b16 %v253
      %v381 = vunpack.c.h.b16 %v253
      %v382 = vunpack.c.l.b16 %v254
      %v383 = vunpack.c.h.b16 %v254
      %v384 = vunpack.c.l.b16 %v255
      %v385 = vunpack.c.h.b16 %v255
      %v386 = vunpack.c.l.b16 %v256
      %v387 = vunpack.c.h.b16 %v256
      %v388 = vunpack.c.l.b16 %v257
      %v389 = vunpack.c.h.b16 %v257
      %v390 = vunpack.c.l.b16 %v258
      %v391 = vunpack.c.h.b16 %v258
      %v392 = vunpack.c.l.b16 %v259
      %v393 = vunpack.c.h.b16 %v259
      %v394 = vunpack.c.l.b16 %v260
      %v395 = vunpack.c.h.b16 %v260
      %v396 = vpack.c.b16 %v334, %v332
      %v397 = vpack.c.b16 %v335, %v333
      %v398 = vpack.c.b16 %v338, %v336
      %v399 = vpack.c.b16 %v339, %v337
      %v400 = vpack.c.b16 %v342, %v340
      %v401 = vpack.c.b16 %v343, %v341
      %v402 = vpack.c.b16 %v346, %v344
      %v403 = vpack.c.b16 %v347, %v345
      %v404 = vpack.c.b16 %v350, %v348
      %v405 = vpack.c.b16 %v351, %v349
      %v406 = vpack.c.b16 %v354, %v352
      %v407 = vpack.c.b16 %v355, %v353
      %v408 = vpack.c.b16 %v358, %v356
      %v409 = vpack.c.b16 %v359, %v357
      %v410 = vpack.c.b16 %v362, %v360
      %v411 = vpack.c.b16 %v363, %v361
      %v412 = vpack.c.b16 %v366, %v364
      %v413 = vpack.c.b16 %v367, %v365
      %v414 = vpack.c.b16 %v370, %v368
      %v415 = vpack.c.b16 %v371, %v369
      %v416 = vpack.c.b16 %v374, %v372
      %v417 = vpack.c.b16 %v375, %v373
      %v418 = vpack.c.b16 %v378, %v376
      %v419 = vpack.c.b16 %v379, %v377
      %v420 = vpack.c.b16 %v382, %v380
      %v421 = vpack.c.b16 %v383, %v381
      %v422 = vpack.c.b16 %v386, %v384
      %v423 = vpack.c.b16 %v387, %v385
      %v424 = vpack.c.b16 %v390, %v388
      %v425 = vpack.c.b16 %v391, %v389
      %v426 = vpack.c.b16 %v394, %v392
      %v427 = vpack.c.b16 %v395, %v393
      %v492 = vunpack.c.l.b16 %v261
      %v493 = vunpack.c.l.b16 %v262
      %v494 = vunpack.c.l.b16 %v263
      %v495 = vunpack.c.l.b16 %v264
      %v496 = vunpack.c.l.b16 %v265
      %v497 = vunpack.c.l.b16 %v266
      %v498 = vunpack.c.l.b16 %v267
      %v499 = vunpack.c.l.b16 %v268
      %v500 = vunpack.c.l.b16 %v269
      %v501 = vunpack.c.l.b16 %v270
      %v502 = vunpack.c.l.b16 %v271
      %v503 = vunpack.c.l.b16 %v272
      %v504 = vunpack.c.l.b16 %v273
      %v505 = vunpack.c.l.b16 %v274
      %v506 = vunpack.c.l.b16 %v275
      %v507 = vunpack.c.l.b16 %v276
      %v508 = vunpack.c.l.b16 %v277
      %v509 = vunpack.c.l.b16 %v278
      %v510 = vunpack.c.l.b16 %v279
      %v511 = vunpack.c.l.b16 %v280
      %v512 = vunpack.c.l.b16 %v281
      %v513 = vunpack.c.l.b16 %v282
      %v514 = vunpack.c.l.b16 %v283
      %v515 = vunpack.c.l.b16 %v284
      %v516 = vunpack.c.l.b16 %v285
      %v517 = vunpack.c.l.b16 %v286
      %v518 = vunpack.c.l.b16 %v287
      %v519 = vunpack.c.l.b16 %v288
      %v520 = vunpack.c.l.b16 %v289
      %v521 = vunpack.c.l.b16 %v290
      %v522 = vunpack.c.l.b16 %v291
      %v523 = vunpack.c.l.b16 %v292
      %v524 = vpack.c.b16 %v493, %v492
      %v525 = vpack.c.b16 %v495, %v494
      %v526 = vpack.c.b16 %v497, %v496
      %v527 = vpack.c.b16 %v499, %v498
      %v528 = vpack.c.b16 %v501, %v500
      %v529 = vpack.c.b16 %v503, %v502
      %v530 = vpack.c.b16 %v505, %v504
      %v531 = vpack.c.b16 %v507, %v506
      %v532 = vpack.c.b16 %v509, %v508
      %v533 = vpack.c.b16 %v511, %v510
      %v534 = vpack.c.b16 %v513, %v512
      %v535 = vpack.c.b16 %v515, %v514
      %v536 = vpack.c.b16 %v517, %v516
      %v537 = vpack.c.b16 %v519, %v518
      %v538 = vpack.c.b16 %v521, %v520
      %v539 = vpack.c.b16 %v523, %v522
      %556 = vmatprep.subr.bf16.mxu0 0
      %557 = vmatpush1.bf16.msra.mxu0 %v524
      %558 = vmatprep.subr.bf16.mxu0 0
      %559 = vmatpush1.bf16.msra.mxu0 %v525
      %560 = vmatprep.subr.bf16.mxu0 0
      %561 = vmatpush1.bf16.msra.mxu0 %v526
      %562 = vmatprep.subr.bf16.mxu0 0
      %563 = vmatpush1.bf16.msra.mxu0 %v527
      %564 = vmatprep.subr.bf16.mxu0 0
      %565 = vmatpush1.bf16.msra.mxu0 %v528
      %566 = vmatprep.subr.bf16.mxu0 0
      %567 = vmatpush1.bf16.msra.mxu0 %v529
      %568 = vmatprep.subr.bf16.mxu0 0
      %569 = vmatpush1.bf16.msra.mxu0 %v530
      %570 = vmatprep.subr.bf16.mxu0 0
      %571 = vmatpush1.bf16.msra.mxu0 %v531
      %572 = vmatprep.subr.bf16.mxu0 0
      %573 = vmatpush1.bf16.msra.mxu0 %v532
      %574 = vmatprep.subr.bf16.mxu0 0
      %575 = vmatpush1.bf16.msra.mxu0 %v533
      %576 = vmatprep.subr.bf16.mxu0 0
      %577 = vmatpush1.bf16.msra.mxu0 %v534
      %578 = vmatprep.subr.bf16.mxu0 0
      %579 = vmatpush1.bf16.msra.mxu0 %v535
      %580 = vmatprep.subr.bf16.mxu0 0
      %581 = vmatpush1.bf16.msra.mxu0 %v536
      %582 = vmatprep.subr.bf16.mxu0 0
      %583 = vmatpush1.bf16.msra.mxu0 %v537
      %584 = vmatprep.subr.bf16.mxu0 0
      %585 = vmatpush1.bf16.msra.mxu0 %v538
      %586 = vmatprep.subr.bf16.mxu0 0
      %587 = vmatpush1.bf16.msra.mxu0 %v539
      %588 = vmatprep.mubr.bf16.mxu0 %v397
      %589 = vmatmul.mubr.bf16.gmra.mrb[0].mxu0 %v396
      %v590 = vpop.f32.mrb[0].mxu0
      %v591 = vadd.f32 %v298, %v590
      %v592 = vpop.f32.mrb[0].mxu0
      %v593 = vpop.f32.mrb[0].mxu0
      %v594 = vadd.f32 %v298, %v593
      %v595 = vpop.f32.mrb[0].mxu0
      %596 = vmatprep.mubr.bf16.mxu0 %v399
      %597 = vmatmul.mubr.bf16.gmra.mrb[0].mxu0 %v398
      %v598 = vpop.f32.mrb[0].mxu0
      %v599 = vadd.f32 %v298, %v598
      %v600 = vpop.f32.mrb[0].mxu0
      %v601 = vpop.f32.mrb[0].mxu0
      %v602 = vadd.f32 %v298, %v601
      %v603 = vpop.f32.mrb[0].mxu0
      %604 = vmatprep.mubr.bf16.mxu0 %v401
      %605 = vmatmul.mubr.bf16.gmra.mrb[0].mxu0 %v400
      %v606 = vpop.f32.mrb[0].mxu0
      %v607 = vadd.f32 %v298, %v606
      %v608 = vpop.f32.mrb[0].mxu0
      %v609 = vpop.f32.mrb[0].mxu0
      %v610 = vadd.f32 %v298, %v609
      %v611 = vpop.f32.mrb[0].mxu0
      %612 = vmatprep.mubr.bf16.mxu0 %v403
      %613 = vmatmul.mubr.bf16.gmra.mrb[0].mxu0 %v402
      %v614 = vpop.f32.mrb[0].mxu0
      %v615 = vadd.f32 %v298, %v614
      %v616 = vpop.f32.mrb[0].mxu0
      %v617 = vpop.f32.mrb[0].mxu0
      %v618 = vadd.f32 %v298, %v617
      %v619 = vpop.f32.mrb[0].mxu0
      %620 = vmatprep.mubr.bf16.mxu0 %v405
      %621 = vmatmul.mubr.bf16.gmra.mrb[0].mxu0 %v404
      %v622 = vpop.f32.mrb[0].mxu0
      %v623 = vadd.f32 %v298, %v622
      %v624 = vpop.f32.mrb[0].mxu0
      %v625 = vpop.f32.mrb[0].mxu0
      %v626 = vadd.f32 %v298, %v625
      %v627 = vpop.f32.mrb[0].mxu0
      %628 = vmatprep.mubr.bf16.mxu0 %v407
      %629 = vmatmul.mubr.bf16.gmra.mrb[0].mxu0 %v406
      %v630 = vpop.f32.mrb[0].mxu0
      %v631 = vadd.f32 %v298, %v630
      %v632 = vpop.f32.mrb[0].mxu0
      %v633 = vpop.f32.mrb[0].mxu0
      %v634 = vadd.f32 %v298, %v633
      %v635 = vpop.f32.mrb[0].mxu0
      %636 = vmatprep.mubr.bf16.mxu0 %v409
      %637 = vmatmul.mubr.bf16.gmra.mrb[0].mxu0 %v408
      %v638 = vpop.f32.mrb[0].mxu0
      %v639 = vadd.f32 %v298, %v638
      %v640 = vpop.f32.mrb[0].mxu0
      %v641 = vpop.f32.mrb[0].mxu0
      %v642 = vadd.f32 %v298, %v641
      %v643 = vpop.f32.mrb[0].mxu0
      %644 = vmatprep.mubr.bf16.mxu0 %v411
      %645 = vmatmul.mubr.bf16.gmra.mrb[0].mxu0 %v410
      %v646 = vpop.f32.mrb[0].mxu0
      %v647 = vadd.f32 %v298, %v646
      %v648 = vpop.f32.mrb[0].mxu0
      %v649 = vpop.f32.mrb[0].mxu0
      %v650 = vadd.f32 %v298, %v649
      %v651 = vpop.f32.mrb[0].mxu0
      %652 = vmatprep.mubr.bf16.mxu0 %v413
      %653 = vmatmul.mubr.bf16.gmra.mrb[0].mxu0 %v412
      %v654 = vpop.f32.mrb[0].mxu0
      %v655 = vadd.f32 %v298, %v654
      %v656 = vpop.f32.mrb[0].mxu0
      %v657 = vpop.f32.mrb[0].mxu0
      %v658 = vadd.f32 %v298, %v657
      %v659 = vpop.f32.mrb[0].mxu0
      %660 = vmatprep.mubr.bf16.mxu0 %v415
      %661 = vmatmul.mubr.bf16.gmra.mrb[0].mxu0 %v414
      %v662 = vpop.f32.mrb[0].mxu0
      %v663 = vadd.f32 %v298, %v662
      %v664 = vpop.f32.mrb[0].mxu0
      %v665 = vpop.f32.mrb[0].mxu0
      %v666 = vadd.f32 %v298, %v665
      %v667 = vpop.f32.mrb[0].mxu0
      %668 = vmatprep.mubr.bf16.mxu0 %v417
      %669 = vmatmul.mubr.bf16.gmra.mrb[0].mxu0 %v416
      %v670 = vpop.f32.mrb[0].mxu0
      %v671 = vadd.f32 %v298, %v670
      %v672 = vpop.f32.mrb[0].mxu0
      %v673 = vpop.f32.mrb[0].mxu0
      %v674 = vadd.f32 %v298, %v673
      %v675 = vpop.f32.mrb[0].mxu0
      %676 = vmatprep.mubr.bf16.mxu0 %v419
      %677 = vmatmul.mubr.bf16.gmra.mrb[0].mxu0 %v418
      %v678 = vpop.f32.mrb[0].mxu0
      %v679 = vadd.f32 %v298, %v678
      %v680 = vpop.f32.mrb[0].mxu0
      %v681 = vpop.f32.mrb[0].mxu0
      %v682 = vadd.f32 %v298, %v681
      %v683 = vpop.f32.mrb[0].mxu0
      %684 = vmatprep.mubr.bf16.mxu0 %v421
      %685 = vmatmul.mubr.bf16.gmra.mrb[0].mxu0 %v420
      %v686 = vpop.f32.mrb[0].mxu0
      %v687 = vadd.f32 %v298, %v686
      %v688 = vpop.f32.mrb[0].mxu0
      %v689 = vpop.f32.mrb[0].mxu0
      %v690 = vadd.f32 %v298, %v689
      %v691 = vpop.f32.mrb[0].mxu0
      %692 = vmatprep.mubr.bf16.mxu0 %v423
      %693 = vmatmul.mubr.bf16.gmra.mrb[0].mxu0 %v422
      %v694 = vpop.f32.mrb[0].mxu0
      %v695 = vadd.f32 %v298, %v694
      %v696 = vpop.f32.mrb[0].mxu0
      %v697 = vpop.f32.mrb[0].mxu0
      %v698 = vadd.f32 %v298, %v697
      %v699 = vpop.f32.mrb[0].mxu0
      %700 = vmatprep.mubr.bf16.mxu0 %v425
      %701 = vmatmul.mubr.bf16.gmra.mrb[0].mxu0 %v424
      %v702 = vpop.f32.mrb[0].mxu0
      %v703 = vadd.f32 %v298, %v702
      %v704 = vpop.f32.mrb[0].mxu0
      %v705 = vpop.f32.mrb[0].mxu0
      %v706 = vadd.f32 %v298, %v705
      %v707 = vpop.f32.mrb[0].mxu0
      %708 = vmatprep.mubr.bf16.mxu0 %v427
      %709 = vmatmul.mubr.bf16.gmra.mrb[0].mxu0 %v426
      %v710 = vpop.f32.mrb[0].mxu0
      %v711 = vadd.f32 %v298, %v710
      %v712 = vpop.f32.mrb[0].mxu0
      %v713 = vpop.f32.mrb[0].mxu0
      %v714 = vadd.f32 %v298, %v713
      %v715 = vpop.f32.mrb[0].mxu0
      %716 = vdwg.mxu0
      %v717 = vxor.u32 %v591, 2147483648
      %v718 = vxor.u32 %v594, 2147483648
      %v719 = vxor.u32 %v599, 2147483648
      %v720 = vxor.u32 %v602, 2147483648
      %v721 = vxor.u32 %v607, 2147483648
      %v722 = vxor.u32 %v610, 2147483648
      %v723 = vxor.u32 %v615, 2147483648
      %v724 = vxor.u32 %v618, 2147483648
      %v725 = vxor.u32 %v623, 2147483648
      %v726 = vxor.u32 %v626, 2147483648
      %v727 = vxor.u32 %v631, 2147483648
      %v728 = vxor.u32 %v634, 2147483648
      %v729 = vxor.u32 %v639, 2147483648
      %v730 = vxor.u32 %v642, 2147483648
      %v731 = vxor.u32 %v647, 2147483648
      %v732 = vxor.u32 %v650, 2147483648
      %v733 = vxor.u32 %v655, 2147483648
      %v734 = vxor.u32 %v658, 2147483648
      %v735 = vxor.u32 %v663, 2147483648
      %v736 = vxor.u32 %v666, 2147483648
      %v737 = vxor.u32 %v671, 2147483648
      %v738 = vxor.u32 %v674, 2147483648
      %v739 = vxor.u32 %v679, 2147483648
      %v740 = vxor.u32 %v682, 2147483648
      %v741 = vxor.u32 %v687, 2147483648
      %v742 = vxor.u32 %v690, 2147483648
      %v743 = vxor.u32 %v695, 2147483648
      %v744 = vxor.u32 %v698, 2147483648
      %v745 = vxor.u32 %v703, 2147483648
      %v746 = vxor.u32 %v706, 2147483648
      %v747 = vxor.u32 %v711, 2147483648
      %v748 = vxor.u32 %v714, 2147483648
      %v749 = vmul.f32 %v717, 1.442695
      %v750 = vpow.pop %v749
      %v751 = vmul.f32 %v718, 1.442695
      %v752 = vpow.pop %v751
      %v753 = vmul.f32 %v719, 1.442695
      %v754 = vpow.pop %v753
      %v755 = vmul.f32 %v720, 1.442695
      %v756 = vpow.pop %v755
      %v757 = vmul.f32 %v721, 1.442695
      %v758 = vpow.pop %v757
      %v759 = vmul.f32 %v722, 1.442695
      %v760 = vpow.pop %v759
      %v761 = vmul.f32 %v723, 1.442695
      %v762 = vpow.pop %v761
      %v763 = vmul.f32 %v724, 1.442695
      %v764 = vpow.pop %v763
      %v765 = vmul.f32 %v725, 1.442695
      %v766 = vpow.pop %v765
      %v767 = vmul.f32 %v726, 1.442695
      %v768 = vpow.pop %v767
      %v769 = vmul.f32 %v727, 1.442695
      %v770 = vpow.pop %v769
      %v771 = vmul.f32 %v728, 1.442695
      %v772 = vpow.pop %v771
      %v773 = vmul.f32 %v729, 1.442695
      %v774 = vpow.pop %v773
      %v775 = vmul.f32 %v730, 1.442695
      %v776 = vpow.pop %v775
      %v777 = vmul.f32 %v731, 1.442695
      %v778 = vpow.pop %v777
      %v779 = vmul.f32 %v732, 1.442695
      %v780 = vpow.pop %v779
      %v781 = vmul.f32 %v733, 1.442695
      %v782 = vpow.pop %v781
      %v783 = vmul.f32 %v734, 1.442695
      %v784 = vpow.pop %v783
      %v785 = vmul.f32 %v735, 1.442695
      %v786 = vpow.pop %v785
      %v787 = vmul.f32 %v736, 1.442695
      %v788 = vpow.pop %v787
      %v789 = vmul.f32 %v737, 1.442695
      %v790 = vpow.pop %v789
      %v791 = vmul.f32 %v738, 1.442695
      %v792 = vpow.pop %v791
      %v793 = vmul.f32 %v739, 1.442695
      %v794 = vpow.pop %v793
      %v795 = vmul.f32 %v740, 1.442695
      %v796 = vpow.pop %v795
      %v797 = vmul.f32 %v741, 1.442695
      %v798 = vpow.pop %v797
      %v799 = vmul.f32 %v742, 1.442695
      %v800 = vpow.pop %v799
      %v801 = vmul.f32 %v743, 1.442695
      %v802 = vpow.pop %v801
      %v803 = vmul.f32 %v744, 1.442695
      %v804 = vpow.pop %v803
      %v805 = vmul.f32 %v745, 1.442695
      %v806 = vpow.pop %v805
      %v807 = vmul.f32 %v746, 1.442695
      %v808 = vpow.pop %v807
      %v809 = vmul.f32 %v747, 1.442695
      %v810 = vpow.pop %v809
      %v811 = vmul.f32 %v748, 1.442695
      %v812 = vpow.pop %v811
      %v813 = vadd.f32 %v750, 1.0
      %v814 = vadd.f32 %v752, 1.0
      %v815 = vadd.f32 %v754, 1.0
      %v816 = vadd.f32 %v756, 1.0
      %v817 = vadd.f32 %v758, 1.0
      %v818 = vadd.f32 %v760, 1.0
      %v819 = vadd.f32 %v762, 1.0
      %v820 = vadd.f32 %v764, 1.0
      %v821 = vadd.f32 %v766, 1.0
      %v822 = vadd.f32 %v768, 1.0
      %v823 = vadd.f32 %v770, 1.0
      %v824 = vadd.f32 %v772, 1.0
      %v825 = vadd.f32 %v774, 1.0
      %v826 = vadd.f32 %v776, 1.0
      %v827 = vadd.f32 %v778, 1.0
      %v828 = vadd.f32 %v780, 1.0
      %v829 = vadd.f32 %v782, 1.0
      %v830 = vadd.f32 %v784, 1.0
      %v831 = vadd.f32 %v786, 1.0
      %v832 = vadd.f32 %v788, 1.0
      %v833 = vadd.f32 %v790, 1.0
      %v834 = vadd.f32 %v792, 1.0
      %v835 = vadd.f32 %v794, 1.0
      %v836 = vadd.f32 %v796, 1.0
      %v837 = vadd.f32 %v798, 1.0
      %v838 = vadd.f32 %v800, 1.0
      %v839 = vadd.f32 %v802, 1.0
      %v840 = vadd.f32 %v804, 1.0
      %v841 = vadd.f32 %v806, 1.0
      %v842 = vadd.f32 %v808, 1.0
      %v843 = vadd.f32 %v810, 1.0
      %v844 = vadd.f32 %v812, 1.0
      %v845 = vrcp.pop %v813
      %v846 = vmul.f32 1.0, %v845
      %v847 = vrcp.pop %v814
      %v848 = vmul.f32 1.0, %v847
      %v849 = vrcp.pop %v815
      %v850 = vmul.f32 1.0, %v849
      %v851 = vrcp.pop %v816
      %v852 = vmul.f32 1.0, %v851
      %v853 = vrcp.pop %v817
      %v854 = vmul.f32 1.0, %v853
      %v855 = vrcp.pop %v818
      %v856 = vmul.f32 1.0, %v855
      %v857 = vrcp.pop %v819
      %v858 = vmul.f32 1.0, %v857
      %v859 = vrcp.pop %v820
      %v860 = vmul.f32 1.0, %v859
      %v861 = vrcp.pop %v821
      %v862 = vmul.f32 1.0, %v861
      %v863 = vrcp.pop %v822
      %v864 = vmul.f32 1.0, %v863
      %v865 = vrcp.pop %v823
      %v866 = vmul.f32 1.0, %v865
      %v867 = vrcp.pop %v824
      %v868 = vmul.f32 1.0, %v867
      %v869 = vrcp.pop %v825
      %v870 = vmul.f32 1.0, %v869
      %v871 = vrcp.pop %v826
      %v872 = vmul.f32 1.0, %v871
      %v873 = vrcp.pop %v827
      %v874 = vmul.f32 1.0, %v873
      %v875 = vrcp.pop %v828
      %v876 = vmul.f32 1.0, %v875
      %v877 = vrcp.pop %v829
      %v878 = vmul.f32 1.0, %v877
      %v879 = vrcp.pop %v830
      %v880 = vmul.f32 1.0, %v879
      %v881 = vrcp.pop %v831
      %v882 = vmul.f32 1.0, %v881
      %v883 = vrcp.pop %v832
      %v884 = vmul.f32 1.0, %v883
      %v885 = vrcp.pop %v833
      %v886 = vmul.f32 1.0, %v885
      %v887 = vrcp.pop %v834
      %v888 = vmul.f32 1.0, %v887
      %v889 = vrcp.pop %v835
      %v890 = vmul.f32 1.0, %v889
      %v891 = vrcp.pop %v836
      %v892 = vmul.f32 1.0, %v891
      %v893 = vrcp.pop %v837
      %v894 = vmul.f32 1.0, %v893
      %v895 = vrcp.pop %v838
      %v896 = vmul.f32 1.0, %v895
      %v897 = vrcp.pop %v839
      %v898 = vmul.f32 1.0, %v897
      %v899 = vrcp.pop %v840
      %v900 = vmul.f32 1.0, %v899
      %v901 = vrcp.pop %v841
      %v902 = vmul.f32 1.0, %v901
      %v903 = vrcp.pop %v842
      %v904 = vmul.f32 1.0, %v903
      %v905 = vrcp.pop %v843
      %v906 = vmul.f32 1.0, %v905
      %v907 = vrcp.pop %v844
      %v908 = vmul.f32 1.0, %v907
      %909 = vst [vmem:[%s226] sm:$0xff] %v846
      %910 = vst [vmem:[%s226 + $0x8] sm:$0xff] %v848
      %911 = vst [vmem:[%s226 + $0x10] sm:$0xff] %v850
      %912 = vst [vmem:[%s226 + $0x18] sm:$0xff] %v852
      %913 = vst [vmem:[%s226 + $0x20] sm:$0xff] %v854
      %914 = vst [vmem:[%s226 + $0x28] sm:$0xff] %v856
      %915 = vst [vmem:[%s226 + $0x30] sm:$0xff] %v858
      %916 = vst [vmem:[%s226 + $0x38] sm:$0xff] %v860
      %917 = vst [vmem:[%s226 + $0x40] sm:$0xff] %v862
      %918 = vst [vmem:[%s226 + $0x48] sm:$0xff] %v864
      %919 = vst [vmem:[%s226 + $0x50] sm:$0xff] %v866
      %920 = vst [vmem:[%s226 + $0x58] sm:$0xff] %v868
      %921 = vst [vmem:[%s226 + $0x60] sm:$0xff] %v870
      %922 = vst [vmem:[%s226 + $0x68] sm:$0xff] %v872
      %923 = vst [vmem:[%s226 + $0x70] sm:$0xff] %v874
      %924 = vst [vmem:[%s226 + $0x78] sm:$0xff] %v876
      %925 = vst [vmem:[%s226 + $0x80] sm:$0xff] %v878
      %926 = vst [vmem:[%s226 + $0x88] sm:$0xff] %v880
      %927 = vst [vmem:[%s226 + $0x90] sm:$0xff] %v882
      %928 = vst [vmem:[%s226 + $0x98] sm:$0xff] %v884
      %929 = vst [vmem:[%s226 + $0xa0] sm:$0xff] %v886
      %930 = vst [vmem:[%s226 + $0xa8] sm:$0xff] %v888
      %931 = vst [vmem:[%s226 + $0xb0] sm:$0xff] %v890
      %932 = vst [vmem:[%s226 + $0xb8] sm:$0xff] %v892
      %933 = vst [vmem:[%s226 + $0xc0] sm:$0xff] %v894
      %934 = vst [vmem:[%s226 + $0xc8] sm:$0xff] %v896
      %935 = vst [vmem:[%s226 + $0xd0] sm:$0xff] %v898
      %936 = vst [vmem:[%s226 + $0xd8] sm:$0xff] %v900
      %937 = vst [vmem:[%s226 + $0xe0] sm:$0xff] %v902
      %938 = vst [vmem:[%s226 + $0xe8] sm:$0xff] %v904
      %939 = vst [vmem:[%s226 + $0xf0] sm:$0xff] %v906
      %940 = vst [vmem:[%s226 + $0xf8] sm:$0xff] %v908
      %s941 = smul.u32 32, %s18
      %p942 = scmp.lt.s32.totalorder %s941, 223
      %s943 = scalar_select %p942, %s941, 223
      %p944 = scmp.lt.s32.totalorder %s19, 0
      %s945 = scalar_select %p944, %s19, 0
      %s946 = sadd.s32 %s945, %s943
      %s947 = smul.addr %s946, 8
      %s948 = scalar_lea.vmem %s3, %s947
      // Predicated region
      $region33: #{cae_forward.11} parent=31 // pred_check
        %p949 = pneg %p124
      $region34: #{cae_forward.11} parent=31 // pred_check_branch
        %951 = sbr.rel (%p949) target = $region36
      $region35: #{cae_forward.11} parent=31 // pred_region
        %s952 = smul.u32 32, %s18
      $region36: #{cae_forward.11} parent=31 // pred_fallthru
        _
    $region32: #{cae_forward.11} parent=5 // pred_fallthru
      _
    %p953 = scmp.le.s32.totalorder 2, %s9
    // Predicated region
    $region37: #{cae_forward.11} parent=5 // pred_check
      %p954 = pneg %p953
    $region38: #{cae_forward.11} parent=5 // pred_check_branch
      %956 = sbr.rel (%p954) target = $region40
    $region39: #{cae_forward.11} parent=5 // pred_region
      %s957 = ssub.s32 %s9, 2
      // Predicated region
      $region41: #{cae_forward.11} parent=39 // pred_check
        %p958 = pneg %p130
      $region42: #{cae_forward.11} parent=39 // pred_check_branch
        %960 = sbr.rel (%p958) target = $region44
      $region43: #{cae_forward.11} parent=39 // pred_region
        %s961 = smul.u32 32, %s20
        %p962 = scmp.lt.s32.totalorder %s961, 223
        %s963 = scalar_select %p962, %s961, 223
        %p964 = scmp.lt.s32.totalorder %s21, 0
        %s965 = scalar_select %p964, %s21, 0
        %s966 = sadd.s32 %s965, %s963
        %s967 = smul.addr %s966, 8
        %s968 = scalar_lea.vmem %s3, %s967
      $region44: #{cae_forward.11} parent=39 // pred_fallthru
        _
    $region40: #{cae_forward.11} parent=5 // pred_fallthru
      _
  $region6: #{cae_forward.11} parent=0 // loop_footer
    %s13 = sadd.s32 1, %s9
  $region7: #{cae_forward.11} parent=0 // loop_footer_branch
    %8 = sbr.rel target = $region3
  $region8: #{cae_forward.11} parent=0 // loop_exit
    _

</llo_original>
